<compile_context>
chip_gen: v5e
topology: v5e:2x2
jax: 0.10.0
libtpu: 0.0.40
codegen_flags: <defaults>
</compile_context>

<pallas_src>
import functools

import numpy as np
import jax
import jax.numpy as jnp
from jax import lax
from jax.experimental import pallas as pl
from jax.experimental.pallas import tpu as pltpu

D_IN = 3                      # layers[0]
HID = 32                      # layers[1] == layers[2]
D_OUT = 2                     # layers[-1]
N_RES = 3
N_HID_LIN = 2 * N_RES + 1     # 6 resblock linears + 1 "middle" linear
N_BN = 2 * N_RES + 2          # stem BN + 2 per resblock + middle BN
BN_EPS = 1e-5
INV_SQRT2 = 0.7071067811865476

# --- layout of the packed per-feature vector buffer: (N_VEC, HID, 1) ----------
VEC_B_IN = 0
VEC_B_STACK0 = 1                          # 1 .. 7
VEC_GAMMA0 = VEC_B_STACK0 + N_HID_LIN     # 8 .. 15
VEC_BETA0 = VEC_GAMMA0 + N_BN             # 16 .. 23
VEC_B_OUT = VEC_BETA0 + N_BN              # 24  (first D_OUT rows used)
VEC_FREQ = VEC_B_OUT + 1                  # 25  (first D_IN rows used)
N_VEC = VEC_FREQ + 1                      # 26


def npinn_kernel(xyt_ref, w_in_ref, w_stack_ref, w_out_ref, vecs_ref, out_ref,
                 *, n_real):
    n_pad = xyt_ref.shape[1]

    xyt = xyt_ref[...]                         # (3, N)  rows = x, y, t
    x = xyt[0:1, :]                            # (1, N)
    y = xyt[1:2, :]
    t = xyt[2:3, :]

    # freq_x == freq_y == freq_t == linspace(0, 10, 3) in the module
    freq = vecs_ref[VEC_FREQ][0:D_IN, :]       # (3, 1)

    # positional encoding + inp_raw (cat([x,y,t]) is simply the xyt slab itself)
    pos = (jnp.sin(freq * x) + jnp.sin(freq * y) + jnp.sin(freq * t)) * (1.0 / 3.0)
    h = xyt + pos                              # (3, N)

    # masked ones-column: BN statistics only see the n_real true batch columns.
    if n_real == n_pad:
        ones_col = jnp.ones((n_pad, 1), jnp.float32)
    else:
        ridx = lax.broadcasted_iota(jnp.int32, (n_pad, 1), 0)
        ones_col = (ridx < n_real).astype(jnp.float32)
    inv_n = np.float32(1.0 / n_real)

    def col(i):
        return vecs_ref[i]                     # (HID, 1) static-index load

    def bn(v, i):
        # PyTorch train-mode BatchNorm1d: batch mean + biased batch variance.
        # Sums go through the (idle) MXU; centered form for robustness.
        s = jnp.dot(v, ones_col, preferred_element_type=jnp.float32)      # (HID,1)
        mean = s * inv_n
        d = v - mean
        ss = jnp.dot(d * d, ones_col, preferred_element_type=jnp.float32)  # (HID,1)
        inv_std = lax.rsqrt(ss * inv_n + BN_EPS)
        return d * (inv_std * col(VEC_GAMMA0 + i)) + col(VEC_BETA0 + i)

    def gelu(v):
        # exact GELU (nn.GELU default)
        return 0.5 * v * (1.0 + lax.erf(v * INV_SQRT2))

    # stem: Linear(3, 32) -> BN -> GELU
    h = jnp.dot(w_in_ref[...], h, preferred_element_type=jnp.float32) + col(VEC_B_IN)
    h = gelu(bn(h, 0))

    # 3 ResBlocks: GELU(x + BN(Linear(GELU(BN(Linear(x))))))
    for k in range(N_RES):
        z = jnp.dot(w_stack_ref[2 * k], h,
                    preferred_element_type=jnp.float32) + col(VEC_B_STACK0 + 2 * k)
        z = gelu(bn(z, 1 + 2 * k))
        z = jnp.dot(w_stack_ref[2 * k + 1], z,
                    preferred_element_type=jnp.float32) + col(VEC_B_STACK0 + 2 * k + 1)
        z = bn(z, 2 + 2 * k)
        h = gelu(h + z)

    # middle block: Linear(32, 32) -> BN -> GELU
    h = jnp.dot(w_stack_ref[2 * N_RES], h,
                preferred_element_type=jnp.float32) + col(VEC_B_STACK0 + 2 * N_RES)
    h = gelu(bn(h, N_BN - 1))

    # head: Linear(32, 2)   -> lane-dense (2, N) output
    out_ref[...] = (jnp.dot(w_out_ref[...], h, preferred_element_type=jnp.float32)
                    + col(VEC_B_OUT)[0:D_OUT, :])


def _vmem_limit_bytes(n_pad):
    # generous bound: ~dozens of live (HID, n_pad) f32 activations + params/IO.
    est = 64 * HID * n_pad * 4 + (8 << 20)
    return int(min(max(32 << 20, est), 60 << 20))   # stay under v7x's 64 MiB


def _cost_estimate(n_pad):
    flops = 2 * n_pad * (D_IN * HID + N_HID_LIN * HID * HID + HID * D_OUT
                         + 2 * N_BN * HID)
    transcendentals = n_pad * (3 * D_IN + (2 * N_RES + 2) * HID)
    bytes_accessed = 4 * (D_IN * n_pad + D_OUT * n_pad
                          + HID * D_IN + N_HID_LIN * HID * HID
                          + D_OUT * HID + N_VEC * HID)
    return pl.CostEstimate(flops=flops, transcendentals=transcendentals,
                           bytes_accessed=bytes_accessed)


def npinn_forward(x, y, t, params):
    """x, y, t: (N, 1) f32.  Returns (A_r, A_i), each (N, 1)."""
    n = int(x.shape[0])
    n_pad = max(128, ((n + 127) // 128) * 128)

    # feature-major input slab: (3, N_pad), rows = x, y, t
    xyt = jnp.concatenate([x, y, t], axis=1).astype(jnp.float32).T
    if n_pad != n:
        xyt = jnp.pad(xyt, ((0, 0), (0, n_pad - n)))

    args = (xyt, params["w_in"], params["w_stack"], params["w_out"], params["vecs"])
    in_specs = [pl.BlockSpec(a.shape, lambda i, _nd=a.ndim: (0,) * _nd) for a in args]

    out = pl.pallas_call(
        functools.partial(npinn_kernel, n_real=n),
        out_shape=jax.ShapeDtypeStruct((D_OUT, n_pad), jnp.float32),
        grid=(1,),
        in_specs=in_specs,
        out_specs=pl.BlockSpec((D_OUT, n_pad), lambda i: (0, 0)),
        compiler_params=pltpu.CompilerParams(
            dimension_semantics=("arbitrary",),
            vmem_limit_bytes=_vmem_limit_bytes(n_pad)),
        cost_estimate=_cost_estimate(n_pad),
    )(*args)

    return out[0, :n][:, None], out[1, :n][:, None]


def init_params(key):
    """__init__-faithful parameters, PyTorch-native (out, in) weight orientation.
    Linear: xavier_uniform weights, zero biases.  BatchNorm: gamma=1, beta=0."""
    def xavier(k, fan_out, fan_in):
        a = float(np.sqrt(6.0 / (fan_in + fan_out)))
        return jax.random.uniform(k, (fan_out, fan_in), jnp.float32, -a, a)

    keys = jax.random.split(key, 2 + N_HID_LIN)
    return dict(
        freq=jnp.linspace(0.0, 10.0, D_IN, dtype=jnp.float32),
        w_in=xavier(keys[0], HID, D_IN),
        b_in=jnp.zeros((HID,), jnp.float32),
        w_stack=jnp.stack([xavier(keys[1 + i], HID, HID) for i in range(N_HID_LIN)]),
        b_stack=jnp.zeros((N_HID_LIN, HID), jnp.float32),
        gamma=jnp.ones((N_BN, HID), jnp.float32),
        beta=jnp.zeros((N_BN, HID), jnp.float32),
        w_out=xavier(keys[1 + N_HID_LIN], D_OUT, HID),
        b_out=jnp.zeros((D_OUT,), jnp.float32),
    )


def pack_params(p):
    """Consolidate all small per-feature vectors into one (N_VEC, HID, 1) buffer."""
    vecs = jnp.zeros((N_VEC, HID), jnp.float32)
    vecs = vecs.at[VEC_B_IN].set(p["b_in"])
    vecs = vecs.at[VEC_B_STACK0:VEC_B_STACK0 + N_HID_LIN].set(p["b_stack"])
    vecs = vecs.at[VEC_GAMMA0:VEC_GAMMA0 + N_BN].set(p["gamma"])
    vecs = vecs.at[VEC_BETA0:VEC_BETA0 + N_BN].set(p["beta"])
    vecs = vecs.at[VEC_B_OUT, :D_OUT].set(p["b_out"])
    vecs = vecs.at[VEC_FREQ, :D_IN].set(p["freq"])
    return dict(w_in=p["w_in"], w_stack=p["w_stack"], w_out=p["w_out"],
                vecs=vecs[:, :, None])


def reference_forward(x, y, t, p):
    """Pure-JAX mirror of the PyTorch forward (batch-major) for correctness."""
    freq = p["freq"][None, :]
    pos = (jnp.sin(x * freq) + jnp.sin(y * freq) + jnp.sin(t * freq)) / 3.0
    h = jnp.concatenate([x, y, t], axis=1) + pos

    def bn(v, i):
        m = jnp.mean(v, axis=0, keepdims=True)
        var = jnp.mean((v - m) ** 2, axis=0, keepdims=True)
        return (v - m) / jnp.sqrt(var + BN_EPS) * p["gamma"][i] + p["beta"][i]

    def gelu(v):
        return 0.5 * v * (1.0 + lax.erf(v * INV_SQRT2))

    h = gelu(bn(h @ p["w_in"].T + p["b_in"], 0))
    for k in range(N_RES):
        z = gelu(bn(h @ p["w_stack"][2 * k].T + p["b_stack"][2 * k], 1 + 2 * k))
        z = bn(z @ p["w_stack"][2 * k + 1].T + p["b_stack"][2 * k + 1], 2 + 2 * k)
        h = gelu(h + z)
    h = gelu(bn(h @ p["w_stack"][2 * N_RES].T + p["b_stack"][2 * N_RES], N_BN - 1))
    out = h @ p["w_out"].T + p["b_out"]
    return out[:, 0:1], out[:, 1:2]


if __name__ == "__main__":
    key = jax.random.PRNGKey(0)
    kx, ky, kt, kp = jax.random.split(key, 4)

    N = 256
    x = jax.random.uniform(kx, (N, 1), jnp.float32, 0.0, 1.0)
    y = jax.random.uniform(ky, (N, 1), jnp.float32, 0.0, 1.0)
    t = jax.random.uniform(kt, (N, 1), jnp.float32, 0.0, 1.0)

    raw = init_params(kp)
    packed = pack_params(raw)

    # lane-aligned batch
    a_r, a_i = npinn_forward(x, y, t, packed)
    jax.block_until_ready((a_r, a_i))
    assert a_r.shape == (N, 1) and a_i.shape == (N, 1)
    ref_r, ref_i = reference_forward(x, y, t, raw)
    np.testing.assert_allclose(np.asarray(a_r), np.asarray(ref_r), rtol=1e-4, atol=1e-4)
    np.testing.assert_allclose(np.asarray(a_i), np.asarray(ref_i), rtol=1e-4, atol=1e-4)

    # non-multiple-of-128 batch exercises the masked-padding BN path
    M = 200
    b_r, b_i = npinn_forward(x[:M], y[:M], t[:M], packed)
    jax.block_until_ready((b_r, b_i))
    rb_r, rb_i = reference_forward(x[:M], y[:M], t[:M], raw)
    np.testing.assert_allclose(np.asarray(b_r), np.asarray(rb_r), rtol=1e-4, atol=1e-4)
    np.testing.assert_allclose(np.asarray(b_i), np.asarray(rb_i), rtol=1e-4, atol=1e-4)

    print("KERNEL_OK")
</pallas_src>

<mosaic_0001>
module attributes {stable_mosaic.version = 11 : i64} {
  func.func @npinn_kernel(%arg0: i32, %arg1: memref<3x256xf32, #tpu.memory_space<vmem>>, %arg2: memref<32x3xf32, #tpu.memory_space<vmem>>, %arg3: memref<7x32x32xf32, #tpu.memory_space<vmem>>, %arg4: memref<2x32xf32, #tpu.memory_space<vmem>>, %arg5: memref<26x32x1xf32, #tpu.memory_space<vmem>>, %arg6: memref<2x256xf32, #tpu.memory_space<vmem>>) attributes {dimension_semantics = [#tpu.dimension_semantics<arbitrary>], iteration_bounds = array<i64: 1>, scalar_prefetch = 0 : i64, scratch_operands = 0 : i64, tpu.core_type = #tpu.core_type<tc>, window_params = [{pipeline_mode = #tpu.pipeline_mode<synchronous>, transform_indices = @transform_0, window_bounds = array<i64: 3, 256>}, {pipeline_mode = #tpu.pipeline_mode<synchronous>, transform_indices = @transform_1, window_bounds = array<i64: 32, 3>}, {pipeline_mode = #tpu.pipeline_mode<synchronous>, transform_indices = @transform_2, window_bounds = array<i64: 7, 32, 32>}, {pipeline_mode = #tpu.pipeline_mode<synchronous>, transform_indices = @transform_3, window_bounds = array<i64: 2, 32>}, {pipeline_mode = #tpu.pipeline_mode<synchronous>, transform_indices = @transform_4, window_bounds = array<i64: 26, 32, 1>}, {pipeline_mode = #tpu.pipeline_mode<synchronous>, transform_indices = @transform_5, window_bounds = array<i64: 2, 256>}]} {
    %c0 = arith.constant 0 : index
    %c0_0 = arith.constant 0 : index
    %0 = vector.load %arg1[%c0, %c0_0] : memref<3x256xf32, #tpu.memory_space<vmem>>, vector<3x256xf32>
    %1 = vector.extract_strided_slice %0 {offsets = [0, 0], sizes = [1, 256], strides = [1, 1]} : vector<3x256xf32> to vector<1x256xf32>
    %2 = vector.extract_strided_slice %0 {offsets = [1, 0], sizes = [1, 256], strides = [1, 1]} : vector<3x256xf32> to vector<1x256xf32>
    %3 = vector.extract_strided_slice %0 {offsets = [2, 0], sizes = [1, 256], strides = [1, 1]} : vector<3x256xf32> to vector<1x256xf32>
    %c25 = arith.constant 25 : index
    %c0_1 = arith.constant 0 : index
    %c0_2 = arith.constant 0 : index
    %4 = vector.load %arg5[%c25, %c0_1, %c0_2] : memref<26x32x1xf32, #tpu.memory_space<vmem>>, vector<1x32x1xf32>
    %5 = vector.shape_cast %4 : vector<1x32x1xf32> to vector<32x1xf32>
    %6 = vector.extract_strided_slice %5 {offsets = [0, 0], sizes = [3, 1], strides = [1, 1]} : vector<32x1xf32> to vector<3x1xf32>
    %7 = vector.broadcast %6 : vector<3x1xf32> to vector<3x256xf32>
    %8 = vector.broadcast %1 : vector<1x256xf32> to vector<3x256xf32>
    %9 = arith.mulf %7, %8 : vector<3x256xf32>
    %10 = math.sin %9 : vector<3x256xf32>
    %11 = vector.broadcast %6 : vector<3x1xf32> to vector<3x256xf32>
    %12 = vector.broadcast %2 : vector<1x256xf32> to vector<3x256xf32>
    %13 = arith.mulf %11, %12 : vector<3x256xf32>
    %14 = math.sin %13 : vector<3x256xf32>
    %15 = arith.addf %10, %14 : vector<3x256xf32>
    %16 = vector.broadcast %6 : vector<3x1xf32> to vector<3x256xf32>
    %17 = vector.broadcast %3 : vector<1x256xf32> to vector<3x256xf32>
    %18 = arith.mulf %16, %17 : vector<3x256xf32>
    %19 = math.sin %18 : vector<3x256xf32>
    %20 = arith.addf %15, %19 : vector<3x256xf32>
    %cst = arith.constant 0.333333343 : f32
    %21 = vector.broadcast %cst : f32 to vector<3x256xf32>
    %22 = arith.mulf %20, %21 : vector<3x256xf32>
    %23 = arith.addf %0, %22 : vector<3x256xf32>
    %cst_3 = arith.constant 1.000000e+00 : f32
    %24 = vector.broadcast %cst_3 : f32 to vector<256x1xf32>
    %c0_4 = arith.constant 0 : index
    %c0_5 = arith.constant 0 : index
    %25 = vector.load %arg2[%c0_4, %c0_5] : memref<32x3xf32, #tpu.memory_space<vmem>>, vector<32x3xf32>
    %cst_6 = arith.constant dense<0.000000e+00> : vector<32x256xf32>
    %26 = tpu.matmul %25, %23, %cst_6 {dimension_numbers = #tpu.dot_dimension_numbers<[1], [0], [0], [1], [0, 0, 1, 1], [], []>} : vector<32x3xf32>, vector<3x256xf32>, vector<32x256xf32> -> vector<32x256xf32>
    %c0_7 = arith.constant 0 : index
    %c0_8 = arith.constant 0 : index
    %c0_9 = arith.constant 0 : index
    %27 = vector.load %arg5[%c0_7, %c0_8, %c0_9] : memref<26x32x1xf32, #tpu.memory_space<vmem>>, vector<1x32x1xf32>
    %28 = vector.shape_cast %27 : vector<1x32x1xf32> to vector<32x1xf32>
    %29 = vector.broadcast %28 : vector<32x1xf32> to vector<32x256xf32>
    %30 = arith.addf %26, %29 : vector<32x256xf32>
    %cst_10 = arith.constant dense<0.000000e+00> : vector<32x1xf32>
    %31 = tpu.matmul %30, %24, %cst_10 {dimension_numbers = #tpu.dot_dimension_numbers<[1], [0], [0], [1], [0, 0, 1, 1], [], []>} : vector<32x256xf32>, vector<256x1xf32>, vector<32x1xf32> -> vector<32x1xf32>
    %cst_11 = arith.constant 3.906250e-03 : f32
    %32 = vector.broadcast %cst_11 : f32 to vector<32x1xf32>
    %33 = arith.mulf %31, %32 : vector<32x1xf32>
    %34 = vector.broadcast %33 : vector<32x1xf32> to vector<32x256xf32>
    %35 = arith.subf %30, %34 : vector<32x256xf32>
    %36 = arith.mulf %35, %35 : vector<32x256xf32>
    %cst_12 = arith.constant dense<0.000000e+00> : vector<32x1xf32>
    %37 = tpu.matmul %36, %24, %cst_12 {dimension_numbers = #tpu.dot_dimension_numbers<[1], [0], [0], [1], [0, 0, 1, 1], [], []>} : vector<32x256xf32>, vector<256x1xf32>, vector<32x1xf32> -> vector<32x1xf32>
    %cst_13 = arith.constant 3.906250e-03 : f32
    %38 = vector.broadcast %cst_13 : f32 to vector<32x1xf32>
    %39 = arith.mulf %37, %38 : vector<32x1xf32>
    %cst_14 = arith.constant 9.99999974E-6 : f32
    %40 = vector.broadcast %cst_14 : f32 to vector<32x1xf32>
    %41 = arith.addf %39, %40 : vector<32x1xf32>
    %42 = math.rsqrt %41 : vector<32x1xf32>
    %c8 = arith.constant 8 : index
    %c0_15 = arith.constant 0 : index
    %c0_16 = arith.constant 0 : index
    %43 = vector.load %arg5[%c8, %c0_15, %c0_16] : memref<26x32x1xf32, #tpu.memory_space<vmem>>, vector<1x32x1xf32>
    %44 = vector.shape_cast %43 : vector<1x32x1xf32> to vector<32x1xf32>
    %45 = arith.mulf %42, %44 : vector<32x1xf32>
    %46 = vector.broadcast %45 : vector<32x1xf32> to vector<32x256xf32>
    %47 = arith.mulf %35, %46 : vector<32x256xf32>
    %c16 = arith.constant 16 : index
    %c0_17 = arith.constant 0 : index
    %c0_18 = arith.constant 0 : index
    %48 = vector.load %arg5[%c16, %c0_17, %c0_18] : memref<26x32x1xf32, #tpu.memory_space<vmem>>, vector<1x32x1xf32>
    %49 = vector.shape_cast %48 : vector<1x32x1xf32> to vector<32x1xf32>
    %50 = vector.broadcast %49 : vector<32x1xf32> to vector<32x256xf32>
    %51 = arith.addf %47, %50 : vector<32x256xf32>
    %cst_19 = arith.constant 5.000000e-01 : f32
    %52 = vector.broadcast %cst_19 : f32 to vector<32x256xf32>
    %53 = arith.mulf %52, %51 : vector<32x256xf32>
    %cst_20 = arith.constant 0.707106769 : f32
    %54 = vector.broadcast %cst_20 : f32 to vector<32x256xf32>
    %55 = arith.mulf %51, %54 : vector<32x256xf32>
    %56 = math.erf %55 : vector<32x256xf32>
    %cst_21 = arith.constant 1.000000e+00 : f32
    %57 = vector.broadcast %cst_21 : f32 to vector<32x256xf32>
    %58 = arith.addf %57, %56 : vector<32x256xf32>
    %59 = arith.mulf %53, %58 : vector<32x256xf32>
    %c0_22 = arith.constant 0 : index
    %c0_23 = arith.constant 0 : index
    %c0_24 = arith.constant 0 : index
    %60 = vector.load %arg3[%c0_22, %c0_23, %c0_24] : memref<7x32x32xf32, #tpu.memory_space<vmem>>, vector<1x32x32xf32>
    %61 = vector.shape_cast %60 : vector<1x32x32xf32> to vector<32x32xf32>
    %cst_25 = arith.constant dense<0.000000e+00> : vector<32x256xf32>
    %62 = tpu.matmul %61, %59, %cst_25 {dimension_numbers = #tpu.dot_dimension_numbers<[1], [0], [0], [1], [0, 0, 1, 1], [], []>} : vector<32x32xf32>, vector<32x256xf32>, vector<32x256xf32> -> vector<32x256xf32>
    %c1 = arith.constant 1 : index
    %c0_26 = arith.constant 0 : index
    %c0_27 = arith.constant 0 : index
    %63 = vector.load %arg5[%c1, %c0_26, %c0_27] : memref<26x32x1xf32, #tpu.memory_space<vmem>>, vector<1x32x1xf32>
    %64 = vector.shape_cast %63 : vector<1x32x1xf32> to vector<32x1xf32>
    %65 = vector.broadcast %64 : vector<32x1xf32> to vector<32x256xf32>
    %66 = arith.addf %62, %65 : vector<32x256xf32>
    %cst_28 = arith.constant dense<0.000000e+00> : vector<32x1xf32>
    %67 = tpu.matmul %66, %24, %cst_28 {dimension_numbers = #tpu.dot_dimension_numbers<[1], [0], [0], [1], [0, 0, 1, 1], [], []>} : vector<32x256xf32>, vector<256x1xf32>, vector<32x1xf32> -> vector<32x1xf32>
    %cst_29 = arith.constant 3.906250e-03 : f32
    %68 = vector.broadcast %cst_29 : f32 to vector<32x1xf32>
    %69 = arith.mulf %67, %68 : vector<32x1xf32>
    %70 = vector.broadcast %69 : vector<32x1xf32> to vector<32x256xf32>
    %71 = arith.subf %66, %70 : vector<32x256xf32>
    %72 = arith.mulf %71, %71 : vector<32x256xf32>
    %cst_30 = arith.constant dense<0.000000e+00> : vector<32x1xf32>
    %73 = tpu.matmul %72, %24, %cst_30 {dimension_numbers = #tpu.dot_dimension_numbers<[1], [0], [0], [1], [0, 0, 1, 1], [], []>} : vector<32x256xf32>, vector<256x1xf32>, vector<32x1xf32> -> vector<32x1xf32>
    %cst_31 = arith.constant 3.906250e-03 : f32
    %74 = vector.broadcast %cst_31 : f32 to vector<32x1xf32>
    %75 = arith.mulf %73, %74 : vector<32x1xf32>
    %cst_32 = arith.constant 9.99999974E-6 : f32
    %76 = vector.broadcast %cst_32 : f32 to vector<32x1xf32>
    %77 = arith.addf %75, %76 : vector<32x1xf32>
    %78 = math.rsqrt %77 : vector<32x1xf32>
    %c9 = arith.constant 9 : index
    %c0_33 = arith.constant 0 : index
    %c0_34 = arith.constant 0 : index
    %79 = vector.load %arg5[%c9, %c0_33, %c0_34] : memref<26x32x1xf32, #tpu.memory_space<vmem>>, vector<1x32x1xf32>
    %80 = vector.shape_cast %79 : vector<1x32x1xf32> to vector<32x1xf32>
    %81 = arith.mulf %78, %80 : vector<32x1xf32>
    %82 = vector.broadcast %81 : vector<32x1xf32> to vector<32x256xf32>
    %83 = arith.mulf %71, %82 : vector<32x256xf32>
    %c17 = arith.constant 17 : index
    %c0_35 = arith.constant 0 : index
    %c0_36 = arith.constant 0 : index
    %84 = vector.load %arg5[%c17, %c0_35, %c0_36] : memref<26x32x1xf32, #tpu.memory_space<vmem>>, vector<1x32x1xf32>
    %85 = vector.shape_cast %84 : vector<1x32x1xf32> to vector<32x1xf32>
    %86 = vector.broadcast %85 : vector<32x1xf32> to vector<32x256xf32>
    %87 = arith.addf %83, %86 : vector<32x256xf32>
    %cst_37 = arith.constant 5.000000e-01 : f32
    %88 = vector.broadcast %cst_37 : f32 to vector<32x256xf32>
    %89 = arith.mulf %88, %87 : vector<32x256xf32>
    %cst_38 = arith.constant 0.707106769 : f32
    %90 = vector.broadcast %cst_38 : f32 to vector<32x256xf32>
    %91 = arith.mulf %87, %90 : vector<32x256xf32>
    %92 = math.erf %91 : vector<32x256xf32>
    %cst_39 = arith.constant 1.000000e+00 : f32
    %93 = vector.broadcast %cst_39 : f32 to vector<32x256xf32>
    %94 = arith.addf %93, %92 : vector<32x256xf32>
    %95 = arith.mulf %89, %94 : vector<32x256xf32>
    %c1_40 = arith.constant 1 : index
    %c0_41 = arith.constant 0 : index
    %c0_42 = arith.constant 0 : index
    %96 = vector.load %arg3[%c1_40, %c0_41, %c0_42] : memref<7x32x32xf32, #tpu.memory_space<vmem>>, vector<1x32x32xf32>
    %97 = vector.shape_cast %96 : vector<1x32x32xf32> to vector<32x32xf32>
    %cst_43 = arith.constant dense<0.000000e+00> : vector<32x256xf32>
    %98 = tpu.matmul %97, %95, %cst_43 {dimension_numbers = #tpu.dot_dimension_numbers<[1], [0], [0], [1], [0, 0, 1, 1], [], []>} : vector<32x32xf32>, vector<32x256xf32>, vector<32x256xf32> -> vector<32x256xf32>
    %c2 = arith.constant 2 : index
    %c0_44 = arith.constant 0 : index
    %c0_45 = arith.constant 0 : index
    %99 = vector.load %arg5[%c2, %c0_44, %c0_45] : memref<26x32x1xf32, #tpu.memory_space<vmem>>, vector<1x32x1xf32>
    %100 = vector.shape_cast %99 : vector<1x32x1xf32> to vector<32x1xf32>
    %101 = vector.broadcast %100 : vector<32x1xf32> to vector<32x256xf32>
    %102 = arith.addf %98, %101 : vector<32x256xf32>
    %cst_46 = arith.constant dense<0.000000e+00> : vector<32x1xf32>
    %103 = tpu.matmul %102, %24, %cst_46 {dimension_numbers = #tpu.dot_dimension_numbers<[1], [0], [0], [1], [0, 0, 1, 1], [], []>} : vector<32x256xf32>, vector<256x1xf32>, vector<32x1xf32> -> vector<32x1xf32>
    %cst_47 = arith.constant 3.906250e-03 : f32
    %104 = vector.broadcast %cst_47 : f32 to vector<32x1xf32>
    %105 = arith.mulf %103, %104 : vector<32x1xf32>
    %106 = vector.broadcast %105 : vector<32x1xf32> to vector<32x256xf32>
    %107 = arith.subf %102, %106 : vector<32x256xf32>
    %108 = arith.mulf %107, %107 : vector<32x256xf32>
    %cst_48 = arith.constant dense<0.000000e+00> : vector<32x1xf32>
    %109 = tpu.matmul %108, %24, %cst_48 {dimension_numbers = #tpu.dot_dimension_numbers<[1], [0], [0], [1], [0, 0, 1, 1], [], []>} : vector<32x256xf32>, vector<256x1xf32>, vector<32x1xf32> -> vector<32x1xf32>
    %cst_49 = arith.constant 3.906250e-03 : f32
    %110 = vector.broadcast %cst_49 : f32 to vector<32x1xf32>
    %111 = arith.mulf %109, %110 : vector<32x1xf32>
    %cst_50 = arith.constant 9.99999974E-6 : f32
    %112 = vector.broadcast %cst_50 : f32 to vector<32x1xf32>
    %113 = arith.addf %111, %112 : vector<32x1xf32>
    %114 = math.rsqrt %113 : vector<32x1xf32>
    %c10 = arith.constant 10 : index
    %c0_51 = arith.constant 0 : index
    %c0_52 = arith.constant 0 : index
    %115 = vector.load %arg5[%c10, %c0_51, %c0_52] : memref<26x32x1xf32, #tpu.memory_space<vmem>>, vector<1x32x1xf32>
    %116 = vector.shape_cast %115 : vector<1x32x1xf32> to vector<32x1xf32>
    %117 = arith.mulf %114, %116 : vector<32x1xf32>
    %118 = vector.broadcast %117 : vector<32x1xf32> to vector<32x256xf32>
    %119 = arith.mulf %107, %118 : vector<32x256xf32>
    %c18 = arith.constant 18 : index
    %c0_53 = arith.constant 0 : index
    %c0_54 = arith.constant 0 : index
    %120 = vector.load %arg5[%c18, %c0_53, %c0_54] : memref<26x32x1xf32, #tpu.memory_space<vmem>>, vector<1x32x1xf32>
    %121 = vector.shape_cast %120 : vector<1x32x1xf32> to vector<32x1xf32>
    %122 = vector.broadcast %121 : vector<32x1xf32> to vector<32x256xf32>
    %123 = arith.addf %119, %122 : vector<32x256xf32>
    %124 = arith.addf %59, %123 : vector<32x256xf32>
    %cst_55 = arith.constant 5.000000e-01 : f32
    %125 = vector.broadcast %cst_55 : f32 to vector<32x256xf32>
    %126 = arith.mulf %125, %124 : vector<32x256xf32>
    %cst_56 = arith.constant 0.707106769 : f32
    %127 = vector.broadcast %cst_56 : f32 to vector<32x256xf32>
    %128 = arith.mulf %124, %127 : vector<32x256xf32>
    %129 = math.erf %128 : vector<32x256xf32>
    %cst_57 = arith.constant 1.000000e+00 : f32
    %130 = vector.broadcast %cst_57 : f32 to vector<32x256xf32>
    %131 = arith.addf %130, %129 : vector<32x256xf32>
    %132 = arith.mulf %126, %131 : vector<32x256xf32>
    %c2_58 = arith.constant 2 : index
    %c0_59 = arith.constant 0 : index
    %c0_60 = arith.constant 0 : index
    %133 = vector.load %arg3[%c2_58, %c0_59, %c0_60] : memref<7x32x32xf32, #tpu.memory_space<vmem>>, vector<1x32x32xf32>
    %134 = vector.shape_cast %133 : vector<1x32x32xf32> to vector<32x32xf32>
    %cst_61 = arith.constant dense<0.000000e+00> : vector<32x256xf32>
    %135 = tpu.matmul %134, %132, %cst_61 {dimension_numbers = #tpu.dot_dimension_numbers<[1], [0], [0], [1], [0, 0, 1, 1], [], []>} : vector<32x32xf32>, vector<32x256xf32>, vector<32x256xf32> -> vector<32x256xf32>
    %c3 = arith.constant 3 : index
    %c0_62 = arith.constant 0 : index
    %c0_63 = arith.constant 0 : index
    %136 = vector.load %arg5[%c3, %c0_62, %c0_63] : memref<26x32x1xf32, #tpu.memory_space<vmem>>, vector<1x32x1xf32>
    %137 = vector.shape_cast %136 : vector<1x32x1xf32> to vector<32x1xf32>
    %138 = vector.broadcast %137 : vector<32x1xf32> to vector<32x256xf32>
    %139 = arith.addf %135, %138 : vector<32x256xf32>
    %cst_64 = arith.constant dense<0.000000e+00> : vector<32x1xf32>
    %140 = tpu.matmul %139, %24, %cst_64 {dimension_numbers = #tpu.dot_dimension_numbers<[1], [0], [0], [1], [0, 0, 1, 1], [], []>} : vector<32x256xf32>, vector<256x1xf32>, vector<32x1xf32> -> vector<32x1xf32>
    %cst_65 = arith.constant 3.906250e-03 : f32
    %141 = vector.broadcast %cst_65 : f32 to vector<32x1xf32>
    %142 = arith.mulf %140, %141 : vector<32x1xf32>
    %143 = vector.broadcast %142 : vector<32x1xf32> to vector<32x256xf32>
    %144 = arith.subf %139, %143 : vector<32x256xf32>
    %145 = arith.mulf %144, %144 : vector<32x256xf32>
    %cst_66 = arith.constant dense<0.000000e+00> : vector<32x1xf32>
    %146 = tpu.matmul %145, %24, %cst_66 {dimension_numbers = #tpu.dot_dimension_numbers<[1], [0], [0], [1], [0, 0, 1, 1], [], []>} : vector<32x256xf32>, vector<256x1xf32>, vector<32x1xf32> -> vector<32x1xf32>
    %cst_67 = arith.constant 3.906250e-03 : f32
    %147 = vector.broadcast %cst_67 : f32 to vector<32x1xf32>
    %148 = arith.mulf %146, %147 : vector<32x1xf32>
    %cst_68 = arith.constant 9.99999974E-6 : f32
    %149 = vector.broadcast %cst_68 : f32 to vector<32x1xf32>
    %150 = arith.addf %148, %149 : vector<32x1xf32>
    %151 = math.rsqrt %150 : vector<32x1xf32>
    %c11 = arith.constant 11 : index
    %c0_69 = arith.constant 0 : index
    %c0_70 = arith.constant 0 : index
    %152 = vector.load %arg5[%c11, %c0_69, %c0_70] : memref<26x32x1xf32, #tpu.memory_space<vmem>>, vector<1x32x1xf32>
    %153 = vector.shape_cast %152 : vector<1x32x1xf32> to vector<32x1xf32>
    %154 = arith.mulf %151, %153 : vector<32x1xf32>
    %155 = vector.broadcast %154 : vector<32x1xf32> to vector<32x256xf32>
    %156 = arith.mulf %144, %155 : vector<32x256xf32>
    %c19 = arith.constant 19 : index
    %c0_71 = arith.constant 0 : index
    %c0_72 = arith.constant 0 : index
    %157 = vector.load %arg5[%c19, %c0_71, %c0_72] : memref<26x32x1xf32, #tpu.memory_space<vmem>>, vector<1x32x1xf32>
    %158 = vector.shape_cast %157 : vector<1x32x1xf32> to vector<32x1xf32>
    %159 = vector.broadcast %158 : vector<32x1xf32> to vector<32x256xf32>
    %160 = arith.addf %156, %159 : vector<32x256xf32>
    %cst_73 = arith.constant 5.000000e-01 : f32
    %161 = vector.broadcast %cst_73 : f32 to vector<32x256xf32>
    %162 = arith.mulf %161, %160 : vector<32x256xf32>
    %cst_74 = arith.constant 0.707106769 : f32
    %163 = vector.broadcast %cst_74 : f32 to vector<32x256xf32>
    %164 = arith.mulf %160, %163 : vector<32x256xf32>
    %165 = math.erf %164 : vector<32x256xf32>
    %cst_75 = arith.constant 1.000000e+00 : f32
    %166 = vector.broadcast %cst_75 : f32 to vector<32x256xf32>
    %167 = arith.addf %166, %165 : vector<32x256xf32>
    %168 = arith.mulf %162, %167 : vector<32x256xf32>
    %c3_76 = arith.constant 3 : index
    %c0_77 = arith.constant 0 : index
    %c0_78 = arith.constant 0 : index
    %169 = vector.load %arg3[%c3_76, %c0_77, %c0_78] : memref<7x32x32xf32, #tpu.memory_space<vmem>>, vector<1x32x32xf32>
    %170 = vector.shape_cast %169 : vector<1x32x32xf32> to vector<32x32xf32>
    %cst_79 = arith.constant dense<0.000000e+00> : vector<32x256xf32>
    %171 = tpu.matmul %170, %168, %cst_79 {dimension_numbers = #tpu.dot_dimension_numbers<[1], [0], [0], [1], [0, 0, 1, 1], [], []>} : vector<32x32xf32>, vector<32x256xf32>, vector<32x256xf32> -> vector<32x256xf32>
    %c4 = arith.constant 4 : index
    %c0_80 = arith.constant 0 : index
    %c0_81 = arith.constant 0 : index
    %172 = vector.load %arg5[%c4, %c0_80, %c0_81] : memref<26x32x1xf32, #tpu.memory_space<vmem>>, vector<1x32x1xf32>
    %173 = vector.shape_cast %172 : vector<1x32x1xf32> to vector<32x1xf32>
    %174 = vector.broadcast %173 : vector<32x1xf32> to vector<32x256xf32>
    %175 = arith.addf %171, %174 : vector<32x256xf32>
    %cst_82 = arith.constant dense<0.000000e+00> : vector<32x1xf32>
    %176 = tpu.matmul %175, %24, %cst_82 {dimension_numbers = #tpu.dot_dimension_numbers<[1], [0], [0], [1], [0, 0, 1, 1], [], []>} : vector<32x256xf32>, vector<256x1xf32>, vector<32x1xf32> -> vector<32x1xf32>
    %cst_83 = arith.constant 3.906250e-03 : f32
    %177 = vector.broadcast %cst_83 : f32 to vector<32x1xf32>
    %178 = arith.mulf %176, %177 : vector<32x1xf32>
    %179 = vector.broadcast %178 : vector<32x1xf32> to vector<32x256xf32>
    %180 = arith.subf %175, %179 : vector<32x256xf32>
    %181 = arith.mulf %180, %180 : vector<32x256xf32>
    %cst_84 = arith.constant dense<0.000000e+00> : vector<32x1xf32>
    %182 = tpu.matmul %181, %24, %cst_84 {dimension_numbers = #tpu.dot_dimension_numbers<[1], [0], [0], [1], [0, 0, 1, 1], [], []>} : vector<32x256xf32>, vector<256x1xf32>, vector<32x1xf32> -> vector<32x1xf32>
    %cst_85 = arith.constant 3.906250e-03 : f32
    %183 = vector.broadcast %cst_85 : f32 to vector<32x1xf32>
    %184 = arith.mulf %182, %183 : vector<32x1xf32>
    %cst_86 = arith.constant 9.99999974E-6 : f32
    %185 = vector.broadcast %cst_86 : f32 to vector<32x1xf32>
    %186 = arith.addf %184, %185 : vector<32x1xf32>
    %187 = math.rsqrt %186 : vector<32x1xf32>
    %c12 = arith.constant 12 : index
    %c0_87 = arith.constant 0 : index
    %c0_88 = arith.constant 0 : index
    %188 = vector.load %arg5[%c12, %c0_87, %c0_88] : memref<26x32x1xf32, #tpu.memory_space<vmem>>, vector<1x32x1xf32>
    %189 = vector.shape_cast %188 : vector<1x32x1xf32> to vector<32x1xf32>
    %190 = arith.mulf %187, %189 : vector<32x1xf32>
    %191 = vector.broadcast %190 : vector<32x1xf32> to vector<32x256xf32>
    %192 = arith.mulf %180, %191 : vector<32x256xf32>
    %c20 = arith.constant 20 : index
    %c0_89 = arith.constant 0 : index
    %c0_90 = arith.constant 0 : index
    %193 = vector.load %arg5[%c20, %c0_89, %c0_90] : memref<26x32x1xf32, #tpu.memory_space<vmem>>, vector<1x32x1xf32>
    %194 = vector.shape_cast %193 : vector<1x32x1xf32> to vector<32x1xf32>
    %195 = vector.broadcast %194 : vector<32x1xf32> to vector<32x256xf32>
    %196 = arith.addf %192, %195 : vector<32x256xf32>
    %197 = arith.addf %132, %196 : vector<32x256xf32>
    %cst_91 = arith.constant 5.000000e-01 : f32
    %198 = vector.broadcast %cst_91 : f32 to vector<32x256xf32>
    %199 = arith.mulf %198, %197 : vector<32x256xf32>
    %cst_92 = arith.constant 0.707106769 : f32
    %200 = vector.broadcast %cst_92 : f32 to vector<32x256xf32>
    %201 = arith.mulf %197, %200 : vector<32x256xf32>
    %202 = math.erf %201 : vector<32x256xf32>
    %cst_93 = arith.constant 1.000000e+00 : f32
    %203 = vector.broadcast %cst_93 : f32 to vector<32x256xf32>
    %204 = arith.addf %203, %202 : vector<32x256xf32>
    %205 = arith.mulf %199, %204 : vector<32x256xf32>
    %c4_94 = arith.constant 4 : index
    %c0_95 = arith.constant 0 : index
    %c0_96 = arith.constant 0 : index
    %206 = vector.load %arg3[%c4_94, %c0_95, %c0_96] : memref<7x32x32xf32, #tpu.memory_space<vmem>>, vector<1x32x32xf32>
    %207 = vector.shape_cast %206 : vector<1x32x32xf32> to vector<32x32xf32>
    %cst_97 = arith.constant dense<0.000000e+00> : vector<32x256xf32>
    %208 = tpu.matmul %207, %205, %cst_97 {dimension_numbers = #tpu.dot_dimension_numbers<[1], [0], [0], [1], [0, 0, 1, 1], [], []>} : vector<32x32xf32>, vector<32x256xf32>, vector<32x256xf32> -> vector<32x256xf32>
    %c5 = arith.constant 5 : index
    %c0_98 = arith.constant 0 : index
    %c0_99 = arith.constant 0 : index
    %209 = vector.load %arg5[%c5, %c0_98, %c0_99] : memref<26x32x1xf32, #tpu.memory_space<vmem>>, vector<1x32x1xf32>
    %210 = vector.shape_cast %209 : vector<1x32x1xf32> to vector<32x1xf32>
    %211 = vector.broadcast %210 : vector<32x1xf32> to vector<32x256xf32>
    %212 = arith.addf %208, %211 : vector<32x256xf32>
    %cst_100 = arith.constant dense<0.000000e+00> : vector<32x1xf32>
    %213 = tpu.matmul %212, %24, %cst_100 {dimension_numbers = #tpu.dot_dimension_numbers<[1], [0], [0], [1], [0, 0, 1, 1], [], []>} : vector<32x256xf32>, vector<256x1xf32>, vector<32x1xf32> -> vector<32x1xf32>
    %cst_101 = arith.constant 3.906250e-03 : f32
    %214 = vector.broadcast %cst_101 : f32 to vector<32x1xf32>
    %215 = arith.mulf %213, %214 : vector<32x1xf32>
    %216 = vector.broadcast %215 : vector<32x1xf32> to vector<32x256xf32>
    %217 = arith.subf %212, %216 : vector<32x256xf32>
    %218 = arith.mulf %217, %217 : vector<32x256xf32>
    %cst_102 = arith.constant dense<0.000000e+00> : vector<32x1xf32>
    %219 = tpu.matmul %218, %24, %cst_102 {dimension_numbers = #tpu.dot_dimension_numbers<[1], [0], [0], [1], [0, 0, 1, 1], [], []>} : vector<32x256xf32>, vector<256x1xf32>, vector<32x1xf32> -> vector<32x1xf32>
    %cst_103 = arith.constant 3.906250e-03 : f32
    %220 = vector.broadcast %cst_103 : f32 to vector<32x1xf32>
    %221 = arith.mulf %219, %220 : vector<32x1xf32>
    %cst_104 = arith.constant 9.99999974E-6 : f32
    %222 = vector.broadcast %cst_104 : f32 to vector<32x1xf32>
    %223 = arith.addf %221, %222 : vector<32x1xf32>
    %224 = math.rsqrt %223 : vector<32x1xf32>
    %c13 = arith.constant 13 : index
    %c0_105 = arith.constant 0 : index
    %c0_106 = arith.constant 0 : index
    %225 = vector.load %arg5[%c13, %c0_105, %c0_106] : memref<26x32x1xf32, #tpu.memory_space<vmem>>, vector<1x32x1xf32>
    %226 = vector.shape_cast %225 : vector<1x32x1xf32> to vector<32x1xf32>
    %227 = arith.mulf %224, %226 : vector<32x1xf32>
    %228 = vector.broadcast %227 : vector<32x1xf32> to vector<32x256xf32>
    %229 = arith.mulf %217, %228 : vector<32x256xf32>
    %c21 = arith.constant 21 : index
    %c0_107 = arith.constant 0 : index
    %c0_108 = arith.constant 0 : index
    %230 = vector.load %arg5[%c21, %c0_107, %c0_108] : memref<26x32x1xf32, #tpu.memory_space<vmem>>, vector<1x32x1xf32>
    %231 = vector.shape_cast %230 : vector<1x32x1xf32> to vector<32x1xf32>
    %232 = vector.broadcast %231 : vector<32x1xf32> to vector<32x256xf32>
    %233 = arith.addf %229, %232 : vector<32x256xf32>
    %cst_109 = arith.constant 5.000000e-01 : f32
    %234 = vector.broadcast %cst_109 : f32 to vector<32x256xf32>
    %235 = arith.mulf %234, %233 : vector<32x256xf32>
    %cst_110 = arith.constant 0.707106769 : f32
    %236 = vector.broadcast %cst_110 : f32 to vector<32x256xf32>
    %237 = arith.mulf %233, %236 : vector<32x256xf32>
    %238 = math.erf %237 : vector<32x256xf32>
    %cst_111 = arith.constant 1.000000e+00 : f32
    %239 = vector.broadcast %cst_111 : f32 to vector<32x256xf32>
    %240 = arith.addf %239, %238 : vector<32x256xf32>
    %241 = arith.mulf %235, %240 : vector<32x256xf32>
    %c5_112 = arith.constant 5 : index
    %c0_113 = arith.constant 0 : index
    %c0_114 = arith.constant 0 : index
    %242 = vector.load %arg3[%c5_112, %c0_113, %c0_114] : memref<7x32x32xf32, #tpu.memory_space<vmem>>, vector<1x32x32xf32>
    %243 = vector.shape_cast %242 : vector<1x32x32xf32> to vector<32x32xf32>
    %cst_115 = arith.constant dense<0.000000e+00> : vector<32x256xf32>
    %244 = tpu.matmul %243, %241, %cst_115 {dimension_numbers = #tpu.dot_dimension_numbers<[1], [0], [0], [1], [0, 0, 1, 1], [], []>} : vector<32x32xf32>, vector<32x256xf32>, vector<32x256xf32> -> vector<32x256xf32>
    %c6 = arith.constant 6 : index
    %c0_116 = arith.constant 0 : index
    %c0_117 = arith.constant 0 : index
    %245 = vector.load %arg5[%c6, %c0_116, %c0_117] : memref<26x32x1xf32, #tpu.memory_space<vmem>>, vector<1x32x1xf32>
    %246 = vector.shape_cast %245 : vector<1x32x1xf32> to vector<32x1xf32>
    %247 = vector.broadcast %246 : vector<32x1xf32> to vector<32x256xf32>
    %248 = arith.addf %244, %247 : vector<32x256xf32>
    %cst_118 = arith.constant dense<0.000000e+00> : vector<32x1xf32>
    %249 = tpu.matmul %248, %24, %cst_118 {dimension_numbers = #tpu.dot_dimension_numbers<[1], [0], [0], [1], [0, 0, 1, 1], [], []>} : vector<32x256xf32>, vector<256x1xf32>, vector<32x1xf32> -> vector<32x1xf32>
    %cst_119 = arith.constant 3.906250e-03 : f32
    %250 = vector.broadcast %cst_119 : f32 to vector<32x1xf32>
    %251 = arith.mulf %249, %250 : vector<32x1xf32>
    %252 = vector.broadcast %251 : vector<32x1xf32> to vector<32x256xf32>
    %253 = arith.subf %248, %252 : vector<32x256xf32>
    %254 = arith.mulf %253, %253 : vector<32x256xf32>
    %cst_120 = arith.constant dense<0.000000e+00> : vector<32x1xf32>
    %255 = tpu.matmul %254, %24, %cst_120 {dimension_numbers = #tpu.dot_dimension_numbers<[1], [0], [0], [1], [0, 0, 1, 1], [], []>} : vector<32x256xf32>, vector<256x1xf32>, vector<32x1xf32> -> vector<32x1xf32>
    %cst_121 = arith.constant 3.906250e-03 : f32
    %256 = vector.broadcast %cst_121 : f32 to vector<32x1xf32>
    %257 = arith.mulf %255, %256 : vector<32x1xf32>
    %cst_122 = arith.constant 9.99999974E-6 : f32
    %258 = vector.broadcast %cst_122 : f32 to vector<32x1xf32>
    %259 = arith.addf %257, %258 : vector<32x1xf32>
    %260 = math.rsqrt %259 : vector<32x1xf32>
    %c14 = arith.constant 14 : index
    %c0_123 = arith.constant 0 : index
    %c0_124 = arith.constant 0 : index
    %261 = vector.load %arg5[%c14, %c0_123, %c0_124] : memref<26x32x1xf32, #tpu.memory_space<vmem>>, vector<1x32x1xf32>
    %262 = vector.shape_cast %261 : vector<1x32x1xf32> to vector<32x1xf32>
    %263 = arith.mulf %260, %262 : vector<32x1xf32>
    %264 = vector.broadcast %263 : vector<32x1xf32> to vector<32x256xf32>
    %265 = arith.mulf %253, %264 : vector<32x256xf32>
    %c22 = arith.constant 22 : index
    %c0_125 = arith.constant 0 : index
    %c0_126 = arith.constant 0 : index
    %266 = vector.load %arg5[%c22, %c0_125, %c0_126] : memref<26x32x1xf32, #tpu.memory_space<vmem>>, vector<1x32x1xf32>
    %267 = vector.shape_cast %266 : vector<1x32x1xf32> to vector<32x1xf32>
    %268 = vector.broadcast %267 : vector<32x1xf32> to vector<32x256xf32>
    %269 = arith.addf %265, %268 : vector<32x256xf32>
    %270 = arith.addf %205, %269 : vector<32x256xf32>
    %cst_127 = arith.constant 5.000000e-01 : f32
    %271 = vector.broadcast %cst_127 : f32 to vector<32x256xf32>
    %272 = arith.mulf %271, %270 : vector<32x256xf32>
    %cst_128 = arith.constant 0.707106769 : f32
    %273 = vector.broadcast %cst_128 : f32 to vector<32x256xf32>
    %274 = arith.mulf %270, %273 : vector<32x256xf32>
    %275 = math.erf %274 : vector<32x256xf32>
    %cst_129 = arith.constant 1.000000e+00 : f32
    %276 = vector.broadcast %cst_129 : f32 to vector<32x256xf32>
    %277 = arith.addf %276, %275 : vector<32x256xf32>
    %278 = arith.mulf %272, %277 : vector<32x256xf32>
    %c6_130 = arith.constant 6 : index
    %c0_131 = arith.constant 0 : index
    %c0_132 = arith.constant 0 : index
    %279 = vector.load %arg3[%c6_130, %c0_131, %c0_132] : memref<7x32x32xf32, #tpu.memory_space<vmem>>, vector<1x32x32xf32>
    %280 = vector.shape_cast %279 : vector<1x32x32xf32> to vector<32x32xf32>
    %cst_133 = arith.constant dense<0.000000e+00> : vector<32x256xf32>
    %281 = tpu.matmul %280, %278, %cst_133 {dimension_numbers = #tpu.dot_dimension_numbers<[1], [0], [0], [1], [0, 0, 1, 1], [], []>} : vector<32x32xf32>, vector<32x256xf32>, vector<32x256xf32> -> vector<32x256xf32>
    %c7 = arith.constant 7 : index
    %c0_134 = arith.constant 0 : index
    %c0_135 = arith.constant 0 : index
    %282 = vector.load %arg5[%c7, %c0_134, %c0_135] : memref<26x32x1xf32, #tpu.memory_space<vmem>>, vector<1x32x1xf32>
    %283 = vector.shape_cast %282 : vector<1x32x1xf32> to vector<32x1xf32>
    %284 = vector.broadcast %283 : vector<32x1xf32> to vector<32x256xf32>
    %285 = arith.addf %281, %284 : vector<32x256xf32>
    %cst_136 = arith.constant dense<0.000000e+00> : vector<32x1xf32>
    %286 = tpu.matmul %285, %24, %cst_136 {dimension_numbers = #tpu.dot_dimension_numbers<[1], [0], [0], [1], [0, 0, 1, 1], [], []>} : vector<32x256xf32>, vector<256x1xf32>, vector<32x1xf32> -> vector<32x1xf32>
    %cst_137 = arith.constant 3.906250e-03 : f32
    %287 = vector.broadcast %cst_137 : f32 to vector<32x1xf32>
    %288 = arith.mulf %286, %287 : vector<32x1xf32>
    %289 = vector.broadcast %288 : vector<32x1xf32> to vector<32x256xf32>
    %290 = arith.subf %285, %289 : vector<32x256xf32>
    %291 = arith.mulf %290, %290 : vector<32x256xf32>
    %cst_138 = arith.constant dense<0.000000e+00> : vector<32x1xf32>
    %292 = tpu.matmul %291, %24, %cst_138 {dimension_numbers = #tpu.dot_dimension_numbers<[1], [0], [0], [1], [0, 0, 1, 1], [], []>} : vector<32x256xf32>, vector<256x1xf32>, vector<32x1xf32> -> vector<32x1xf32>
    %cst_139 = arith.constant 3.906250e-03 : f32
    %293 = vector.broadcast %cst_139 : f32 to vector<32x1xf32>
    %294 = arith.mulf %292, %293 : vector<32x1xf32>
    %cst_140 = arith.constant 9.99999974E-6 : f32
    %295 = vector.broadcast %cst_140 : f32 to vector<32x1xf32>
    %296 = arith.addf %294, %295 : vector<32x1xf32>
    %297 = math.rsqrt %296 : vector<32x1xf32>
    %c15 = arith.constant 15 : index
    %c0_141 = arith.constant 0 : index
    %c0_142 = arith.constant 0 : index
    %298 = vector.load %arg5[%c15, %c0_141, %c0_142] : memref<26x32x1xf32, #tpu.memory_space<vmem>>, vector<1x32x1xf32>
    %299 = vector.shape_cast %298 : vector<1x32x1xf32> to vector<32x1xf32>
    %300 = arith.mulf %297, %299 : vector<32x1xf32>
    %301 = vector.broadcast %300 : vector<32x1xf32> to vector<32x256xf32>
    %302 = arith.mulf %290, %301 : vector<32x256xf32>
    %c23 = arith.constant 23 : index
    %c0_143 = arith.constant 0 : index
    %c0_144 = arith.constant 0 : index
    %303 = vector.load %arg5[%c23, %c0_143, %c0_144] : memref<26x32x1xf32, #tpu.memory_space<vmem>>, vector<1x32x1xf32>
    %304 = vector.shape_cast %303 : vector<1x32x1xf32> to vector<32x1xf32>
    %305 = vector.broadcast %304 : vector<32x1xf32> to vector<32x256xf32>
    %306 = arith.addf %302, %305 : vector<32x256xf32>
    %cst_145 = arith.constant 5.000000e-01 : f32
    %307 = vector.broadcast %cst_145 : f32 to vector<32x256xf32>
    %308 = arith.mulf %307, %306 : vector<32x256xf32>
    %cst_146 = arith.constant 0.707106769 : f32
    %309 = vector.broadcast %cst_146 : f32 to vector<32x256xf32>
    %310 = arith.mulf %306, %309 : vector<32x256xf32>
    %311 = math.erf %310 : vector<32x256xf32>
    %cst_147 = arith.constant 1.000000e+00 : f32
    %312 = vector.broadcast %cst_147 : f32 to vector<32x256xf32>
    %313 = arith.addf %312, %311 : vector<32x256xf32>
    %314 = arith.mulf %308, %313 : vector<32x256xf32>
    %c0_148 = arith.constant 0 : index
    %c0_149 = arith.constant 0 : index
    %315 = vector.load %arg4[%c0_148, %c0_149] : memref<2x32xf32, #tpu.memory_space<vmem>>, vector<2x32xf32>
    %cst_150 = arith.constant dense<0.000000e+00> : vector<2x256xf32>
    %316 = tpu.matmul %315, %314, %cst_150 {dimension_numbers = #tpu.dot_dimension_numbers<[1], [0], [0], [1], [0, 0, 1, 1], [], []>} : vector<2x32xf32>, vector<32x256xf32>, vector<2x256xf32> -> vector<2x256xf32>
    %c24 = arith.constant 24 : index
    %c0_151 = arith.constant 0 : index
    %c0_152 = arith.constant 0 : index
    %317 = vector.load %arg5[%c24, %c0_151, %c0_152] : memref<26x32x1xf32, #tpu.memory_space<vmem>>, vector<1x32x1xf32>
    %318 = vector.shape_cast %317 : vector<1x32x1xf32> to vector<32x1xf32>
    %319 = vector.extract_strided_slice %318 {offsets = [0, 0], sizes = [2, 1], strides = [1, 1]} : vector<32x1xf32> to vector<2x1xf32>
    %320 = vector.broadcast %319 : vector<2x1xf32> to vector<2x256xf32>
    %321 = arith.addf %316, %320 : vector<2x256xf32>
    %c0_153 = arith.constant 0 : index
    %c0_154 = arith.constant 0 : index
    %322 = vector.load %arg6[%c0_153, %c0_154] : memref<2x256xf32, #tpu.memory_space<vmem>>, vector<2x256xf32>
    tpu.vector_store %arg6[%c0_153, %c0_154], %321 {strides = array<i32>} : memref<2x256xf32, #tpu.memory_space<vmem>>, vector<2x256xf32>,
    return
  }
  func.func @transform_0(%arg0: i32) -> (i32, i32) {
    %c0_i32 = arith.constant 0 : i32
    %c0_i32_0 = arith.constant 0 : i32
    %c0_i32_1 = arith.constant 0 : i32
    return %c0_i32, %c0_i32_0 : i32, i32
  }
  func.func @transform_1(%arg0: i32) -> (i32, i32) {
    %c0_i32 = arith.constant 0 : i32
    %c0_i32_0 = arith.constant 0 : i32
    %c0_i32_1 = arith.constant 0 : i32
    return %c0_i32, %c0_i32_0 : i32, i32
  }
  func.func @transform_2(%arg0: i32) -> (i32, i32, i32) {
    %c0_i32 = arith.constant 0 : i32
    %c0_i32_0 = arith.constant 0 : i32
    %c0_i32_1 = arith.constant 0 : i32
    %c0_i32_2 = arith.constant 0 : i32
    return %c0_i32, %c0_i32_0, %c0_i32_1 : i32, i32, i32
  }
  func.func @transform_3(%arg0: i32) -> (i32, i32) {
    %c0_i32 = arith.constant 0 : i32
    %c0_i32_0 = arith.constant 0 : i32
    %c0_i32_1 = arith.constant 0 : i32
    return %c0_i32, %c0_i32_0 : i32, i32
  }
  func.func @transform_4(%arg0: i32) -> (i32, i32, i32) {
    %c0_i32 = arith.constant 0 : i32
    %c0_i32_0 = arith.constant 0 : i32
    %c0_i32_1 = arith.constant 0 : i32
    %c0_i32_2 = arith.constant 0 : i32
    return %c0_i32, %c0_i32_0, %c0_i32_1 : i32, i32, i32
  }
  func.func @transform_5(%arg0: i32) -> (i32, i32) {
    %c0_i32 = arith.constant 0 : i32
    %c0_i32_0 = arith.constant 0 : i32
    %c0_i32_1 = arith.constant 0 : i32
    return %c0_i32, %c0_i32_0 : i32, i32
  }
}

</mosaic_0001>

<llo_original>
// kernel: tpu_custom_call.1
$region0: #{tpu_custom_call.1}
  #allocation0 [shape = 'u32[]', space=smem, size = 0x4, offset = 0x4, fixed_abs, tag = 'smem constant byte address 0x4 - core index']
  #allocation1 [shape = 'u32[72,128]{1,0:T(1,128)}', space=vmem, size = 0x9000, scoped, tag = 'internal scratch']
  %s0 = inlined_call_operand.vmem [shape: f32[3,256], index: 0, kind: input, shape index: {}]
  %s1 = inlined_call_operand.vmem [shape: f32[32,3], index: 1, kind: input, shape index: {}]
  %s2 = inlined_call_operand.vmem [shape: f32[7,32,32], index: 2, kind: input, shape index: {}]
  %s3 = inlined_call_operand.vmem [shape: f32[2,32], index: 3, kind: input, shape index: {}]
  %s4 = inlined_call_operand.vmem [shape: f32[26,32,1], index: 4, kind: input, shape index: {}]
  %s5 = inlined_call_operand.hbm [shape: f32[2,256], index: 5, kind: output, shape index: {}]
  %s6 = sld [smem:[#allocation0]]
  $region30: #{tpu_custom_call.1} parent=0
    _
  %s8 = ssub.s32 1, %s6
  %s9 = scalar_select 0, %s8, %s6
  $region1: #{tpu_custom_call.1} parent=0
    #allocation2 [shape = 'u8[2048]{0}', space=vmem, size = 0x800, scoped, tag = 'output window, operand 0, single buffered']
    #allocation3 [shape = 's32[1]{0}', space=sflag, size = 0x4, scoped, tag = 'scoped memory for tpu_custom_call.1']
    %10 = vsyncpa [#allocation3], 0
    // Predicated region
    $region2: #{tpu_custom_call.1} parent=1 // pred_check
      _
    $region3: #{tpu_custom_call.1} parent=1 // pred_check_branch
      %12 = sbr.rel (0) target = $region5
    $region4: #{tpu_custom_call.1} parent=1 // pred_region
      _
    $region5: #{tpu_custom_call.1} parent=1 // pred_fallthru
      _
    // Predicated region
    $region6: #{tpu_custom_call.1} parent=1 // pred_check
      _
    $region7: #{tpu_custom_call.1} parent=1 // pred_check_branch
      %14 = sbr.rel (0) target = $region9
    $region8: #{tpu_custom_call.1} parent=1 // pred_region
      _
    $region9: #{tpu_custom_call.1} parent=1 // pred_fallthru
      _
    // Predicated region
    $region10: #{tpu_custom_call.1} parent=1 // pred_check
      _
    $region11: #{tpu_custom_call.1} parent=1 // pred_check_branch
      %16 = sbr.rel (0) target = $region13
    $region12: #{tpu_custom_call.1} parent=1 // pred_region
      _
    $region13: #{tpu_custom_call.1} parent=1 // pred_fallthru
      _
    // Predicated region
    $region14: #{tpu_custom_call.1} parent=1 // pred_check
      _
    $region15: #{tpu_custom_call.1} parent=1 // pred_check_branch
      %18 = sbr.rel (0) target = $region17
    $region16: #{tpu_custom_call.1} parent=1 // pred_region
      _
    $region17: #{tpu_custom_call.1} parent=1 // pred_fallthru
      _
    // Predicated region
    $region18: #{tpu_custom_call.1} parent=1 // pred_check
      _
    $region19: #{tpu_custom_call.1} parent=1 // pred_check_branch
      %20 = sbr.rel (0) target = $region21
    $region20: #{tpu_custom_call.1} parent=1 // pred_region
      _
    $region21: #{tpu_custom_call.1} parent=1 // pred_fallthru
      _
    %v21 = vld [vmem:[%s0] sm:$0x77]
    %s22 = scalar_lea.vmem %s4, 800
    %v23 = vld [vmem:[%s22] sm:$0xff]
    %25 = vset.pattern.permute.xlu0 0
    %26 = vperm.xlu0 %25, %v23
    %v27 = vpop.permute.xlu0 %26
    %v30 = vperm.slane %v21, 0
    %v31 = vperm.slane %v21, 4
    %v34 = vperm.slane %v30, 0
    %v35 = vperm.slane %v31, 0
    %v36 = vmul.f32 %v27, %v34
    %v37 = vmul.f32 %v27, %v35
    %v38 = vand.u32 2147483647, %v36
    %vm39 = vcmp.le.f32.partialorder %v38, 0.7853982
    %vm40 = vcmp.lt.s32.totalorder %v36, 0
    %v41 = vand.u32 %v36, 2139095040
    %v42 = vshrl.u32 %v41, 23
    %v43 = vsub.s32 %v42, 127
    %v44 = vand.u32 2147483647, %v36
    %v45 = vand.u32 %v44, 8388607
    %v46 = vor.u32 %v45, 8388608
    %v47 = vsub.s32 0, %v46
    %v48 = vadd.s32 %v43, 1
    %vm49 = vcmp.gt.s32.totalorder %v48, 0
    %v50 = vsel %vm49, %v48, 0
    %v51 = vshrl.u32 %v50, 5
    %v52 = vand.u32 %v50, 31
    %v53 = vsub.s32 32, %v52
    %v54 = vshrl.u32 683565275, %v53
    %v55 = vshll.u32 683565275, %v52
    %v56 = vshrl.u32 2475754826, %v53
    %v57 = vor.u32 %v55, %v56
    %v58 = vshll.u32 2475754826, %v52
    %v59 = vshrl.u32 2131351028, %v53
    %v60 = vor.u32 %v58, %v59
    %v61 = vshll.u32 2131351028, %v52
    %v62 = vshrl.u32 2102212464, %v53
    %v63 = vor.u32 %v61, %v62
    %v64 = vshll.u32 2102212464, %v52
    %v65 = vshrl.u32 920167782, %v53
    %v66 = vor.u32 %v64, %v65
    %v67 = vshll.u32 920167782, %v52
    %v68 = vshrl.u32 1326507024, %v53
    %v69 = vor.u32 %v67, %v68
    %vm70 = vcmp.lt.s32.totalorder %v51, 1
    %vm71 = vcmp.lt.s32.totalorder %v51, 2
    %vm72 = vcmp.lt.s32.totalorder %v51, 3
    %vm73 = vcmp.lt.s32.totalorder %v51, 4
    %v74 = vsel %vm70, %v54, %v57
    %v75 = vsel %vm73, %v63, 2102212464
    %v76 = vsel %vm72, %v60, %v75
    %v77 = vsel %vm71, %v74, %v76
    %v78 = vsel %vm70, %v57, %v60
    %v79 = vsel %vm73, %v66, 920167782
    %v80 = vsel %vm72, %v63, %v79
    %v81 = vsel %vm71, %v78, %v80
    %v82 = vsel %vm70, %v60, %v63
    %v83 = vsel %vm73, %v69, 1326507024
    %v84 = vsel %vm72, %v66, %v83
    %v85 = vsel %vm71, %v82, %v84
    %v86 = vshll.u32 %v46, 8
    %v87 = vand.u32 %v86, 65535
    %v88 = vshrl.u32 %v86, 16
    %v89 = vand.u32 %v85, 65535
    %v90 = vshrl.u32 %v85, 16
    %v91 = vmul.u32 %v87, %v89
    %v92 = vmul.u32 %v87, %v90
    %v93 = vmul.u32 %v88, %v89
    %v94 = vmul.u32 %v88, %v90
    %v95 = vshll.u32 %v92, 16
    %v96 = vshrl.u32 %v92, 16
    %v97 = vshll.u32 %v93, 16
    %v98 = vshrl.u32 %v93, 16
    %vm99 = vc.u32 %v91, %v95
    %v100 = vsel %vm99, 1, 0
    %v101 = vadd.s32 %v91, %v95
    %v102 = vadd.s32 %v94, %v100
    %vm103 = vc.u32 %v101, %v97
    %v104 = vsel %vm103, 1, 0
    %v105 = vadd.s32 %v101, %v97
    %v106 = vadd.s32 %v102, %v104
    %v107 = vadd.s32 %v106, %v96
    %v108 = vadd.s32 %v107, %v98
    %v109 = vand.u32 %v86, 65535
    %v110 = vshrl.u32 %v86, 16
    %v111 = vand.u32 %v81, 65535
    %v112 = vshrl.u32 %v81, 16
    %v113 = vmul.u32 %v109, %v111
    %v114 = vmul.u32 %v109, %v112
    %v115 = vmul.u32 %v110, %v111
    %v116 = vmul.u32 %v110, %v112
    %v117 = vshll.u32 %v114, 16
    %v118 = vshrl.u32 %v114, 16
    %v119 = vshll.u32 %v115, 16
    %v120 = vshrl.u32 %v115, 16
    %vm121 = vc.u32 %v113, %v117
    %v122 = vsel %vm121, 1, 0
    %v123 = vadd.s32 %v113, %v117
    %v124 = vadd.s32 %v116, %v122
    %vm125 = vc.u32 %v123, %v119
    %v126 = vsel %vm125, 1, 0
    %v127 = vadd.s32 %v123, %v119
    %v128 = vadd.s32 %v124, %v126
    %v129 = vadd.s32 %v128, %v118
    %v130 = vadd.s32 %v129, %v120
    %v131 = vmul.u32 %v86, %v77
    %v132 = vadd.s32 %v108, %v127
    %vm133 = vc.u32 %v108, %v127
    %v134 = vadd.s32 %v130, 1
    %v135 = vsel %vm133, %v134, %v130
    %v136 = vadd.s32 %v131, %v135
    %v137 = vadd.s32 %v136, 536870912
    %v138 = vshrl.u32 %v137, 30
    %v139 = vshll.u32 %v138, 30
    %v140 = vsub.s32 %v136, %v139
    %vm141 = vcmp.lt.s32.totalorder %v140, 0
    %v142 = vsub.s32 0, %v140
    %v143 = vsel %vm141, %v142, %v140
    %v144 = vclz %v143
    %v145 = vsub.s32 %v144, 2
    %vm146 = vcmp.gt.s32.totalorder 0, %v145
    %v147 = vsel %vm146, 0, %v145
    %v148 = vsub.s32 32, %v147
    %v149 = vshll.u32 %v140, %v147
    %v150 = vshrl.u32 %v132, %v148
    %v151 = vor.u32 %v149, %v150
    %v152 = vsub.s32 4294967266, %v147
    %v153 = vadd.s32 %v152, 127
    %v154 = vshll.u32 %v153, 23
    %v155 = vor.u32 4788187, %v154
    %v156 = vand.u32 2147483647, %v155
    %v158 = vcvt.s32.f32 %v151
    %v159 = vmul.f32 %v158, %v156
    %v160 = vxor.u32 %v159, 2147483648
    %v161 = vsel %vm40, %v160, %v159
    %v162 = vsub.s32 4, %v138
    %v163 = vsel %vm40, %v162, %v138
    %v164 = vsel %vm39, %v36, %v161
    %v165 = vsel %vm39, 0, %v163
    %v166 = vmul.f32 %v164, %v164
    %v167 = vmul.f32 %v166, -0.001358992
    %v168 = vadd.f32 %v167, 0.041655596
    %v169 = vmul.f32 %v166, %v168
    %v170 = vadd.f32 %v169, -0.4999988
    %v171 = vmul.f32 %v166, %v170
    %v172 = vadd.f32 1.0, %v171
    %v173 = vmul.f32 %v164, %v164
    %v174 = vmul.f32 %v173, -0.00019511016
    %v175 = vadd.f32 %v174, 0.008332121
    %v176 = vmul.f32 %v173, %v175
    %v177 = vadd.f32 %v176, -0.16666654
    %v178 = vmul.f32 %v173, %v177
    %v179 = vadd.f32 %v178, 1.0
    %v180 = vmul.f32 %v179, %v164
    %vm181 = vweird.f32 %v36
    %v182 = vadd.s32 %v165, 3
    %v183 = vand.u32 %v182, 3
    %vm184 = vcmp.lt.s32.totalorder %v183, 2
    %vm185 = vcmp.eq.s32.totalorder %v183, 0
    %v186 = vxor.u32 %v180, 2147483648
    %v187 = vsel %vm185, %v172, %v186
    %vm188 = vcmp.eq.s32.totalorder %v183, 2
    %v189 = vxor.u32 %v172, 2147483648
    %v190 = vsel %vm188, %v189, %v180
    %v191 = vsel %vm184, %v187, %v190
    %v192 = vsel %vm181, nan, %v191
    %v193 = vand.u32 2147483647, %v37
    %vm194 = vcmp.le.f32.partialorder %v193, 0.7853982
    %vm195 = vcmp.lt.s32.totalorder %v37, 0
    %v196 = vand.u32 %v37, 2139095040
    %v197 = vshrl.u32 %v196, 23
    %v198 = vsub.s32 %v197, 127
    %v199 = vand.u32 2147483647, %v37
    %v200 = vand.u32 %v199, 8388607
    %v201 = vor.u32 %v200, 8388608
    %v202 = vsub.s32 0, %v201
    %v203 = vadd.s32 %v198, 1
    %vm204 = vcmp.gt.s32.totalorder %v203, 0
    %v205 = vsel %vm204, %v203, 0
    %v206 = vshrl.u32 %v205, 5
    %v207 = vand.u32 %v205, 31
    %v208 = vsub.s32 32, %v207
    %v209 = vshrl.u32 683565275, %v208
    %v210 = vshll.u32 683565275, %v207
    %v211 = vshrl.u32 2475754826, %v208
    %v212 = vor.u32 %v210, %v211
    %v213 = vshll.u32 2475754826, %v207
    %v214 = vshrl.u32 2131351028, %v208
    %v215 = vor.u32 %v213, %v214
    %v216 = vshll.u32 2131351028, %v207
    %v217 = vshrl.u32 2102212464, %v208
    %v218 = vor.u32 %v216, %v217
    %v219 = vshll.u32 2102212464, %v207
    %v220 = vshrl.u32 920167782, %v208
    %v221 = vor.u32 %v219, %v220
    %v222 = vshll.u32 920167782, %v207
    %v223 = vshrl.u32 1326507024, %v208
    %v224 = vor.u32 %v222, %v223
    %vm225 = vcmp.lt.s32.totalorder %v206, 1
    %vm226 = vcmp.lt.s32.totalorder %v206, 2
    %vm227 = vcmp.lt.s32.totalorder %v206, 3
    %vm228 = vcmp.lt.s32.totalorder %v206, 4
    %v229 = vsel %vm225, %v209, %v212
    %v230 = vsel %vm228, %v218, 2102212464
    %v231 = vsel %vm227, %v215, %v230
    %v232 = vsel %vm226, %v229, %v231
    %v233 = vsel %vm225, %v212, %v215
    %v234 = vsel %vm228, %v221, 920167782
    %v235 = vsel %vm227, %v218, %v234
    %v236 = vsel %vm226, %v233, %v235
    %v237 = vsel %vm225, %v215, %v218
    %v238 = vsel %vm228, %v224, 1326507024
    %v239 = vsel %vm227, %v221, %v238
    %v240 = vsel %vm226, %v237, %v239
    %v241 = vshll.u32 %v201, 8
    %v242 = vand.u32 %v241, 65535
    %v243 = vshrl.u32 %v241, 16
    %v244 = vand.u32 %v240, 65535
    %v245 = vshrl.u32 %v240, 16
    %v246 = vmul.u32 %v242, %v244
    %v247 = vmul.u32 %v242, %v245
    %v248 = vmul.u32 %v243, %v244
    %v249 = vmul.u32 %v243, %v245
    %v250 = vshll.u32 %v247, 16
    %v251 = vshrl.u32 %v247, 16
    %v252 = vshll.u32 %v248, 16
    %v253 = vshrl.u32 %v248, 16
    %vm254 = vc.u32 %v246, %v250
    %v255 = vsel %vm254, 1, 0
    %v256 = vadd.s32 %v246, %v250
    %v257 = vadd.s32 %v249, %v255
    %vm258 = vc.u32 %v256, %v252
    %v259 = vsel %vm258, 1, 0
    %v260 = vadd.s32 %v256, %v252
    %v261 = vadd.s32 %v257, %v259
    %v262 = vadd.s32 %v261, %v251
    %v263 = vadd.s32 %v262, %v253
    %v264 = vand.u32 %v241, 65535
    %v265 = vshrl.u32 %v241, 16
    %v266 = vand.u32 %v236, 65535
    %v267 = vshrl.u32 %v236, 16
    %v268 = vmul.u32 %v264, %v266
    %v269 = vmul.u32 %v264, %v267
    %v270 = vmul.u32 %v265, %v266
    %v271 = vmul.u32 %v265, %v267
    %v272 = vshll.u32 %v269, 16
    %v273 = vshrl.u32 %v269, 16
    %v274 = vshll.u32 %v270, 16
    %v275 = vshrl.u32 %v270, 16
    %vm276 = vc.u32 %v268, %v272
    %v277 = vsel %vm276, 1, 0
    %v278 = vadd.s32 %v268, %v272
    %v279 = vadd.s32 %v271, %v277
    %vm280 = vc.u32 %v278, %v274
    %v281 = vsel %vm280, 1, 0
    %v282 = vadd.s32 %v278, %v274
    %v283 = vadd.s32 %v279, %v281
    %v284 = vadd.s32 %v283, %v273
    %v285 = vadd.s32 %v284, %v275
    %v286 = vmul.u32 %v241, %v232
    %v287 = vadd.s32 %v263, %v282
    %vm288 = vc.u32 %v263, %v282
    %v289 = vadd.s32 %v285, 1
    %v290 = vsel %vm288, %v289, %v285
    %v291 = vadd.s32 %v286, %v290
    %v292 = vadd.s32 %v291, 536870912
    %v293 = vshrl.u32 %v292, 30
    %v294 = vshll.u32 %v293, 30
    %v295 = vsub.s32 %v291, %v294
    %vm296 = vcmp.lt.s32.totalorder %v295, 0
    %v297 = vsub.s32 0, %v295
    %v298 = vsel %vm296, %v297, %v295
    %v299 = vclz %v298
    %v300 = vsub.s32 %v299, 2
    %vm301 = vcmp.gt.s32.totalorder 0, %v300
    %v302 = vsel %vm301, 0, %v300
    %v303 = vsub.s32 32, %v302
    %v304 = vshll.u32 %v295, %v302
    %v305 = vshrl.u32 %v287, %v303
    %v306 = vor.u32 %v304, %v305
    %v307 = vsub.s32 4294967266, %v302
    %v308 = vadd.s32 %v307, 127
    %v309 = vshll.u32 %v308, 23
    %v310 = vor.u32 4788187, %v309
    %v311 = vand.u32 2147483647, %v310
    %v313 = vcvt.s32.f32 %v306
    %v314 = vmul.f32 %v313, %v311
    %v315 = vxor.u32 %v314, 2147483648
    %v316 = vsel %vm195, %v315, %v314
    %v317 = vsub.s32 4, %v293
    %v318 = vsel %vm195, %v317, %v293
    %v319 = vsel %vm194, %v37, %v316
    %v320 = vsel %vm194, 0, %v318
    %v321 = vmul.f32 %v319, %v319
    %v322 = vmul.f32 %v321, -0.001358992
    %v323 = vadd.f32 %v322, 0.041655596
    %v324 = vmul.f32 %v321, %v323
    %v325 = vadd.f32 %v324, -0.4999988
    %v326 = vmul.f32 %v321, %v325
    %v327 = vadd.f32 1.0, %v326
    %v328 = vmul.f32 %v319, %v319
    %v329 = vmul.f32 %v328, -0.00019511016
    %v330 = vadd.f32 %v329, 0.008332121
    %v331 = vmul.f32 %v328, %v330
    %v332 = vadd.f32 %v331, -0.16666654
    %v333 = vmul.f32 %v328, %v332
    %v334 = vadd.f32 %v333, 1.0
    %v335 = vmul.f32 %v334, %v319
    %vm336 = vweird.f32 %v37
    %v337 = vadd.s32 %v320, 3
    %v338 = vand.u32 %v337, 3
    %vm339 = vcmp.lt.s32.totalorder %v338, 2
    %vm340 = vcmp.eq.s32.totalorder %v338, 0
    %v341 = vxor.u32 %v335, 2147483648
    %v342 = vsel %vm340, %v327, %v341
    %vm343 = vcmp.eq.s32.totalorder %v338, 2
    %v344 = vxor.u32 %v327, 2147483648
    %v345 = vsel %vm343, %v344, %v335
    %v346 = vsel %vm339, %v342, %v345
    %v347 = vsel %vm336, nan, %v346
    %v348 = vperm.slane %v21, 1
    %v349 = vperm.slane %v21, 5
    %v352 = vperm.slane %v348, 1
    %v353 = vperm.slane %v349, 1
    %v354 = vmul.f32 %v27, %v352
    %v355 = vmul.f32 %v27, %v353
    %v356 = vand.u32 2147483647, %v354
    %vm357 = vcmp.le.f32.partialorder %v356, 0.7853982
    %vm358 = vcmp.lt.s32.totalorder %v354, 0
    %v359 = vand.u32 %v354, 2139095040
    %v360 = vshrl.u32 %v359, 23
    %v361 = vsub.s32 %v360, 127
    %v362 = vand.u32 2147483647, %v354
    %v363 = vand.u32 %v362, 8388607
    %v364 = vor.u32 %v363, 8388608
    %v365 = vsub.s32 0, %v364
    %v366 = vadd.s32 %v361, 1
    %vm367 = vcmp.gt.s32.totalorder %v366, 0
    %v368 = vsel %vm367, %v366, 0
    %v369 = vshrl.u32 %v368, 5
    %v370 = vand.u32 %v368, 31
    %v371 = vsub.s32 32, %v370
    %v372 = vshrl.u32 683565275, %v371
    %v373 = vshll.u32 683565275, %v370
    %v374 = vshrl.u32 2475754826, %v371
    %v375 = vor.u32 %v373, %v374
    %v376 = vshll.u32 2475754826, %v370
    %v377 = vshrl.u32 2131351028, %v371
    %v378 = vor.u32 %v376, %v377
    %v379 = vshll.u32 2131351028, %v370
    %v380 = vshrl.u32 2102212464, %v371
    %v381 = vor.u32 %v379, %v380
    %v382 = vshll.u32 2102212464, %v370
    %v383 = vshrl.u32 920167782, %v371
    %v384 = vor.u32 %v382, %v383
    %v385 = vshll.u32 920167782, %v370
    %v386 = vshrl.u32 1326507024, %v371
    %v387 = vor.u32 %v385, %v386
    %vm388 = vcmp.lt.s32.totalorder %v369, 1
    %vm389 = vcmp.lt.s32.totalorder %v369, 2
    %vm390 = vcmp.lt.s32.totalorder %v369, 3
    %vm391 = vcmp.lt.s32.totalorder %v369, 4
    %v392 = vsel %vm388, %v372, %v375
    %v393 = vsel %vm391, %v381, 2102212464
    %v394 = vsel %vm390, %v378, %v393
    %v395 = vsel %vm389, %v392, %v394
    %v396 = vsel %vm388, %v375, %v378
    %v397 = vsel %vm391, %v384, 920167782
    %v398 = vsel %vm390, %v381, %v397
    %v399 = vsel %vm389, %v396, %v398
    %v400 = vsel %vm388, %v378, %v381
    %v401 = vsel %vm391, %v387, 1326507024
    %v402 = vsel %vm390, %v384, %v401
    %v403 = vsel %vm389, %v400, %v402
    %v404 = vshll.u32 %v364, 8
    %v405 = vand.u32 %v404, 65535
    %v406 = vshrl.u32 %v404, 16
    %v407 = vand.u32 %v403, 65535
    %v408 = vshrl.u32 %v403, 16
    %v409 = vmul.u32 %v405, %v407
    %v410 = vmul.u32 %v405, %v408
    %v411 = vmul.u32 %v406, %v407
    %v412 = vmul.u32 %v406, %v408
    %v413 = vshll.u32 %v410, 16
    %v414 = vshrl.u32 %v410, 16
    %v415 = vshll.u32 %v411, 16
    %v416 = vshrl.u32 %v411, 16
    %vm417 = vc.u32 %v409, %v413
    %v418 = vsel %vm417, 1, 0
    %v419 = vadd.s32 %v409, %v413
    %v420 = vadd.s32 %v412, %v418
    %vm421 = vc.u32 %v419, %v415
    %v422 = vsel %vm421, 1, 0
    %v423 = vadd.s32 %v419, %v415
    %v424 = vadd.s32 %v420, %v422
    %v425 = vadd.s32 %v424, %v414
    %v426 = vadd.s32 %v425, %v416
    %v427 = vand.u32 %v404, 65535
    %v428 = vshrl.u32 %v404, 16
    %v429 = vand.u32 %v399, 65535
    %v430 = vshrl.u32 %v399, 16
    %v431 = vmul.u32 %v427, %v429
    %v432 = vmul.u32 %v427, %v430
    %v433 = vmul.u32 %v428, %v429
    %v434 = vmul.u32 %v428, %v430
    %v435 = vshll.u32 %v432, 16
    %v436 = vshrl.u32 %v432, 16
    %v437 = vshll.u32 %v433, 16
    %v438 = vshrl.u32 %v433, 16
    %vm439 = vc.u32 %v431, %v435
    %v440 = vsel %vm439, 1, 0
    %v441 = vadd.s32 %v431, %v435
    %v442 = vadd.s32 %v434, %v440
    %vm443 = vc.u32 %v441, %v437
    %v444 = vsel %vm443, 1, 0
    %v445 = vadd.s32 %v441, %v437
    %v446 = vadd.s32 %v442, %v444
    %v447 = vadd.s32 %v446, %v436
    %v448 = vadd.s32 %v447, %v438
    %v449 = vmul.u32 %v404, %v395
    %v450 = vadd.s32 %v426, %v445
    %vm451 = vc.u32 %v426, %v445
    %v452 = vadd.s32 %v448, 1
    %v453 = vsel %vm451, %v452, %v448
    %v454 = vadd.s32 %v449, %v453
    %v455 = vadd.s32 %v454, 536870912
    %v456 = vshrl.u32 %v455, 30
    %v457 = vshll.u32 %v456, 30
    %v458 = vsub.s32 %v454, %v457
    %vm459 = vcmp.lt.s32.totalorder %v458, 0
    %v460 = vsub.s32 0, %v458
    %v461 = vsel %vm459, %v460, %v458
    %v462 = vclz %v461
    %v463 = vsub.s32 %v462, 2
    %vm464 = vcmp.gt.s32.totalorder 0, %v463
    %v465 = vsel %vm464, 0, %v463
    %v466 = vsub.s32 32, %v465
    %v467 = vshll.u32 %v458, %v465
    %v468 = vshrl.u32 %v450, %v466
    %v469 = vor.u32 %v467, %v468
    %v470 = vsub.s32 4294967266, %v465
    %v471 = vadd.s32 %v470, 127
    %v472 = vshll.u32 %v471, 23
    %v473 = vor.u32 4788187, %v472
    %v474 = vand.u32 2147483647, %v473
    %v476 = vcvt.s32.f32 %v469
    %v477 = vmul.f32 %v476, %v474
    %v478 = vxor.u32 %v477, 2147483648
    %v479 = vsel %vm358, %v478, %v477
    %v480 = vsub.s32 4, %v456
    %v481 = vsel %vm358, %v480, %v456
    %v482 = vsel %vm357, %v354, %v479
    %v483 = vsel %vm357, 0, %v481
    %v484 = vmul.f32 %v482, %v482
    %v485 = vmul.f32 %v484, -0.001358992
    %v486 = vadd.f32 %v485, 0.041655596
    %v487 = vmul.f32 %v484, %v486
    %v488 = vadd.f32 %v487, -0.4999988
    %v489 = vmul.f32 %v484, %v488
    %v490 = vadd.f32 1.0, %v489
    %v491 = vmul.f32 %v482, %v482
    %v492 = vmul.f32 %v491, -0.00019511016
    %v493 = vadd.f32 %v492, 0.008332121
    %v494 = vmul.f32 %v491, %v493
    %v495 = vadd.f32 %v494, -0.16666654
    %v496 = vmul.f32 %v491, %v495
    %v497 = vadd.f32 %v496, 1.0
    %v498 = vmul.f32 %v497, %v482
    %vm499 = vweird.f32 %v354
    %v500 = vadd.s32 %v483, 3
    %v501 = vand.u32 %v500, 3
    %vm502 = vcmp.lt.s32.totalorder %v501, 2
    %vm503 = vcmp.eq.s32.totalorder %v501, 0
    %v504 = vxor.u32 %v498, 2147483648
    %v505 = vsel %vm503, %v490, %v504
    %vm506 = vcmp.eq.s32.totalorder %v501, 2
    %v507 = vxor.u32 %v490, 2147483648
    %v508 = vsel %vm506, %v507, %v498
    %v509 = vsel %vm502, %v505, %v508
    %v510 = vsel %vm499, nan, %v509
    %v511 = vand.u32 2147483647, %v355
    %vm512 = vcmp.le.f32.partialorder %v511, 0.7853982
    %vm513 = vcmp.lt.s32.totalorder %v355, 0
    %v514 = vand.u32 %v355, 2139095040
    %v515 = vshrl.u32 %v514, 23
    %v516 = vsub.s32 %v515, 127
    %v517 = vand.u32 2147483647, %v355
    %v518 = vand.u32 %v517, 8388607
    %v519 = vor.u32 %v518, 8388608
    %v520 = vsub.s32 0, %v519
    %v521 = vadd.s32 %v516, 1
    %vm522 = vcmp.gt.s32.totalorder %v521, 0
    %v523 = vsel %vm522, %v521, 0
    %v524 = vshrl.u32 %v523, 5
    %v525 = vand.u32 %v523, 31
    %v526 = vsub.s32 32, %v525
    %v527 = vshrl.u32 683565275, %v526
    %v528 = vshll.u32 683565275, %v525
    %v529 = vshrl.u32 2475754826, %v526
    %v530 = vor.u32 %v528, %v529
    %v531 = vshll.u32 2475754826, %v525
    %v532 = vshrl.u32 2131351028, %v526
    %v533 = vor.u32 %v531, %v532
    %v534 = vshll.u32 2131351028, %v525
    %v535 = vshrl.u32 2102212464, %v526
    %v536 = vor.u32 %v534, %v535
    %v537 = vshll.u32 2102212464, %v525
    %v538 = vshrl.u32 920167782, %v526
    %v539 = vor.u32 %v537, %v538
    %v540 = vshll.u32 920167782, %v525
    %v541 = vshrl.u32 1326507024, %v526
    %v542 = vor.u32 %v540, %v541
    %vm543 = vcmp.lt.s32.totalorder %v524, 1
    %vm544 = vcmp.lt.s32.totalorder %v524, 2
    %vm545 = vcmp.lt.s32.totalorder %v524, 3
    %vm546 = vcmp.lt.s32.totalorder %v524, 4
    %v547 = vsel %vm543, %v527, %v530
    %v548 = vsel %vm546, %v536, 2102212464
    %v549 = vsel %vm545, %v533, %v548
    %v550 = vsel %vm544, %v547, %v549
    %v551 = vsel %vm543, %v530, %v533
    %v552 = vsel %vm546, %v539, 920167782
    %v553 = vsel %vm545, %v536, %v552
    %v554 = vsel %vm544, %v551, %v553
    %v555 = vsel %vm543, %v533, %v536
    %v556 = vsel %vm546, %v542, 1326507024
    %v557 = vsel %vm545, %v539, %v556
    %v558 = vsel %vm544, %v555, %v557
    %v559 = vshll.u32 %v519, 8
    %v560 = vand.u32 %v559, 65535
    %v561 = vshrl.u32 %v559, 16
    %v562 = vand.u32 %v558, 65535
    %v563 = vshrl.u32 %v558, 16
    %v564 = vmul.u32 %v560, %v562
    %v565 = vmul.u32 %v560, %v563
    %v566 = vmul.u32 %v561, %v562
    %v567 = vmul.u32 %v561, %v563
    %v568 = vshll.u32 %v565, 16
    %v569 = vshrl.u32 %v565, 16
    %v570 = vshll.u32 %v566, 16
    %v571 = vshrl.u32 %v566, 16
    %vm572 = vc.u32 %v564, %v568
    %v573 = vsel %vm572, 1, 0
    %v574 = vadd.s32 %v564, %v568
    %v575 = vadd.s32 %v567, %v573
    %vm576 = vc.u32 %v574, %v570
    %v577 = vsel %vm576, 1, 0
    %v578 = vadd.s32 %v574, %v570
    %v579 = vadd.s32 %v575, %v577
    %v580 = vadd.s32 %v579, %v569
    %v581 = vadd.s32 %v580, %v571
    %v582 = vand.u32 %v559, 65535
    %v583 = vshrl.u32 %v559, 16
    %v584 = vand.u32 %v554, 65535
    %v585 = vshrl.u32 %v554, 16
    %v586 = vmul.u32 %v582, %v584
    %v587 = vmul.u32 %v582, %v585
    %v588 = vmul.u32 %v583, %v584
    %v589 = vmul.u32 %v583, %v585
    %v590 = vshll.u32 %v587, 16
    %v591 = vshrl.u32 %v587, 16
    %v592 = vshll.u32 %v588, 16
    %v593 = vshrl.u32 %v588, 16
    %vm594 = vc.u32 %v586, %v590
    %v595 = vsel %vm594, 1, 0
    %v596 = vadd.s32 %v586, %v590
    %v597 = vadd.s32 %v589, %v595
    %vm598 = vc.u32 %v596, %v592
    %v599 = vsel %vm598, 1, 0
    %v600 = vadd.s32 %v596, %v592
    %v601 = vadd.s32 %v597, %v599
    %v602 = vadd.s32 %v601, %v591
    %v603 = vadd.s32 %v602, %v593
    %v604 = vmul.u32 %v559, %v550
    %v605 = vadd.s32 %v581, %v600
    %vm606 = vc.u32 %v581, %v600
    %v607 = vadd.s32 %v603, 1
    %v608 = vsel %vm606, %v607, %v603
    %v609 = vadd.s32 %v604, %v608
    %v610 = vadd.s32 %v609, 536870912
    %v611 = vshrl.u32 %v610, 30
    %v612 = vshll.u32 %v611, 30
    %v613 = vsub.s32 %v609, %v612
    %vm614 = vcmp.lt.s32.totalorder %v613, 0
    %v615 = vsub.s32 0, %v613
    %v616 = vsel %vm614, %v615, %v613
    %v617 = vclz %v616
    %v618 = vsub.s32 %v617, 2
    %vm619 = vcmp.gt.s32.totalorder 0, %v618
    %v620 = vsel %vm619, 0, %v618
    %v621 = vsub.s32 32, %v620
    %v622 = vshll.u32 %v613, %v620
    %v623 = vshrl.u32 %v605, %v621
    %v624 = vor.u32 %v622, %v623
    %v625 = vsub.s32 4294967266, %v620
    %v626 = vadd.s32 %v625, 127
    %v627 = vshll.u32 %v626, 23
    %v628 = vor.u32 4788187, %v627
    %v629 = vand.u32 2147483647, %v628
    %v631 = vcvt.s32.f32 %v624
    %v632 = vmul.f32 %v631, %v629
    %v633 = vxor.u32 %v632, 2147483648
    %v634 = vsel %vm513, %v633, %v632
    %v635 = vsub.s32 4, %v611
    %v636 = vsel %vm513, %v635, %v611
    %v637 = vsel %vm512, %v355, %v634
    %v638 = vsel %vm512, 0, %v636
    %v639 = vmul.f32 %v637, %v637
    %v640 = vmul.f32 %v639, -0.001358992
    %v641 = vadd.f32 %v640, 0.041655596
    %v642 = vmul.f32 %v639, %v641
    %v643 = vadd.f32 %v642, -0.4999988
    %v644 = vmul.f32 %v639, %v643
    %v645 = vadd.f32 1.0, %v644
    %v646 = vmul.f32 %v637, %v637
    %v647 = vmul.f32 %v646, -0.00019511016
    %v648 = vadd.f32 %v647, 0.008332121
    %v649 = vmul.f32 %v646, %v648
    %v650 = vadd.f32 %v649, -0.16666654
    %v651 = vmul.f32 %v646, %v650
    %v652 = vadd.f32 %v651, 1.0
    %v653 = vmul.f32 %v652, %v637
    %vm654 = vweird.f32 %v355
    %v655 = vadd.s32 %v638, 3
    %v656 = vand.u32 %v655, 3
    %vm657 = vcmp.lt.s32.totalorder %v656, 2
    %vm658 = vcmp.eq.s32.totalorder %v656, 0
    %v659 = vxor.u32 %v653, 2147483648
    %v660 = vsel %vm658, %v645, %v659
    %vm661 = vcmp.eq.s32.totalorder %v656, 2
    %v662 = vxor.u32 %v645, 2147483648
    %v663 = vsel %vm661, %v662, %v653
    %v664 = vsel %vm657, %v660, %v663
    %v665 = vsel %vm654, nan, %v664
    %v666 = vadd.f32 %v192, %v510
    %v667 = vadd.f32 %v347, %v665
    %v668 = vperm.slane %v21, 2
    %v669 = vperm.slane %v21, 6
    %v672 = vperm.slane %v668, 2
    %v673 = vperm.slane %v669, 2
    %v674 = vmul.f32 %v27, %v672
    %v675 = vmul.f32 %v27, %v673
    %v676 = vand.u32 2147483647, %v674
    %vm677 = vcmp.le.f32.partialorder %v676, 0.7853982
    %vm678 = vcmp.lt.s32.totalorder %v674, 0
    %v679 = vand.u32 %v674, 2139095040
    %v680 = vshrl.u32 %v679, 23
    %v681 = vsub.s32 %v680, 127
    %v682 = vand.u32 2147483647, %v674
    %v683 = vand.u32 %v682, 8388607
    %v684 = vor.u32 %v683, 8388608
    %v685 = vsub.s32 0, %v684
    %v686 = vadd.s32 %v681, 1
    %vm687 = vcmp.gt.s32.totalorder %v686, 0
    %v688 = vsel %vm687, %v686, 0
    %v689 = vshrl.u32 %v688, 5
    %v690 = vand.u32 %v688, 31
    %v691 = vsub.s32 32, %v690
    %v692 = vshrl.u32 683565275, %v691
    %v693 = vshll.u32 683565275, %v690
    %v694 = vshrl.u32 2475754826, %v691
    %v695 = vor.u32 %v693, %v694
    %v696 = vshll.u32 2475754826, %v690
    %v697 = vshrl.u32 2131351028, %v691
    %v698 = vor.u32 %v696, %v697
    %v699 = vshll.u32 2131351028, %v690
    %v700 = vshrl.u32 2102212464, %v691
    %v701 = vor.u32 %v699, %v700
    %v702 = vshll.u32 2102212464, %v690
    %v703 = vshrl.u32 920167782, %v691
    %v704 = vor.u32 %v702, %v703
    %v705 = vshll.u32 920167782, %v690
    %v706 = vshrl.u32 1326507024, %v691
    %v707 = vor.u32 %v705, %v706
    %vm708 = vcmp.lt.s32.totalorder %v689, 1
    %vm709 = vcmp.lt.s32.totalorder %v689, 2
    %vm710 = vcmp.lt.s32.totalorder %v689, 3
    %vm711 = vcmp.lt.s32.totalorder %v689, 4
    %v712 = vsel %vm708, %v692, %v695
    %v713 = vsel %vm711, %v701, 2102212464
    %v714 = vsel %vm710, %v698, %v713
    %v715 = vsel %vm709, %v712, %v714
    %v716 = vsel %vm708, %v695, %v698
    %v717 = vsel %vm711, %v704, 920167782
    %v718 = vsel %vm710, %v701, %v717
    %v719 = vsel %vm709, %v716, %v718
    %v720 = vsel %vm708, %v698, %v701
    %v721 = vsel %vm711, %v707, 1326507024
    %v722 = vsel %vm710, %v704, %v721
    %v723 = vsel %vm709, %v720, %v722
    %v724 = vshll.u32 %v684, 8
    %v725 = vand.u32 %v724, 65535
    %v726 = vshrl.u32 %v724, 16
    %v727 = vand.u32 %v723, 65535
    %v728 = vshrl.u32 %v723, 16
    %v729 = vmul.u32 %v725, %v727
    %v730 = vmul.u32 %v725, %v728
    %v731 = vmul.u32 %v726, %v727
    %v732 = vmul.u32 %v726, %v728
    %v733 = vshll.u32 %v730, 16
    %v734 = vshrl.u32 %v730, 16
    %v735 = vshll.u32 %v731, 16
    %v736 = vshrl.u32 %v731, 16
    %vm737 = vc.u32 %v729, %v733
    %v738 = vsel %vm737, 1, 0
    %v739 = vadd.s32 %v729, %v733
    %v740 = vadd.s32 %v732, %v738
    %vm741 = vc.u32 %v739, %v735
    %v742 = vsel %vm741, 1, 0
    %v743 = vadd.s32 %v739, %v735
    %v744 = vadd.s32 %v740, %v742
    %v745 = vadd.s32 %v744, %v734
    %v746 = vadd.s32 %v745, %v736
    %v747 = vand.u32 %v724, 65535
    %v748 = vshrl.u32 %v724, 16
    %v749 = vand.u32 %v719, 65535
    %v750 = vshrl.u32 %v719, 16
    %v751 = vmul.u32 %v747, %v749
    %v752 = vmul.u32 %v747, %v750
    %v753 = vmul.u32 %v748, %v749
    %v754 = vmul.u32 %v748, %v750
    %v755 = vshll.u32 %v752, 16
    %v756 = vshrl.u32 %v752, 16
    %v757 = vshll.u32 %v753, 16
    %v758 = vshrl.u32 %v753, 16
    %vm759 = vc.u32 %v751, %v755
    %v760 = vsel %vm759, 1, 0
    %v761 = vadd.s32 %v751, %v755
    %v762 = vadd.s32 %v754, %v760
    %vm763 = vc.u32 %v761, %v757
    %v764 = vsel %vm763, 1, 0
    %v765 = vadd.s32 %v761, %v757
    %v766 = vadd.s32 %v762, %v764
    %v767 = vadd.s32 %v766, %v756
    %v768 = vadd.s32 %v767, %v758
    %v769 = vmul.u32 %v724, %v715
    %v770 = vadd.s32 %v746, %v765
    %vm771 = vc.u32 %v746, %v765
    %v772 = vadd.s32 %v768, 1
    %v773 = vsel %vm771, %v772, %v768
    %v774 = vadd.s32 %v769, %v773
    %v775 = vadd.s32 %v774, 536870912
    %v776 = vshrl.u32 %v775, 30
    %v777 = vshll.u32 %v776, 30
    %v778 = vsub.s32 %v774, %v777
    %vm779 = vcmp.lt.s32.totalorder %v778, 0
    %v780 = vsub.s32 0, %v778
    %v781 = vsel %vm779, %v780, %v778
    %v782 = vclz %v781
    %v783 = vsub.s32 %v782, 2
    %vm784 = vcmp.gt.s32.totalorder 0, %v783
    %v785 = vsel %vm784, 0, %v783
    %v786 = vsub.s32 32, %v785
    %v787 = vshll.u32 %v778, %v785
    %v788 = vshrl.u32 %v770, %v786
    %v789 = vor.u32 %v787, %v788
    %v790 = vsub.s32 4294967266, %v785
    %v791 = vadd.s32 %v790, 127
    %v792 = vshll.u32 %v791, 23
    %v793 = vor.u32 4788187, %v792
    %v794 = vand.u32 2147483647, %v793
    %v796 = vcvt.s32.f32 %v789
    %v797 = vmul.f32 %v796, %v794
    %v798 = vxor.u32 %v797, 2147483648
    %v799 = vsel %vm678, %v798, %v797
    %v800 = vsub.s32 4, %v776
    %v801 = vsel %vm678, %v800, %v776
    %v802 = vsel %vm677, %v674, %v799
    %v803 = vsel %vm677, 0, %v801
    %v804 = vmul.f32 %v802, %v802
    %v805 = vmul.f32 %v804, -0.001358992
    %v806 = vadd.f32 %v805, 0.041655596
    %v807 = vmul.f32 %v804, %v806
    %v808 = vadd.f32 %v807, -0.4999988
    %v809 = vmul.f32 %v804, %v808
    %v810 = vadd.f32 1.0, %v809
    %v811 = vmul.f32 %v802, %v802
    %v812 = vmul.f32 %v811, -0.00019511016
    %v813 = vadd.f32 %v812, 0.008332121
    %v814 = vmul.f32 %v811, %v813
    %v815 = vadd.f32 %v814, -0.16666654
    %v816 = vmul.f32 %v811, %v815
    %v817 = vadd.f32 %v816, 1.0
    %v818 = vmul.f32 %v817, %v802
    %vm819 = vweird.f32 %v674
    %v820 = vadd.s32 %v803, 3
    %v821 = vand.u32 %v820, 3
    %vm822 = vcmp.lt.s32.totalorder %v821, 2
    %vm823 = vcmp.eq.s32.totalorder %v821, 0
    %v824 = vxor.u32 %v818, 2147483648
    %v825 = vsel %vm823, %v810, %v824
    %vm826 = vcmp.eq.s32.totalorder %v821, 2
    %v827 = vxor.u32 %v810, 2147483648
    %v828 = vsel %vm826, %v827, %v818
    %v829 = vsel %vm822, %v825, %v828
    %v830 = vsel %vm819, nan, %v829
    %v831 = vand.u32 2147483647, %v675
    %vm832 = vcmp.le.f32.partialorder %v831, 0.7853982
    %vm833 = vcmp.lt.s32.totalorder %v675, 0
    %v834 = vand.u32 %v675, 2139095040
    %v835 = vshrl.u32 %v834, 23
    %v836 = vsub.s32 %v835, 127
    %v837 = vand.u32 2147483647, %v675
    %v838 = vand.u32 %v837, 8388607
    %v839 = vor.u32 %v838, 8388608
    %v840 = vsub.s32 0, %v839
    %v841 = vadd.s32 %v836, 1
    %vm842 = vcmp.gt.s32.totalorder %v841, 0
    %v843 = vsel %vm842, %v841, 0
    %v844 = vshrl.u32 %v843, 5
    %v845 = vand.u32 %v843, 31
    %v846 = vsub.s32 32, %v845
    %v847 = vshrl.u32 683565275, %v846
    %v848 = vshll.u32 683565275, %v845
    %v849 = vshrl.u32 2475754826, %v846
    %v850 = vor.u32 %v848, %v849
    %v851 = vshll.u32 2475754826, %v845
    %v852 = vshrl.u32 2131351028, %v846
    %v853 = vor.u32 %v851, %v852
    %v854 = vshll.u32 2131351028, %v845
    %v855 = vshrl.u32 2102212464, %v846
    %v856 = vor.u32 %v854, %v855
    %v857 = vshll.u32 2102212464, %v845
    %v858 = vshrl.u32 920167782, %v846
    %v859 = vor.u32 %v857, %v858
    %v860 = vshll.u32 920167782, %v845
    %v861 = vshrl.u32 1326507024, %v846
    %v862 = vor.u32 %v860, %v861
    %vm863 = vcmp.lt.s32.totalorder %v844, 1
    %vm864 = vcmp.lt.s32.totalorder %v844, 2
    %vm865 = vcmp.lt.s32.totalorder %v844, 3
    %vm866 = vcmp.lt.s32.totalorder %v844, 4
    %v867 = vsel %vm863, %v847, %v850
    %v868 = vsel %vm866, %v856, 2102212464
    %v869 = vsel %vm865, %v853, %v868
    %v870 = vsel %vm864, %v867, %v869
    %v871 = vsel %vm863, %v850, %v853
    %v872 = vsel %vm866, %v859, 920167782
    %v873 = vsel %vm865, %v856, %v872
    %v874 = vsel %vm864, %v871, %v873
    %v875 = vsel %vm863, %v853, %v856
    %v876 = vsel %vm866, %v862, 1326507024
    %v877 = vsel %vm865, %v859, %v876
    %v878 = vsel %vm864, %v875, %v877
    %v879 = vshll.u32 %v839, 8
    %v880 = vand.u32 %v879, 65535
    %v881 = vshrl.u32 %v879, 16
    %v882 = vand.u32 %v878, 65535
    %v883 = vshrl.u32 %v878, 16
    %v884 = vmul.u32 %v880, %v882
    %v885 = vmul.u32 %v880, %v883
    %v886 = vmul.u32 %v881, %v882
    %v887 = vmul.u32 %v881, %v883
    %v888 = vshll.u32 %v885, 16
    %v889 = vshrl.u32 %v885, 16
    %v890 = vshll.u32 %v886, 16
    %v891 = vshrl.u32 %v886, 16
    %vm892 = vc.u32 %v884, %v888
    %v893 = vsel %vm892, 1, 0
    %v894 = vadd.s32 %v884, %v888
    %v895 = vadd.s32 %v887, %v893
    %vm896 = vc.u32 %v894, %v890
    %v897 = vsel %vm896, 1, 0
    %v898 = vadd.s32 %v894, %v890
    %v899 = vadd.s32 %v895, %v897
    %v900 = vadd.s32 %v899, %v889
    %v901 = vadd.s32 %v900, %v891
    %v902 = vand.u32 %v879, 65535
    %v903 = vshrl.u32 %v879, 16
    %v904 = vand.u32 %v874, 65535
    %v905 = vshrl.u32 %v874, 16
    %v906 = vmul.u32 %v902, %v904
    %v907 = vmul.u32 %v902, %v905
    %v908 = vmul.u32 %v903, %v904
    %v909 = vmul.u32 %v903, %v905
    %v910 = vshll.u32 %v907, 16
    %v911 = vshrl.u32 %v907, 16
    %v912 = vshll.u32 %v908, 16
    %v913 = vshrl.u32 %v908, 16
    %vm914 = vc.u32 %v906, %v910
    %v915 = vsel %vm914, 1, 0
    %v916 = vadd.s32 %v906, %v910
    %v917 = vadd.s32 %v909, %v915
    %vm918 = vc.u32 %v916, %v912
    %v919 = vsel %vm918, 1, 0
    %v920 = vadd.s32 %v916, %v912
    %v921 = vadd.s32 %v917, %v919
    %v922 = vadd.s32 %v921, %v911
    %v923 = vadd.s32 %v922, %v913
    %v924 = vmul.u32 %v879, %v870
    %v925 = vadd.s32 %v901, %v920
    %vm926 = vc.u32 %v901, %v920
    %v927 = vadd.s32 %v923, 1
    %v928 = vsel %vm926, %v927, %v923
    %v929 = vadd.s32 %v924, %v928
    %v930 = vadd.s32 %v929, 536870912
    %v931 = vshrl.u32 %v930, 30
    %v932 = vshll.u32 %v931, 30
    %v933 = vsub.s32 %v929, %v932
    %vm934 = vcmp.lt.s32.totalorder %v933, 0
    %v935 = vsub.s32 0, %v933
    %v936 = vsel %vm934, %v935, %v933
    %v937 = vclz %v936
    %v938 = vsub.s32 %v937, 2
    %vm939 = vcmp.gt.s32.totalorder 0, %v938
    %v940 = vsel %vm939, 0, %v938
    %v941 = vsub.s32 32, %v940
    %v942 = vshll.u32 %v933, %v940
    %v943 = vshrl.u32 %v925, %v941
    %v944 = vor.u32 %v942, %v943
    %v945 = vsub.s32 4294967266, %v940
    %v946 = vadd.s32 %v945, 127
    %v947 = vshll.u32 %v946, 23
    %v948 = vor.u32 4788187, %v947
    %v949 = vand.u32 2147483647, %v948
    %v951 = vcvt.s32.f32 %v944
    %v952 = vmul.f32 %v951, %v949
    %v953 = vxor.u32 %v952, 2147483648
    %v954 = vsel %vm833, %v953, %v952
    %v955 = vsub.s32 4, %v931
    %v956 = vsel %vm833, %v955, %v931
    %v957 = vsel %vm832, %v675, %v954
    %v958 = vsel %vm832, 0, %v956
    %v959 = vmul.f32 %v957, %v957
    %v960 = vmul.f32 %v959, -0.001358992
    %v961 = vadd.f32 %v960, 0.041655596
    %v962 = vmul.f32 %v959, %v961
    %v963 = vadd.f32 %v962, -0.4999988
    %v964 = vmul.f32 %v959, %v963
    %v965 = vadd.f32 1.0, %v964
    %v966 = vmul.f32 %v957, %v957
    %v967 = vmul.f32 %v966, -0.00019511016
    %v968 = vadd.f32 %v967, 0.008332121
    %v969 = vmul.f32 %v966, %v968
    %v970 = vadd.f32 %v969, -0.16666654
    %v971 = vmul.f32 %v966, %v970
    %v972 = vadd.f32 %v971, 1.0
    %v973 = vmul.f32 %v972, %v957
    %vm974 = vweird.f32 %v675
    %v975 = vadd.s32 %v958, 3
    %v976 = vand.u32 %v975, 3
    %vm977 = vcmp.lt.s32.totalorder %v976, 2
    %vm978 = vcmp.eq.s32.totalorder %v976, 0
    %v979 = vxor.u32 %v973, 2147483648
    %v980 = vsel %vm978, %v965, %v979
    %vm981 = vcmp.eq.s32.totalorder %v976, 2
    %v982 = vxor.u32 %v965, 2147483648
    %v983 = vsel %vm981, %v982, %v973
    %v984 = vsel %vm977, %v980, %v983
    %v985 = vsel %vm974, nan, %v984
    %v986 = vadd.f32 %v666, %v830
    %v987 = vadd.f32 %v667, %v985
    %v988 = vmul.f32 %v986, 0.33333334
    %v989 = vmul.f32 %v987, 0.33333334
    %v992 = vrot.slane %v989, 4
    %vm993 = vcmask 1043456
    %v994 = vsel %vm993, %v988, %v992
    %v996 = vadd.f32 %v21, %v994
    %v997 = vld [vmem:[%s1] sm:$0xff]
    %v998 = vld [vmem:[%s1 + $0x8] sm:$0xff]
    %v999 = vld [vmem:[%s1 + $0x10] sm:$0xff]
    %v1000 = vld [vmem:[%s1 + $0x18] sm:$0xff]
    %v1001 = vld [vmem:[%s4] sm:$0xff]
    %v1002 = vld [vmem:[%s4 + $0x8] sm:$0xff]
    %v1003 = vld [vmem:[%s4 + $0x10] sm:$0xff]
    %v1004 = vld [vmem:[%s4 + $0x18] sm:$0xff]
    %1006 = vset.pattern.permute.xlu0 0
    %1007 = vperm.xlu0 %1006, %v1001
    %v1008 = vpop.permute.xlu0 %1007
    %1011 = vset.pattern.permute.xlu0 0
    %1012 = vperm.xlu0 %1011, %v1002
    %v1013 = vpop.permute.xlu0 %1012
    %1016 = vset.pattern.permute.xlu0 0
    %1017 = vperm.xlu0 %1016, %v1003
    %v1018 = vpop.permute.xlu0 %1017
    %1021 = vset.pattern.permute.xlu0 0
    %1022 = vperm.xlu0 %1021, %v1004
    %v1023 = vpop.permute.xlu0 %1022
    %1026 = vst [vmem:[#allocation1] ss:$2 sm:$0xff] %v996
    %v1027 = vld.sshfl [vmem:[#allocation1] sm:$0xff pattern:$0x75316420]
    %v1028 = vld.sshfl [vmem:[#allocation1 + $0x8] sm:$0xff pattern:$0x75316420]
    %vm1029 = vcmask 23552
    %v1031 = vsel %vm1029, %v997, 0
    %v1034 = vsel %vm1029, %v998, 0
    %v1037 = vsel %vm1029, %v999, 0
    %v1040 = vsel %vm1029, %v1000, 0
    %vm1042 = vcmask 1042432
    %v1043 = vsel %vm1042, %v1027, 0
    %v1045 = vsel %vm1042, %v1028, 0
    %1047 = vmatpush.msra.mxu0 0.0
    %1048 = vmatpush.msra.mxu0 0.0
    %1049 = vmatpush.msra.mxu0 0.0
    %1050 = vmatpush.msra.mxu0 0.0
    %1051 = vmatpush.msra.mxu0 0.0
    %1052 = vmatpush.msra.mxu0 0.0
    %1053 = vmatpush.msra.mxu0 0.0
    %1054 = vmatpush.msra.mxu0 0.0
    %1055 = vmatpush.msra.mxu0 0.0
    %1056 = vmatpush.msra.mxu0 0.0
    %1057 = vmatpush.msra.mxu0 0.0
    %1058 = vmatpush.msra.mxu0 0.0
    %1059 = vmatpush.msra.mxu0 0.0
    %1060 = vmatpush.msra.mxu0 0.0
    %1061 = vmatpush.msra.mxu0 0.0
    %1062 = vmatpush.msra.mxu0 %v1043
    %1063 = vmatmul.f32.gmra.mxu0 %v1031
    %v1064 = vpop.f32.mrf.mxu0
    %v1065 = vadd.f32 %v1008, %v1064
    %1066 = vmatmul.f32.gmra.mxu0 %v1034
    %v1067 = vpop.f32.mrf.mxu0
    %v1068 = vadd.f32 %v1013, %v1067
    %1069 = vmatmul.f32.gmra.mxu0 %v1037
    %v1070 = vpop.f32.mrf.mxu0
    %v1071 = vadd.f32 %v1018, %v1070
    %1072 = vmatmul.f32.gmra.mxu0 %v1040
    %v1073 = vpop.f32.mrf.mxu0
    %v1074 = vadd.f32 %v1023, %v1073
    %1075 = vdwg.mxu0
    %1076 = vmatpush.msra.mxu0 0.0
    %1077 = vmatpush.msra.mxu0 0.0
    %1078 = vmatpush.msra.mxu0 0.0
    %1079 = vmatpush.msra.mxu0 0.0
    %1080 = vmatpush.msra.mxu0 0.0
    %1081 = vmatpush.msra.mxu0 0.0
    %1082 = vmatpush.msra.mxu0 0.0
    %1083 = vmatpush.msra.mxu0 0.0
    %1084 = vmatpush.msra.mxu0 0.0
    %1085 = vmatpush.msra.mxu0 0.0
    %1086 = vmatpush.msra.mxu0 0.0
    %1087 = vmatpush.msra.mxu0 0.0
    %1088 = vmatpush.msra.mxu0 0.0
    %1089 = vmatpush.msra.mxu0 0.0
    %1090 = vmatpush.msra.mxu0 0.0
    %1091 = vmatpush.msra.mxu0 %v1045
    %1092 = vmatmul.f32.gmra.mxu0 %v1031
    %v1093 = vpop.f32.mrf.mxu0
    %v1094 = vadd.f32 %v1008, %v1093
    %1095 = vmatmul.f32.gmra.mxu0 %v1034
    %v1096 = vpop.f32.mrf.mxu0
    %v1097 = vadd.f32 %v1013, %v1096
    %1098 = vmatmul.f32.gmra.mxu0 %v1037
    %v1099 = vpop.f32.mrf.mxu0
    %v1100 = vadd.f32 %v1018, %v1099
    %1101 = vmatmul.f32.gmra.mxu0 %v1040
    %v1102 = vpop.f32.mrf.mxu0
    %v1103 = vadd.f32 %v1023, %v1102
    %1104 = vdwg.mxu0
    %1105 = vmatpush.msra.mxu0 1.0
    %1106 = vmatpush.msra.mxu0 1.0
    %1107 = vmatpush.msra.mxu0 1.0
    %1108 = vmatpush.msra.mxu0 1.0
    %1109 = vmatpush.msra.mxu0 1.0
    %1110 = vmatpush.msra.mxu0 1.0
    %1111 = vmatpush.msra.mxu0 1.0
    %1112 = vmatpush.msra.mxu0 1.0
    %1113 = vmatpush.msra.mxu0 1.0
    %1114 = vmatpush.msra.mxu0 1.0
    %1115 = vmatpush.msra.mxu0 1.0
    %1116 = vmatpush.msra.mxu0 1.0
    %1117 = vmatpush.msra.mxu0 1.0
    %1118 = vmatpush.msra.mxu0 1.0
    %1119 = vmatpush.msra.mxu0 1.0
    %1120 = vmatpush.msra.mxu0 1.0
    %1121 = vmatmul.f32.gmra.mxu0 %v1065
    %v1122 = vpop.f32.mrf.mxu0
    %v1123 = vadd.f32 0.0, %v1122
    %1124 = vmatmul.f32.gmra.mxu0 %v1068
    %v1125 = vpop.f32.mrf.mxu0
    %v1126 = vadd.f32 0.0, %v1125
    %1127 = vmatmul.f32.gmra.mxu0 %v1071
    %v1128 = vpop.f32.mrf.mxu0
    %v1129 = vadd.f32 0.0, %v1128
    %1130 = vmatmul.f32.gmra.mxu0 %v1074
    %v1131 = vpop.f32.mrf.mxu0
    %v1132 = vadd.f32 0.0, %v1131
    %1133 = vdwg.mxu0
    %1134 = vmatpush.msra.mxu0 1.0
    %1135 = vmatpush.msra.mxu0 1.0
    %1136 = vmatpush.msra.mxu0 1.0
    %1137 = vmatpush.msra.mxu0 1.0
    %1138 = vmatpush.msra.mxu0 1.0
    %1139 = vmatpush.msra.mxu0 1.0
    %1140 = vmatpush.msra.mxu0 1.0
    %1141 = vmatpush.msra.mxu0 1.0
    %1142 = vmatpush.msra.mxu0 1.0
    %1143 = vmatpush.msra.mxu0 1.0
    %1144 = vmatpush.msra.mxu0 1.0
    %1145 = vmatpush.msra.mxu0 1.0
    %1146 = vmatpush.msra.mxu0 1.0
    %1147 = vmatpush.msra.mxu0 1.0
    %1148 = vmatpush.msra.mxu0 1.0
    %1149 = vmatpush.msra.mxu0 1.0
    %1150 = vmatmul.f32.gmra.mxu0 %v1094
    %v1151 = vpop.f32.mrf.mxu0
    %v1152 = vadd.f32 %v1123, %v1151
    %1153 = vmatmul.f32.gmra.mxu0 %v1097
    %v1154 = vpop.f32.mrf.mxu0
    %v1155 = vadd.f32 %v1126, %v1154
    %1156 = vmatmul.f32.gmra.mxu0 %v1100
    %v1157 = vpop.f32.mrf.mxu0
    %v1158 = vadd.f32 %v1129, %v1157
    %1159 = vmatmul.f32.gmra.mxu0 %v1103
    %v1160 = vpop.f32.mrf.mxu0
    %v1161 = vadd.f32 %v1132, %v1160
    %1162 = vdwg.mxu0
    %v1163 = vmul.f32 %v1152, 0.00390625
    %v1164 = vmul.f32 %v1155, 0.00390625
    %v1165 = vmul.f32 %v1158, 0.00390625
    %v1166 = vmul.f32 %v1161, 0.00390625
    %1168 = vset.pattern.permute.xlu0 0
    %1169 = vperm.xlu0 %1168, %v1163
    %v1170 = vpop.permute.xlu0 %1169
    %1173 = vset.pattern.permute.xlu0 0
    %1174 = vperm.xlu0 %1173, %v1164
    %v1175 = vpop.permute.xlu0 %1174
    %1178 = vset.pattern.permute.xlu0 0
    %1179 = vperm.xlu0 %1178, %v1165
    %v1180 = vpop.permute.xlu0 %1179
    %1183 = vset.pattern.permute.xlu0 0
    %1184 = vperm.xlu0 %1183, %v1166
    %v1185 = vpop.permute.xlu0 %1184
    %v1187 = vsub.f32 %v1065, %v1170
    %v1188 = vsub.f32 %v1094, %v1170
    %v1189 = vsub.f32 %v1068, %v1175
    %v1190 = vsub.f32 %v1097, %v1175
    %v1191 = vsub.f32 %v1071, %v1180
    %v1192 = vsub.f32 %v1100, %v1180
    %v1193 = vsub.f32 %v1074, %v1185
    %v1194 = vsub.f32 %v1103, %v1185
    %v1195 = vmul.f32 %v1187, %v1187
    %v1196 = vmul.f32 %v1188, %v1188
    %v1197 = vmul.f32 %v1189, %v1189
    %v1198 = vmul.f32 %v1190, %v1190
    %v1199 = vmul.f32 %v1191, %v1191
    %v1200 = vmul.f32 %v1192, %v1192
    %v1201 = vmul.f32 %v1193, %v1193
    %v1202 = vmul.f32 %v1194, %v1194
    %1203 = vmatpush.msra.mxu0 1.0
    %1204 = vmatpush.msra.mxu0 1.0
    %1205 = vmatpush.msra.mxu0 1.0
    %1206 = vmatpush.msra.mxu0 1.0
    %1207 = vmatpush.msra.mxu0 1.0
    %1208 = vmatpush.msra.mxu0 1.0
    %1209 = vmatpush.msra.mxu0 1.0
    %1210 = vmatpush.msra.mxu0 1.0
    %1211 = vmatpush.msra.mxu0 1.0
    %1212 = vmatpush.msra.mxu0 1.0
    %1213 = vmatpush.msra.mxu0 1.0
    %1214 = vmatpush.msra.mxu0 1.0
    %1215 = vmatpush.msra.mxu0 1.0
    %1216 = vmatpush.msra.mxu0 1.0
    %1217 = vmatpush.msra.mxu0 1.0
    %1218 = vmatpush.msra.mxu0 1.0
    %1219 = vmatmul.f32.gmra.mxu0 %v1195
    %v1220 = vpop.f32.mrf.mxu0
    %v1221 = vadd.f32 0.0, %v1220
    %1222 = vmatmul.f32.gmra.mxu0 %v1197
    %v1223 = vpop.f32.mrf.mxu0
    %v1224 = vadd.f32 0.0, %v1223
    %1225 = vmatmul.f32.gmra.mxu0 %v1199
    %v1226 = vpop.f32.mrf.mxu0
    %v1227 = vadd.f32 0.0, %v1226
    %1228 = vmatmul.f32.gmra.mxu0 %v1201
    %v1229 = vpop.f32.mrf.mxu0
    %v1230 = vadd.f32 0.0, %v1229
    %1231 = vdwg.mxu0
    %1232 = vmatpush.msra.mxu0 1.0
    %1233 = vmatpush.msra.mxu0 1.0
    %1234 = vmatpush.msra.mxu0 1.0
    %1235 = vmatpush.msra.mxu0 1.0
    %1236 = vmatpush.msra.mxu0 1.0
    %1237 = vmatpush.msra.mxu0 1.0
    %1238 = vmatpush.msra.mxu0 1.0
    %1239 = vmatpush.msra.mxu0 1.0
    %1240 = vmatpush.msra.mxu0 1.0
    %1241 = vmatpush.msra.mxu0 1.0
    %1242 = vmatpush.msra.mxu0 1.0
    %1243 = vmatpush.msra.mxu0 1.0
    %1244 = vmatpush.msra.mxu0 1.0
    %1245 = vmatpush.msra.mxu0 1.0
    %1246 = vmatpush.msra.mxu0 1.0
    %1247 = vmatpush.msra.mxu0 1.0
    %1248 = vmatmul.f32.gmra.mxu0 %v1196
    %v1249 = vpop.f32.mrf.mxu0
    %v1250 = vadd.f32 %v1221, %v1249
    %1251 = vmatmul.f32.gmra.mxu0 %v1198
    %v1252 = vpop.f32.mrf.mxu0
    %v1253 = vadd.f32 %v1224, %v1252
    %1254 = vmatmul.f32.gmra.mxu0 %v1200
    %v1255 = vpop.f32.mrf.mxu0
    %v1256 = vadd.f32 %v1227, %v1255
    %1257 = vmatmul.f32.gmra.mxu0 %v1202
    %v1258 = vpop.f32.mrf.mxu0
    %v1259 = vadd.f32 %v1230, %v1258
    %1260 = vdwg.mxu0
    %v1261 = vmul.f32 %v1250, 0.00390625
    %v1262 = vmul.f32 %v1253, 0.00390625
    %v1263 = vmul.f32 %v1256, 0.00390625
    %v1264 = vmul.f32 %v1259, 0.00390625
    %v1265 = vadd.f32 %v1261, 1e-05
    %v1266 = vadd.f32 %v1262, 1e-05
    %v1267 = vadd.f32 %v1263, 1e-05
    %v1268 = vadd.f32 %v1264, 1e-05
    %v1269 = vrsqrt.pop %v1265
    %v1270 = vmul.f32 %v1269, %v1265
    %v1271 = vmul.f32 %v1270, %v1269
    %v1272 = vmul.f32 0.5, %v1271
    %v1273 = vsub.f32 1.5, %v1272
    %v1274 = vmul.f32 %v1269, %v1273
    %vm1275 = vweird.f32 %v1265
    %vm1276 = vweird.f32 %v1269
    %vm1277 = vmor %vm1275, %vm1276
    %v1278 = vsel %vm1277, %v1269, %v1274
    %v1279 = vrsqrt.pop %v1266
    %v1280 = vmul.f32 %v1279, %v1266
    %v1281 = vmul.f32 %v1280, %v1279
    %v1282 = vmul.f32 0.5, %v1281
    %v1283 = vsub.f32 1.5, %v1282
    %v1284 = vmul.f32 %v1279, %v1283
    %vm1285 = vweird.f32 %v1266
    %vm1286 = vweird.f32 %v1279
    %vm1287 = vmor %vm1285, %vm1286
    %v1288 = vsel %vm1287, %v1279, %v1284
    %v1289 = vrsqrt.pop %v1267
    %v1290 = vmul.f32 %v1289, %v1267
    %v1291 = vmul.f32 %v1290, %v1289
    %v1292 = vmul.f32 0.5, %v1291
    %v1293 = vsub.f32 1.5, %v1292
    %v1294 = vmul.f32 %v1289, %v1293
    %vm1295 = vweird.f32 %v1267
    %vm1296 = vweird.f32 %v1289
    %vm1297 = vmor %vm1295, %vm1296
    %v1298 = vsel %vm1297, %v1289, %v1294
    %v1299 = vrsqrt.pop %v1268
    %v1300 = vmul.f32 %v1299, %v1268
    %v1301 = vmul.f32 %v1300, %v1299
    %v1302 = vmul.f32 0.5, %v1301
    %v1303 = vsub.f32 1.5, %v1302
    %v1304 = vmul.f32 %v1299, %v1303
    %vm1305 = vweird.f32 %v1268
    %vm1306 = vweird.f32 %v1299
    %vm1307 = vmor %vm1305, %vm1306
    %v1308 = vsel %vm1307, %v1299, %v1304
    %s1309 = scalar_lea.vmem %s4, 256
    %v1310 = vld [vmem:[%s1309] sm:$0xff]
    %v1311 = vld [vmem:[%s1309 + $0x8] sm:$0xff]
    %v1312 = vld [vmem:[%s1309 + $0x10] sm:$0xff]
    %v1313 = vld [vmem:[%s1309 + $0x18] sm:$0xff]
    %v1314 = vmul.f32 %v1278, %v1310
    %v1315 = vmul.f32 %v1288, %v1311
    %v1316 = vmul.f32 %v1298, %v1312
    %v1317 = vmul.f32 %v1308, %v1313
    %1319 = vset.pattern.permute.xlu0 0
    %1320 = vperm.xlu0 %1319, %v1314
    %v1321 = vpop.permute.xlu0 %1320
    %1324 = vset.pattern.permute.xlu0 0
    %1325 = vperm.xlu0 %1324, %v1315
    %v1326 = vpop.permute.xlu0 %1325
    %1329 = vset.pattern.permute.xlu0 0
    %1330 = vperm.xlu0 %1329, %v1316
    %v1331 = vpop.permute.xlu0 %1330
    %1334 = vset.pattern.permute.xlu0 0
    %1335 = vperm.xlu0 %1334, %v1317
    %v1336 = vpop.permute.xlu0 %1335
    %v1338 = vmul.f32 %v1187, %v1321
    %v1339 = vmul.f32 %v1188, %v1321
    %v1340 = vmul.f32 %v1189, %v1326
    %v1341 = vmul.f32 %v1190, %v1326
    %v1342 = vmul.f32 %v1191, %v1331
    %v1343 = vmul.f32 %v1192, %v1331
    %v1344 = vmul.f32 %v1193, %v1336
    %v1345 = vmul.f32 %v1194, %v1336
    %s1346 = scalar_lea.vmem %s4, 512
    %v1347 = vld [vmem:[%s1346] sm:$0xff]
    %v1348 = vld [vmem:[%s1346 + $0x8] sm:$0xff]
    %v1349 = vld [vmem:[%s1346 + $0x10] sm:$0xff]
    %v1350 = vld [vmem:[%s1346 + $0x18] sm:$0xff]
    %1352 = vset.pattern.permute.xlu0 0
    %1353 = vperm.xlu0 %1352, %v1347
    %v1354 = vpop.permute.xlu0 %1353
    %1357 = vset.pattern.permute.xlu0 0
    %1358 = vperm.xlu0 %1357, %v1348
    %v1359 = vpop.permute.xlu0 %1358
    %1362 = vset.pattern.permute.xlu0 0
    %1363 = vperm.xlu0 %1362, %v1349
    %v1364 = vpop.permute.xlu0 %1363
    %1367 = vset.pattern.permute.xlu0 0
    %1368 = vperm.xlu0 %1367, %v1350
    %v1369 = vpop.permute.xlu0 %1368
    %v1371 = vadd.f32 %v1338, %v1354
    %v1372 = vadd.f32 %v1339, %v1354
    %v1373 = vadd.f32 %v1340, %v1359
    %v1374 = vadd.f32 %v1341, %v1359
    %v1375 = vadd.f32 %v1342, %v1364
    %v1376 = vadd.f32 %v1343, %v1364
    %v1377 = vadd.f32 %v1344, %v1369
    %v1378 = vadd.f32 %v1345, %v1369
    %v1379 = vmul.f32 %v1371, 0.5
    %v1380 = vmul.f32 %v1372, 0.5
    %v1381 = vmul.f32 %v1373, 0.5
    %v1382 = vmul.f32 %v1374, 0.5
    %v1383 = vmul.f32 %v1375, 0.5
    %v1384 = vmul.f32 %v1376, 0.5
    %v1385 = vmul.f32 %v1377, 0.5
    %v1386 = vmul.f32 %v1378, 0.5
    %v1387 = vmul.f32 %v1371, 0.70710677
    %v1388 = vmul.f32 %v1372, 0.70710677
    %v1389 = vmul.f32 %v1373, 0.70710677
    %v1390 = vmul.f32 %v1374, 0.70710677
    %v1391 = vmul.f32 %v1375, 0.70710677
    %v1392 = vmul.f32 %v1376, 0.70710677
    %v1393 = vmul.f32 %v1377, 0.70710677
    %v1394 = vmul.f32 %v1378, 0.70710677
    %v1395 = vmul.f32 %v1387, %v1387
    %v1396 = vmin.f32 16.0, %v1395
    %v1397 = vmul.f32 %v1396, 2.1237322e-06
    %v1398 = vadd.f32 %v1397, 0.00028619796
    %v1399 = vmul.f32 %v1396, %v1398
    %v1400 = vadd.f32 %v1399, 0.0036580483
    %v1401 = vmul.f32 %v1396, %v1400
    %v1402 = vadd.f32 %v1401, 0.05243302
    %v1403 = vmul.f32 %v1396, %v1402
    %v1404 = vadd.f32 %v1403, 0.18741608
    %v1405 = vmul.f32 %v1396, %v1404
    %v1406 = vadd.f32 %v1405, 1.1283791
    %v1407 = vmul.f32 %v1387, %v1406
    %v1408 = vmul.f32 %v1396, 3.8918573e-05
    %v1409 = vadd.f32 %v1408, 0.001143296
    %v1410 = vmul.f32 %v1396, %v1409
    %v1411 = vadd.f32 %v1410, 0.014752088
    %v1412 = vmul.f32 %v1396, %v1411
    %v1413 = vadd.f32 %v1412, 0.112945676
    %v1414 = vmul.f32 %v1396, %v1413
    %v1415 = vadd.f32 %v1414, 0.4994258
    %v1416 = vmul.f32 %v1396, %v1415
    %v1417 = vadd.f32 %v1416, 1.0
    %v1418 = vrcp.pop %v1417
    %v1419 = vmul.f32 %v1417, %v1418
    %v1420 = vsub.f32 1.0, %v1419
    %v1421 = vmul.f32 %v1418, %v1420
    %v1422 = vadd.f32 %v1418, %v1421
    %vm1423 = vweird.f32 %v1417
    %vm1424 = vweird.f32 %v1418
    %vm1425 = vmor %vm1423, %vm1424
    %v1426 = vsel %vm1425, %v1418, %v1422
    %v1427 = vand.u32 2147483647, %v1417
    %vm1428 = vcmp.eq.f32.partialorder %v1427, 8.507059e+37
    %v1429 = vand.u32 %v1417, 2147483648
    %v1430 = vor.u32 1.1754944e-38, %v1429
    %v1431 = vsel %vm1428, %v1430, %v1426
    %v1432 = vmul.f32 %v1407, %v1431
    %v1433 = vmin.f32 %v1432, 1.0
    %v1434 = vmax.f32 %v1433, -1.0
    %v1435 = vmul.f32 %v1388, %v1388
    %v1436 = vmin.f32 16.0, %v1435
    %v1437 = vmul.f32 %v1436, 2.1237322e-06
    %v1438 = vadd.f32 %v1437, 0.00028619796
    %v1439 = vmul.f32 %v1436, %v1438
    %v1440 = vadd.f32 %v1439, 0.0036580483
    %v1441 = vmul.f32 %v1436, %v1440
    %v1442 = vadd.f32 %v1441, 0.05243302
    %v1443 = vmul.f32 %v1436, %v1442
    %v1444 = vadd.f32 %v1443, 0.18741608
    %v1445 = vmul.f32 %v1436, %v1444
    %v1446 = vadd.f32 %v1445, 1.1283791
    %v1447 = vmul.f32 %v1388, %v1446
    %v1448 = vmul.f32 %v1436, 3.8918573e-05
    %v1449 = vadd.f32 %v1448, 0.001143296
    %v1450 = vmul.f32 %v1436, %v1449
    %v1451 = vadd.f32 %v1450, 0.014752088
    %v1452 = vmul.f32 %v1436, %v1451
    %v1453 = vadd.f32 %v1452, 0.112945676
    %v1454 = vmul.f32 %v1436, %v1453
    %v1455 = vadd.f32 %v1454, 0.4994258
    %v1456 = vmul.f32 %v1436, %v1455
    %v1457 = vadd.f32 %v1456, 1.0
    %v1458 = vrcp.pop %v1457
    %v1459 = vmul.f32 %v1457, %v1458
    %v1460 = vsub.f32 1.0, %v1459
    %v1461 = vmul.f32 %v1458, %v1460
    %v1462 = vadd.f32 %v1458, %v1461
    %vm1463 = vweird.f32 %v1457
    %vm1464 = vweird.f32 %v1458
    %vm1465 = vmor %vm1463, %vm1464
    %v1466 = vsel %vm1465, %v1458, %v1462
    %v1467 = vand.u32 2147483647, %v1457
    %vm1468 = vcmp.eq.f32.partialorder %v1467, 8.507059e+37
    %v1469 = vand.u32 %v1457, 2147483648
    %v1470 = vor.u32 1.1754944e-38, %v1469
    %v1471 = vsel %vm1468, %v1470, %v1466
    %v1472 = vmul.f32 %v1447, %v1471
    %v1473 = vmin.f32 %v1472, 1.0
    %v1474 = vmax.f32 %v1473, -1.0
    %v1475 = vmul.f32 %v1389, %v1389
    %v1476 = vmin.f32 16.0, %v1475
    %v1477 = vmul.f32 %v1476, 2.1237322e-06
    %v1478 = vadd.f32 %v1477, 0.00028619796
    %v1479 = vmul.f32 %v1476, %v1478
    %v1480 = vadd.f32 %v1479, 0.0036580483
    %v1481 = vmul.f32 %v1476, %v1480
    %v1482 = vadd.f32 %v1481, 0.05243302
    %v1483 = vmul.f32 %v1476, %v1482
    %v1484 = vadd.f32 %v1483, 0.18741608
    %v1485 = vmul.f32 %v1476, %v1484
    %v1486 = vadd.f32 %v1485, 1.1283791
    %v1487 = vmul.f32 %v1389, %v1486
    %v1488 = vmul.f32 %v1476, 3.8918573e-05
    %v1489 = vadd.f32 %v1488, 0.001143296
    %v1490 = vmul.f32 %v1476, %v1489
    %v1491 = vadd.f32 %v1490, 0.014752088
    %v1492 = vmul.f32 %v1476, %v1491
    %v1493 = vadd.f32 %v1492, 0.112945676
    %v1494 = vmul.f32 %v1476, %v1493
    %v1495 = vadd.f32 %v1494, 0.4994258
    %v1496 = vmul.f32 %v1476, %v1495
    %v1497 = vadd.f32 %v1496, 1.0
    %v1498 = vrcp.pop %v1497
    %v1499 = vmul.f32 %v1497, %v1498
    %v1500 = vsub.f32 1.0, %v1499
    %v1501 = vmul.f32 %v1498, %v1500
    %v1502 = vadd.f32 %v1498, %v1501
    %vm1503 = vweird.f32 %v1497
    %vm1504 = vweird.f32 %v1498
    %vm1505 = vmor %vm1503, %vm1504
    %v1506 = vsel %vm1505, %v1498, %v1502
    %v1507 = vand.u32 2147483647, %v1497
    %vm1508 = vcmp.eq.f32.partialorder %v1507, 8.507059e+37
    %v1509 = vand.u32 %v1497, 2147483648
    %v1510 = vor.u32 1.1754944e-38, %v1509
    %v1511 = vsel %vm1508, %v1510, %v1506
    %v1512 = vmul.f32 %v1487, %v1511
    %v1513 = vmin.f32 %v1512, 1.0
    %v1514 = vmax.f32 %v1513, -1.0
    %v1515 = vmul.f32 %v1390, %v1390
    %v1516 = vmin.f32 16.0, %v1515
    %v1517 = vmul.f32 %v1516, 2.1237322e-06
    %v1518 = vadd.f32 %v1517, 0.00028619796
    %v1519 = vmul.f32 %v1516, %v1518
    %v1520 = vadd.f32 %v1519, 0.0036580483
    %v1521 = vmul.f32 %v1516, %v1520
    %v1522 = vadd.f32 %v1521, 0.05243302
    %v1523 = vmul.f32 %v1516, %v1522
    %v1524 = vadd.f32 %v1523, 0.18741608
    %v1525 = vmul.f32 %v1516, %v1524
    %v1526 = vadd.f32 %v1525, 1.1283791
    %v1527 = vmul.f32 %v1390, %v1526
    %v1528 = vmul.f32 %v1516, 3.8918573e-05
    %v1529 = vadd.f32 %v1528, 0.001143296
    %v1530 = vmul.f32 %v1516, %v1529
    %v1531 = vadd.f32 %v1530, 0.014752088
    %v1532 = vmul.f32 %v1516, %v1531
    %v1533 = vadd.f32 %v1532, 0.112945676
    %v1534 = vmul.f32 %v1516, %v1533
    %v1535 = vadd.f32 %v1534, 0.4994258
    %v1536 = vmul.f32 %v1516, %v1535
    %v1537 = vadd.f32 %v1536, 1.0
    %v1538 = vrcp.pop %v1537
    %v1539 = vmul.f32 %v1537, %v1538
    %v1540 = vsub.f32 1.0, %v1539
    %v1541 = vmul.f32 %v1538, %v1540
    %v1542 = vadd.f32 %v1538, %v1541
    %vm1543 = vweird.f32 %v1537
    %vm1544 = vweird.f32 %v1538
    %vm1545 = vmor %vm1543, %vm1544
    %v1546 = vsel %vm1545, %v1538, %v1542
    %v1547 = vand.u32 2147483647, %v1537
    %vm1548 = vcmp.eq.f32.partialorder %v1547, 8.507059e+37
    %v1549 = vand.u32 %v1537, 2147483648
    %v1550 = vor.u32 1.1754944e-38, %v1549
    %v1551 = vsel %vm1548, %v1550, %v1546
    %v1552 = vmul.f32 %v1527, %v1551
    %v1553 = vmin.f32 %v1552, 1.0
    %v1554 = vmax.f32 %v1553, -1.0
    %v1555 = vmul.f32 %v1391, %v1391
    %v1556 = vmin.f32 16.0, %v1555
    %v1557 = vmul.f32 %v1556, 2.1237322e-06
    %v1558 = vadd.f32 %v1557, 0.00028619796
    %v1559 = vmul.f32 %v1556, %v1558
    %v1560 = vadd.f32 %v1559, 0.0036580483
    %v1561 = vmul.f32 %v1556, %v1560
    %v1562 = vadd.f32 %v1561, 0.05243302
    %v1563 = vmul.f32 %v1556, %v1562
    %v1564 = vadd.f32 %v1563, 0.18741608
    %v1565 = vmul.f32 %v1556, %v1564
    %v1566 = vadd.f32 %v1565, 1.1283791
    %v1567 = vmul.f32 %v1391, %v1566
    %v1568 = vmul.f32 %v1556, 3.8918573e-05
    %v1569 = vadd.f32 %v1568, 0.001143296
    %v1570 = vmul.f32 %v1556, %v1569
    %v1571 = vadd.f32 %v1570, 0.014752088
    %v1572 = vmul.f32 %v1556, %v1571
    %v1573 = vadd.f32 %v1572, 0.112945676
    %v1574 = vmul.f32 %v1556, %v1573
    %v1575 = vadd.f32 %v1574, 0.4994258
    %v1576 = vmul.f32 %v1556, %v1575
    %v1577 = vadd.f32 %v1576, 1.0
    %v1578 = vrcp.pop %v1577
    %v1579 = vmul.f32 %v1577, %v1578
    %v1580 = vsub.f32 1.0, %v1579
    %v1581 = vmul.f32 %v1578, %v1580
    %v1582 = vadd.f32 %v1578, %v1581
    %vm1583 = vweird.f32 %v1577
    %vm1584 = vweird.f32 %v1578
    %vm1585 = vmor %vm1583, %vm1584
    %v1586 = vsel %vm1585, %v1578, %v1582
    %v1587 = vand.u32 2147483647, %v1577
    %vm1588 = vcmp.eq.f32.partialorder %v1587, 8.507059e+37
    %v1589 = vand.u32 %v1577, 2147483648
    %v1590 = vor.u32 1.1754944e-38, %v1589
    %v1591 = vsel %vm1588, %v1590, %v1586
    %v1592 = vmul.f32 %v1567, %v1591
    %v1593 = vmin.f32 %v1592, 1.0
    %v1594 = vmax.f32 %v1593, -1.0
    %v1595 = vmul.f32 %v1392, %v1392
    %v1596 = vmin.f32 16.0, %v1595
    %v1597 = vmul.f32 %v1596, 2.1237322e-06
    %v1598 = vadd.f32 %v1597, 0.00028619796
    %v1599 = vmul.f32 %v1596, %v1598
    %v1600 = vadd.f32 %v1599, 0.0036580483
    %v1601 = vmul.f32 %v1596, %v1600
    %v1602 = vadd.f32 %v1601, 0.05243302
    %v1603 = vmul.f32 %v1596, %v1602
    %v1604 = vadd.f32 %v1603, 0.18741608
    %v1605 = vmul.f32 %v1596, %v1604
    %v1606 = vadd.f32 %v1605, 1.1283791
    %v1607 = vmul.f32 %v1392, %v1606
    %v1608 = vmul.f32 %v1596, 3.8918573e-05
    %v1609 = vadd.f32 %v1608, 0.001143296
    %v1610 = vmul.f32 %v1596, %v1609
    %v1611 = vadd.f32 %v1610, 0.014752088
    %v1612 = vmul.f32 %v1596, %v1611
    %v1613 = vadd.f32 %v1612, 0.112945676
    %v1614 = vmul.f32 %v1596, %v1613
    %v1615 = vadd.f32 %v1614, 0.4994258
    %v1616 = vmul.f32 %v1596, %v1615
    %v1617 = vadd.f32 %v1616, 1.0
    %v1618 = vrcp.pop %v1617
    %v1619 = vmul.f32 %v1617, %v1618
    %v1620 = vsub.f32 1.0, %v1619
    %v1621 = vmul.f32 %v1618, %v1620
    %v1622 = vadd.f32 %v1618, %v1621
    %vm1623 = vweird.f32 %v1617
    %vm1624 = vweird.f32 %v1618
    %vm1625 = vmor %vm1623, %vm1624
    %v1626 = vsel %vm1625, %v1618, %v1622
    %v1627 = vand.u32 2147483647, %v1617
    %vm1628 = vcmp.eq.f32.partialorder %v1627, 8.507059e+37
    %v1629 = vand.u32 %v1617, 2147483648
    %v1630 = vor.u32 1.1754944e-38, %v1629
    %v1631 = vsel %vm1628, %v1630, %v1626
    %v1632 = vmul.f32 %v1607, %v1631
    %v1633 = vmin.f32 %v1632, 1.0
    %v1634 = vmax.f32 %v1633, -1.0
    %v1635 = vmul.f32 %v1393, %v1393
    %v1636 = vmin.f32 16.0, %v1635
    %v1637 = vmul.f32 %v1636, 2.1237322e-06
    %v1638 = vadd.f32 %v1637, 0.00028619796
    %v1639 = vmul.f32 %v1636, %v1638
    %v1640 = vadd.f32 %v1639, 0.0036580483
    %v1641 = vmul.f32 %v1636, %v1640
    %v1642 = vadd.f32 %v1641, 0.05243302
    %v1643 = vmul.f32 %v1636, %v1642
    %v1644 = vadd.f32 %v1643, 0.18741608
    %v1645 = vmul.f32 %v1636, %v1644
    %v1646 = vadd.f32 %v1645, 1.1283791
    %v1647 = vmul.f32 %v1393, %v1646
    %v1648 = vmul.f32 %v1636, 3.8918573e-05
    %v1649 = vadd.f32 %v1648, 0.001143296
    %v1650 = vmul.f32 %v1636, %v1649
    %v1651 = vadd.f32 %v1650, 0.014752088
    %v1652 = vmul.f32 %v1636, %v1651
    %v1653 = vadd.f32 %v1652, 0.112945676
    %v1654 = vmul.f32 %v1636, %v1653
    %v1655 = vadd.f32 %v1654, 0.4994258
    %v1656 = vmul.f32 %v1636, %v1655
    %v1657 = vadd.f32 %v1656, 1.0
    %v1658 = vrcp.pop %v1657
    %v1659 = vmul.f32 %v1657, %v1658
    %v1660 = vsub.f32 1.0, %v1659
    %v1661 = vmul.f32 %v1658, %v1660
    %v1662 = vadd.f32 %v1658, %v1661
    %vm1663 = vweird.f32 %v1657
    %vm1664 = vweird.f32 %v1658
    %vm1665 = vmor %vm1663, %vm1664
    %v1666 = vsel %vm1665, %v1658, %v1662
    %v1667 = vand.u32 2147483647, %v1657
    %vm1668 = vcmp.eq.f32.partialorder %v1667, 8.507059e+37
    %v1669 = vand.u32 %v1657, 2147483648
    %v1670 = vor.u32 1.1754944e-38, %v1669
    %v1671 = vsel %vm1668, %v1670, %v1666
    %v1672 = vmul.f32 %v1647, %v1671
    %v1673 = vmin.f32 %v1672, 1.0
    %v1674 = vmax.f32 %v1673, -1.0
    %v1675 = vmul.f32 %v1394, %v1394
    %v1676 = vmin.f32 16.0, %v1675
    %v1677 = vmul.f32 %v1676, 2.1237322e-06
    %v1678 = vadd.f32 %v1677, 0.00028619796
    %v1679 = vmul.f32 %v1676, %v1678
    %v1680 = vadd.f32 %v1679, 0.0036580483
    %v1681 = vmul.f32 %v1676, %v1680
    %v1682 = vadd.f32 %v1681, 0.05243302
    %v1683 = vmul.f32 %v1676, %v1682
    %v1684 = vadd.f32 %v1683, 0.18741608
    %v1685 = vmul.f32 %v1676, %v1684
    %v1686 = vadd.f32 %v1685, 1.1283791
    %v1687 = vmul.f32 %v1394, %v1686
    %v1688 = vmul.f32 %v1676, 3.8918573e-05
    %v1689 = vadd.f32 %v1688, 0.001143296
    %v1690 = vmul.f32 %v1676, %v1689
    %v1691 = vadd.f32 %v1690, 0.014752088
    %v1692 = vmul.f32 %v1676, %v1691
    %v1693 = vadd.f32 %v1692, 0.112945676
    %v1694 = vmul.f32 %v1676, %v1693
    %v1695 = vadd.f32 %v1694, 0.4994258
    %v1696 = vmul.f32 %v1676, %v1695
    %v1697 = vadd.f32 %v1696, 1.0
    %v1698 = vrcp.pop %v1697
    %v1699 = vmul.f32 %v1697, %v1698
    %v1700 = vsub.f32 1.0, %v1699
    %v1701 = vmul.f32 %v1698, %v1700
    %v1702 = vadd.f32 %v1698, %v1701
    %vm1703 = vweird.f32 %v1697
    %vm1704 = vweird.f32 %v1698
    %vm1705 = vmor %vm1703, %vm1704
    %v1706 = vsel %vm1705, %v1698, %v1702
    %v1707 = vand.u32 2147483647, %v1697
    %vm1708 = vcmp.eq.f32.partialorder %v1707, 8.507059e+37
    %v1709 = vand.u32 %v1697, 2147483648
    %v1710 = vor.u32 1.1754944e-38, %v1709
    %v1711 = vsel %vm1708, %v1710, %v1706
    %v1712 = vmul.f32 %v1687, %v1711
    %v1713 = vmin.f32 %v1712, 1.0
    %v1714 = vmax.f32 %v1713, -1.0
    %v1715 = vadd.f32 %v1434, 1.0
    %v1716 = vadd.f32 %v1474, 1.0
    %v1717 = vadd.f32 %v1514, 1.0
    %v1718 = vadd.f32 %v1554, 1.0
    %v1719 = vadd.f32 %v1594, 1.0
    %v1720 = vadd.f32 %v1634, 1.0
    %v1721 = vadd.f32 %v1674, 1.0
    %v1722 = vadd.f32 %v1714, 1.0
    %v1723 = vmul.f32 %v1379, %v1715
    %v1724 = vmul.f32 %v1380, %v1716
    %v1725 = vmul.f32 %v1381, %v1717
    %v1726 = vmul.f32 %v1382, %v1718
    %v1727 = vmul.f32 %v1383, %v1719
    %v1728 = vmul.f32 %v1384, %v1720
    %v1729 = vmul.f32 %v1385, %v1721
    %v1730 = vmul.f32 %v1386, %v1722
    %v1731 = vld [vmem:[%s2] sm:$0xff]
    %v1732 = vld [vmem:[%s2 + $0x8] sm:$0xff]
    %v1733 = vld [vmem:[%s2 + $0x10] sm:$0xff]
    %v1734 = vld [vmem:[%s2 + $0x18] sm:$0xff]
    %s1735 = scalar_lea.vmem %s4, 32
    %v1736 = vld [vmem:[%s1735] sm:$0xff]
    %v1737 = vld [vmem:[%s1735 + $0x8] sm:$0xff]
    %v1738 = vld [vmem:[%s1735 + $0x10] sm:$0xff]
    %v1739 = vld [vmem:[%s1735 + $0x18] sm:$0xff]
    %1741 = vset.pattern.permute.xlu0 0
    %1742 = vperm.xlu0 %1741, %v1736
    %v1743 = vpop.permute.xlu0 %1742
    %1746 = vset.pattern.permute.xlu0 0
    %1747 = vperm.xlu0 %1746, %v1737
    %v1748 = vpop.permute.xlu0 %1747
    %1751 = vset.pattern.permute.xlu0 0
    %1752 = vperm.xlu0 %1751, %v1738
    %v1753 = vpop.permute.xlu0 %1752
    %1756 = vset.pattern.permute.xlu0 0
    %1757 = vperm.xlu0 %1756, %v1739
    %v1758 = vpop.permute.xlu0 %1757
    %vm1760 = vcmask 261120
    %v1762 = vsel %vm1760, %v1731, 0
    %v1765 = vsel %vm1760, %v1732, 0
    %v1768 = vsel %vm1760, %v1733, 0
    %v1771 = vsel %vm1760, %v1734, 0
    %1773 = vmatpush.msra.mxu0 0.0
    %1774 = vmatpush.msra.mxu0 0.0
    %1775 = vmatpush.msra.mxu0 0.0
    %1776 = vmatpush.msra.mxu0 0.0
    %1777 = vmatpush.msra.mxu0 0.0
    %1778 = vmatpush.msra.mxu0 0.0
    %1779 = vmatpush.msra.mxu0 0.0
    %1780 = vmatpush.msra.mxu0 0.0
    %1781 = vmatpush.msra.mxu0 0.0
    %1782 = vmatpush.msra.mxu0 0.0
    %1783 = vmatpush.msra.mxu0 0.0
    %1784 = vmatpush.msra.mxu0 0.0
    %1785 = vmatpush.msra.mxu0 %v1729
    %1786 = vmatpush.msra.mxu0 %v1727
    %1787 = vmatpush.msra.mxu0 %v1725
    %1788 = vmatpush.msra.mxu0 %v1723
    %1789 = vmatmul.f32.gmra.mxu0 %v1762
    %v1790 = vpop.f32.mrf.mxu0
    %v1791 = vadd.f32 %v1743, %v1790
    %1792 = vmatmul.f32.gmra.mxu0 %v1765
    %v1793 = vpop.f32.mrf.mxu0
    %v1794 = vadd.f32 %v1748, %v1793
    %1795 = vmatmul.f32.gmra.mxu0 %v1768
    %v1796 = vpop.f32.mrf.mxu0
    %v1797 = vadd.f32 %v1753, %v1796
    %1798 = vmatmul.f32.gmra.mxu0 %v1771
    %v1799 = vpop.f32.mrf.mxu0
    %v1800 = vadd.f32 %v1758, %v1799
    %1801 = vdwg.mxu0
    %1802 = vmatpush.msra.mxu0 0.0
    %1803 = vmatpush.msra.mxu0 0.0
    %1804 = vmatpush.msra.mxu0 0.0
    %1805 = vmatpush.msra.mxu0 0.0
    %1806 = vmatpush.msra.mxu0 0.0
    %1807 = vmatpush.msra.mxu0 0.0
    %1808 = vmatpush.msra.mxu0 0.0
    %1809 = vmatpush.msra.mxu0 0.0
    %1810 = vmatpush.msra.mxu0 0.0
    %1811 = vmatpush.msra.mxu0 0.0
    %1812 = vmatpush.msra.mxu0 0.0
    %1813 = vmatpush.msra.mxu0 0.0
    %1814 = vmatpush.msra.mxu0 %v1730
    %1815 = vmatpush.msra.mxu0 %v1728
    %1816 = vmatpush.msra.mxu0 %v1726
    %1817 = vmatpush.msra.mxu0 %v1724
    %1818 = vmatmul.f32.gmra.mxu0 %v1762
    %v1819 = vpop.f32.mrf.mxu0
    %v1820 = vadd.f32 %v1743, %v1819
    %1821 = vmatmul.f32.gmra.mxu0 %v1765
    %v1822 = vpop.f32.mrf.mxu0
    %v1823 = vadd.f32 %v1748, %v1822
    %1824 = vmatmul.f32.gmra.mxu0 %v1768
    %v1825 = vpop.f32.mrf.mxu0
    %v1826 = vadd.f32 %v1753, %v1825
    %1827 = vmatmul.f32.gmra.mxu0 %v1771
    %v1828 = vpop.f32.mrf.mxu0
    %v1829 = vadd.f32 %v1758, %v1828
    %1830 = vdwg.mxu0
    %1831 = vmatpush.msra.mxu0 1.0
    %1832 = vmatpush.msra.mxu0 1.0
    %1833 = vmatpush.msra.mxu0 1.0
    %1834 = vmatpush.msra.mxu0 1.0
    %1835 = vmatpush.msra.mxu0 1.0
    %1836 = vmatpush.msra.mxu0 1.0
    %1837 = vmatpush.msra.mxu0 1.0
    %1838 = vmatpush.msra.mxu0 1.0
    %1839 = vmatpush.msra.mxu0 1.0
    %1840 = vmatpush.msra.mxu0 1.0
    %1841 = vmatpush.msra.mxu0 1.0
    %1842 = vmatpush.msra.mxu0 1.0
    %1843 = vmatpush.msra.mxu0 1.0
    %1844 = vmatpush.msra.mxu0 1.0
    %1845 = vmatpush.msra.mxu0 1.0
    %1846 = vmatpush.msra.mxu0 1.0
    %1847 = vmatmul.f32.gmra.mxu0 %v1791
    %v1848 = vpop.f32.mrf.mxu0
    %v1849 = vadd.f32 0.0, %v1848
    %1850 = vmatmul.f32.gmra.mxu0 %v1794
    %v1851 = vpop.f32.mrf.mxu0
    %v1852 = vadd.f32 0.0, %v1851
    %1853 = vmatmul.f32.gmra.mxu0 %v1797
    %v1854 = vpop.f32.mrf.mxu0
    %v1855 = vadd.f32 0.0, %v1854
    %1856 = vmatmul.f32.gmra.mxu0 %v1800
    %v1857 = vpop.f32.mrf.mxu0
    %v1858 = vadd.f32 0.0, %v1857
    %1859 = vdwg.mxu0
    %1860 = vmatpush.msra.mxu0 1.0
    %1861 = vmatpush.msra.mxu0 1.0
    %1862 = vmatpush.msra.mxu0 1.0
    %1863 = vmatpush.msra.mxu0 1.0
    %1864 = vmatpush.msra.mxu0 1.0
    %1865 = vmatpush.msra.mxu0 1.0
    %1866 = vmatpush.msra.mxu0 1.0
    %1867 = vmatpush.msra.mxu0 1.0
    %1868 = vmatpush.msra.mxu0 1.0
    %1869 = vmatpush.msra.mxu0 1.0
    %1870 = vmatpush.msra.mxu0 1.0
    %1871 = vmatpush.msra.mxu0 1.0
    %1872 = vmatpush.msra.mxu0 1.0
    %1873 = vmatpush.msra.mxu0 1.0
    %1874 = vmatpush.msra.mxu0 1.0
    %1875 = vmatpush.msra.mxu0 1.0
    %1876 = vmatmul.f32.gmra.mxu0 %v1820
    %v1877 = vpop.f32.mrf.mxu0
    %v1878 = vadd.f32 %v1849, %v1877
    %1879 = vmatmul.f32.gmra.mxu0 %v1823
    %v1880 = vpop.f32.mrf.mxu0
    %v1881 = vadd.f32 %v1852, %v1880
    %1882 = vmatmul.f32.gmra.mxu0 %v1826
    %v1883 = vpop.f32.mrf.mxu0
    %v1884 = vadd.f32 %v1855, %v1883
    %1885 = vmatmul.f32.gmra.mxu0 %v1829
    %v1886 = vpop.f32.mrf.mxu0
    %v1887 = vadd.f32 %v1858, %v1886
    %1888 = vdwg.mxu0
    %v1889 = vmul.f32 %v1878, 0.00390625
    %v1890 = vmul.f32 %v1881, 0.00390625
    %v1891 = vmul.f32 %v1884, 0.00390625
    %v1892 = vmul.f32 %v1887, 0.00390625
    %1894 = vset.pattern.permute.xlu0 0
    %1895 = vperm.xlu0 %1894, %v1889
    %v1896 = vpop.permute.xlu0 %1895
    %1899 = vset.pattern.permute.xlu0 0
    %1900 = vperm.xlu0 %1899, %v1890
    %v1901 = vpop.permute.xlu0 %1900
    %1904 = vset.pattern.permute.xlu0 0
    %1905 = vperm.xlu0 %1904, %v1891
    %v1906 = vpop.permute.xlu0 %1905
    %1909 = vset.pattern.permute.xlu0 0
    %1910 = vperm.xlu0 %1909, %v1892
    %v1911 = vpop.permute.xlu0 %1910
    %v1913 = vsub.f32 %v1791, %v1896
    %v1914 = vsub.f32 %v1820, %v1896
    %v1915 = vsub.f32 %v1794, %v1901
    %v1916 = vsub.f32 %v1823, %v1901
    %v1917 = vsub.f32 %v1797, %v1906
    %v1918 = vsub.f32 %v1826, %v1906
    %v1919 = vsub.f32 %v1800, %v1911
    %v1920 = vsub.f32 %v1829, %v1911
    %v1921 = vmul.f32 %v1913, %v1913
    %v1922 = vmul.f32 %v1914, %v1914
    %v1923 = vmul.f32 %v1915, %v1915
    %v1924 = vmul.f32 %v1916, %v1916
    %v1925 = vmul.f32 %v1917, %v1917
    %v1926 = vmul.f32 %v1918, %v1918
    %v1927 = vmul.f32 %v1919, %v1919
    %v1928 = vmul.f32 %v1920, %v1920
    %1929 = vmatpush.msra.mxu0 1.0
    %1930 = vmatpush.msra.mxu0 1.0
    %1931 = vmatpush.msra.mxu0 1.0
    %1932 = vmatpush.msra.mxu0 1.0
    %1933 = vmatpush.msra.mxu0 1.0
    %1934 = vmatpush.msra.mxu0 1.0
    %1935 = vmatpush.msra.mxu0 1.0
    %1936 = vmatpush.msra.mxu0 1.0
    %1937 = vmatpush.msra.mxu0 1.0
    %1938 = vmatpush.msra.mxu0 1.0
    %1939 = vmatpush.msra.mxu0 1.0
    %1940 = vmatpush.msra.mxu0 1.0
    %1941 = vmatpush.msra.mxu0 1.0
    %1942 = vmatpush.msra.mxu0 1.0
    %1943 = vmatpush.msra.mxu0 1.0
    %1944 = vmatpush.msra.mxu0 1.0
    %1945 = vmatmul.f32.gmra.mxu0 %v1921
    %v1946 = vpop.f32.mrf.mxu0
    %v1947 = vadd.f32 0.0, %v1946
    %1948 = vmatmul.f32.gmra.mxu0 %v1923
    %v1949 = vpop.f32.mrf.mxu0
    %v1950 = vadd.f32 0.0, %v1949
    %1951 = vmatmul.f32.gmra.mxu0 %v1925
    %v1952 = vpop.f32.mrf.mxu0
    %v1953 = vadd.f32 0.0, %v1952
    %1954 = vmatmul.f32.gmra.mxu0 %v1927
    %v1955 = vpop.f32.mrf.mxu0
    %v1956 = vadd.f32 0.0, %v1955
    %1957 = vdwg.mxu0
    %1958 = vmatpush.msra.mxu0 1.0
    %1959 = vmatpush.msra.mxu0 1.0
    %1960 = vmatpush.msra.mxu0 1.0
    %1961 = vmatpush.msra.mxu0 1.0
    %1962 = vmatpush.msra.mxu0 1.0
    %1963 = vmatpush.msra.mxu0 1.0
    %1964 = vmatpush.msra.mxu0 1.0
    %1965 = vmatpush.msra.mxu0 1.0
    %1966 = vmatpush.msra.mxu0 1.0
    %1967 = vmatpush.msra.mxu0 1.0
    %1968 = vmatpush.msra.mxu0 1.0
    %1969 = vmatpush.msra.mxu0 1.0
    %1970 = vmatpush.msra.mxu0 1.0
    %1971 = vmatpush.msra.mxu0 1.0
    %1972 = vmatpush.msra.mxu0 1.0
    %1973 = vmatpush.msra.mxu0 1.0
    %1974 = vmatmul.f32.gmra.mxu0 %v1922
    %v1975 = vpop.f32.mrf.mxu0
    %v1976 = vadd.f32 %v1947, %v1975
    %1977 = vmatmul.f32.gmra.mxu0 %v1924
    %v1978 = vpop.f32.mrf.mxu0
    %v1979 = vadd.f32 %v1950, %v1978
    %1980 = vmatmul.f32.gmra.mxu0 %v1926
    %v1981 = vpop.f32.mrf.mxu0
    %v1982 = vadd.f32 %v1953, %v1981
    %1983 = vmatmul.f32.gmra.mxu0 %v1928
    %v1984 = vpop.f32.mrf.mxu0
    %v1985 = vadd.f32 %v1956, %v1984
    %1986 = vdwg.mxu0
    %v1987 = vmul.f32 %v1976, 0.00390625
    %v1988 = vmul.f32 %v1979, 0.00390625
    %v1989 = vmul.f32 %v1982, 0.00390625
    %v1990 = vmul.f32 %v1985, 0.00390625
    %v1991 = vadd.f32 %v1987, 1e-05
    %v1992 = vadd.f32 %v1988, 1e-05
    %v1993 = vadd.f32 %v1989, 1e-05
    %v1994 = vadd.f32 %v1990, 1e-05
    %v1995 = vrsqrt.pop %v1991
    %v1996 = vmul.f32 %v1995, %v1991
    %v1997 = vmul.f32 %v1996, %v1995
    %v1998 = vmul.f32 0.5, %v1997
    %v1999 = vsub.f32 1.5, %v1998
    %v2000 = vmul.f32 %v1995, %v1999
    %vm2001 = vweird.f32 %v1991
    %vm2002 = vweird.f32 %v1995
    %vm2003 = vmor %vm2001, %vm2002
    %v2004 = vsel %vm2003, %v1995, %v2000
    %v2005 = vrsqrt.pop %v1992
    %v2006 = vmul.f32 %v2005, %v1992
    %v2007 = vmul.f32 %v2006, %v2005
    %v2008 = vmul.f32 0.5, %v2007
    %v2009 = vsub.f32 1.5, %v2008
    %v2010 = vmul.f32 %v2005, %v2009
    %vm2011 = vweird.f32 %v1992
    %vm2012 = vweird.f32 %v2005
    %vm2013 = vmor %vm2011, %vm2012
    %v2014 = vsel %vm2013, %v2005, %v2010
    %v2015 = vrsqrt.pop %v1993
    %v2016 = vmul.f32 %v2015, %v1993
    %v2017 = vmul.f32 %v2016, %v2015
    %v2018 = vmul.f32 0.5, %v2017
    %v2019 = vsub.f32 1.5, %v2018
    %v2020 = vmul.f32 %v2015, %v2019
    %vm2021 = vweird.f32 %v1993
    %vm2022 = vweird.f32 %v2015
    %vm2023 = vmor %vm2021, %vm2022
    %v2024 = vsel %vm2023, %v2015, %v2020
    %v2025 = vrsqrt.pop %v1994
    %v2026 = vmul.f32 %v2025, %v1994
    %v2027 = vmul.f32 %v2026, %v2025
    %v2028 = vmul.f32 0.5, %v2027
    %v2029 = vsub.f32 1.5, %v2028
    %v2030 = vmul.f32 %v2025, %v2029
    %vm2031 = vweird.f32 %v1994
    %vm2032 = vweird.f32 %v2025
    %vm2033 = vmor %vm2031, %vm2032
    %v2034 = vsel %vm2033, %v2025, %v2030
    %s2035 = scalar_lea.vmem %s4, 288
    %v2036 = vld [vmem:[%s2035] sm:$0xff]
    %v2037 = vld [vmem:[%s2035 + $0x8] sm:$0xff]
    %v2038 = vld [vmem:[%s2035 + $0x10] sm:$0xff]
    %v2039 = vld [vmem:[%s2035 + $0x18] sm:$0xff]
    %v2040 = vmul.f32 %v2004, %v2036
    %v2041 = vmul.f32 %v2014, %v2037
    %v2042 = vmul.f32 %v2024, %v2038
    %v2043 = vmul.f32 %v2034, %v2039
    %2045 = vset.pattern.permute.xlu0 0
    %2046 = vperm.xlu0 %2045, %v2040
    %v2047 = vpop.permute.xlu0 %2046
    %2050 = vset.pattern.permute.xlu0 0
    %2051 = vperm.xlu0 %2050, %v2041
    %v2052 = vpop.permute.xlu0 %2051
    %2055 = vset.pattern.permute.xlu0 0
    %2056 = vperm.xlu0 %2055, %v2042
    %v2057 = vpop.permute.xlu0 %2056
    %2060 = vset.pattern.permute.xlu0 0
    %2061 = vperm.xlu0 %2060, %v2043
    %v2062 = vpop.permute.xlu0 %2061
    %v2064 = vmul.f32 %v1913, %v2047
    %v2065 = vmul.f32 %v1914, %v2047
    %v2066 = vmul.f32 %v1915, %v2052
    %v2067 = vmul.f32 %v1916, %v2052
    %v2068 = vmul.f32 %v1917, %v2057
    %v2069 = vmul.f32 %v1918, %v2057
    %v2070 = vmul.f32 %v1919, %v2062
    %v2071 = vmul.f32 %v1920, %v2062
    %s2072 = scalar_lea.vmem %s4, 544
    %v2073 = vld [vmem:[%s2072] sm:$0xff]
    %v2074 = vld [vmem:[%s2072 + $0x8] sm:$0xff]
    %v2075 = vld [vmem:[%s2072 + $0x10] sm:$0xff]
    %v2076 = vld [vmem:[%s2072 + $0x18] sm:$0xff]
    %2078 = vset.pattern.permute.xlu0 0
    %2079 = vperm.xlu0 %2078, %v2073
    %v2080 = vpop.permute.xlu0 %2079
    %2083 = vset.pattern.permute.xlu0 0
    %2084 = vperm.xlu0 %2083, %v2074
    %v2085 = vpop.permute.xlu0 %2084
    %2088 = vset.pattern.permute.xlu0 0
    %2089 = vperm.xlu0 %2088, %v2075
    %v2090 = vpop.permute.xlu0 %2089
    %2093 = vset.pattern.permute.xlu0 0
    %2094 = vperm.xlu0 %2093, %v2076
    %v2095 = vpop.permute.xlu0 %2094
    %v2097 = vadd.f32 %v2064, %v2080
    %v2098 = vadd.f32 %v2065, %v2080
    %v2099 = vadd.f32 %v2066, %v2085
    %v2100 = vadd.f32 %v2067, %v2085
    %v2101 = vadd.f32 %v2068, %v2090
    %v2102 = vadd.f32 %v2069, %v2090
    %v2103 = vadd.f32 %v2070, %v2095
    %v2104 = vadd.f32 %v2071, %v2095
    %v2105 = vmul.f32 %v2097, 0.5
    %v2106 = vmul.f32 %v2098, 0.5
    %v2107 = vmul.f32 %v2099, 0.5
    %v2108 = vmul.f32 %v2100, 0.5
    %v2109 = vmul.f32 %v2101, 0.5
    %v2110 = vmul.f32 %v2102, 0.5
    %v2111 = vmul.f32 %v2103, 0.5
    %v2112 = vmul.f32 %v2104, 0.5
    %v2113 = vmul.f32 %v2097, 0.70710677
    %v2114 = vmul.f32 %v2098, 0.70710677
    %v2115 = vmul.f32 %v2099, 0.70710677
    %v2116 = vmul.f32 %v2100, 0.70710677
    %v2117 = vmul.f32 %v2101, 0.70710677
    %v2118 = vmul.f32 %v2102, 0.70710677
    %v2119 = vmul.f32 %v2103, 0.70710677
    %v2120 = vmul.f32 %v2104, 0.70710677
    %v2121 = vmul.f32 %v2113, %v2113
    %v2122 = vmin.f32 16.0, %v2121
    %v2123 = vmul.f32 %v2122, 2.1237322e-06
    %v2124 = vadd.f32 %v2123, 0.00028619796
    %v2125 = vmul.f32 %v2122, %v2124
    %v2126 = vadd.f32 %v2125, 0.0036580483
    %v2127 = vmul.f32 %v2122, %v2126
    %v2128 = vadd.f32 %v2127, 0.05243302
    %v2129 = vmul.f32 %v2122, %v2128
    %v2130 = vadd.f32 %v2129, 0.18741608
    %v2131 = vmul.f32 %v2122, %v2130
    %v2132 = vadd.f32 %v2131, 1.1283791
    %v2133 = vmul.f32 %v2113, %v2132
    %v2134 = vmul.f32 %v2122, 3.8918573e-05
    %v2135 = vadd.f32 %v2134, 0.001143296
    %v2136 = vmul.f32 %v2122, %v2135
    %v2137 = vadd.f32 %v2136, 0.014752088
    %v2138 = vmul.f32 %v2122, %v2137
    %v2139 = vadd.f32 %v2138, 0.112945676
    %v2140 = vmul.f32 %v2122, %v2139
    %v2141 = vadd.f32 %v2140, 0.4994258
    %v2142 = vmul.f32 %v2122, %v2141
    %v2143 = vadd.f32 %v2142, 1.0
    %v2144 = vrcp.pop %v2143
    %v2145 = vmul.f32 %v2143, %v2144
    %v2146 = vsub.f32 1.0, %v2145
    %v2147 = vmul.f32 %v2144, %v2146
    %v2148 = vadd.f32 %v2144, %v2147
    %vm2149 = vweird.f32 %v2143
    %vm2150 = vweird.f32 %v2144
    %vm2151 = vmor %vm2149, %vm2150
    %v2152 = vsel %vm2151, %v2144, %v2148
    %v2153 = vand.u32 2147483647, %v2143
    %vm2154 = vcmp.eq.f32.partialorder %v2153, 8.507059e+37
    %v2155 = vand.u32 %v2143, 2147483648
    %v2156 = vor.u32 1.1754944e-38, %v2155
    %v2157 = vsel %vm2154, %v2156, %v2152
    %v2158 = vmul.f32 %v2133, %v2157
    %v2159 = vmin.f32 %v2158, 1.0
    %v2160 = vmax.f32 %v2159, -1.0
    %v2161 = vmul.f32 %v2114, %v2114
    %v2162 = vmin.f32 16.0, %v2161
    %v2163 = vmul.f32 %v2162, 2.1237322e-06
    %v2164 = vadd.f32 %v2163, 0.00028619796
    %v2165 = vmul.f32 %v2162, %v2164
    %v2166 = vadd.f32 %v2165, 0.0036580483
    %v2167 = vmul.f32 %v2162, %v2166
    %v2168 = vadd.f32 %v2167, 0.05243302
    %v2169 = vmul.f32 %v2162, %v2168
    %v2170 = vadd.f32 %v2169, 0.18741608
    %v2171 = vmul.f32 %v2162, %v2170
    %v2172 = vadd.f32 %v2171, 1.1283791
    %v2173 = vmul.f32 %v2114, %v2172
    %v2174 = vmul.f32 %v2162, 3.8918573e-05
    %v2175 = vadd.f32 %v2174, 0.001143296
    %v2176 = vmul.f32 %v2162, %v2175
    %v2177 = vadd.f32 %v2176, 0.014752088
    %v2178 = vmul.f32 %v2162, %v2177
    %v2179 = vadd.f32 %v2178, 0.112945676
    %v2180 = vmul.f32 %v2162, %v2179
    %v2181 = vadd.f32 %v2180, 0.4994258
    %v2182 = vmul.f32 %v2162, %v2181
    %v2183 = vadd.f32 %v2182, 1.0
    %v2184 = vrcp.pop %v2183
    %v2185 = vmul.f32 %v2183, %v2184
    %v2186 = vsub.f32 1.0, %v2185
    %v2187 = vmul.f32 %v2184, %v2186
    %v2188 = vadd.f32 %v2184, %v2187
    %vm2189 = vweird.f32 %v2183
    %vm2190 = vweird.f32 %v2184
    %vm2191 = vmor %vm2189, %vm2190
    %v2192 = vsel %vm2191, %v2184, %v2188
    %v2193 = vand.u32 2147483647, %v2183
    %vm2194 = vcmp.eq.f32.partialorder %v2193, 8.507059e+37
    %v2195 = vand.u32 %v2183, 2147483648
    %v2196 = vor.u32 1.1754944e-38, %v2195
    %v2197 = vsel %vm2194, %v2196, %v2192
    %v2198 = vmul.f32 %v2173, %v2197
    %v2199 = vmin.f32 %v2198, 1.0
    %v2200 = vmax.f32 %v2199, -1.0
    %v2201 = vmul.f32 %v2115, %v2115
    %v2202 = vmin.f32 16.0, %v2201
    %v2203 = vmul.f32 %v2202, 2.1237322e-06
    %v2204 = vadd.f32 %v2203, 0.00028619796
    %v2205 = vmul.f32 %v2202, %v2204
    %v2206 = vadd.f32 %v2205, 0.0036580483
    %v2207 = vmul.f32 %v2202, %v2206
    %v2208 = vadd.f32 %v2207, 0.05243302
    %v2209 = vmul.f32 %v2202, %v2208
    %v2210 = vadd.f32 %v2209, 0.18741608
    %v2211 = vmul.f32 %v2202, %v2210
    %v2212 = vadd.f32 %v2211, 1.1283791
    %v2213 = vmul.f32 %v2115, %v2212
    %v2214 = vmul.f32 %v2202, 3.8918573e-05
    %v2215 = vadd.f32 %v2214, 0.001143296
    %v2216 = vmul.f32 %v2202, %v2215
    %v2217 = vadd.f32 %v2216, 0.014752088
    %v2218 = vmul.f32 %v2202, %v2217
    %v2219 = vadd.f32 %v2218, 0.112945676
    %v2220 = vmul.f32 %v2202, %v2219
    %v2221 = vadd.f32 %v2220, 0.4994258
    %v2222 = vmul.f32 %v2202, %v2221
    %v2223 = vadd.f32 %v2222, 1.0
    %v2224 = vrcp.pop %v2223
    %v2225 = vmul.f32 %v2223, %v2224
    %v2226 = vsub.f32 1.0, %v2225
    %v2227 = vmul.f32 %v2224, %v2226
    %v2228 = vadd.f32 %v2224, %v2227
    %vm2229 = vweird.f32 %v2223
    %vm2230 = vweird.f32 %v2224
    %vm2231 = vmor %vm2229, %vm2230
    %v2232 = vsel %vm2231, %v2224, %v2228
    %v2233 = vand.u32 2147483647, %v2223
    %vm2234 = vcmp.eq.f32.partialorder %v2233, 8.507059e+37
    %v2235 = vand.u32 %v2223, 2147483648
    %v2236 = vor.u32 1.1754944e-38, %v2235
    %v2237 = vsel %vm2234, %v2236, %v2232
    %v2238 = vmul.f32 %v2213, %v2237
    %v2239 = vmin.f32 %v2238, 1.0
    %v2240 = vmax.f32 %v2239, -1.0
    %v2241 = vmul.f32 %v2116, %v2116
    %v2242 = vmin.f32 16.0, %v2241
    %v2243 = vmul.f32 %v2242, 2.1237322e-06
    %v2244 = vadd.f32 %v2243, 0.00028619796
    %v2245 = vmul.f32 %v2242, %v2244
    %v2246 = vadd.f32 %v2245, 0.0036580483
    %v2247 = vmul.f32 %v2242, %v2246
    %v2248 = vadd.f32 %v2247, 0.05243302
    %v2249 = vmul.f32 %v2242, %v2248
    %v2250 = vadd.f32 %v2249, 0.18741608
    %v2251 = vmul.f32 %v2242, %v2250
    %v2252 = vadd.f32 %v2251, 1.1283791
    %v2253 = vmul.f32 %v2116, %v2252
    %v2254 = vmul.f32 %v2242, 3.8918573e-05
    %v2255 = vadd.f32 %v2254, 0.001143296
    %v2256 = vmul.f32 %v2242, %v2255
    %v2257 = vadd.f32 %v2256, 0.014752088
    %v2258 = vmul.f32 %v2242, %v2257
    %v2259 = vadd.f32 %v2258, 0.112945676
    %v2260 = vmul.f32 %v2242, %v2259
    %v2261 = vadd.f32 %v2260, 0.4994258
    %v2262 = vmul.f32 %v2242, %v2261
    %v2263 = vadd.f32 %v2262, 1.0
    %v2264 = vrcp.pop %v2263
    %v2265 = vmul.f32 %v2263, %v2264
    %v2266 = vsub.f32 1.0, %v2265
    %v2267 = vmul.f32 %v2264, %v2266
    %v2268 = vadd.f32 %v2264, %v2267
    %vm2269 = vweird.f32 %v2263
    %vm2270 = vweird.f32 %v2264
    %vm2271 = vmor %vm2269, %vm2270
    %v2272 = vsel %vm2271, %v2264, %v2268
    %v2273 = vand.u32 2147483647, %v2263
    %vm2274 = vcmp.eq.f32.partialorder %v2273, 8.507059e+37
    %v2275 = vand.u32 %v2263, 2147483648
    %v2276 = vor.u32 1.1754944e-38, %v2275
    %v2277 = vsel %vm2274, %v2276, %v2272
    %v2278 = vmul.f32 %v2253, %v2277
    %v2279 = vmin.f32 %v2278, 1.0
    %v2280 = vmax.f32 %v2279, -1.0
    %v2281 = vmul.f32 %v2117, %v2117
    %v2282 = vmin.f32 16.0, %v2281
    %v2283 = vmul.f32 %v2282, 2.1237322e-06
    %v2284 = vadd.f32 %v2283, 0.00028619796
    %v2285 = vmul.f32 %v2282, %v2284
    %v2286 = vadd.f32 %v2285, 0.0036580483
    %v2287 = vmul.f32 %v2282, %v2286
    %v2288 = vadd.f32 %v2287, 0.05243302
    %v2289 = vmul.f32 %v2282, %v2288
    %v2290 = vadd.f32 %v2289, 0.18741608
    %v2291 = vmul.f32 %v2282, %v2290
    %v2292 = vadd.f32 %v2291, 1.1283791
    %v2293 = vmul.f32 %v2117, %v2292
    %v2294 = vmul.f32 %v2282, 3.8918573e-05
    %v2295 = vadd.f32 %v2294, 0.001143296
    %v2296 = vmul.f32 %v2282, %v2295
    %v2297 = vadd.f32 %v2296, 0.014752088
    %v2298 = vmul.f32 %v2282, %v2297
    %v2299 = vadd.f32 %v2298, 0.112945676
    %v2300 = vmul.f32 %v2282, %v2299
    %v2301 = vadd.f32 %v2300, 0.4994258
    %v2302 = vmul.f32 %v2282, %v2301
    %v2303 = vadd.f32 %v2302, 1.0
    %v2304 = vrcp.pop %v2303
    %v2305 = vmul.f32 %v2303, %v2304
    %v2306 = vsub.f32 1.0, %v2305
    %v2307 = vmul.f32 %v2304, %v2306
    %v2308 = vadd.f32 %v2304, %v2307
    %vm2309 = vweird.f32 %v2303
    %vm2310 = vweird.f32 %v2304
    %vm2311 = vmor %vm2309, %vm2310
    %v2312 = vsel %vm2311, %v2304, %v2308
    %v2313 = vand.u32 2147483647, %v2303
    %vm2314 = vcmp.eq.f32.partialorder %v2313, 8.507059e+37
    %v2315 = vand.u32 %v2303, 2147483648
    %v2316 = vor.u32 1.1754944e-38, %v2315
    %v2317 = vsel %vm2314, %v2316, %v2312
    %v2318 = vmul.f32 %v2293, %v2317
    %v2319 = vmin.f32 %v2318, 1.0
    %v2320 = vmax.f32 %v2319, -1.0
    %v2321 = vmul.f32 %v2118, %v2118
    %v2322 = vmin.f32 16.0, %v2321
    %v2323 = vmul.f32 %v2322, 2.1237322e-06
    %v2324 = vadd.f32 %v2323, 0.00028619796
    %v2325 = vmul.f32 %v2322, %v2324
    %v2326 = vadd.f32 %v2325, 0.0036580483
    %v2327 = vmul.f32 %v2322, %v2326
    %v2328 = vadd.f32 %v2327, 0.05243302
    %v2329 = vmul.f32 %v2322, %v2328
    %v2330 = vadd.f32 %v2329, 0.18741608
    %v2331 = vmul.f32 %v2322, %v2330
    %v2332 = vadd.f32 %v2331, 1.1283791
    %v2333 = vmul.f32 %v2118, %v2332
    %v2334 = vmul.f32 %v2322, 3.8918573e-05
    %v2335 = vadd.f32 %v2334, 0.001143296
    %v2336 = vmul.f32 %v2322, %v2335
    %v2337 = vadd.f32 %v2336, 0.014752088
    %v2338 = vmul.f32 %v2322, %v2337
    %v2339 = vadd.f32 %v2338, 0.112945676
    %v2340 = vmul.f32 %v2322, %v2339
    %v2341 = vadd.f32 %v2340, 0.4994258
    %v2342 = vmul.f32 %v2322, %v2341
    %v2343 = vadd.f32 %v2342, 1.0
    %v2344 = vrcp.pop %v2343
    %v2345 = vmul.f32 %v2343, %v2344
    %v2346 = vsub.f32 1.0, %v2345
    %v2347 = vmul.f32 %v2344, %v2346
    %v2348 = vadd.f32 %v2344, %v2347
    %vm2349 = vweird.f32 %v2343
    %vm2350 = vweird.f32 %v2344
    %vm2351 = vmor %vm2349, %vm2350
    %v2352 = vsel %vm2351, %v2344, %v2348
    %v2353 = vand.u32 2147483647, %v2343
    %vm2354 = vcmp.eq.f32.partialorder %v2353, 8.507059e+37
    %v2355 = vand.u32 %v2343, 2147483648
    %v2356 = vor.u32 1.1754944e-38, %v2355
    %v2357 = vsel %vm2354, %v2356, %v2352
    %v2358 = vmul.f32 %v2333, %v2357
    %v2359 = vmin.f32 %v2358, 1.0
    %v2360 = vmax.f32 %v2359, -1.0
    %v2361 = vmul.f32 %v2119, %v2119
    %v2362 = vmin.f32 16.0, %v2361
    %v2363 = vmul.f32 %v2362, 2.1237322e-06
    %v2364 = vadd.f32 %v2363, 0.00028619796
    %v2365 = vmul.f32 %v2362, %v2364
    %v2366 = vadd.f32 %v2365, 0.0036580483
    %v2367 = vmul.f32 %v2362, %v2366
    %v2368 = vadd.f32 %v2367, 0.05243302
    %v2369 = vmul.f32 %v2362, %v2368
    %v2370 = vadd.f32 %v2369, 0.18741608
    %v2371 = vmul.f32 %v2362, %v2370
    %v2372 = vadd.f32 %v2371, 1.1283791
    %v2373 = vmul.f32 %v2119, %v2372
    %v2374 = vmul.f32 %v2362, 3.8918573e-05
    %v2375 = vadd.f32 %v2374, 0.001143296
    %v2376 = vmul.f32 %v2362, %v2375
    %v2377 = vadd.f32 %v2376, 0.014752088
    %v2378 = vmul.f32 %v2362, %v2377
    %v2379 = vadd.f32 %v2378, 0.112945676
    %v2380 = vmul.f32 %v2362, %v2379
    %v2381 = vadd.f32 %v2380, 0.4994258
    %v2382 = vmul.f32 %v2362, %v2381
    %v2383 = vadd.f32 %v2382, 1.0
    %v2384 = vrcp.pop %v2383
    %v2385 = vmul.f32 %v2383, %v2384
    %v2386 = vsub.f32 1.0, %v2385
    %v2387 = vmul.f32 %v2384, %v2386
    %v2388 = vadd.f32 %v2384, %v2387
    %vm2389 = vweird.f32 %v2383
    %vm2390 = vweird.f32 %v2384
    %vm2391 = vmor %vm2389, %vm2390
    %v2392 = vsel %vm2391, %v2384, %v2388
    %v2393 = vand.u32 2147483647, %v2383
    %vm2394 = vcmp.eq.f32.partialorder %v2393, 8.507059e+37
    %v2395 = vand.u32 %v2383, 2147483648
    %v2396 = vor.u32 1.1754944e-38, %v2395
    %v2397 = vsel %vm2394, %v2396, %v2392
    %v2398 = vmul.f32 %v2373, %v2397
    %v2399 = vmin.f32 %v2398, 1.0
    %v2400 = vmax.f32 %v2399, -1.0
    %v2401 = vmul.f32 %v2120, %v2120
    %v2402 = vmin.f32 16.0, %v2401
    %v2403 = vmul.f32 %v2402, 2.1237322e-06
    %v2404 = vadd.f32 %v2403, 0.00028619796
    %v2405 = vmul.f32 %v2402, %v2404
    %v2406 = vadd.f32 %v2405, 0.0036580483
    %v2407 = vmul.f32 %v2402, %v2406
    %v2408 = vadd.f32 %v2407, 0.05243302
    %v2409 = vmul.f32 %v2402, %v2408
    %v2410 = vadd.f32 %v2409, 0.18741608
    %v2411 = vmul.f32 %v2402, %v2410
    %v2412 = vadd.f32 %v2411, 1.1283791
    %v2413 = vmul.f32 %v2120, %v2412
    %v2414 = vmul.f32 %v2402, 3.8918573e-05
    %v2415 = vadd.f32 %v2414, 0.001143296
    %v2416 = vmul.f32 %v2402, %v2415
    %v2417 = vadd.f32 %v2416, 0.014752088
    %v2418 = vmul.f32 %v2402, %v2417
    %v2419 = vadd.f32 %v2418, 0.112945676
    %v2420 = vmul.f32 %v2402, %v2419
    %v2421 = vadd.f32 %v2420, 0.4994258
    %v2422 = vmul.f32 %v2402, %v2421
    %v2423 = vadd.f32 %v2422, 1.0
    %v2424 = vrcp.pop %v2423
    %v2425 = vmul.f32 %v2423, %v2424
    %v2426 = vsub.f32 1.0, %v2425
    %v2427 = vmul.f32 %v2424, %v2426
    %v2428 = vadd.f32 %v2424, %v2427
    %vm2429 = vweird.f32 %v2423
    %vm2430 = vweird.f32 %v2424
    %vm2431 = vmor %vm2429, %vm2430
    %v2432 = vsel %vm2431, %v2424, %v2428
    %v2433 = vand.u32 2147483647, %v2423
    %vm2434 = vcmp.eq.f32.partialorder %v2433, 8.507059e+37
    %v2435 = vand.u32 %v2423, 2147483648
    %v2436 = vor.u32 1.1754944e-38, %v2435
    %v2437 = vsel %vm2434, %v2436, %v2432
    %v2438 = vmul.f32 %v2413, %v2437
    %v2439 = vmin.f32 %v2438, 1.0
    %v2440 = vmax.f32 %v2439, -1.0
    %v2441 = vadd.f32 %v2160, 1.0
    %v2442 = vadd.f32 %v2200, 1.0
    %v2443 = vadd.f32 %v2240, 1.0
    %v2444 = vadd.f32 %v2280, 1.0
    %v2445 = vadd.f32 %v2320, 1.0
    %v2446 = vadd.f32 %v2360, 1.0
    %v2447 = vadd.f32 %v2400, 1.0
    %v2448 = vadd.f32 %v2440, 1.0
    %v2449 = vmul.f32 %v2105, %v2441
    %v2450 = vmul.f32 %v2106, %v2442
    %v2451 = vmul.f32 %v2107, %v2443
    %v2452 = vmul.f32 %v2108, %v2444
    %v2453 = vmul.f32 %v2109, %v2445
    %v2454 = vmul.f32 %v2110, %v2446
    %v2455 = vmul.f32 %v2111, %v2447
    %v2456 = vmul.f32 %v2112, %v2448
    %s2457 = scalar_lea.vmem %s2, 32
    %v2458 = vld [vmem:[%s2457] sm:$0xff]
    %v2459 = vld [vmem:[%s2457 + $0x8] sm:$0xff]
    %v2460 = vld [vmem:[%s2457 + $0x10] sm:$0xff]
    %v2461 = vld [vmem:[%s2457 + $0x18] sm:$0xff]
    %s2462 = scalar_lea.vmem %s4, 64
    %v2463 = vld [vmem:[%s2462] sm:$0xff]
    %v2464 = vld [vmem:[%s2462 + $0x8] sm:$0xff]
    %v2465 = vld [vmem:[%s2462 + $0x10] sm:$0xff]
    %v2466 = vld [vmem:[%s2462 + $0x18] sm:$0xff]
    %2468 = vset.pattern.permute.xlu0 0
    %2469 = vperm.xlu0 %2468, %v2463
    %v2470 = vpop.permute.xlu0 %2469
    %2473 = vset.pattern.permute.xlu0 0
    %2474 = vperm.xlu0 %2473, %v2464
    %v2475 = vpop.permute.xlu0 %2474
    %2478 = vset.pattern.permute.xlu0 0
    %2479 = vperm.xlu0 %2478, %v2465
    %v2480 = vpop.permute.xlu0 %2479
    %2483 = vset.pattern.permute.xlu0 0
    %2484 = vperm.xlu0 %2483, %v2466
    %v2485 = vpop.permute.xlu0 %2484
    %v2488 = vsel %vm1760, %v2458, 0
    %v2491 = vsel %vm1760, %v2459, 0
    %v2494 = vsel %vm1760, %v2460, 0
    %v2497 = vsel %vm1760, %v2461, 0
    %2499 = vmatpush.msra.mxu0 0.0
    %2500 = vmatpush.msra.mxu0 0.0
    %2501 = vmatpush.msra.mxu0 0.0
    %2502 = vmatpush.msra.mxu0 0.0
    %2503 = vmatpush.msra.mxu0 0.0
    %2504 = vmatpush.msra.mxu0 0.0
    %2505 = vmatpush.msra.mxu0 0.0
    %2506 = vmatpush.msra.mxu0 0.0
    %2507 = vmatpush.msra.mxu0 0.0
    %2508 = vmatpush.msra.mxu0 0.0
    %2509 = vmatpush.msra.mxu0 0.0
    %2510 = vmatpush.msra.mxu0 0.0
    %2511 = vmatpush.msra.mxu0 %v2455
    %2512 = vmatpush.msra.mxu0 %v2453
    %2513 = vmatpush.msra.mxu0 %v2451
    %2514 = vmatpush.msra.mxu0 %v2449
    %2515 = vmatmul.f32.gmra.mxu0 %v2488
    %v2516 = vpop.f32.mrf.mxu0
    %v2517 = vadd.f32 %v2470, %v2516
    %2518 = vmatmul.f32.gmra.mxu0 %v2491
    %v2519 = vpop.f32.mrf.mxu0
    %v2520 = vadd.f32 %v2475, %v2519
    %2521 = vmatmul.f32.gmra.mxu0 %v2494
    %v2522 = vpop.f32.mrf.mxu0
    %v2523 = vadd.f32 %v2480, %v2522
    %2524 = vmatmul.f32.gmra.mxu0 %v2497
    %v2525 = vpop.f32.mrf.mxu0
    %v2526 = vadd.f32 %v2485, %v2525
    %2527 = vdwg.mxu0
    %2528 = vmatpush.msra.mxu0 0.0
    %2529 = vmatpush.msra.mxu0 0.0
    %2530 = vmatpush.msra.mxu0 0.0
    %2531 = vmatpush.msra.mxu0 0.0
    %2532 = vmatpush.msra.mxu0 0.0
    %2533 = vmatpush.msra.mxu0 0.0
    %2534 = vmatpush.msra.mxu0 0.0
    %2535 = vmatpush.msra.mxu0 0.0
    %2536 = vmatpush.msra.mxu0 0.0
    %2537 = vmatpush.msra.mxu0 0.0
    %2538 = vmatpush.msra.mxu0 0.0
    %2539 = vmatpush.msra.mxu0 0.0
    %2540 = vmatpush.msra.mxu0 %v2456
    %2541 = vmatpush.msra.mxu0 %v2454
    %2542 = vmatpush.msra.mxu0 %v2452
    %2543 = vmatpush.msra.mxu0 %v2450
    %2544 = vmatmul.f32.gmra.mxu0 %v2488
    %v2545 = vpop.f32.mrf.mxu0
    %v2546 = vadd.f32 %v2470, %v2545
    %2547 = vmatmul.f32.gmra.mxu0 %v2491
    %v2548 = vpop.f32.mrf.mxu0
    %v2549 = vadd.f32 %v2475, %v2548
    %2550 = vmatmul.f32.gmra.mxu0 %v2494
    %v2551 = vpop.f32.mrf.mxu0
    %v2552 = vadd.f32 %v2480, %v2551
    %2553 = vmatmul.f32.gmra.mxu0 %v2497
    %v2554 = vpop.f32.mrf.mxu0
    %v2555 = vadd.f32 %v2485, %v2554
    %2556 = vdwg.mxu0
    %2557 = vmatpush.msra.mxu0 1.0
    %2558 = vmatpush.msra.mxu0 1.0
    %2559 = vmatpush.msra.mxu0 1.0
    %2560 = vmatpush.msra.mxu0 1.0
    %2561 = vmatpush.msra.mxu0 1.0
    %2562 = vmatpush.msra.mxu0 1.0
    %2563 = vmatpush.msra.mxu0 1.0
    %2564 = vmatpush.msra.mxu0 1.0
    %2565 = vmatpush.msra.mxu0 1.0
    %2566 = vmatpush.msra.mxu0 1.0
    %2567 = vmatpush.msra.mxu0 1.0
    %2568 = vmatpush.msra.mxu0 1.0
    %2569 = vmatpush.msra.mxu0 1.0
    %2570 = vmatpush.msra.mxu0 1.0
    %2571 = vmatpush.msra.mxu0 1.0
    %2572 = vmatpush.msra.mxu0 1.0
    %2573 = vmatmul.f32.gmra.mxu0 %v2517
    %v2574 = vpop.f32.mrf.mxu0
    %v2575 = vadd.f32 0.0, %v2574
    %2576 = vmatmul.f32.gmra.mxu0 %v2520
    %v2577 = vpop.f32.mrf.mxu0
    %v2578 = vadd.f32 0.0, %v2577
    %2579 = vmatmul.f32.gmra.mxu0 %v2523
    %v2580 = vpop.f32.mrf.mxu0
    %v2581 = vadd.f32 0.0, %v2580
    %2582 = vmatmul.f32.gmra.mxu0 %v2526
    %v2583 = vpop.f32.mrf.mxu0
    %v2584 = vadd.f32 0.0, %v2583
    %2585 = vdwg.mxu0
    %2586 = vmatpush.msra.mxu0 1.0
    %2587 = vmatpush.msra.mxu0 1.0
    %2588 = vmatpush.msra.mxu0 1.0
    %2589 = vmatpush.msra.mxu0 1.0
    %2590 = vmatpush.msra.mxu0 1.0
    %2591 = vmatpush.msra.mxu0 1.0
    %2592 = vmatpush.msra.mxu0 1.0
    %2593 = vmatpush.msra.mxu0 1.0
    %2594 = vmatpush.msra.mxu0 1.0
    %2595 = vmatpush.msra.mxu0 1.0
    %2596 = vmatpush.msra.mxu0 1.0
    %2597 = vmatpush.msra.mxu0 1.0
    %2598 = vmatpush.msra.mxu0 1.0
    %2599 = vmatpush.msra.mxu0 1.0
    %2600 = vmatpush.msra.mxu0 1.0
    %2601 = vmatpush.msra.mxu0 1.0
    %2602 = vmatmul.f32.gmra.mxu0 %v2546
    %v2603 = vpop.f32.mrf.mxu0
    %v2604 = vadd.f32 %v2575, %v2603
    %2605 = vmatmul.f32.gmra.mxu0 %v2549
    %v2606 = vpop.f32.mrf.mxu0
    %v2607 = vadd.f32 %v2578, %v2606
    %2608 = vmatmul.f32.gmra.mxu0 %v2552
    %v2609 = vpop.f32.mrf.mxu0
    %v2610 = vadd.f32 %v2581, %v2609
    %2611 = vmatmul.f32.gmra.mxu0 %v2555
    %v2612 = vpop.f32.mrf.mxu0
    %v2613 = vadd.f32 %v2584, %v2612
    %2614 = vdwg.mxu0
    %v2615 = vmul.f32 %v2604, 0.00390625
    %v2616 = vmul.f32 %v2607, 0.00390625
    %v2617 = vmul.f32 %v2610, 0.00390625
    %v2618 = vmul.f32 %v2613, 0.00390625
    %2620 = vset.pattern.permute.xlu0 0
    %2621 = vperm.xlu0 %2620, %v2615
    %v2622 = vpop.permute.xlu0 %2621
    %2625 = vset.pattern.permute.xlu0 0
    %2626 = vperm.xlu0 %2625, %v2616
    %v2627 = vpop.permute.xlu0 %2626
    %2630 = vset.pattern.permute.xlu0 0
    %2631 = vperm.xlu0 %2630, %v2617
    %v2632 = vpop.permute.xlu0 %2631
    %2635 = vset.pattern.permute.xlu0 0
    %2636 = vperm.xlu0 %2635, %v2618
    %v2637 = vpop.permute.xlu0 %2636
    %v2639 = vsub.f32 %v2517, %v2622
    %v2640 = vsub.f32 %v2546, %v2622
    %v2641 = vsub.f32 %v2520, %v2627
    %v2642 = vsub.f32 %v2549, %v2627
    %v2643 = vsub.f32 %v2523, %v2632
    %v2644 = vsub.f32 %v2552, %v2632
    %v2645 = vsub.f32 %v2526, %v2637
    %v2646 = vsub.f32 %v2555, %v2637
    %v2647 = vmul.f32 %v2639, %v2639
    %v2648 = vmul.f32 %v2640, %v2640
    %v2649 = vmul.f32 %v2641, %v2641
    %v2650 = vmul.f32 %v2642, %v2642
    %v2651 = vmul.f32 %v2643, %v2643
    %v2652 = vmul.f32 %v2644, %v2644
    %v2653 = vmul.f32 %v2645, %v2645
    %v2654 = vmul.f32 %v2646, %v2646
    %2655 = vmatpush.msra.mxu0 1.0
    %2656 = vmatpush.msra.mxu0 1.0
    %2657 = vmatpush.msra.mxu0 1.0
    %2658 = vmatpush.msra.mxu0 1.0
    %2659 = vmatpush.msra.mxu0 1.0
    %2660 = vmatpush.msra.mxu0 1.0
    %2661 = vmatpush.msra.mxu0 1.0
    %2662 = vmatpush.msra.mxu0 1.0
    %2663 = vmatpush.msra.mxu0 1.0
    %2664 = vmatpush.msra.mxu0 1.0
    %2665 = vmatpush.msra.mxu0 1.0
    %2666 = vmatpush.msra.mxu0 1.0
    %2667 = vmatpush.msra.mxu0 1.0
    %2668 = vmatpush.msra.mxu0 1.0
    %2669 = vmatpush.msra.mxu0 1.0
    %2670 = vmatpush.msra.mxu0 1.0
    %2671 = vmatmul.f32.gmra.mxu0 %v2647
    %v2672 = vpop.f32.mrf.mxu0
    %v2673 = vadd.f32 0.0, %v2672
    %2674 = vmatmul.f32.gmra.mxu0 %v2649
    %v2675 = vpop.f32.mrf.mxu0
    %v2676 = vadd.f32 0.0, %v2675
    %2677 = vmatmul.f32.gmra.mxu0 %v2651
    %v2678 = vpop.f32.mrf.mxu0
    %v2679 = vadd.f32 0.0, %v2678
    %2680 = vmatmul.f32.gmra.mxu0 %v2653
    %v2681 = vpop.f32.mrf.mxu0
    %v2682 = vadd.f32 0.0, %v2681
    %2683 = vdwg.mxu0
    %2684 = vmatpush.msra.mxu0 1.0
    %2685 = vmatpush.msra.mxu0 1.0
    %2686 = vmatpush.msra.mxu0 1.0
    %2687 = vmatpush.msra.mxu0 1.0
    %2688 = vmatpush.msra.mxu0 1.0
    %2689 = vmatpush.msra.mxu0 1.0
    %2690 = vmatpush.msra.mxu0 1.0
    %2691 = vmatpush.msra.mxu0 1.0
    %2692 = vmatpush.msra.mxu0 1.0
    %2693 = vmatpush.msra.mxu0 1.0
    %2694 = vmatpush.msra.mxu0 1.0
    %2695 = vmatpush.msra.mxu0 1.0
    %2696 = vmatpush.msra.mxu0 1.0
    %2697 = vmatpush.msra.mxu0 1.0
    %2698 = vmatpush.msra.mxu0 1.0
    %2699 = vmatpush.msra.mxu0 1.0
    %2700 = vmatmul.f32.gmra.mxu0 %v2648
    %v2701 = vpop.f32.mrf.mxu0
    %v2702 = vadd.f32 %v2673, %v2701
    %2703 = vmatmul.f32.gmra.mxu0 %v2650
    %v2704 = vpop.f32.mrf.mxu0
    %v2705 = vadd.f32 %v2676, %v2704
    %2706 = vmatmul.f32.gmra.mxu0 %v2652
    %v2707 = vpop.f32.mrf.mxu0
    %v2708 = vadd.f32 %v2679, %v2707
    %2709 = vmatmul.f32.gmra.mxu0 %v2654
    %v2710 = vpop.f32.mrf.mxu0
    %v2711 = vadd.f32 %v2682, %v2710
    %2712 = vdwg.mxu0
    %v2713 = vmul.f32 %v2702, 0.00390625
    %v2714 = vmul.f32 %v2705, 0.00390625
    %v2715 = vmul.f32 %v2708, 0.00390625
    %v2716 = vmul.f32 %v2711, 0.00390625
    %v2717 = vadd.f32 %v2713, 1e-05
    %v2718 = vadd.f32 %v2714, 1e-05
    %v2719 = vadd.f32 %v2715, 1e-05
    %v2720 = vadd.f32 %v2716, 1e-05
    %v2721 = vrsqrt.pop %v2717
    %v2722 = vmul.f32 %v2721, %v2717
    %v2723 = vmul.f32 %v2722, %v2721
    %v2724 = vmul.f32 0.5, %v2723
    %v2725 = vsub.f32 1.5, %v2724
    %v2726 = vmul.f32 %v2721, %v2725
    %vm2727 = vweird.f32 %v2717
    %vm2728 = vweird.f32 %v2721
    %vm2729 = vmor %vm2727, %vm2728
    %v2730 = vsel %vm2729, %v2721, %v2726
    %v2731 = vrsqrt.pop %v2718
    %v2732 = vmul.f32 %v2731, %v2718
    %v2733 = vmul.f32 %v2732, %v2731
    %v2734 = vmul.f32 0.5, %v2733
    %v2735 = vsub.f32 1.5, %v2734
    %v2736 = vmul.f32 %v2731, %v2735
    %vm2737 = vweird.f32 %v2718
    %vm2738 = vweird.f32 %v2731
    %vm2739 = vmor %vm2737, %vm2738
    %v2740 = vsel %vm2739, %v2731, %v2736
    %v2741 = vrsqrt.pop %v2719
    %v2742 = vmul.f32 %v2741, %v2719
    %v2743 = vmul.f32 %v2742, %v2741
    %v2744 = vmul.f32 0.5, %v2743
    %v2745 = vsub.f32 1.5, %v2744
    %v2746 = vmul.f32 %v2741, %v2745
    %vm2747 = vweird.f32 %v2719
    %vm2748 = vweird.f32 %v2741
    %vm2749 = vmor %vm2747, %vm2748
    %v2750 = vsel %vm2749, %v2741, %v2746
    %v2751 = vrsqrt.pop %v2720
    %v2752 = vmul.f32 %v2751, %v2720
    %v2753 = vmul.f32 %v2752, %v2751
    %v2754 = vmul.f32 0.5, %v2753
    %v2755 = vsub.f32 1.5, %v2754
    %v2756 = vmul.f32 %v2751, %v2755
    %vm2757 = vweird.f32 %v2720
    %vm2758 = vweird.f32 %v2751
    %vm2759 = vmor %vm2757, %vm2758
    %v2760 = vsel %vm2759, %v2751, %v2756
    %s2761 = scalar_lea.vmem %s4, 320
    %v2762 = vld [vmem:[%s2761] sm:$0xff]
    %v2763 = vld [vmem:[%s2761 + $0x8] sm:$0xff]
    %v2764 = vld [vmem:[%s2761 + $0x10] sm:$0xff]
    %v2765 = vld [vmem:[%s2761 + $0x18] sm:$0xff]
    %v2766 = vmul.f32 %v2730, %v2762
    %v2767 = vmul.f32 %v2740, %v2763
    %v2768 = vmul.f32 %v2750, %v2764
    %v2769 = vmul.f32 %v2760, %v2765
    %2771 = vset.pattern.permute.xlu0 0
    %2772 = vperm.xlu0 %2771, %v2766
    %v2773 = vpop.permute.xlu0 %2772
    %2776 = vset.pattern.permute.xlu0 0
    %2777 = vperm.xlu0 %2776, %v2767
    %v2778 = vpop.permute.xlu0 %2777
    %2781 = vset.pattern.permute.xlu0 0
    %2782 = vperm.xlu0 %2781, %v2768
    %v2783 = vpop.permute.xlu0 %2782
    %2786 = vset.pattern.permute.xlu0 0
    %2787 = vperm.xlu0 %2786, %v2769
    %v2788 = vpop.permute.xlu0 %2787
    %v2790 = vmul.f32 %v2639, %v2773
    %v2791 = vmul.f32 %v2640, %v2773
    %v2792 = vmul.f32 %v2641, %v2778
    %v2793 = vmul.f32 %v2642, %v2778
    %v2794 = vmul.f32 %v2643, %v2783
    %v2795 = vmul.f32 %v2644, %v2783
    %v2796 = vmul.f32 %v2645, %v2788
    %v2797 = vmul.f32 %v2646, %v2788
    %s2798 = scalar_lea.vmem %s4, 576
    %v2799 = vld [vmem:[%s2798] sm:$0xff]
    %v2800 = vld [vmem:[%s2798 + $0x8] sm:$0xff]
    %v2801 = vld [vmem:[%s2798 + $0x10] sm:$0xff]
    %v2802 = vld [vmem:[%s2798 + $0x18] sm:$0xff]
    %2804 = vset.pattern.permute.xlu0 0
    %2805 = vperm.xlu0 %2804, %v2799
    %v2806 = vpop.permute.xlu0 %2805
    %2809 = vset.pattern.permute.xlu0 0
    %2810 = vperm.xlu0 %2809, %v2800
    %v2811 = vpop.permute.xlu0 %2810
    %2814 = vset.pattern.permute.xlu0 0
    %2815 = vperm.xlu0 %2814, %v2801
    %v2816 = vpop.permute.xlu0 %2815
    %2819 = vset.pattern.permute.xlu0 0
    %2820 = vperm.xlu0 %2819, %v2802
    %v2821 = vpop.permute.xlu0 %2820
    %v2823 = vadd.f32 %v2790, %v2806
    %v2824 = vadd.f32 %v2791, %v2806
    %v2825 = vadd.f32 %v2792, %v2811
    %v2826 = vadd.f32 %v2793, %v2811
    %v2827 = vadd.f32 %v2794, %v2816
    %v2828 = vadd.f32 %v2795, %v2816
    %v2829 = vadd.f32 %v2796, %v2821
    %v2830 = vadd.f32 %v2797, %v2821
    %v2831 = vadd.f32 %v1723, %v2823
    %v2832 = vadd.f32 %v1724, %v2824
    %v2833 = vadd.f32 %v1725, %v2825
    %v2834 = vadd.f32 %v1726, %v2826
    %v2835 = vadd.f32 %v1727, %v2827
    %v2836 = vadd.f32 %v1728, %v2828
    %v2837 = vadd.f32 %v1729, %v2829
    %v2838 = vadd.f32 %v1730, %v2830
    %v2839 = vmul.f32 %v2831, 0.5
    %v2840 = vmul.f32 %v2832, 0.5
    %v2841 = vmul.f32 %v2833, 0.5
    %v2842 = vmul.f32 %v2834, 0.5
    %v2843 = vmul.f32 %v2835, 0.5
    %v2844 = vmul.f32 %v2836, 0.5
    %v2845 = vmul.f32 %v2837, 0.5
    %v2846 = vmul.f32 %v2838, 0.5
    %v2847 = vmul.f32 %v2831, 0.70710677
    %v2848 = vmul.f32 %v2832, 0.70710677
    %v2849 = vmul.f32 %v2833, 0.70710677
    %v2850 = vmul.f32 %v2834, 0.70710677
    %v2851 = vmul.f32 %v2835, 0.70710677
    %v2852 = vmul.f32 %v2836, 0.70710677
    %v2853 = vmul.f32 %v2837, 0.70710677
    %v2854 = vmul.f32 %v2838, 0.70710677
    %v2855 = vmul.f32 %v2847, %v2847
    %v2856 = vmin.f32 16.0, %v2855
    %v2857 = vmul.f32 %v2856, 2.1237322e-06
    %v2858 = vadd.f32 %v2857, 0.00028619796
    %v2859 = vmul.f32 %v2856, %v2858
    %v2860 = vadd.f32 %v2859, 0.0036580483
    %v2861 = vmul.f32 %v2856, %v2860
    %v2862 = vadd.f32 %v2861, 0.05243302
    %v2863 = vmul.f32 %v2856, %v2862
    %v2864 = vadd.f32 %v2863, 0.18741608
    %v2865 = vmul.f32 %v2856, %v2864
    %v2866 = vadd.f32 %v2865, 1.1283791
    %v2867 = vmul.f32 %v2847, %v2866
    %v2868 = vmul.f32 %v2856, 3.8918573e-05
    %v2869 = vadd.f32 %v2868, 0.001143296
    %v2870 = vmul.f32 %v2856, %v2869
    %v2871 = vadd.f32 %v2870, 0.014752088
    %v2872 = vmul.f32 %v2856, %v2871
    %v2873 = vadd.f32 %v2872, 0.112945676
    %v2874 = vmul.f32 %v2856, %v2873
    %v2875 = vadd.f32 %v2874, 0.4994258
    %v2876 = vmul.f32 %v2856, %v2875
    %v2877 = vadd.f32 %v2876, 1.0
    %v2878 = vrcp.pop %v2877
    %v2879 = vmul.f32 %v2877, %v2878
    %v2880 = vsub.f32 1.0, %v2879
    %v2881 = vmul.f32 %v2878, %v2880
    %v2882 = vadd.f32 %v2878, %v2881
    %vm2883 = vweird.f32 %v2877
    %vm2884 = vweird.f32 %v2878
    %vm2885 = vmor %vm2883, %vm2884
    %v2886 = vsel %vm2885, %v2878, %v2882
    %v2887 = vand.u32 2147483647, %v2877
    %vm2888 = vcmp.eq.f32.partialorder %v2887, 8.507059e+37
    %v2889 = vand.u32 %v2877, 2147483648
    %v2890 = vor.u32 1.1754944e-38, %v2889
    %v2891 = vsel %vm2888, %v2890, %v2886
    %v2892 = vmul.f32 %v2867, %v2891
    %v2893 = vmin.f32 %v2892, 1.0
    %v2894 = vmax.f32 %v2893, -1.0
    %v2895 = vmul.f32 %v2848, %v2848
    %v2896 = vmin.f32 16.0, %v2895
    %v2897 = vmul.f32 %v2896, 2.1237322e-06
    %v2898 = vadd.f32 %v2897, 0.00028619796
    %v2899 = vmul.f32 %v2896, %v2898
    %v2900 = vadd.f32 %v2899, 0.0036580483
    %v2901 = vmul.f32 %v2896, %v2900
    %v2902 = vadd.f32 %v2901, 0.05243302
    %v2903 = vmul.f32 %v2896, %v2902
    %v2904 = vadd.f32 %v2903, 0.18741608
    %v2905 = vmul.f32 %v2896, %v2904
    %v2906 = vadd.f32 %v2905, 1.1283791
    %v2907 = vmul.f32 %v2848, %v2906
    %v2908 = vmul.f32 %v2896, 3.8918573e-05
    %v2909 = vadd.f32 %v2908, 0.001143296
    %v2910 = vmul.f32 %v2896, %v2909
    %v2911 = vadd.f32 %v2910, 0.014752088
    %v2912 = vmul.f32 %v2896, %v2911
    %v2913 = vadd.f32 %v2912, 0.112945676
    %v2914 = vmul.f32 %v2896, %v2913
    %v2915 = vadd.f32 %v2914, 0.4994258
    %v2916 = vmul.f32 %v2896, %v2915
    %v2917 = vadd.f32 %v2916, 1.0
    %v2918 = vrcp.pop %v2917
    %v2919 = vmul.f32 %v2917, %v2918
    %v2920 = vsub.f32 1.0, %v2919
    %v2921 = vmul.f32 %v2918, %v2920
    %v2922 = vadd.f32 %v2918, %v2921
    %vm2923 = vweird.f32 %v2917
    %vm2924 = vweird.f32 %v2918
    %vm2925 = vmor %vm2923, %vm2924
    %v2926 = vsel %vm2925, %v2918, %v2922
    %v2927 = vand.u32 2147483647, %v2917
    %vm2928 = vcmp.eq.f32.partialorder %v2927, 8.507059e+37
    %v2929 = vand.u32 %v2917, 2147483648
    %v2930 = vor.u32 1.1754944e-38, %v2929
    %v2931 = vsel %vm2928, %v2930, %v2926
    %v2932 = vmul.f32 %v2907, %v2931
    %v2933 = vmin.f32 %v2932, 1.0
    %v2934 = vmax.f32 %v2933, -1.0
    %v2935 = vmul.f32 %v2849, %v2849
    %v2936 = vmin.f32 16.0, %v2935
    %v2937 = vmul.f32 %v2936, 2.1237322e-06
    %v2938 = vadd.f32 %v2937, 0.00028619796
    %v2939 = vmul.f32 %v2936, %v2938
    %v2940 = vadd.f32 %v2939, 0.0036580483
    %v2941 = vmul.f32 %v2936, %v2940
    %v2942 = vadd.f32 %v2941, 0.05243302
    %v2943 = vmul.f32 %v2936, %v2942
    %v2944 = vadd.f32 %v2943, 0.18741608
    %v2945 = vmul.f32 %v2936, %v2944
    %v2946 = vadd.f32 %v2945, 1.1283791
    %v2947 = vmul.f32 %v2849, %v2946
    %v2948 = vmul.f32 %v2936, 3.8918573e-05
    %v2949 = vadd.f32 %v2948, 0.001143296
    %v2950 = vmul.f32 %v2936, %v2949
    %v2951 = vadd.f32 %v2950, 0.014752088
    %v2952 = vmul.f32 %v2936, %v2951
    %v2953 = vadd.f32 %v2952, 0.112945676
    %v2954 = vmul.f32 %v2936, %v2953
    %v2955 = vadd.f32 %v2954, 0.4994258
    %v2956 = vmul.f32 %v2936, %v2955
    %v2957 = vadd.f32 %v2956, 1.0
    %v2958 = vrcp.pop %v2957
    %v2959 = vmul.f32 %v2957, %v2958
    %v2960 = vsub.f32 1.0, %v2959
    %v2961 = vmul.f32 %v2958, %v2960
    %v2962 = vadd.f32 %v2958, %v2961
    %vm2963 = vweird.f32 %v2957
    %vm2964 = vweird.f32 %v2958
    %vm2965 = vmor %vm2963, %vm2964
    %v2966 = vsel %vm2965, %v2958, %v2962
    %v2967 = vand.u32 2147483647, %v2957
    %vm2968 = vcmp.eq.f32.partialorder %v2967, 8.507059e+37
    %v2969 = vand.u32 %v2957, 2147483648
    %v2970 = vor.u32 1.1754944e-38, %v2969
    %v2971 = vsel %vm2968, %v2970, %v2966
    %v2972 = vmul.f32 %v2947, %v2971
    %v2973 = vmin.f32 %v2972, 1.0
    %v2974 = vmax.f32 %v2973, -1.0
    %v2975 = vmul.f32 %v2850, %v2850
    %v2976 = vmin.f32 16.0, %v2975
    %v2977 = vmul.f32 %v2976, 2.1237322e-06
    %v2978 = vadd.f32 %v2977, 0.00028619796
    %v2979 = vmul.f32 %v2976, %v2978
    %v2980 = vadd.f32 %v2979, 0.0036580483
    %v2981 = vmul.f32 %v2976, %v2980
    %v2982 = vadd.f32 %v2981, 0.05243302
    %v2983 = vmul.f32 %v2976, %v2982
    %v2984 = vadd.f32 %v2983, 0.18741608
    %v2985 = vmul.f32 %v2976, %v2984
    %v2986 = vadd.f32 %v2985, 1.1283791
    %v2987 = vmul.f32 %v2850, %v2986
    %v2988 = vmul.f32 %v2976, 3.8918573e-05
    %v2989 = vadd.f32 %v2988, 0.001143296
    %v2990 = vmul.f32 %v2976, %v2989
    %v2991 = vadd.f32 %v2990, 0.014752088
    %v2992 = vmul.f32 %v2976, %v2991
    %v2993 = vadd.f32 %v2992, 0.112945676
    %v2994 = vmul.f32 %v2976, %v2993
    %v2995 = vadd.f32 %v2994, 0.4994258
    %v2996 = vmul.f32 %v2976, %v2995
    %v2997 = vadd.f32 %v2996, 1.0
    %v2998 = vrcp.pop %v2997
    %v2999 = vmul.f32 %v2997, %v2998
    %v3000 = vsub.f32 1.0, %v2999
    %v3001 = vmul.f32 %v2998, %v3000
    %v3002 = vadd.f32 %v2998, %v3001
    %vm3003 = vweird.f32 %v2997
    %vm3004 = vweird.f32 %v2998
    %vm3005 = vmor %vm3003, %vm3004
    %v3006 = vsel %vm3005, %v2998, %v3002
    %v3007 = vand.u32 2147483647, %v2997
    %vm3008 = vcmp.eq.f32.partialorder %v3007, 8.507059e+37
    %v3009 = vand.u32 %v2997, 2147483648
    %v3010 = vor.u32 1.1754944e-38, %v3009
    %v3011 = vsel %vm3008, %v3010, %v3006
    %v3012 = vmul.f32 %v2987, %v3011
    %v3013 = vmin.f32 %v3012, 1.0
    %v3014 = vmax.f32 %v3013, -1.0
    %v3015 = vmul.f32 %v2851, %v2851
    %v3016 = vmin.f32 16.0, %v3015
    %v3017 = vmul.f32 %v3016, 2.1237322e-06
    %v3018 = vadd.f32 %v3017, 0.00028619796
    %v3019 = vmul.f32 %v3016, %v3018
    %v3020 = vadd.f32 %v3019, 0.0036580483
    %v3021 = vmul.f32 %v3016, %v3020
    %v3022 = vadd.f32 %v3021, 0.05243302
    %v3023 = vmul.f32 %v3016, %v3022
    %v3024 = vadd.f32 %v3023, 0.18741608
    %v3025 = vmul.f32 %v3016, %v3024
    %v3026 = vadd.f32 %v3025, 1.1283791
    %v3027 = vmul.f32 %v2851, %v3026
    %v3028 = vmul.f32 %v3016, 3.8918573e-05
    %v3029 = vadd.f32 %v3028, 0.001143296
    %v3030 = vmul.f32 %v3016, %v3029
    %v3031 = vadd.f32 %v3030, 0.014752088
    %v3032 = vmul.f32 %v3016, %v3031
    %v3033 = vadd.f32 %v3032, 0.112945676
    %v3034 = vmul.f32 %v3016, %v3033
    %v3035 = vadd.f32 %v3034, 0.4994258
    %v3036 = vmul.f32 %v3016, %v3035
    %v3037 = vadd.f32 %v3036, 1.0
    %v3038 = vrcp.pop %v3037
    %v3039 = vmul.f32 %v3037, %v3038
    %v3040 = vsub.f32 1.0, %v3039
    %v3041 = vmul.f32 %v3038, %v3040
    %v3042 = vadd.f32 %v3038, %v3041
    %vm3043 = vweird.f32 %v3037
    %vm3044 = vweird.f32 %v3038
    %vm3045 = vmor %vm3043, %vm3044
    %v3046 = vsel %vm3045, %v3038, %v3042
    %v3047 = vand.u32 2147483647, %v3037
    %vm3048 = vcmp.eq.f32.partialorder %v3047, 8.507059e+37
    %v3049 = vand.u32 %v3037, 2147483648
    %v3050 = vor.u32 1.1754944e-38, %v3049
    %v3051 = vsel %vm3048, %v3050, %v3046
    %v3052 = vmul.f32 %v3027, %v3051
    %v3053 = vmin.f32 %v3052, 1.0
    %v3054 = vmax.f32 %v3053, -1.0
    %v3055 = vmul.f32 %v2852, %v2852
    %v3056 = vmin.f32 16.0, %v3055
    %v3057 = vmul.f32 %v3056, 2.1237322e-06
    %v3058 = vadd.f32 %v3057, 0.00028619796
    %v3059 = vmul.f32 %v3056, %v3058
    %v3060 = vadd.f32 %v3059, 0.0036580483
    %v3061 = vmul.f32 %v3056, %v3060
    %v3062 = vadd.f32 %v3061, 0.05243302
    %v3063 = vmul.f32 %v3056, %v3062
    %v3064 = vadd.f32 %v3063, 0.18741608
    %v3065 = vmul.f32 %v3056, %v3064
    %v3066 = vadd.f32 %v3065, 1.1283791
    %v3067 = vmul.f32 %v2852, %v3066
    %v3068 = vmul.f32 %v3056, 3.8918573e-05
    %v3069 = vadd.f32 %v3068, 0.001143296
    %v3070 = vmul.f32 %v3056, %v3069
    %v3071 = vadd.f32 %v3070, 0.014752088
    %v3072 = vmul.f32 %v3056, %v3071
    %v3073 = vadd.f32 %v3072, 0.112945676
    %v3074 = vmul.f32 %v3056, %v3073
    %v3075 = vadd.f32 %v3074, 0.4994258
    %v3076 = vmul.f32 %v3056, %v3075
    %v3077 = vadd.f32 %v3076, 1.0
    %v3078 = vrcp.pop %v3077
    %v3079 = vmul.f32 %v3077, %v3078
    %v3080 = vsub.f32 1.0, %v3079
    %v3081 = vmul.f32 %v3078, %v3080
    %v3082 = vadd.f32 %v3078, %v3081
    %vm3083 = vweird.f32 %v3077
    %vm3084 = vweird.f32 %v3078
    %vm3085 = vmor %vm3083, %vm3084
    %v3086 = vsel %vm3085, %v3078, %v3082
    %v3087 = vand.u32 2147483647, %v3077
    %vm3088 = vcmp.eq.f32.partialorder %v3087, 8.507059e+37
    %v3089 = vand.u32 %v3077, 2147483648
    %v3090 = vor.u32 1.1754944e-38, %v3089
    %v3091 = vsel %vm3088, %v3090, %v3086
    %v3092 = vmul.f32 %v3067, %v3091
    %v3093 = vmin.f32 %v3092, 1.0
    %v3094 = vmax.f32 %v3093, -1.0
    %v3095 = vmul.f32 %v2853, %v2853
    %v3096 = vmin.f32 16.0, %v3095
    %v3097 = vmul.f32 %v3096, 2.1237322e-06
    %v3098 = vadd.f32 %v3097, 0.00028619796
    %v3099 = vmul.f32 %v3096, %v3098
    %v3100 = vadd.f32 %v3099, 0.0036580483
    %v3101 = vmul.f32 %v3096, %v3100
    %v3102 = vadd.f32 %v3101, 0.05243302
    %v3103 = vmul.f32 %v3096, %v3102
    %v3104 = vadd.f32 %v3103, 0.18741608
    %v3105 = vmul.f32 %v3096, %v3104
    %v3106 = vadd.f32 %v3105, 1.1283791
    %v3107 = vmul.f32 %v2853, %v3106
    %v3108 = vmul.f32 %v3096, 3.8918573e-05
    %v3109 = vadd.f32 %v3108, 0.001143296
    %v3110 = vmul.f32 %v3096, %v3109
    %v3111 = vadd.f32 %v3110, 0.014752088
    %v3112 = vmul.f32 %v3096, %v3111
    %v3113 = vadd.f32 %v3112, 0.112945676
    %v3114 = vmul.f32 %v3096, %v3113
    %v3115 = vadd.f32 %v3114, 0.4994258
    %v3116 = vmul.f32 %v3096, %v3115
    %v3117 = vadd.f32 %v3116, 1.0
    %v3118 = vrcp.pop %v3117
    %v3119 = vmul.f32 %v3117, %v3118
    %v3120 = vsub.f32 1.0, %v3119
    %v3121 = vmul.f32 %v3118, %v3120
    %v3122 = vadd.f32 %v3118, %v3121
    %vm3123 = vweird.f32 %v3117
    %vm3124 = vweird.f32 %v3118
    %vm3125 = vmor %vm3123, %vm3124
    %v3126 = vsel %vm3125, %v3118, %v3122
    %v3127 = vand.u32 2147483647, %v3117
    %vm3128 = vcmp.eq.f32.partialorder %v3127, 8.507059e+37
    %v3129 = vand.u32 %v3117, 2147483648
    %v3130 = vor.u32 1.1754944e-38, %v3129
    %v3131 = vsel %vm3128, %v3130, %v3126
    %v3132 = vmul.f32 %v3107, %v3131
    %v3133 = vmin.f32 %v3132, 1.0
    %v3134 = vmax.f32 %v3133, -1.0
    %v3135 = vmul.f32 %v2854, %v2854
    %v3136 = vmin.f32 16.0, %v3135
    %v3137 = vmul.f32 %v3136, 2.1237322e-06
    %v3138 = vadd.f32 %v3137, 0.00028619796
    %v3139 = vmul.f32 %v3136, %v3138
    %v3140 = vadd.f32 %v3139, 0.0036580483
    %v3141 = vmul.f32 %v3136, %v3140
    %v3142 = vadd.f32 %v3141, 0.05243302
    %v3143 = vmul.f32 %v3136, %v3142
    %v3144 = vadd.f32 %v3143, 0.18741608
    %v3145 = vmul.f32 %v3136, %v3144
    %v3146 = vadd.f32 %v3145, 1.1283791
    %v3147 = vmul.f32 %v2854, %v3146
    %v3148 = vmul.f32 %v3136, 3.8918573e-05
    %v3149 = vadd.f32 %v3148, 0.001143296
    %v3150 = vmul.f32 %v3136, %v3149
    %v3151 = vadd.f32 %v3150, 0.014752088
    %v3152 = vmul.f32 %v3136, %v3151
    %v3153 = vadd.f32 %v3152, 0.112945676
    %v3154 = vmul.f32 %v3136, %v3153
    %v3155 = vadd.f32 %v3154, 0.4994258
    %v3156 = vmul.f32 %v3136, %v3155
    %v3157 = vadd.f32 %v3156, 1.0
    %v3158 = vrcp.pop %v3157
    %v3159 = vmul.f32 %v3157, %v3158
    %v3160 = vsub.f32 1.0, %v3159
    %v3161 = vmul.f32 %v3158, %v3160
    %v3162 = vadd.f32 %v3158, %v3161
    %vm3163 = vweird.f32 %v3157
    %vm3164 = vweird.f32 %v3158
    %vm3165 = vmor %vm3163, %vm3164
    %v3166 = vsel %vm3165, %v3158, %v3162
    %v3167 = vand.u32 2147483647, %v3157
    %vm3168 = vcmp.eq.f32.partialorder %v3167, 8.507059e+37
    %v3169 = vand.u32 %v3157, 2147483648
    %v3170 = vor.u32 1.1754944e-38, %v3169
    %v3171 = vsel %vm3168, %v3170, %v3166
    %v3172 = vmul.f32 %v3147, %v3171
    %v3173 = vmin.f32 %v3172, 1.0
    %v3174 = vmax.f32 %v3173, -1.0
    %v3175 = vadd.f32 %v2894, 1.0
    %v3176 = vadd.f32 %v2934, 1.0
    %v3177 = vadd.f32 %v2974, 1.0
    %v3178 = vadd.f32 %v3014, 1.0
    %v3179 = vadd.f32 %v3054, 1.0
    %v3180 = vadd.f32 %v3094, 1.0
    %v3181 = vadd.f32 %v3134, 1.0
    %v3182 = vadd.f32 %v3174, 1.0
    %v3183 = vmul.f32 %v2839, %v3175
    %v3184 = vmul.f32 %v2840, %v3176
    %v3185 = vmul.f32 %v2841, %v3177
    %v3186 = vmul.f32 %v2842, %v3178
    %v3187 = vmul.f32 %v2843, %v3179
    %v3188 = vmul.f32 %v2844, %v3180
    %v3189 = vmul.f32 %v2845, %v3181
    %v3190 = vmul.f32 %v2846, %v3182
    %s3191 = scalar_lea.vmem %s2, 64
    %v3192 = vld [vmem:[%s3191] sm:$0xff]
    %v3193 = vld [vmem:[%s3191 + $0x8] sm:$0xff]
    %v3194 = vld [vmem:[%s3191 + $0x10] sm:$0xff]
    %v3195 = vld [vmem:[%s3191 + $0x18] sm:$0xff]
    %s3196 = scalar_lea.vmem %s4, 96
    %v3197 = vld [vmem:[%s3196] sm:$0xff]
    %v3198 = vld [vmem:[%s3196 + $0x8] sm:$0xff]
    %v3199 = vld [vmem:[%s3196 + $0x10] sm:$0xff]
    %v3200 = vld [vmem:[%s3196 + $0x18] sm:$0xff]
    %3202 = vset.pattern.permute.xlu0 0
    %3203 = vperm.xlu0 %3202, %v3197
    %v3204 = vpop.permute.xlu0 %3203
    %3207 = vset.pattern.permute.xlu0 0
    %3208 = vperm.xlu0 %3207, %v3198
    %v3209 = vpop.permute.xlu0 %3208
    %3212 = vset.pattern.permute.xlu0 0
    %3213 = vperm.xlu0 %3212, %v3199
    %v3214 = vpop.permute.xlu0 %3213
    %3217 = vset.pattern.permute.xlu0 0
    %3218 = vperm.xlu0 %3217, %v3200
    %v3219 = vpop.permute.xlu0 %3218
    %v3222 = vsel %vm1760, %v3192, 0
    %v3225 = vsel %vm1760, %v3193, 0
    %v3228 = vsel %vm1760, %v3194, 0
    %v3231 = vsel %vm1760, %v3195, 0
    %3233 = vmatpush.msra.mxu0 0.0
    %3234 = vmatpush.msra.mxu0 0.0
    %3235 = vmatpush.msra.mxu0 0.0
    %3236 = vmatpush.msra.mxu0 0.0
    %3237 = vmatpush.msra.mxu0 0.0
    %3238 = vmatpush.msra.mxu0 0.0
    %3239 = vmatpush.msra.mxu0 0.0
    %3240 = vmatpush.msra.mxu0 0.0
    %3241 = vmatpush.msra.mxu0 0.0
    %3242 = vmatpush.msra.mxu0 0.0
    %3243 = vmatpush.msra.mxu0 0.0
    %3244 = vmatpush.msra.mxu0 0.0
    %3245 = vmatpush.msra.mxu0 %v3189
    %3246 = vmatpush.msra.mxu0 %v3187
    %3247 = vmatpush.msra.mxu0 %v3185
    %3248 = vmatpush.msra.mxu0 %v3183
    %3249 = vmatmul.f32.gmra.mxu0 %v3222
    %v3250 = vpop.f32.mrf.mxu0
    %v3251 = vadd.f32 %v3204, %v3250
    %3252 = vmatmul.f32.gmra.mxu0 %v3225
    %v3253 = vpop.f32.mrf.mxu0
    %v3254 = vadd.f32 %v3209, %v3253
    %3255 = vmatmul.f32.gmra.mxu0 %v3228
    %v3256 = vpop.f32.mrf.mxu0
    %v3257 = vadd.f32 %v3214, %v3256
    %3258 = vmatmul.f32.gmra.mxu0 %v3231
    %v3259 = vpop.f32.mrf.mxu0
    %v3260 = vadd.f32 %v3219, %v3259
    %3261 = vdwg.mxu0
    %3262 = vmatpush.msra.mxu0 0.0
    %3263 = vmatpush.msra.mxu0 0.0
    %3264 = vmatpush.msra.mxu0 0.0
    %3265 = vmatpush.msra.mxu0 0.0
    %3266 = vmatpush.msra.mxu0 0.0
    %3267 = vmatpush.msra.mxu0 0.0
    %3268 = vmatpush.msra.mxu0 0.0
    %3269 = vmatpush.msra.mxu0 0.0
    %3270 = vmatpush.msra.mxu0 0.0
    %3271 = vmatpush.msra.mxu0 0.0
    %3272 = vmatpush.msra.mxu0 0.0
    %3273 = vmatpush.msra.mxu0 0.0
    %3274 = vmatpush.msra.mxu0 %v3190
    %3275 = vmatpush.msra.mxu0 %v3188
    %3276 = vmatpush.msra.mxu0 %v3186
    %3277 = vmatpush.msra.mxu0 %v3184
    %3278 = vmatmul.f32.gmra.mxu0 %v3222
    %v3279 = vpop.f32.mrf.mxu0
    %v3280 = vadd.f32 %v3204, %v3279
    %3281 = vmatmul.f32.gmra.mxu0 %v3225
    %v3282 = vpop.f32.mrf.mxu0
    %v3283 = vadd.f32 %v3209, %v3282
    %3284 = vmatmul.f32.gmra.mxu0 %v3228
    %v3285 = vpop.f32.mrf.mxu0
    %v3286 = vadd.f32 %v3214, %v3285
    %3287 = vmatmul.f32.gmra.mxu0 %v3231
    %v3288 = vpop.f32.mrf.mxu0
    %v3289 = vadd.f32 %v3219, %v3288
    %3290 = vdwg.mxu0
    %3291 = vmatpush.msra.mxu0 1.0
    %3292 = vmatpush.msra.mxu0 1.0
    %3293 = vmatpush.msra.mxu0 1.0
    %3294 = vmatpush.msra.mxu0 1.0
    %3295 = vmatpush.msra.mxu0 1.0
    %3296 = vmatpush.msra.mxu0 1.0
    %3297 = vmatpush.msra.mxu0 1.0
    %3298 = vmatpush.msra.mxu0 1.0
    %3299 = vmatpush.msra.mxu0 1.0
    %3300 = vmatpush.msra.mxu0 1.0
    %3301 = vmatpush.msra.mxu0 1.0
    %3302 = vmatpush.msra.mxu0 1.0
    %3303 = vmatpush.msra.mxu0 1.0
    %3304 = vmatpush.msra.mxu0 1.0
    %3305 = vmatpush.msra.mxu0 1.0
    %3306 = vmatpush.msra.mxu0 1.0
    %3307 = vmatmul.f32.gmra.mxu0 %v3251
    %v3308 = vpop.f32.mrf.mxu0
    %v3309 = vadd.f32 0.0, %v3308
    %3310 = vmatmul.f32.gmra.mxu0 %v3254
    %v3311 = vpop.f32.mrf.mxu0
    %v3312 = vadd.f32 0.0, %v3311
    %3313 = vmatmul.f32.gmra.mxu0 %v3257
    %v3314 = vpop.f32.mrf.mxu0
    %v3315 = vadd.f32 0.0, %v3314
    %3316 = vmatmul.f32.gmra.mxu0 %v3260
    %v3317 = vpop.f32.mrf.mxu0
    %v3318 = vadd.f32 0.0, %v3317
    %3319 = vdwg.mxu0
    %3320 = vmatpush.msra.mxu0 1.0
    %3321 = vmatpush.msra.mxu0 1.0
    %3322 = vmatpush.msra.mxu0 1.0
    %3323 = vmatpush.msra.mxu0 1.0
    %3324 = vmatpush.msra.mxu0 1.0
    %3325 = vmatpush.msra.mxu0 1.0
    %3326 = vmatpush.msra.mxu0 1.0
    %3327 = vmatpush.msra.mxu0 1.0
    %3328 = vmatpush.msra.mxu0 1.0
    %3329 = vmatpush.msra.mxu0 1.0
    %3330 = vmatpush.msra.mxu0 1.0
    %3331 = vmatpush.msra.mxu0 1.0
    %3332 = vmatpush.msra.mxu0 1.0
    %3333 = vmatpush.msra.mxu0 1.0
    %3334 = vmatpush.msra.mxu0 1.0
    %3335 = vmatpush.msra.mxu0 1.0
    %3336 = vmatmul.f32.gmra.mxu0 %v3280
    %v3337 = vpop.f32.mrf.mxu0
    %v3338 = vadd.f32 %v3309, %v3337
    %3339 = vmatmul.f32.gmra.mxu0 %v3283
    %v3340 = vpop.f32.mrf.mxu0
    %v3341 = vadd.f32 %v3312, %v3340
    %3342 = vmatmul.f32.gmra.mxu0 %v3286
    %v3343 = vpop.f32.mrf.mxu0
    %v3344 = vadd.f32 %v3315, %v3343
    %3345 = vmatmul.f32.gmra.mxu0 %v3289
    %v3346 = vpop.f32.mrf.mxu0
    %v3347 = vadd.f32 %v3318, %v3346
    %3348 = vdwg.mxu0
    %v3349 = vmul.f32 %v3338, 0.00390625
    %v3350 = vmul.f32 %v3341, 0.00390625
    %v3351 = vmul.f32 %v3344, 0.00390625
    %v3352 = vmul.f32 %v3347, 0.00390625
    %3354 = vset.pattern.permute.xlu0 0
    %3355 = vperm.xlu0 %3354, %v3349
    %v3356 = vpop.permute.xlu0 %3355
    %3359 = vset.pattern.permute.xlu0 0
    %3360 = vperm.xlu0 %3359, %v3350
    %v3361 = vpop.permute.xlu0 %3360
    %3364 = vset.pattern.permute.xlu0 0
    %3365 = vperm.xlu0 %3364, %v3351
    %v3366 = vpop.permute.xlu0 %3365
    %3369 = vset.pattern.permute.xlu0 0
    %3370 = vperm.xlu0 %3369, %v3352
    %v3371 = vpop.permute.xlu0 %3370
    %v3373 = vsub.f32 %v3251, %v3356
    %v3374 = vsub.f32 %v3280, %v3356
    %v3375 = vsub.f32 %v3254, %v3361
    %v3376 = vsub.f32 %v3283, %v3361
    %v3377 = vsub.f32 %v3257, %v3366
    %v3378 = vsub.f32 %v3286, %v3366
    %v3379 = vsub.f32 %v3260, %v3371
    %v3380 = vsub.f32 %v3289, %v3371
    %v3381 = vmul.f32 %v3373, %v3373
    %v3382 = vmul.f32 %v3374, %v3374
    %v3383 = vmul.f32 %v3375, %v3375
    %v3384 = vmul.f32 %v3376, %v3376
    %v3385 = vmul.f32 %v3377, %v3377
    %v3386 = vmul.f32 %v3378, %v3378
    %v3387 = vmul.f32 %v3379, %v3379
    %v3388 = vmul.f32 %v3380, %v3380
    %3389 = vmatpush.msra.mxu0 1.0
    %3390 = vmatpush.msra.mxu0 1.0
    %3391 = vmatpush.msra.mxu0 1.0
    %3392 = vmatpush.msra.mxu0 1.0
    %3393 = vmatpush.msra.mxu0 1.0
    %3394 = vmatpush.msra.mxu0 1.0
    %3395 = vmatpush.msra.mxu0 1.0
    %3396 = vmatpush.msra.mxu0 1.0
    %3397 = vmatpush.msra.mxu0 1.0
    %3398 = vmatpush.msra.mxu0 1.0
    %3399 = vmatpush.msra.mxu0 1.0
    %3400 = vmatpush.msra.mxu0 1.0
    %3401 = vmatpush.msra.mxu0 1.0
    %3402 = vmatpush.msra.mxu0 1.0
    %3403 = vmatpush.msra.mxu0 1.0
    %3404 = vmatpush.msra.mxu0 1.0
    %3405 = vmatmul.f32.gmra.mxu0 %v3381
    %v3406 = vpop.f32.mrf.mxu0
    %v3407 = vadd.f32 0.0, %v3406
    %3408 = vmatmul.f32.gmra.mxu0 %v3383
    %v3409 = vpop.f32.mrf.mxu0
    %v3410 = vadd.f32 0.0, %v3409
    %3411 = vmatmul.f32.gmra.mxu0 %v3385
    %v3412 = vpop.f32.mrf.mxu0
    %v3413 = vadd.f32 0.0, %v3412
    %3414 = vmatmul.f32.gmra.mxu0 %v3387
    %v3415 = vpop.f32.mrf.mxu0
    %v3416 = vadd.f32 0.0, %v3415
    %3417 = vdwg.mxu0
    %3418 = vmatpush.msra.mxu0 1.0
    %3419 = vmatpush.msra.mxu0 1.0
    %3420 = vmatpush.msra.mxu0 1.0
    %3421 = vmatpush.msra.mxu0 1.0
    %3422 = vmatpush.msra.mxu0 1.0
    %3423 = vmatpush.msra.mxu0 1.0
    %3424 = vmatpush.msra.mxu0 1.0
    %3425 = vmatpush.msra.mxu0 1.0
    %3426 = vmatpush.msra.mxu0 1.0
    %3427 = vmatpush.msra.mxu0 1.0
    %3428 = vmatpush.msra.mxu0 1.0
    %3429 = vmatpush.msra.mxu0 1.0
    %3430 = vmatpush.msra.mxu0 1.0
    %3431 = vmatpush.msra.mxu0 1.0
    %3432 = vmatpush.msra.mxu0 1.0
    %3433 = vmatpush.msra.mxu0 1.0
    %3434 = vmatmul.f32.gmra.mxu0 %v3382
    %v3435 = vpop.f32.mrf.mxu0
    %v3436 = vadd.f32 %v3407, %v3435
    %3437 = vmatmul.f32.gmra.mxu0 %v3384
    %v3438 = vpop.f32.mrf.mxu0
    %v3439 = vadd.f32 %v3410, %v3438
    %3440 = vmatmul.f32.gmra.mxu0 %v3386
    %v3441 = vpop.f32.mrf.mxu0
    %v3442 = vadd.f32 %v3413, %v3441
    %3443 = vmatmul.f32.gmra.mxu0 %v3388
    %v3444 = vpop.f32.mrf.mxu0
    %v3445 = vadd.f32 %v3416, %v3444
    %3446 = vdwg.mxu0
    %v3447 = vmul.f32 %v3436, 0.00390625
    %v3448 = vmul.f32 %v3439, 0.00390625
    %v3449 = vmul.f32 %v3442, 0.00390625
    %v3450 = vmul.f32 %v3445, 0.00390625
    %v3451 = vadd.f32 %v3447, 1e-05
    %v3452 = vadd.f32 %v3448, 1e-05
    %v3453 = vadd.f32 %v3449, 1e-05
    %v3454 = vadd.f32 %v3450, 1e-05
    %v3455 = vrsqrt.pop %v3451
    %v3456 = vmul.f32 %v3455, %v3451
    %v3457 = vmul.f32 %v3456, %v3455
    %v3458 = vmul.f32 0.5, %v3457
    %v3459 = vsub.f32 1.5, %v3458
    %v3460 = vmul.f32 %v3455, %v3459
    %vm3461 = vweird.f32 %v3451
    %vm3462 = vweird.f32 %v3455
    %vm3463 = vmor %vm3461, %vm3462
    %v3464 = vsel %vm3463, %v3455, %v3460
    %v3465 = vrsqrt.pop %v3452
    %v3466 = vmul.f32 %v3465, %v3452
    %v3467 = vmul.f32 %v3466, %v3465
    %v3468 = vmul.f32 0.5, %v3467
    %v3469 = vsub.f32 1.5, %v3468
    %v3470 = vmul.f32 %v3465, %v3469
    %vm3471 = vweird.f32 %v3452
    %vm3472 = vweird.f32 %v3465
    %vm3473 = vmor %vm3471, %vm3472
    %v3474 = vsel %vm3473, %v3465, %v3470
    %v3475 = vrsqrt.pop %v3453
    %v3476 = vmul.f32 %v3475, %v3453
    %v3477 = vmul.f32 %v3476, %v3475
    %v3478 = vmul.f32 0.5, %v3477
    %v3479 = vsub.f32 1.5, %v3478
    %v3480 = vmul.f32 %v3475, %v3479
    %vm3481 = vweird.f32 %v3453
    %vm3482 = vweird.f32 %v3475
    %vm3483 = vmor %vm3481, %vm3482
    %v3484 = vsel %vm3483, %v3475, %v3480
    %v3485 = vrsqrt.pop %v3454
    %v3486 = vmul.f32 %v3485, %v3454
    %v3487 = vmul.f32 %v3486, %v3485
    %v3488 = vmul.f32 0.5, %v3487
    %v3489 = vsub.f32 1.5, %v3488
    %v3490 = vmul.f32 %v3485, %v3489
    %vm3491 = vweird.f32 %v3454
    %vm3492 = vweird.f32 %v3485
    %vm3493 = vmor %vm3491, %vm3492
    %v3494 = vsel %vm3493, %v3485, %v3490
    %s3495 = scalar_lea.vmem %s4, 352
    %v3496 = vld [vmem:[%s3495] sm:$0xff]
    %v3497 = vld [vmem:[%s3495 + $0x8] sm:$0xff]
    %v3498 = vld [vmem:[%s3495 + $0x10] sm:$0xff]
    %v3499 = vld [vmem:[%s3495 + $0x18] sm:$0xff]
    %v3500 = vmul.f32 %v3464, %v3496
    %v3501 = vmul.f32 %v3474, %v3497
    %v3502 = vmul.f32 %v3484, %v3498
    %v3503 = vmul.f32 %v3494, %v3499
    %3505 = vset.pattern.permute.xlu0 0
    %3506 = vperm.xlu0 %3505, %v3500
    %v3507 = vpop.permute.xlu0 %3506
    %3510 = vset.pattern.permute.xlu0 0
    %3511 = vperm.xlu0 %3510, %v3501
    %v3512 = vpop.permute.xlu0 %3511
    %3515 = vset.pattern.permute.xlu0 0
    %3516 = vperm.xlu0 %3515, %v3502
    %v3517 = vpop.permute.xlu0 %3516
    %3520 = vset.pattern.permute.xlu0 0
    %3521 = vperm.xlu0 %3520, %v3503
    %v3522 = vpop.permute.xlu0 %3521
    %v3524 = vmul.f32 %v3373, %v3507
    %v3525 = vmul.f32 %v3374, %v3507
    %v3526 = vmul.f32 %v3375, %v3512
    %v3527 = vmul.f32 %v3376, %v3512
    %v3528 = vmul.f32 %v3377, %v3517
    %v3529 = vmul.f32 %v3378, %v3517
    %v3530 = vmul.f32 %v3379, %v3522
    %v3531 = vmul.f32 %v3380, %v3522
    %s3532 = scalar_lea.vmem %s4, 608
    %v3533 = vld [vmem:[%s3532] sm:$0xff]
    %v3534 = vld [vmem:[%s3532 + $0x8] sm:$0xff]
    %v3535 = vld [vmem:[%s3532 + $0x10] sm:$0xff]
    %v3536 = vld [vmem:[%s3532 + $0x18] sm:$0xff]
    %3538 = vset.pattern.permute.xlu0 0
    %3539 = vperm.xlu0 %3538, %v3533
    %v3540 = vpop.permute.xlu0 %3539
    %3543 = vset.pattern.permute.xlu0 0
    %3544 = vperm.xlu0 %3543, %v3534
    %v3545 = vpop.permute.xlu0 %3544
    %3548 = vset.pattern.permute.xlu0 0
    %3549 = vperm.xlu0 %3548, %v3535
    %v3550 = vpop.permute.xlu0 %3549
    %3553 = vset.pattern.permute.xlu0 0
    %3554 = vperm.xlu0 %3553, %v3536
    %v3555 = vpop.permute.xlu0 %3554
    %v3557 = vadd.f32 %v3524, %v3540
    %v3558 = vadd.f32 %v3525, %v3540
    %v3559 = vadd.f32 %v3526, %v3545
    %v3560 = vadd.f32 %v3527, %v3545
    %v3561 = vadd.f32 %v3528, %v3550
    %v3562 = vadd.f32 %v3529, %v3550
    %v3563 = vadd.f32 %v3530, %v3555
    %v3564 = vadd.f32 %v3531, %v3555
    %v3565 = vmul.f32 %v3557, 0.5
    %v3566 = vmul.f32 %v3558, 0.5
    %v3567 = vmul.f32 %v3559, 0.5
    %v3568 = vmul.f32 %v3560, 0.5
    %v3569 = vmul.f32 %v3561, 0.5
    %v3570 = vmul.f32 %v3562, 0.5
    %v3571 = vmul.f32 %v3563, 0.5
    %v3572 = vmul.f32 %v3564, 0.5
    %v3573 = vmul.f32 %v3557, 0.70710677
    %v3574 = vmul.f32 %v3558, 0.70710677
    %v3575 = vmul.f32 %v3559, 0.70710677
    %v3576 = vmul.f32 %v3560, 0.70710677
    %v3577 = vmul.f32 %v3561, 0.70710677
    %v3578 = vmul.f32 %v3562, 0.70710677
    %v3579 = vmul.f32 %v3563, 0.70710677
    %v3580 = vmul.f32 %v3564, 0.70710677
    %v3581 = vmul.f32 %v3573, %v3573
    %v3582 = vmin.f32 16.0, %v3581
    %v3583 = vmul.f32 %v3582, 2.1237322e-06
    %v3584 = vadd.f32 %v3583, 0.00028619796
    %v3585 = vmul.f32 %v3582, %v3584
    %v3586 = vadd.f32 %v3585, 0.0036580483
    %v3587 = vmul.f32 %v3582, %v3586
    %v3588 = vadd.f32 %v3587, 0.05243302
    %v3589 = vmul.f32 %v3582, %v3588
    %v3590 = vadd.f32 %v3589, 0.18741608
    %v3591 = vmul.f32 %v3582, %v3590
    %v3592 = vadd.f32 %v3591, 1.1283791
    %v3593 = vmul.f32 %v3573, %v3592
    %v3594 = vmul.f32 %v3582, 3.8918573e-05
    %v3595 = vadd.f32 %v3594, 0.001143296
    %v3596 = vmul.f32 %v3582, %v3595
    %v3597 = vadd.f32 %v3596, 0.014752088
    %v3598 = vmul.f32 %v3582, %v3597
    %v3599 = vadd.f32 %v3598, 0.112945676
    %v3600 = vmul.f32 %v3582, %v3599
    %v3601 = vadd.f32 %v3600, 0.4994258
    %v3602 = vmul.f32 %v3582, %v3601
    %v3603 = vadd.f32 %v3602, 1.0
    %v3604 = vrcp.pop %v3603
    %v3605 = vmul.f32 %v3603, %v3604
    %v3606 = vsub.f32 1.0, %v3605
    %v3607 = vmul.f32 %v3604, %v3606
    %v3608 = vadd.f32 %v3604, %v3607
    %vm3609 = vweird.f32 %v3603
    %vm3610 = vweird.f32 %v3604
    %vm3611 = vmor %vm3609, %vm3610
    %v3612 = vsel %vm3611, %v3604, %v3608
    %v3613 = vand.u32 2147483647, %v3603
    %vm3614 = vcmp.eq.f32.partialorder %v3613, 8.507059e+37
    %v3615 = vand.u32 %v3603, 2147483648
    %v3616 = vor.u32 1.1754944e-38, %v3615
    %v3617 = vsel %vm3614, %v3616, %v3612
    %v3618 = vmul.f32 %v3593, %v3617
    %v3619 = vmin.f32 %v3618, 1.0
    %v3620 = vmax.f32 %v3619, -1.0
    %v3621 = vmul.f32 %v3574, %v3574
    %v3622 = vmin.f32 16.0, %v3621
    %v3623 = vmul.f32 %v3622, 2.1237322e-06
    %v3624 = vadd.f32 %v3623, 0.00028619796
    %v3625 = vmul.f32 %v3622, %v3624
    %v3626 = vadd.f32 %v3625, 0.0036580483
    %v3627 = vmul.f32 %v3622, %v3626
    %v3628 = vadd.f32 %v3627, 0.05243302
    %v3629 = vmul.f32 %v3622, %v3628
    %v3630 = vadd.f32 %v3629, 0.18741608
    %v3631 = vmul.f32 %v3622, %v3630
    %v3632 = vadd.f32 %v3631, 1.1283791
    %v3633 = vmul.f32 %v3574, %v3632
    %v3634 = vmul.f32 %v3622, 3.8918573e-05
    %v3635 = vadd.f32 %v3634, 0.001143296
    %v3636 = vmul.f32 %v3622, %v3635
    %v3637 = vadd.f32 %v3636, 0.014752088
    %v3638 = vmul.f32 %v3622, %v3637
    %v3639 = vadd.f32 %v3638, 0.112945676
    %v3640 = vmul.f32 %v3622, %v3639
    %v3641 = vadd.f32 %v3640, 0.4994258
    %v3642 = vmul.f32 %v3622, %v3641
    %v3643 = vadd.f32 %v3642, 1.0
    %v3644 = vrcp.pop %v3643
    %v3645 = vmul.f32 %v3643, %v3644
    %v3646 = vsub.f32 1.0, %v3645
    %v3647 = vmul.f32 %v3644, %v3646
    %v3648 = vadd.f32 %v3644, %v3647
    %vm3649 = vweird.f32 %v3643
    %vm3650 = vweird.f32 %v3644
    %vm3651 = vmor %vm3649, %vm3650
    %v3652 = vsel %vm3651, %v3644, %v3648
    %v3653 = vand.u32 2147483647, %v3643
    %vm3654 = vcmp.eq.f32.partialorder %v3653, 8.507059e+37
    %v3655 = vand.u32 %v3643, 2147483648
    %v3656 = vor.u32 1.1754944e-38, %v3655
    %v3657 = vsel %vm3654, %v3656, %v3652
    %v3658 = vmul.f32 %v3633, %v3657
    %v3659 = vmin.f32 %v3658, 1.0
    %v3660 = vmax.f32 %v3659, -1.0
    %v3661 = vmul.f32 %v3575, %v3575
    %v3662 = vmin.f32 16.0, %v3661
    %v3663 = vmul.f32 %v3662, 2.1237322e-06
    %v3664 = vadd.f32 %v3663, 0.00028619796
    %v3665 = vmul.f32 %v3662, %v3664
    %v3666 = vadd.f32 %v3665, 0.0036580483
    %v3667 = vmul.f32 %v3662, %v3666
    %v3668 = vadd.f32 %v3667, 0.05243302
    %v3669 = vmul.f32 %v3662, %v3668
    %v3670 = vadd.f32 %v3669, 0.18741608
    %v3671 = vmul.f32 %v3662, %v3670
    %v3672 = vadd.f32 %v3671, 1.1283791
    %v3673 = vmul.f32 %v3575, %v3672
    %v3674 = vmul.f32 %v3662, 3.8918573e-05
    %v3675 = vadd.f32 %v3674, 0.001143296
    %v3676 = vmul.f32 %v3662, %v3675
    %v3677 = vadd.f32 %v3676, 0.014752088
    %v3678 = vmul.f32 %v3662, %v3677
    %v3679 = vadd.f32 %v3678, 0.112945676
    %v3680 = vmul.f32 %v3662, %v3679
    %v3681 = vadd.f32 %v3680, 0.4994258
    %v3682 = vmul.f32 %v3662, %v3681
    %v3683 = vadd.f32 %v3682, 1.0
    %v3684 = vrcp.pop %v3683
    %v3685 = vmul.f32 %v3683, %v3684
    %v3686 = vsub.f32 1.0, %v3685
    %v3687 = vmul.f32 %v3684, %v3686
    %v3688 = vadd.f32 %v3684, %v3687
    %vm3689 = vweird.f32 %v3683
    %vm3690 = vweird.f32 %v3684
    %vm3691 = vmor %vm3689, %vm3690
    %v3692 = vsel %vm3691, %v3684, %v3688
    %v3693 = vand.u32 2147483647, %v3683
    %vm3694 = vcmp.eq.f32.partialorder %v3693, 8.507059e+37
    %v3695 = vand.u32 %v3683, 2147483648
    %v3696 = vor.u32 1.1754944e-38, %v3695
    %v3697 = vsel %vm3694, %v3696, %v3692
    %v3698 = vmul.f32 %v3673, %v3697
    %v3699 = vmin.f32 %v3698, 1.0
    %v3700 = vmax.f32 %v3699, -1.0
    %v3701 = vmul.f32 %v3576, %v3576
    %v3702 = vmin.f32 16.0, %v3701
    %v3703 = vmul.f32 %v3702, 2.1237322e-06
    %v3704 = vadd.f32 %v3703, 0.00028619796
    %v3705 = vmul.f32 %v3702, %v3704
    %v3706 = vadd.f32 %v3705, 0.0036580483
    %v3707 = vmul.f32 %v3702, %v3706
    %v3708 = vadd.f32 %v3707, 0.05243302
    %v3709 = vmul.f32 %v3702, %v3708
    %v3710 = vadd.f32 %v3709, 0.18741608
    %v3711 = vmul.f32 %v3702, %v3710
    %v3712 = vadd.f32 %v3711, 1.1283791
    %v3713 = vmul.f32 %v3576, %v3712
    %v3714 = vmul.f32 %v3702, 3.8918573e-05
    %v3715 = vadd.f32 %v3714, 0.001143296
    %v3716 = vmul.f32 %v3702, %v3715
    %v3717 = vadd.f32 %v3716, 0.014752088
    %v3718 = vmul.f32 %v3702, %v3717
    %v3719 = vadd.f32 %v3718, 0.112945676
    %v3720 = vmul.f32 %v3702, %v3719
    %v3721 = vadd.f32 %v3720, 0.4994258
    %v3722 = vmul.f32 %v3702, %v3721
    %v3723 = vadd.f32 %v3722, 1.0
    %v3724 = vrcp.pop %v3723
    %v3725 = vmul.f32 %v3723, %v3724
    %v3726 = vsub.f32 1.0, %v3725
    %v3727 = vmul.f32 %v3724, %v3726
    %v3728 = vadd.f32 %v3724, %v3727
    %vm3729 = vweird.f32 %v3723
    %vm3730 = vweird.f32 %v3724
    %vm3731 = vmor %vm3729, %vm3730
    %v3732 = vsel %vm3731, %v3724, %v3728
    %v3733 = vand.u32 2147483647, %v3723
    %vm3734 = vcmp.eq.f32.partialorder %v3733, 8.507059e+37
    %v3735 = vand.u32 %v3723, 2147483648
    %v3736 = vor.u32 1.1754944e-38, %v3735
    %v3737 = vsel %vm3734, %v3736, %v3732
    %v3738 = vmul.f32 %v3713, %v3737
    %v3739 = vmin.f32 %v3738, 1.0
    %v3740 = vmax.f32 %v3739, -1.0
    %v3741 = vmul.f32 %v3577, %v3577
    %v3742 = vmin.f32 16.0, %v3741
    %v3743 = vmul.f32 %v3742, 2.1237322e-06
    %v3744 = vadd.f32 %v3743, 0.00028619796
    %v3745 = vmul.f32 %v3742, %v3744
    %v3746 = vadd.f32 %v3745, 0.0036580483
    %v3747 = vmul.f32 %v3742, %v3746
    %v3748 = vadd.f32 %v3747, 0.05243302
    %v3749 = vmul.f32 %v3742, %v3748
    %v3750 = vadd.f32 %v3749, 0.18741608
    %v3751 = vmul.f32 %v3742, %v3750
    %v3752 = vadd.f32 %v3751, 1.1283791
    %v3753 = vmul.f32 %v3577, %v3752
    %v3754 = vmul.f32 %v3742, 3.8918573e-05
    %v3755 = vadd.f32 %v3754, 0.001143296
    %v3756 = vmul.f32 %v3742, %v3755
    %v3757 = vadd.f32 %v3756, 0.014752088
    %v3758 = vmul.f32 %v3742, %v3757
    %v3759 = vadd.f32 %v3758, 0.112945676
    %v3760 = vmul.f32 %v3742, %v3759
    %v3761 = vadd.f32 %v3760, 0.4994258
    %v3762 = vmul.f32 %v3742, %v3761
    %v3763 = vadd.f32 %v3762, 1.0
    %v3764 = vrcp.pop %v3763
    %v3765 = vmul.f32 %v3763, %v3764
    %v3766 = vsub.f32 1.0, %v3765
    %v3767 = vmul.f32 %v3764, %v3766
    %v3768 = vadd.f32 %v3764, %v3767
    %vm3769 = vweird.f32 %v3763
    %vm3770 = vweird.f32 %v3764
    %vm3771 = vmor %vm3769, %vm3770
    %v3772 = vsel %vm3771, %v3764, %v3768
    %v3773 = vand.u32 2147483647, %v3763
    %vm3774 = vcmp.eq.f32.partialorder %v3773, 8.507059e+37
    %v3775 = vand.u32 %v3763, 2147483648
    %v3776 = vor.u32 1.1754944e-38, %v3775
    %v3777 = vsel %vm3774, %v3776, %v3772
    %v3778 = vmul.f32 %v3753, %v3777
    %v3779 = vmin.f32 %v3778, 1.0
    %v3780 = vmax.f32 %v3779, -1.0
    %v3781 = vmul.f32 %v3578, %v3578
    %v3782 = vmin.f32 16.0, %v3781
    %v3783 = vmul.f32 %v3782, 2.1237322e-06
    %v3784 = vadd.f32 %v3783, 0.00028619796
    %v3785 = vmul.f32 %v3782, %v3784
    %v3786 = vadd.f32 %v3785, 0.0036580483
    %v3787 = vmul.f32 %v3782, %v3786
    %v3788 = vadd.f32 %v3787, 0.05243302
    %v3789 = vmul.f32 %v3782, %v3788
    %v3790 = vadd.f32 %v3789, 0.18741608
    %v3791 = vmul.f32 %v3782, %v3790
    %v3792 = vadd.f32 %v3791, 1.1283791
    %v3793 = vmul.f32 %v3578, %v3792
    %v3794 = vmul.f32 %v3782, 3.8918573e-05
    %v3795 = vadd.f32 %v3794, 0.001143296
    %v3796 = vmul.f32 %v3782, %v3795
    %v3797 = vadd.f32 %v3796, 0.014752088
    %v3798 = vmul.f32 %v3782, %v3797
    %v3799 = vadd.f32 %v3798, 0.112945676
    %v3800 = vmul.f32 %v3782, %v3799
    %v3801 = vadd.f32 %v3800, 0.4994258
    %v3802 = vmul.f32 %v3782, %v3801
    %v3803 = vadd.f32 %v3802, 1.0
    %v3804 = vrcp.pop %v3803
    %v3805 = vmul.f32 %v3803, %v3804
    %v3806 = vsub.f32 1.0, %v3805
    %v3807 = vmul.f32 %v3804, %v3806
    %v3808 = vadd.f32 %v3804, %v3807
    %vm3809 = vweird.f32 %v3803
    %vm3810 = vweird.f32 %v3804
    %vm3811 = vmor %vm3809, %vm3810
    %v3812 = vsel %vm3811, %v3804, %v3808
    %v3813 = vand.u32 2147483647, %v3803
    %vm3814 = vcmp.eq.f32.partialorder %v3813, 8.507059e+37
    %v3815 = vand.u32 %v3803, 2147483648
    %v3816 = vor.u32 1.1754944e-38, %v3815
    %v3817 = vsel %vm3814, %v3816, %v3812
    %v3818 = vmul.f32 %v3793, %v3817
    %v3819 = vmin.f32 %v3818, 1.0
    %v3820 = vmax.f32 %v3819, -1.0
    %v3821 = vmul.f32 %v3579, %v3579
    %v3822 = vmin.f32 16.0, %v3821
    %v3823 = vmul.f32 %v3822, 2.1237322e-06
    %v3824 = vadd.f32 %v3823, 0.00028619796
    %v3825 = vmul.f32 %v3822, %v3824
    %v3826 = vadd.f32 %v3825, 0.0036580483
    %v3827 = vmul.f32 %v3822, %v3826
    %v3828 = vadd.f32 %v3827, 0.05243302
    %v3829 = vmul.f32 %v3822, %v3828
    %v3830 = vadd.f32 %v3829, 0.18741608
    %v3831 = vmul.f32 %v3822, %v3830
    %v3832 = vadd.f32 %v3831, 1.1283791
    %v3833 = vmul.f32 %v3579, %v3832
    %v3834 = vmul.f32 %v3822, 3.8918573e-05
    %v3835 = vadd.f32 %v3834, 0.001143296
    %v3836 = vmul.f32 %v3822, %v3835
    %v3837 = vadd.f32 %v3836, 0.014752088
    %v3838 = vmul.f32 %v3822, %v3837
    %v3839 = vadd.f32 %v3838, 0.112945676
    %v3840 = vmul.f32 %v3822, %v3839
    %v3841 = vadd.f32 %v3840, 0.4994258
    %v3842 = vmul.f32 %v3822, %v3841
    %v3843 = vadd.f32 %v3842, 1.0
    %v3844 = vrcp.pop %v3843
    %v3845 = vmul.f32 %v3843, %v3844
    %v3846 = vsub.f32 1.0, %v3845
    %v3847 = vmul.f32 %v3844, %v3846
    %v3848 = vadd.f32 %v3844, %v3847
    %vm3849 = vweird.f32 %v3843
    %vm3850 = vweird.f32 %v3844
    %vm3851 = vmor %vm3849, %vm3850
    %v3852 = vsel %vm3851, %v3844, %v3848
    %v3853 = vand.u32 2147483647, %v3843
    %vm3854 = vcmp.eq.f32.partialorder %v3853, 8.507059e+37
    %v3855 = vand.u32 %v3843, 2147483648
    %v3856 = vor.u32 1.1754944e-38, %v3855
    %v3857 = vsel %vm3854, %v3856, %v3852
    %v3858 = vmul.f32 %v3833, %v3857
    %v3859 = vmin.f32 %v3858, 1.0
    %v3860 = vmax.f32 %v3859, -1.0
    %v3861 = vmul.f32 %v3580, %v3580
    %v3862 = vmin.f32 16.0, %v3861
    %v3863 = vmul.f32 %v3862, 2.1237322e-06
    %v3864 = vadd.f32 %v3863, 0.00028619796
    %v3865 = vmul.f32 %v3862, %v3864
    %v3866 = vadd.f32 %v3865, 0.0036580483
    %v3867 = vmul.f32 %v3862, %v3866
    %v3868 = vadd.f32 %v3867, 0.05243302
    %v3869 = vmul.f32 %v3862, %v3868
    %v3870 = vadd.f32 %v3869, 0.18741608
    %v3871 = vmul.f32 %v3862, %v3870
    %v3872 = vadd.f32 %v3871, 1.1283791
    %v3873 = vmul.f32 %v3580, %v3872
    %v3874 = vmul.f32 %v3862, 3.8918573e-05
    %v3875 = vadd.f32 %v3874, 0.001143296
    %v3876 = vmul.f32 %v3862, %v3875
    %v3877 = vadd.f32 %v3876, 0.014752088
    %v3878 = vmul.f32 %v3862, %v3877
    %v3879 = vadd.f32 %v3878, 0.112945676
    %v3880 = vmul.f32 %v3862, %v3879
    %v3881 = vadd.f32 %v3880, 0.4994258
    %v3882 = vmul.f32 %v3862, %v3881
    %v3883 = vadd.f32 %v3882, 1.0
    %v3884 = vrcp.pop %v3883
    %v3885 = vmul.f32 %v3883, %v3884
    %v3886 = vsub.f32 1.0, %v3885
    %v3887 = vmul.f32 %v3884, %v3886
    %v3888 = vadd.f32 %v3884, %v3887
    %vm3889 = vweird.f32 %v3883
    %vm3890 = vweird.f32 %v3884
    %vm3891 = vmor %vm3889, %vm3890
    %v3892 = vsel %vm3891, %v3884, %v3888
    %v3893 = vand.u32 2147483647, %v3883
    %vm3894 = vcmp.eq.f32.partialorder %v3893, 8.507059e+37
    %v3895 = vand.u32 %v3883, 2147483648
    %v3896 = vor.u32 1.1754944e-38, %v3895
    %v3897 = vsel %vm3894, %v3896, %v3892
    %v3898 = vmul.f32 %v3873, %v3897
    %v3899 = vmin.f32 %v3898, 1.0
    %v3900 = vmax.f32 %v3899, -1.0
    %v3901 = vadd.f32 %v3620, 1.0
    %v3902 = vadd.f32 %v3660, 1.0
    %v3903 = vadd.f32 %v3700, 1.0
    %v3904 = vadd.f32 %v3740, 1.0
    %v3905 = vadd.f32 %v3780, 1.0
    %v3906 = vadd.f32 %v3820, 1.0
    %v3907 = vadd.f32 %v3860, 1.0
    %v3908 = vadd.f32 %v3900, 1.0
    %v3909 = vmul.f32 %v3565, %v3901
    %v3910 = vmul.f32 %v3566, %v3902
    %v3911 = vmul.f32 %v3567, %v3903
    %v3912 = vmul.f32 %v3568, %v3904
    %v3913 = vmul.f32 %v3569, %v3905
    %v3914 = vmul.f32 %v3570, %v3906
    %v3915 = vmul.f32 %v3571, %v3907
    %v3916 = vmul.f32 %v3572, %v3908
    %s3917 = scalar_lea.vmem %s2, 96
    %v3918 = vld [vmem:[%s3917] sm:$0xff]
    %v3919 = vld [vmem:[%s3917 + $0x8] sm:$0xff]
    %v3920 = vld [vmem:[%s3917 + $0x10] sm:$0xff]
    %v3921 = vld [vmem:[%s3917 + $0x18] sm:$0xff]
    %s3922 = scalar_lea.vmem %s4, 128
    %v3923 = vld [vmem:[%s3922] sm:$0xff]
    %v3924 = vld [vmem:[%s3922 + $0x8] sm:$0xff]
    %v3925 = vld [vmem:[%s3922 + $0x10] sm:$0xff]
    %v3926 = vld [vmem:[%s3922 + $0x18] sm:$0xff]
    %3928 = vset.pattern.permute.xlu0 0
    %3929 = vperm.xlu0 %3928, %v3923
    %v3930 = vpop.permute.xlu0 %3929
    %3933 = vset.pattern.permute.xlu0 0
    %3934 = vperm.xlu0 %3933, %v3924
    %v3935 = vpop.permute.xlu0 %3934
    %3938 = vset.pattern.permute.xlu0 0
    %3939 = vperm.xlu0 %3938, %v3925
    %v3940 = vpop.permute.xlu0 %3939
    %3943 = vset.pattern.permute.xlu0 0
    %3944 = vperm.xlu0 %3943, %v3926
    %v3945 = vpop.permute.xlu0 %3944
    %v3948 = vsel %vm1760, %v3918, 0
    %v3951 = vsel %vm1760, %v3919, 0
    %v3954 = vsel %vm1760, %v3920, 0
    %v3957 = vsel %vm1760, %v3921, 0
    %3959 = vmatpush.msra.mxu0 0.0
    %3960 = vmatpush.msra.mxu0 0.0
    %3961 = vmatpush.msra.mxu0 0.0
    %3962 = vmatpush.msra.mxu0 0.0
    %3963 = vmatpush.msra.mxu0 0.0
    %3964 = vmatpush.msra.mxu0 0.0
    %3965 = vmatpush.msra.mxu0 0.0
    %3966 = vmatpush.msra.mxu0 0.0
    %3967 = vmatpush.msra.mxu0 0.0
    %3968 = vmatpush.msra.mxu0 0.0
    %3969 = vmatpush.msra.mxu0 0.0
    %3970 = vmatpush.msra.mxu0 0.0
    %3971 = vmatpush.msra.mxu0 %v3915
    %3972 = vmatpush.msra.mxu0 %v3913
    %3973 = vmatpush.msra.mxu0 %v3911
    %3974 = vmatpush.msra.mxu0 %v3909
    %3975 = vmatmul.f32.gmra.mxu0 %v3948
    %v3976 = vpop.f32.mrf.mxu0
    %v3977 = vadd.f32 %v3930, %v3976
    %3978 = vmatmul.f32.gmra.mxu0 %v3951
    %v3979 = vpop.f32.mrf.mxu0
    %v3980 = vadd.f32 %v3935, %v3979
    %3981 = vmatmul.f32.gmra.mxu0 %v3954
    %v3982 = vpop.f32.mrf.mxu0
    %v3983 = vadd.f32 %v3940, %v3982
    %3984 = vmatmul.f32.gmra.mxu0 %v3957
    %v3985 = vpop.f32.mrf.mxu0
    %v3986 = vadd.f32 %v3945, %v3985
    %3987 = vdwg.mxu0
    %3988 = vmatpush.msra.mxu0 0.0
    %3989 = vmatpush.msra.mxu0 0.0
    %3990 = vmatpush.msra.mxu0 0.0
    %3991 = vmatpush.msra.mxu0 0.0
    %3992 = vmatpush.msra.mxu0 0.0
    %3993 = vmatpush.msra.mxu0 0.0
    %3994 = vmatpush.msra.mxu0 0.0
    %3995 = vmatpush.msra.mxu0 0.0
    %3996 = vmatpush.msra.mxu0 0.0
    %3997 = vmatpush.msra.mxu0 0.0
    %3998 = vmatpush.msra.mxu0 0.0
    %3999 = vmatpush.msra.mxu0 0.0
    %4000 = vmatpush.msra.mxu0 %v3916
    %4001 = vmatpush.msra.mxu0 %v3914
    %4002 = vmatpush.msra.mxu0 %v3912
    %4003 = vmatpush.msra.mxu0 %v3910
    %4004 = vmatmul.f32.gmra.mxu0 %v3948
    %v4005 = vpop.f32.mrf.mxu0
    %v4006 = vadd.f32 %v3930, %v4005
    %4007 = vmatmul.f32.gmra.mxu0 %v3951
    %v4008 = vpop.f32.mrf.mxu0
    %v4009 = vadd.f32 %v3935, %v4008
    %4010 = vmatmul.f32.gmra.mxu0 %v3954
    %v4011 = vpop.f32.mrf.mxu0
    %v4012 = vadd.f32 %v3940, %v4011
    %4013 = vmatmul.f32.gmra.mxu0 %v3957
    %v4014 = vpop.f32.mrf.mxu0
    %v4015 = vadd.f32 %v3945, %v4014
    %4016 = vdwg.mxu0
    %4017 = vmatpush.msra.mxu0 1.0
    %4018 = vmatpush.msra.mxu0 1.0
    %4019 = vmatpush.msra.mxu0 1.0
    %4020 = vmatpush.msra.mxu0 1.0
    %4021 = vmatpush.msra.mxu0 1.0
    %4022 = vmatpush.msra.mxu0 1.0
    %4023 = vmatpush.msra.mxu0 1.0
    %4024 = vmatpush.msra.mxu0 1.0
    %4025 = vmatpush.msra.mxu0 1.0
    %4026 = vmatpush.msra.mxu0 1.0
    %4027 = vmatpush.msra.mxu0 1.0
    %4028 = vmatpush.msra.mxu0 1.0
    %4029 = vmatpush.msra.mxu0 1.0
    %4030 = vmatpush.msra.mxu0 1.0
    %4031 = vmatpush.msra.mxu0 1.0
    %4032 = vmatpush.msra.mxu0 1.0
    %4033 = vmatmul.f32.gmra.mxu0 %v3977
    %v4034 = vpop.f32.mrf.mxu0
    %v4035 = vadd.f32 0.0, %v4034
    %4036 = vmatmul.f32.gmra.mxu0 %v3980
    %v4037 = vpop.f32.mrf.mxu0
    %v4038 = vadd.f32 0.0, %v4037
    %4039 = vmatmul.f32.gmra.mxu0 %v3983
    %v4040 = vpop.f32.mrf.mxu0
    %v4041 = vadd.f32 0.0, %v4040
    %4042 = vmatmul.f32.gmra.mxu0 %v3986
    %v4043 = vpop.f32.mrf.mxu0
    %v4044 = vadd.f32 0.0, %v4043
    %4045 = vdwg.mxu0
    %4046 = vmatpush.msra.mxu0 1.0
    %4047 = vmatpush.msra.mxu0 1.0
    %4048 = vmatpush.msra.mxu0 1.0
    %4049 = vmatpush.msra.mxu0 1.0
    %4050 = vmatpush.msra.mxu0 1.0
    %4051 = vmatpush.msra.mxu0 1.0
    %4052 = vmatpush.msra.mxu0 1.0
    %4053 = vmatpush.msra.mxu0 1.0
    %4054 = vmatpush.msra.mxu0 1.0
    %4055 = vmatpush.msra.mxu0 1.0
    %4056 = vmatpush.msra.mxu0 1.0
    %4057 = vmatpush.msra.mxu0 1.0
    %4058 = vmatpush.msra.mxu0 1.0
    %4059 = vmatpush.msra.mxu0 1.0
    %4060 = vmatpush.msra.mxu0 1.0
    %4061 = vmatpush.msra.mxu0 1.0
    %4062 = vmatmul.f32.gmra.mxu0 %v4006
    %v4063 = vpop.f32.mrf.mxu0
    %v4064 = vadd.f32 %v4035, %v4063
    %4065 = vmatmul.f32.gmra.mxu0 %v4009
    %v4066 = vpop.f32.mrf.mxu0
    %v4067 = vadd.f32 %v4038, %v4066
    %4068 = vmatmul.f32.gmra.mxu0 %v4012
    %v4069 = vpop.f32.mrf.mxu0
    %v4070 = vadd.f32 %v4041, %v4069
    %4071 = vmatmul.f32.gmra.mxu0 %v4015
    %v4072 = vpop.f32.mrf.mxu0
    %v4073 = vadd.f32 %v4044, %v4072
    %4074 = vdwg.mxu0
    %v4075 = vmul.f32 %v4064, 0.00390625
    %v4076 = vmul.f32 %v4067, 0.00390625
    %v4077 = vmul.f32 %v4070, 0.00390625
    %v4078 = vmul.f32 %v4073, 0.00390625
    %4080 = vset.pattern.permute.xlu0 0
    %4081 = vperm.xlu0 %4080, %v4075
    %v4082 = vpop.permute.xlu0 %4081
    %4085 = vset.pattern.permute.xlu0 0
    %4086 = vperm.xlu0 %4085, %v4076
    %v4087 = vpop.permute.xlu0 %4086
    %4090 = vset.pattern.permute.xlu0 0
    %4091 = vperm.xlu0 %4090, %v4077
    %v4092 = vpop.permute.xlu0 %4091
    %4095 = vset.pattern.permute.xlu0 0
    %4096 = vperm.xlu0 %4095, %v4078
    %v4097 = vpop.permute.xlu0 %4096
    %v4099 = vsub.f32 %v3977, %v4082
    %v4100 = vsub.f32 %v4006, %v4082
    %v4101 = vsub.f32 %v3980, %v4087
    %v4102 = vsub.f32 %v4009, %v4087
    %v4103 = vsub.f32 %v3983, %v4092
    %v4104 = vsub.f32 %v4012, %v4092
    %v4105 = vsub.f32 %v3986, %v4097
    %v4106 = vsub.f32 %v4015, %v4097
    %v4107 = vmul.f32 %v4099, %v4099
    %v4108 = vmul.f32 %v4100, %v4100
    %v4109 = vmul.f32 %v4101, %v4101
    %v4110 = vmul.f32 %v4102, %v4102
    %v4111 = vmul.f32 %v4103, %v4103
    %v4112 = vmul.f32 %v4104, %v4104
    %v4113 = vmul.f32 %v4105, %v4105
    %v4114 = vmul.f32 %v4106, %v4106
    %4115 = vmatpush.msra.mxu0 1.0
    %4116 = vmatpush.msra.mxu0 1.0
    %4117 = vmatpush.msra.mxu0 1.0
    %4118 = vmatpush.msra.mxu0 1.0
    %4119 = vmatpush.msra.mxu0 1.0
    %4120 = vmatpush.msra.mxu0 1.0
    %4121 = vmatpush.msra.mxu0 1.0
    %4122 = vmatpush.msra.mxu0 1.0
    %4123 = vmatpush.msra.mxu0 1.0
    %4124 = vmatpush.msra.mxu0 1.0
    %4125 = vmatpush.msra.mxu0 1.0
    %4126 = vmatpush.msra.mxu0 1.0
    %4127 = vmatpush.msra.mxu0 1.0
    %4128 = vmatpush.msra.mxu0 1.0
    %4129 = vmatpush.msra.mxu0 1.0
    %4130 = vmatpush.msra.mxu0 1.0
    %4131 = vmatmul.f32.gmra.mxu0 %v4107
    %v4132 = vpop.f32.mrf.mxu0
    %v4133 = vadd.f32 0.0, %v4132
    %4134 = vmatmul.f32.gmra.mxu0 %v4109
    %v4135 = vpop.f32.mrf.mxu0
    %v4136 = vadd.f32 0.0, %v4135
    %4137 = vmatmul.f32.gmra.mxu0 %v4111
    %v4138 = vpop.f32.mrf.mxu0
    %v4139 = vadd.f32 0.0, %v4138
    %4140 = vmatmul.f32.gmra.mxu0 %v4113
    %v4141 = vpop.f32.mrf.mxu0
    %v4142 = vadd.f32 0.0, %v4141
    %4143 = vdwg.mxu0
    %4144 = vmatpush.msra.mxu0 1.0
    %4145 = vmatpush.msra.mxu0 1.0
    %4146 = vmatpush.msra.mxu0 1.0
    %4147 = vmatpush.msra.mxu0 1.0
    %4148 = vmatpush.msra.mxu0 1.0
    %4149 = vmatpush.msra.mxu0 1.0
    %4150 = vmatpush.msra.mxu0 1.0
    %4151 = vmatpush.msra.mxu0 1.0
    %4152 = vmatpush.msra.mxu0 1.0
    %4153 = vmatpush.msra.mxu0 1.0
    %4154 = vmatpush.msra.mxu0 1.0
    %4155 = vmatpush.msra.mxu0 1.0
    %4156 = vmatpush.msra.mxu0 1.0
    %4157 = vmatpush.msra.mxu0 1.0
    %4158 = vmatpush.msra.mxu0 1.0
    %4159 = vmatpush.msra.mxu0 1.0
    %4160 = vmatmul.f32.gmra.mxu0 %v4108
    %v4161 = vpop.f32.mrf.mxu0
    %v4162 = vadd.f32 %v4133, %v4161
    %4163 = vmatmul.f32.gmra.mxu0 %v4110
    %v4164 = vpop.f32.mrf.mxu0
    %v4165 = vadd.f32 %v4136, %v4164
    %4166 = vmatmul.f32.gmra.mxu0 %v4112
    %v4167 = vpop.f32.mrf.mxu0
    %v4168 = vadd.f32 %v4139, %v4167
    %4169 = vmatmul.f32.gmra.mxu0 %v4114
    %v4170 = vpop.f32.mrf.mxu0
    %v4171 = vadd.f32 %v4142, %v4170
    %4172 = vdwg.mxu0
    %v4173 = vmul.f32 %v4162, 0.00390625
    %v4174 = vmul.f32 %v4165, 0.00390625
    %v4175 = vmul.f32 %v4168, 0.00390625
    %v4176 = vmul.f32 %v4171, 0.00390625
    %v4177 = vadd.f32 %v4173, 1e-05
    %v4178 = vadd.f32 %v4174, 1e-05
    %v4179 = vadd.f32 %v4175, 1e-05
    %v4180 = vadd.f32 %v4176, 1e-05
    %v4181 = vrsqrt.pop %v4177
    %v4182 = vmul.f32 %v4181, %v4177
    %v4183 = vmul.f32 %v4182, %v4181
    %v4184 = vmul.f32 0.5, %v4183
    %v4185 = vsub.f32 1.5, %v4184
    %v4186 = vmul.f32 %v4181, %v4185
    %vm4187 = vweird.f32 %v4177
    %vm4188 = vweird.f32 %v4181
    %vm4189 = vmor %vm4187, %vm4188
    %v4190 = vsel %vm4189, %v4181, %v4186
    %v4191 = vrsqrt.pop %v4178
    %v4192 = vmul.f32 %v4191, %v4178
    %v4193 = vmul.f32 %v4192, %v4191
    %v4194 = vmul.f32 0.5, %v4193
    %v4195 = vsub.f32 1.5, %v4194
    %v4196 = vmul.f32 %v4191, %v4195
    %vm4197 = vweird.f32 %v4178
    %vm4198 = vweird.f32 %v4191
    %vm4199 = vmor %vm4197, %vm4198
    %v4200 = vsel %vm4199, %v4191, %v4196
    %v4201 = vrsqrt.pop %v4179
    %v4202 = vmul.f32 %v4201, %v4179
    %v4203 = vmul.f32 %v4202, %v4201
    %v4204 = vmul.f32 0.5, %v4203
    %v4205 = vsub.f32 1.5, %v4204
    %v4206 = vmul.f32 %v4201, %v4205
    %vm4207 = vweird.f32 %v4179
    %vm4208 = vweird.f32 %v4201
    %vm4209 = vmor %vm4207, %vm4208
    %v4210 = vsel %vm4209, %v4201, %v4206
    %v4211 = vrsqrt.pop %v4180
    %v4212 = vmul.f32 %v4211, %v4180
    %v4213 = vmul.f32 %v4212, %v4211
    %v4214 = vmul.f32 0.5, %v4213
    %v4215 = vsub.f32 1.5, %v4214
    %v4216 = vmul.f32 %v4211, %v4215
    %vm4217 = vweird.f32 %v4180
    %vm4218 = vweird.f32 %v4211
    %vm4219 = vmor %vm4217, %vm4218
    %v4220 = vsel %vm4219, %v4211, %v4216
    %s4221 = scalar_lea.vmem %s4, 384
    %v4222 = vld [vmem:[%s4221] sm:$0xff]
    %v4223 = vld [vmem:[%s4221 + $0x8] sm:$0xff]
    %v4224 = vld [vmem:[%s4221 + $0x10] sm:$0xff]
    %v4225 = vld [vmem:[%s4221 + $0x18] sm:$0xff]
    %v4226 = vmul.f32 %v4190, %v4222
    %v4227 = vmul.f32 %v4200, %v4223
    %v4228 = vmul.f32 %v4210, %v4224
    %v4229 = vmul.f32 %v4220, %v4225
    %4231 = vset.pattern.permute.xlu0 0
    %4232 = vperm.xlu0 %4231, %v4226
    %v4233 = vpop.permute.xlu0 %4232
    %4236 = vset.pattern.permute.xlu0 0
    %4237 = vperm.xlu0 %4236, %v4227
    %v4238 = vpop.permute.xlu0 %4237
    %4241 = vset.pattern.permute.xlu0 0
    %4242 = vperm.xlu0 %4241, %v4228
    %v4243 = vpop.permute.xlu0 %4242
    %4246 = vset.pattern.permute.xlu0 0
    %4247 = vperm.xlu0 %4246, %v4229
    %v4248 = vpop.permute.xlu0 %4247
    %v4250 = vmul.f32 %v4099, %v4233
    %v4251 = vmul.f32 %v4100, %v4233
    %v4252 = vmul.f32 %v4101, %v4238
    %v4253 = vmul.f32 %v4102, %v4238
    %v4254 = vmul.f32 %v4103, %v4243
    %v4255 = vmul.f32 %v4104, %v4243
    %v4256 = vmul.f32 %v4105, %v4248
    %v4257 = vmul.f32 %v4106, %v4248
    %s4258 = scalar_lea.vmem %s4, 640
    %v4259 = vld [vmem:[%s4258] sm:$0xff]
    %v4260 = vld [vmem:[%s4258 + $0x8] sm:$0xff]
    %v4261 = vld [vmem:[%s4258 + $0x10] sm:$0xff]
    %v4262 = vld [vmem:[%s4258 + $0x18] sm:$0xff]
    %4264 = vset.pattern.permute.xlu0 0
    %4265 = vperm.xlu0 %4264, %v4259
    %v4266 = vpop.permute.xlu0 %4265
    %4269 = vset.pattern.permute.xlu0 0
    %4270 = vperm.xlu0 %4269, %v4260
    %v4271 = vpop.permute.xlu0 %4270
    %4274 = vset.pattern.permute.xlu0 0
    %4275 = vperm.xlu0 %4274, %v4261
    %v4276 = vpop.permute.xlu0 %4275
    %4279 = vset.pattern.permute.xlu0 0
    %4280 = vperm.xlu0 %4279, %v4262
    %v4281 = vpop.permute.xlu0 %4280
    %v4283 = vadd.f32 %v4250, %v4266
    %v4284 = vadd.f32 %v4251, %v4266
    %v4285 = vadd.f32 %v4252, %v4271
    %v4286 = vadd.f32 %v4253, %v4271
    %v4287 = vadd.f32 %v4254, %v4276
    %v4288 = vadd.f32 %v4255, %v4276
    %v4289 = vadd.f32 %v4256, %v4281
    %v4290 = vadd.f32 %v4257, %v4281
    %v4291 = vadd.f32 %v3183, %v4283
    %v4292 = vadd.f32 %v3184, %v4284
    %v4293 = vadd.f32 %v3185, %v4285
    %v4294 = vadd.f32 %v3186, %v4286
    %v4295 = vadd.f32 %v3187, %v4287
    %v4296 = vadd.f32 %v3188, %v4288
    %v4297 = vadd.f32 %v3189, %v4289
    %v4298 = vadd.f32 %v3190, %v4290
    %v4299 = vmul.f32 %v4291, 0.5
    %v4300 = vmul.f32 %v4292, 0.5
    %v4301 = vmul.f32 %v4293, 0.5
    %v4302 = vmul.f32 %v4294, 0.5
    %v4303 = vmul.f32 %v4295, 0.5
    %v4304 = vmul.f32 %v4296, 0.5
    %v4305 = vmul.f32 %v4297, 0.5
    %v4306 = vmul.f32 %v4298, 0.5
    %v4307 = vmul.f32 %v4291, 0.70710677
    %v4308 = vmul.f32 %v4292, 0.70710677
    %v4309 = vmul.f32 %v4293, 0.70710677
    %v4310 = vmul.f32 %v4294, 0.70710677
    %v4311 = vmul.f32 %v4295, 0.70710677
    %v4312 = vmul.f32 %v4296, 0.70710677
    %v4313 = vmul.f32 %v4297, 0.70710677
    %v4314 = vmul.f32 %v4298, 0.70710677
    %v4315 = vmul.f32 %v4307, %v4307
    %v4316 = vmin.f32 16.0, %v4315
    %v4317 = vmul.f32 %v4316, 2.1237322e-06
    %v4318 = vadd.f32 %v4317, 0.00028619796
    %v4319 = vmul.f32 %v4316, %v4318
    %v4320 = vadd.f32 %v4319, 0.0036580483
    %v4321 = vmul.f32 %v4316, %v4320
    %v4322 = vadd.f32 %v4321, 0.05243302
    %v4323 = vmul.f32 %v4316, %v4322
    %v4324 = vadd.f32 %v4323, 0.18741608
    %v4325 = vmul.f32 %v4316, %v4324
    %v4326 = vadd.f32 %v4325, 1.1283791
    %v4327 = vmul.f32 %v4307, %v4326
    %v4328 = vmul.f32 %v4316, 3.8918573e-05
    %v4329 = vadd.f32 %v4328, 0.001143296
    %v4330 = vmul.f32 %v4316, %v4329
    %v4331 = vadd.f32 %v4330, 0.014752088
    %v4332 = vmul.f32 %v4316, %v4331
    %v4333 = vadd.f32 %v4332, 0.112945676
    %v4334 = vmul.f32 %v4316, %v4333
    %v4335 = vadd.f32 %v4334, 0.4994258
    %v4336 = vmul.f32 %v4316, %v4335
    %v4337 = vadd.f32 %v4336, 1.0
    %v4338 = vrcp.pop %v4337
    %v4339 = vmul.f32 %v4337, %v4338
    %v4340 = vsub.f32 1.0, %v4339
    %v4341 = vmul.f32 %v4338, %v4340
    %v4342 = vadd.f32 %v4338, %v4341
    %vm4343 = vweird.f32 %v4337
    %vm4344 = vweird.f32 %v4338
    %vm4345 = vmor %vm4343, %vm4344
    %v4346 = vsel %vm4345, %v4338, %v4342
    %v4347 = vand.u32 2147483647, %v4337
    %vm4348 = vcmp.eq.f32.partialorder %v4347, 8.507059e+37
    %v4349 = vand.u32 %v4337, 2147483648
    %v4350 = vor.u32 1.1754944e-38, %v4349
    %v4351 = vsel %vm4348, %v4350, %v4346
    %v4352 = vmul.f32 %v4327, %v4351
    %v4353 = vmin.f32 %v4352, 1.0
    %v4354 = vmax.f32 %v4353, -1.0
    %v4355 = vmul.f32 %v4308, %v4308
    %v4356 = vmin.f32 16.0, %v4355
    %v4357 = vmul.f32 %v4356, 2.1237322e-06
    %v4358 = vadd.f32 %v4357, 0.00028619796
    %v4359 = vmul.f32 %v4356, %v4358
    %v4360 = vadd.f32 %v4359, 0.0036580483
    %v4361 = vmul.f32 %v4356, %v4360
    %v4362 = vadd.f32 %v4361, 0.05243302
    %v4363 = vmul.f32 %v4356, %v4362
    %v4364 = vadd.f32 %v4363, 0.18741608
    %v4365 = vmul.f32 %v4356, %v4364
    %v4366 = vadd.f32 %v4365, 1.1283791
    %v4367 = vmul.f32 %v4308, %v4366
    %v4368 = vmul.f32 %v4356, 3.8918573e-05
    %v4369 = vadd.f32 %v4368, 0.001143296
    %v4370 = vmul.f32 %v4356, %v4369
    %v4371 = vadd.f32 %v4370, 0.014752088
    %v4372 = vmul.f32 %v4356, %v4371
    %v4373 = vadd.f32 %v4372, 0.112945676
    %v4374 = vmul.f32 %v4356, %v4373
    %v4375 = vadd.f32 %v4374, 0.4994258
    %v4376 = vmul.f32 %v4356, %v4375
    %v4377 = vadd.f32 %v4376, 1.0
    %v4378 = vrcp.pop %v4377
    %v4379 = vmul.f32 %v4377, %v4378
    %v4380 = vsub.f32 1.0, %v4379
    %v4381 = vmul.f32 %v4378, %v4380
    %v4382 = vadd.f32 %v4378, %v4381
    %vm4383 = vweird.f32 %v4377
    %vm4384 = vweird.f32 %v4378
    %vm4385 = vmor %vm4383, %vm4384
    %v4386 = vsel %vm4385, %v4378, %v4382
    %v4387 = vand.u32 2147483647, %v4377
    %vm4388 = vcmp.eq.f32.partialorder %v4387, 8.507059e+37
    %v4389 = vand.u32 %v4377, 2147483648
    %v4390 = vor.u32 1.1754944e-38, %v4389
    %v4391 = vsel %vm4388, %v4390, %v4386
    %v4392 = vmul.f32 %v4367, %v4391
    %v4393 = vmin.f32 %v4392, 1.0
    %v4394 = vmax.f32 %v4393, -1.0
    %v4395 = vmul.f32 %v4309, %v4309
    %v4396 = vmin.f32 16.0, %v4395
    %v4397 = vmul.f32 %v4396, 2.1237322e-06
    %v4398 = vadd.f32 %v4397, 0.00028619796
    %v4399 = vmul.f32 %v4396, %v4398
    %v4400 = vadd.f32 %v4399, 0.0036580483
    %v4401 = vmul.f32 %v4396, %v4400
    %v4402 = vadd.f32 %v4401, 0.05243302
    %v4403 = vmul.f32 %v4396, %v4402
    %v4404 = vadd.f32 %v4403, 0.18741608
    %v4405 = vmul.f32 %v4396, %v4404
    %v4406 = vadd.f32 %v4405, 1.1283791
    %v4407 = vmul.f32 %v4309, %v4406
    %v4408 = vmul.f32 %v4396, 3.8918573e-05
    %v4409 = vadd.f32 %v4408, 0.001143296
    %v4410 = vmul.f32 %v4396, %v4409
    %v4411 = vadd.f32 %v4410, 0.014752088
    %v4412 = vmul.f32 %v4396, %v4411
    %v4413 = vadd.f32 %v4412, 0.112945676
    %v4414 = vmul.f32 %v4396, %v4413
    %v4415 = vadd.f32 %v4414, 0.4994258
    %v4416 = vmul.f32 %v4396, %v4415
    %v4417 = vadd.f32 %v4416, 1.0
    %v4418 = vrcp.pop %v4417
    %v4419 = vmul.f32 %v4417, %v4418
    %v4420 = vsub.f32 1.0, %v4419
    %v4421 = vmul.f32 %v4418, %v4420
    %v4422 = vadd.f32 %v4418, %v4421
    %vm4423 = vweird.f32 %v4417
    %vm4424 = vweird.f32 %v4418
    %vm4425 = vmor %vm4423, %vm4424
    %v4426 = vsel %vm4425, %v4418, %v4422
    %v4427 = vand.u32 2147483647, %v4417
    %vm4428 = vcmp.eq.f32.partialorder %v4427, 8.507059e+37
    %v4429 = vand.u32 %v4417, 2147483648
    %v4430 = vor.u32 1.1754944e-38, %v4429
    %v4431 = vsel %vm4428, %v4430, %v4426
    %v4432 = vmul.f32 %v4407, %v4431
    %v4433 = vmin.f32 %v4432, 1.0
    %v4434 = vmax.f32 %v4433, -1.0
    %v4435 = vmul.f32 %v4310, %v4310
    %v4436 = vmin.f32 16.0, %v4435
    %v4437 = vmul.f32 %v4436, 2.1237322e-06
    %v4438 = vadd.f32 %v4437, 0.00028619796
    %v4439 = vmul.f32 %v4436, %v4438
    %v4440 = vadd.f32 %v4439, 0.0036580483
    %v4441 = vmul.f32 %v4436, %v4440
    %v4442 = vadd.f32 %v4441, 0.05243302
    %v4443 = vmul.f32 %v4436, %v4442
    %v4444 = vadd.f32 %v4443, 0.18741608
    %v4445 = vmul.f32 %v4436, %v4444
    %v4446 = vadd.f32 %v4445, 1.1283791
    %v4447 = vmul.f32 %v4310, %v4446
    %v4448 = vmul.f32 %v4436, 3.8918573e-05
    %v4449 = vadd.f32 %v4448, 0.001143296
    %v4450 = vmul.f32 %v4436, %v4449
    %v4451 = vadd.f32 %v4450, 0.014752088
    %v4452 = vmul.f32 %v4436, %v4451
    %v4453 = vadd.f32 %v4452, 0.112945676
    %v4454 = vmul.f32 %v4436, %v4453
    %v4455 = vadd.f32 %v4454, 0.4994258
    %v4456 = vmul.f32 %v4436, %v4455
    %v4457 = vadd.f32 %v4456, 1.0
    %v4458 = vrcp.pop %v4457
    %v4459 = vmul.f32 %v4457, %v4458
    %v4460 = vsub.f32 1.0, %v4459
    %v4461 = vmul.f32 %v4458, %v4460
    %v4462 = vadd.f32 %v4458, %v4461
    %vm4463 = vweird.f32 %v4457
    %vm4464 = vweird.f32 %v4458
    %vm4465 = vmor %vm4463, %vm4464
    %v4466 = vsel %vm4465, %v4458, %v4462
    %v4467 = vand.u32 2147483647, %v4457
    %vm4468 = vcmp.eq.f32.partialorder %v4467, 8.507059e+37
    %v4469 = vand.u32 %v4457, 2147483648
    %v4470 = vor.u32 1.1754944e-38, %v4469
    %v4471 = vsel %vm4468, %v4470, %v4466
    %v4472 = vmul.f32 %v4447, %v4471
    %v4473 = vmin.f32 %v4472, 1.0
    %v4474 = vmax.f32 %v4473, -1.0
    %v4475 = vmul.f32 %v4311, %v4311
    %v4476 = vmin.f32 16.0, %v4475
    %v4477 = vmul.f32 %v4476, 2.1237322e-06
    %v4478 = vadd.f32 %v4477, 0.00028619796
    %v4479 = vmul.f32 %v4476, %v4478
    %v4480 = vadd.f32 %v4479, 0.0036580483
    %v4481 = vmul.f32 %v4476, %v4480
    %v4482 = vadd.f32 %v4481, 0.05243302
    %v4483 = vmul.f32 %v4476, %v4482
    %v4484 = vadd.f32 %v4483, 0.18741608
    %v4485 = vmul.f32 %v4476, %v4484
    %v4486 = vadd.f32 %v4485, 1.1283791
    %v4487 = vmul.f32 %v4311, %v4486
    %v4488 = vmul.f32 %v4476, 3.8918573e-05
    %v4489 = vadd.f32 %v4488, 0.001143296
    %v4490 = vmul.f32 %v4476, %v4489
    %v4491 = vadd.f32 %v4490, 0.014752088
    %v4492 = vmul.f32 %v4476, %v4491
    %v4493 = vadd.f32 %v4492, 0.112945676
    %v4494 = vmul.f32 %v4476, %v4493
    %v4495 = vadd.f32 %v4494, 0.4994258
    %v4496 = vmul.f32 %v4476, %v4495
    %v4497 = vadd.f32 %v4496, 1.0
    %v4498 = vrcp.pop %v4497
    %v4499 = vmul.f32 %v4497, %v4498
    %v4500 = vsub.f32 1.0, %v4499
    %v4501 = vmul.f32 %v4498, %v4500
    %v4502 = vadd.f32 %v4498, %v4501
    %vm4503 = vweird.f32 %v4497
    %vm4504 = vweird.f32 %v4498
    %vm4505 = vmor %vm4503, %vm4504
    %v4506 = vsel %vm4505, %v4498, %v4502
    %v4507 = vand.u32 2147483647, %v4497
    %vm4508 = vcmp.eq.f32.partialorder %v4507, 8.507059e+37
    %v4509 = vand.u32 %v4497, 2147483648
    %v4510 = vor.u32 1.1754944e-38, %v4509
    %v4511 = vsel %vm4508, %v4510, %v4506
    %v4512 = vmul.f32 %v4487, %v4511
    %v4513 = vmin.f32 %v4512, 1.0
    %v4514 = vmax.f32 %v4513, -1.0
    %v4515 = vmul.f32 %v4312, %v4312
    %v4516 = vmin.f32 16.0, %v4515
    %v4517 = vmul.f32 %v4516, 2.1237322e-06
    %v4518 = vadd.f32 %v4517, 0.00028619796
    %v4519 = vmul.f32 %v4516, %v4518
    %v4520 = vadd.f32 %v4519, 0.0036580483
    %v4521 = vmul.f32 %v4516, %v4520
    %v4522 = vadd.f32 %v4521, 0.05243302
    %v4523 = vmul.f32 %v4516, %v4522
    %v4524 = vadd.f32 %v4523, 0.18741608
    %v4525 = vmul.f32 %v4516, %v4524
    %v4526 = vadd.f32 %v4525, 1.1283791
    %v4527 = vmul.f32 %v4312, %v4526
    %v4528 = vmul.f32 %v4516, 3.8918573e-05
    %v4529 = vadd.f32 %v4528, 0.001143296
    %v4530 = vmul.f32 %v4516, %v4529
    %v4531 = vadd.f32 %v4530, 0.014752088
    %v4532 = vmul.f32 %v4516, %v4531
    %v4533 = vadd.f32 %v4532, 0.112945676
    %v4534 = vmul.f32 %v4516, %v4533
    %v4535 = vadd.f32 %v4534, 0.4994258
    %v4536 = vmul.f32 %v4516, %v4535
    %v4537 = vadd.f32 %v4536, 1.0
    %v4538 = vrcp.pop %v4537
    %v4539 = vmul.f32 %v4537, %v4538
    %v4540 = vsub.f32 1.0, %v4539
    %v4541 = vmul.f32 %v4538, %v4540
    %v4542 = vadd.f32 %v4538, %v4541
    %vm4543 = vweird.f32 %v4537
    %vm4544 = vweird.f32 %v4538
    %vm4545 = vmor %vm4543, %vm4544
    %v4546 = vsel %vm4545, %v4538, %v4542
    %v4547 = vand.u32 2147483647, %v4537
    %vm4548 = vcmp.eq.f32.partialorder %v4547, 8.507059e+37
    %v4549 = vand.u32 %v4537, 2147483648
    %v4550 = vor.u32 1.1754944e-38, %v4549
    %v4551 = vsel %vm4548, %v4550, %v4546
    %v4552 = vmul.f32 %v4527, %v4551
    %v4553 = vmin.f32 %v4552, 1.0
    %v4554 = vmax.f32 %v4553, -1.0
    %v4555 = vmul.f32 %v4313, %v4313
    %v4556 = vmin.f32 16.0, %v4555
    %v4557 = vmul.f32 %v4556, 2.1237322e-06
    %v4558 = vadd.f32 %v4557, 0.00028619796
    %v4559 = vmul.f32 %v4556, %v4558
    %v4560 = vadd.f32 %v4559, 0.0036580483
    %v4561 = vmul.f32 %v4556, %v4560
    %v4562 = vadd.f32 %v4561, 0.05243302
    %v4563 = vmul.f32 %v4556, %v4562
    %v4564 = vadd.f32 %v4563, 0.18741608
    %v4565 = vmul.f32 %v4556, %v4564
    %v4566 = vadd.f32 %v4565, 1.1283791
    %v4567 = vmul.f32 %v4313, %v4566
    %v4568 = vmul.f32 %v4556, 3.8918573e-05
    %v4569 = vadd.f32 %v4568, 0.001143296
    %v4570 = vmul.f32 %v4556, %v4569
    %v4571 = vadd.f32 %v4570, 0.014752088
    %v4572 = vmul.f32 %v4556, %v4571
    %v4573 = vadd.f32 %v4572, 0.112945676
    %v4574 = vmul.f32 %v4556, %v4573
    %v4575 = vadd.f32 %v4574, 0.4994258
    %v4576 = vmul.f32 %v4556, %v4575
    %v4577 = vadd.f32 %v4576, 1.0
    %v4578 = vrcp.pop %v4577
    %v4579 = vmul.f32 %v4577, %v4578
    %v4580 = vsub.f32 1.0, %v4579
    %v4581 = vmul.f32 %v4578, %v4580
    %v4582 = vadd.f32 %v4578, %v4581
    %vm4583 = vweird.f32 %v4577
    %vm4584 = vweird.f32 %v4578
    %vm4585 = vmor %vm4583, %vm4584
    %v4586 = vsel %vm4585, %v4578, %v4582
    %v4587 = vand.u32 2147483647, %v4577
    %vm4588 = vcmp.eq.f32.partialorder %v4587, 8.507059e+37
    %v4589 = vand.u32 %v4577, 2147483648
    %v4590 = vor.u32 1.1754944e-38, %v4589
    %v4591 = vsel %vm4588, %v4590, %v4586
    %v4592 = vmul.f32 %v4567, %v4591
    %v4593 = vmin.f32 %v4592, 1.0
    %v4594 = vmax.f32 %v4593, -1.0
    %v4595 = vmul.f32 %v4314, %v4314
    %v4596 = vmin.f32 16.0, %v4595
    %v4597 = vmul.f32 %v4596, 2.1237322e-06
    %v4598 = vadd.f32 %v4597, 0.00028619796
    %v4599 = vmul.f32 %v4596, %v4598
    %v4600 = vadd.f32 %v4599, 0.0036580483
    %v4601 = vmul.f32 %v4596, %v4600
    %v4602 = vadd.f32 %v4601, 0.05243302
    %v4603 = vmul.f32 %v4596, %v4602
    %v4604 = vadd.f32 %v4603, 0.18741608
    %v4605 = vmul.f32 %v4596, %v4604
    %v4606 = vadd.f32 %v4605, 1.1283791
    %v4607 = vmul.f32 %v4314, %v4606
    %v4608 = vmul.f32 %v4596, 3.8918573e-05
    %v4609 = vadd.f32 %v4608, 0.001143296
    %v4610 = vmul.f32 %v4596, %v4609
    %v4611 = vadd.f32 %v4610, 0.014752088
    %v4612 = vmul.f32 %v4596, %v4611
    %v4613 = vadd.f32 %v4612, 0.112945676
    %v4614 = vmul.f32 %v4596, %v4613
    %v4615 = vadd.f32 %v4614, 0.4994258
    %v4616 = vmul.f32 %v4596, %v4615
    %v4617 = vadd.f32 %v4616, 1.0
    %v4618 = vrcp.pop %v4617
    %v4619 = vmul.f32 %v4617, %v4618
    %v4620 = vsub.f32 1.0, %v4619
    %v4621 = vmul.f32 %v4618, %v4620
    %v4622 = vadd.f32 %v4618, %v4621
    %vm4623 = vweird.f32 %v4617
    %vm4624 = vweird.f32 %v4618
    %vm4625 = vmor %vm4623, %vm4624
    %v4626 = vsel %vm4625, %v4618, %v4622
    %v4627 = vand.u32 2147483647, %v4617
    %vm4628 = vcmp.eq.f32.partialorder %v4627, 8.507059e+37
    %v4629 = vand.u32 %v4617, 2147483648
    %v4630 = vor.u32 1.1754944e-38, %v4629
    %v4631 = vsel %vm4628, %v4630, %v4626
    %v4632 = vmul.f32 %v4607, %v4631
    %v4633 = vmin.f32 %v4632, 1.0
    %v4634 = vmax.f32 %v4633, -1.0
    %v4635 = vadd.f32 %v4354, 1.0
    %v4636 = vadd.f32 %v4394, 1.0
    %v4637 = vadd.f32 %v4434, 1.0
    %v4638 = vadd.f32 %v4474, 1.0
    %v4639 = vadd.f32 %v4514, 1.0
    %v4640 = vadd.f32 %v4554, 1.0
    %v4641 = vadd.f32 %v4594, 1.0
    %v4642 = vadd.f32 %v4634, 1.0
    %v4643 = vmul.f32 %v4299, %v4635
    %v4644 = vmul.f32 %v4300, %v4636
    %v4645 = vmul.f32 %v4301, %v4637
    %v4646 = vmul.f32 %v4302, %v4638
    %v4647 = vmul.f32 %v4303, %v4639
    %v4648 = vmul.f32 %v4304, %v4640
    %v4649 = vmul.f32 %v4305, %v4641
    %v4650 = vmul.f32 %v4306, %v4642
    %s4651 = scalar_lea.vmem %s2, 128
    %v4652 = vld [vmem:[%s4651] sm:$0xff]
    %v4653 = vld [vmem:[%s4651 + $0x8] sm:$0xff]
    %v4654 = vld [vmem:[%s4651 + $0x10] sm:$0xff]
    %v4655 = vld [vmem:[%s4651 + $0x18] sm:$0xff]
    %s4656 = scalar_lea.vmem %s4, 160
    %v4657 = vld [vmem:[%s4656] sm:$0xff]
    %v4658 = vld [vmem:[%s4656 + $0x8] sm:$0xff]
    %v4659 = vld [vmem:[%s4656 + $0x10] sm:$0xff]
    %v4660 = vld [vmem:[%s4656 + $0x18] sm:$0xff]
    %4662 = vset.pattern.permute.xlu0 0
    %4663 = vperm.xlu0 %4662, %v4657
    %v4664 = vpop.permute.xlu0 %4663
    %4667 = vset.pattern.permute.xlu0 0
    %4668 = vperm.xlu0 %4667, %v4658
    %v4669 = vpop.permute.xlu0 %4668
    %4672 = vset.pattern.permute.xlu0 0
    %4673 = vperm.xlu0 %4672, %v4659
    %v4674 = vpop.permute.xlu0 %4673
    %4677 = vset.pattern.permute.xlu0 0
    %4678 = vperm.xlu0 %4677, %v4660
    %v4679 = vpop.permute.xlu0 %4678
    %v4682 = vsel %vm1760, %v4652, 0
    %v4685 = vsel %vm1760, %v4653, 0
    %v4688 = vsel %vm1760, %v4654, 0
    %v4691 = vsel %vm1760, %v4655, 0
    %4693 = vmatpush.msra.mxu0 0.0
    %4694 = vmatpush.msra.mxu0 0.0
    %4695 = vmatpush.msra.mxu0 0.0
    %4696 = vmatpush.msra.mxu0 0.0
    %4697 = vmatpush.msra.mxu0 0.0
    %4698 = vmatpush.msra.mxu0 0.0
    %4699 = vmatpush.msra.mxu0 0.0
    %4700 = vmatpush.msra.mxu0 0.0
    %4701 = vmatpush.msra.mxu0 0.0
    %4702 = vmatpush.msra.mxu0 0.0
    %4703 = vmatpush.msra.mxu0 0.0
    %4704 = vmatpush.msra.mxu0 0.0
    %4705 = vmatpush.msra.mxu0 %v4649
    %4706 = vmatpush.msra.mxu0 %v4647
    %4707 = vmatpush.msra.mxu0 %v4645
    %4708 = vmatpush.msra.mxu0 %v4643
    %4709 = vmatmul.f32.gmra.mxu0 %v4682
    %v4710 = vpop.f32.mrf.mxu0
    %v4711 = vadd.f32 %v4664, %v4710
    %4712 = vmatmul.f32.gmra.mxu0 %v4685
    %v4713 = vpop.f32.mrf.mxu0
    %v4714 = vadd.f32 %v4669, %v4713
    %4715 = vmatmul.f32.gmra.mxu0 %v4688
    %v4716 = vpop.f32.mrf.mxu0
    %v4717 = vadd.f32 %v4674, %v4716
    %4718 = vmatmul.f32.gmra.mxu0 %v4691
    %v4719 = vpop.f32.mrf.mxu0
    %v4720 = vadd.f32 %v4679, %v4719
    %4721 = vdwg.mxu0
    %4722 = vmatpush.msra.mxu0 0.0
    %4723 = vmatpush.msra.mxu0 0.0
    %4724 = vmatpush.msra.mxu0 0.0
    %4725 = vmatpush.msra.mxu0 0.0
    %4726 = vmatpush.msra.mxu0 0.0
    %4727 = vmatpush.msra.mxu0 0.0
    %4728 = vmatpush.msra.mxu0 0.0
    %4729 = vmatpush.msra.mxu0 0.0
    %4730 = vmatpush.msra.mxu0 0.0
    %4731 = vmatpush.msra.mxu0 0.0
    %4732 = vmatpush.msra.mxu0 0.0
    %4733 = vmatpush.msra.mxu0 0.0
    %4734 = vmatpush.msra.mxu0 %v4650
    %4735 = vmatpush.msra.mxu0 %v4648
    %4736 = vmatpush.msra.mxu0 %v4646
    %4737 = vmatpush.msra.mxu0 %v4644
    %4738 = vmatmul.f32.gmra.mxu0 %v4682
    %v4739 = vpop.f32.mrf.mxu0
    %v4740 = vadd.f32 %v4664, %v4739
    %4741 = vmatmul.f32.gmra.mxu0 %v4685
    %v4742 = vpop.f32.mrf.mxu0
    %v4743 = vadd.f32 %v4669, %v4742
    %4744 = vmatmul.f32.gmra.mxu0 %v4688
    %v4745 = vpop.f32.mrf.mxu0
    %v4746 = vadd.f32 %v4674, %v4745
    %4747 = vmatmul.f32.gmra.mxu0 %v4691
    %v4748 = vpop.f32.mrf.mxu0
    %v4749 = vadd.f32 %v4679, %v4748
    %4750 = vdwg.mxu0
    %4751 = vmatpush.msra.mxu0 1.0
    %4752 = vmatpush.msra.mxu0 1.0
    %4753 = vmatpush.msra.mxu0 1.0
    %4754 = vmatpush.msra.mxu0 1.0
    %4755 = vmatpush.msra.mxu0 1.0
    %4756 = vmatpush.msra.mxu0 1.0
    %4757 = vmatpush.msra.mxu0 1.0
    %4758 = vmatpush.msra.mxu0 1.0
    %4759 = vmatpush.msra.mxu0 1.0
    %4760 = vmatpush.msra.mxu0 1.0
    %4761 = vmatpush.msra.mxu0 1.0
    %4762 = vmatpush.msra.mxu0 1.0
    %4763 = vmatpush.msra.mxu0 1.0
    %4764 = vmatpush.msra.mxu0 1.0
    %4765 = vmatpush.msra.mxu0 1.0
    %4766 = vmatpush.msra.mxu0 1.0
    %4767 = vmatmul.f32.gmra.mxu0 %v4711
    %v4768 = vpop.f32.mrf.mxu0
    %v4769 = vadd.f32 0.0, %v4768
    %4770 = vmatmul.f32.gmra.mxu0 %v4714
    %v4771 = vpop.f32.mrf.mxu0
    %v4772 = vadd.f32 0.0, %v4771
    %4773 = vmatmul.f32.gmra.mxu0 %v4717
    %v4774 = vpop.f32.mrf.mxu0
    %v4775 = vadd.f32 0.0, %v4774
    %4776 = vmatmul.f32.gmra.mxu0 %v4720
    %v4777 = vpop.f32.mrf.mxu0
    %v4778 = vadd.f32 0.0, %v4777
    %4779 = vdwg.mxu0
    %4780 = vmatpush.msra.mxu0 1.0
    %4781 = vmatpush.msra.mxu0 1.0
    %4782 = vmatpush.msra.mxu0 1.0
    %4783 = vmatpush.msra.mxu0 1.0
    %4784 = vmatpush.msra.mxu0 1.0
    %4785 = vmatpush.msra.mxu0 1.0
    %4786 = vmatpush.msra.mxu0 1.0
    %4787 = vmatpush.msra.mxu0 1.0
    %4788 = vmatpush.msra.mxu0 1.0
    %4789 = vmatpush.msra.mxu0 1.0
    %4790 = vmatpush.msra.mxu0 1.0
    %4791 = vmatpush.msra.mxu0 1.0
    %4792 = vmatpush.msra.mxu0 1.0
    %4793 = vmatpush.msra.mxu0 1.0
    %4794 = vmatpush.msra.mxu0 1.0
    %4795 = vmatpush.msra.mxu0 1.0
    %4796 = vmatmul.f32.gmra.mxu0 %v4740
    %v4797 = vpop.f32.mrf.mxu0
    %v4798 = vadd.f32 %v4769, %v4797
    %4799 = vmatmul.f32.gmra.mxu0 %v4743
    %v4800 = vpop.f32.mrf.mxu0
    %v4801 = vadd.f32 %v4772, %v4800
    %4802 = vmatmul.f32.gmra.mxu0 %v4746
    %v4803 = vpop.f32.mrf.mxu0
    %v4804 = vadd.f32 %v4775, %v4803
    %4805 = vmatmul.f32.gmra.mxu0 %v4749
    %v4806 = vpop.f32.mrf.mxu0
    %v4807 = vadd.f32 %v4778, %v4806
    %4808 = vdwg.mxu0
    %v4809 = vmul.f32 %v4798, 0.00390625
    %v4810 = vmul.f32 %v4801, 0.00390625
    %v4811 = vmul.f32 %v4804, 0.00390625
    %v4812 = vmul.f32 %v4807, 0.00390625
    %4814 = vset.pattern.permute.xlu0 0
    %4815 = vperm.xlu0 %4814, %v4809
    %v4816 = vpop.permute.xlu0 %4815
    %4819 = vset.pattern.permute.xlu0 0
    %4820 = vperm.xlu0 %4819, %v4810
    %v4821 = vpop.permute.xlu0 %4820
    %4824 = vset.pattern.permute.xlu0 0
    %4825 = vperm.xlu0 %4824, %v4811
    %v4826 = vpop.permute.xlu0 %4825
    %4829 = vset.pattern.permute.xlu0 0
    %4830 = vperm.xlu0 %4829, %v4812
    %v4831 = vpop.permute.xlu0 %4830
    %v4833 = vsub.f32 %v4711, %v4816
    %v4834 = vsub.f32 %v4740, %v4816
    %v4835 = vsub.f32 %v4714, %v4821
    %v4836 = vsub.f32 %v4743, %v4821
    %v4837 = vsub.f32 %v4717, %v4826
    %v4838 = vsub.f32 %v4746, %v4826
    %v4839 = vsub.f32 %v4720, %v4831
    %v4840 = vsub.f32 %v4749, %v4831
    %v4841 = vmul.f32 %v4833, %v4833
    %v4842 = vmul.f32 %v4834, %v4834
    %v4843 = vmul.f32 %v4835, %v4835
    %v4844 = vmul.f32 %v4836, %v4836
    %v4845 = vmul.f32 %v4837, %v4837
    %v4846 = vmul.f32 %v4838, %v4838
    %v4847 = vmul.f32 %v4839, %v4839
    %v4848 = vmul.f32 %v4840, %v4840
    %4849 = vmatpush.msra.mxu0 1.0
    %4850 = vmatpush.msra.mxu0 1.0
    %4851 = vmatpush.msra.mxu0 1.0
    %4852 = vmatpush.msra.mxu0 1.0
    %4853 = vmatpush.msra.mxu0 1.0
    %4854 = vmatpush.msra.mxu0 1.0
    %4855 = vmatpush.msra.mxu0 1.0
    %4856 = vmatpush.msra.mxu0 1.0
    %4857 = vmatpush.msra.mxu0 1.0
    %4858 = vmatpush.msra.mxu0 1.0
    %4859 = vmatpush.msra.mxu0 1.0
    %4860 = vmatpush.msra.mxu0 1.0
    %4861 = vmatpush.msra.mxu0 1.0
    %4862 = vmatpush.msra.mxu0 1.0
    %4863 = vmatpush.msra.mxu0 1.0
    %4864 = vmatpush.msra.mxu0 1.0
    %4865 = vmatmul.f32.gmra.mxu0 %v4841
    %v4866 = vpop.f32.mrf.mxu0
    %v4867 = vadd.f32 0.0, %v4866
    %4868 = vmatmul.f32.gmra.mxu0 %v4843
    %v4869 = vpop.f32.mrf.mxu0
    %v4870 = vadd.f32 0.0, %v4869
    %4871 = vmatmul.f32.gmra.mxu0 %v4845
    %v4872 = vpop.f32.mrf.mxu0
    %v4873 = vadd.f32 0.0, %v4872
    %4874 = vmatmul.f32.gmra.mxu0 %v4847
    %v4875 = vpop.f32.mrf.mxu0
    %v4876 = vadd.f32 0.0, %v4875
    %4877 = vdwg.mxu0
    %4878 = vmatpush.msra.mxu0 1.0
    %4879 = vmatpush.msra.mxu0 1.0
    %4880 = vmatpush.msra.mxu0 1.0
    %4881 = vmatpush.msra.mxu0 1.0
    %4882 = vmatpush.msra.mxu0 1.0
    %4883 = vmatpush.msra.mxu0 1.0
    %4884 = vmatpush.msra.mxu0 1.0
    %4885 = vmatpush.msra.mxu0 1.0
    %4886 = vmatpush.msra.mxu0 1.0
    %4887 = vmatpush.msra.mxu0 1.0
    %4888 = vmatpush.msra.mxu0 1.0
    %4889 = vmatpush.msra.mxu0 1.0
    %4890 = vmatpush.msra.mxu0 1.0
    %4891 = vmatpush.msra.mxu0 1.0
    %4892 = vmatpush.msra.mxu0 1.0
    %4893 = vmatpush.msra.mxu0 1.0
    %4894 = vmatmul.f32.gmra.mxu0 %v4842
    %v4895 = vpop.f32.mrf.mxu0
    %v4896 = vadd.f32 %v4867, %v4895
    %4897 = vmatmul.f32.gmra.mxu0 %v4844
    %v4898 = vpop.f32.mrf.mxu0
    %v4899 = vadd.f32 %v4870, %v4898
    %4900 = vmatmul.f32.gmra.mxu0 %v4846
    %v4901 = vpop.f32.mrf.mxu0
    %v4902 = vadd.f32 %v4873, %v4901
    %4903 = vmatmul.f32.gmra.mxu0 %v4848
    %v4904 = vpop.f32.mrf.mxu0
    %v4905 = vadd.f32 %v4876, %v4904
    %4906 = vdwg.mxu0
    %v4907 = vmul.f32 %v4896, 0.00390625
    %v4908 = vmul.f32 %v4899, 0.00390625
    %v4909 = vmul.f32 %v4902, 0.00390625
    %v4910 = vmul.f32 %v4905, 0.00390625
    %v4911 = vadd.f32 %v4907, 1e-05
    %v4912 = vadd.f32 %v4908, 1e-05
    %v4913 = vadd.f32 %v4909, 1e-05
    %v4914 = vadd.f32 %v4910, 1e-05
    %v4915 = vrsqrt.pop %v4911
    %v4916 = vmul.f32 %v4915, %v4911
    %v4917 = vmul.f32 %v4916, %v4915
    %v4918 = vmul.f32 0.5, %v4917
    %v4919 = vsub.f32 1.5, %v4918
    %v4920 = vmul.f32 %v4915, %v4919
    %vm4921 = vweird.f32 %v4911
    %vm4922 = vweird.f32 %v4915
    %vm4923 = vmor %vm4921, %vm4922
    %v4924 = vsel %vm4923, %v4915, %v4920
    %v4925 = vrsqrt.pop %v4912
    %v4926 = vmul.f32 %v4925, %v4912
    %v4927 = vmul.f32 %v4926, %v4925
    %v4928 = vmul.f32 0.5, %v4927
    %v4929 = vsub.f32 1.5, %v4928
    %v4930 = vmul.f32 %v4925, %v4929
    %vm4931 = vweird.f32 %v4912
    %vm4932 = vweird.f32 %v4925
    %vm4933 = vmor %vm4931, %vm4932
    %v4934 = vsel %vm4933, %v4925, %v4930
    %v4935 = vrsqrt.pop %v4913
    %v4936 = vmul.f32 %v4935, %v4913
    %v4937 = vmul.f32 %v4936, %v4935
    %v4938 = vmul.f32 0.5, %v4937
    %v4939 = vsub.f32 1.5, %v4938
    %v4940 = vmul.f32 %v4935, %v4939
    %vm4941 = vweird.f32 %v4913
    %vm4942 = vweird.f32 %v4935
    %vm4943 = vmor %vm4941, %vm4942
    %v4944 = vsel %vm4943, %v4935, %v4940
    %v4945 = vrsqrt.pop %v4914
    %v4946 = vmul.f32 %v4945, %v4914
    %v4947 = vmul.f32 %v4946, %v4945
    %v4948 = vmul.f32 0.5, %v4947
    %v4949 = vsub.f32 1.5, %v4948
    %v4950 = vmul.f32 %v4945, %v4949
    %vm4951 = vweird.f32 %v4914
    %vm4952 = vweird.f32 %v4945
    %vm4953 = vmor %vm4951, %vm4952
    %v4954 = vsel %vm4953, %v4945, %v4950
    %s4955 = scalar_lea.vmem %s4, 416
    %v4956 = vld [vmem:[%s4955] sm:$0xff]
    %v4957 = vld [vmem:[%s4955 + $0x8] sm:$0xff]
    %v4958 = vld [vmem:[%s4955 + $0x10] sm:$0xff]
    %v4959 = vld [vmem:[%s4955 + $0x18] sm:$0xff]
    %v4960 = vmul.f32 %v4924, %v4956
    %v4961 = vmul.f32 %v4934, %v4957
    %v4962 = vmul.f32 %v4944, %v4958
    %v4963 = vmul.f32 %v4954, %v4959
    %4965 = vset.pattern.permute.xlu0 0
    %4966 = vperm.xlu0 %4965, %v4960
    %v4967 = vpop.permute.xlu0 %4966
    %4970 = vset.pattern.permute.xlu0 0
    %4971 = vperm.xlu0 %4970, %v4961
    %v4972 = vpop.permute.xlu0 %4971
    %4975 = vset.pattern.permute.xlu0 0
    %4976 = vperm.xlu0 %4975, %v4962
    %v4977 = vpop.permute.xlu0 %4976
    %4980 = vset.pattern.permute.xlu0 0
    %4981 = vperm.xlu0 %4980, %v4963
    %v4982 = vpop.permute.xlu0 %4981
    %v4984 = vmul.f32 %v4833, %v4967
    %v4985 = vmul.f32 %v4834, %v4967
    %v4986 = vmul.f32 %v4835, %v4972
    %v4987 = vmul.f32 %v4836, %v4972
    %v4988 = vmul.f32 %v4837, %v4977
    %v4989 = vmul.f32 %v4838, %v4977
    %v4990 = vmul.f32 %v4839, %v4982
    %v4991 = vmul.f32 %v4840, %v4982
    %s4992 = scalar_lea.vmem %s4, 672
    %v4993 = vld [vmem:[%s4992] sm:$0xff]
    %v4994 = vld [vmem:[%s4992 + $0x8] sm:$0xff]
    %v4995 = vld [vmem:[%s4992 + $0x10] sm:$0xff]
    %v4996 = vld [vmem:[%s4992 + $0x18] sm:$0xff]
    %4998 = vset.pattern.permute.xlu0 0
    %4999 = vperm.xlu0 %4998, %v4993
    %v5000 = vpop.permute.xlu0 %4999
    %5003 = vset.pattern.permute.xlu0 0
    %5004 = vperm.xlu0 %5003, %v4994
    %v5005 = vpop.permute.xlu0 %5004
    %5008 = vset.pattern.permute.xlu0 0
    %5009 = vperm.xlu0 %5008, %v4995
    %v5010 = vpop.permute.xlu0 %5009
    %5013 = vset.pattern.permute.xlu0 0
    %5014 = vperm.xlu0 %5013, %v4996
    %v5015 = vpop.permute.xlu0 %5014
    %v5017 = vadd.f32 %v4984, %v5000
    %v5018 = vadd.f32 %v4985, %v5000
    %v5019 = vadd.f32 %v4986, %v5005
    %v5020 = vadd.f32 %v4987, %v5005
    %v5021 = vadd.f32 %v4988, %v5010
    %v5022 = vadd.f32 %v4989, %v5010
    %v5023 = vadd.f32 %v4990, %v5015
    %v5024 = vadd.f32 %v4991, %v5015
    %v5025 = vmul.f32 %v5017, 0.5
    %v5026 = vmul.f32 %v5018, 0.5
    %v5027 = vmul.f32 %v5019, 0.5
    %v5028 = vmul.f32 %v5020, 0.5
    %v5029 = vmul.f32 %v5021, 0.5
    %v5030 = vmul.f32 %v5022, 0.5
    %v5031 = vmul.f32 %v5023, 0.5
    %v5032 = vmul.f32 %v5024, 0.5
    %v5033 = vmul.f32 %v5017, 0.70710677
    %v5034 = vmul.f32 %v5018, 0.70710677
    %v5035 = vmul.f32 %v5019, 0.70710677
    %v5036 = vmul.f32 %v5020, 0.70710677
    %v5037 = vmul.f32 %v5021, 0.70710677
    %v5038 = vmul.f32 %v5022, 0.70710677
    %v5039 = vmul.f32 %v5023, 0.70710677
    %v5040 = vmul.f32 %v5024, 0.70710677
    %v5041 = vmul.f32 %v5033, %v5033
    %v5042 = vmin.f32 16.0, %v5041
    %v5043 = vmul.f32 %v5042, 2.1237322e-06
    %v5044 = vadd.f32 %v5043, 0.00028619796
    %v5045 = vmul.f32 %v5042, %v5044
    %v5046 = vadd.f32 %v5045, 0.0036580483
    %v5047 = vmul.f32 %v5042, %v5046
    %v5048 = vadd.f32 %v5047, 0.05243302
    %v5049 = vmul.f32 %v5042, %v5048
    %v5050 = vadd.f32 %v5049, 0.18741608
    %v5051 = vmul.f32 %v5042, %v5050
    %v5052 = vadd.f32 %v5051, 1.1283791
    %v5053 = vmul.f32 %v5033, %v5052
    %v5054 = vmul.f32 %v5042, 3.8918573e-05
    %v5055 = vadd.f32 %v5054, 0.001143296
    %v5056 = vmul.f32 %v5042, %v5055
    %v5057 = vadd.f32 %v5056, 0.014752088
    %v5058 = vmul.f32 %v5042, %v5057
    %v5059 = vadd.f32 %v5058, 0.112945676
    %v5060 = vmul.f32 %v5042, %v5059
    %v5061 = vadd.f32 %v5060, 0.4994258
    %v5062 = vmul.f32 %v5042, %v5061
    %v5063 = vadd.f32 %v5062, 1.0
    %v5064 = vrcp.pop %v5063
    %v5065 = vmul.f32 %v5063, %v5064
    %v5066 = vsub.f32 1.0, %v5065
    %v5067 = vmul.f32 %v5064, %v5066
    %v5068 = vadd.f32 %v5064, %v5067
    %vm5069 = vweird.f32 %v5063
    %vm5070 = vweird.f32 %v5064
    %vm5071 = vmor %vm5069, %vm5070
    %v5072 = vsel %vm5071, %v5064, %v5068
    %v5073 = vand.u32 2147483647, %v5063
    %vm5074 = vcmp.eq.f32.partialorder %v5073, 8.507059e+37
    %v5075 = vand.u32 %v5063, 2147483648
    %v5076 = vor.u32 1.1754944e-38, %v5075
    %v5077 = vsel %vm5074, %v5076, %v5072
    %v5078 = vmul.f32 %v5053, %v5077
    %v5079 = vmin.f32 %v5078, 1.0
    %v5080 = vmax.f32 %v5079, -1.0
    %v5081 = vmul.f32 %v5034, %v5034
    %v5082 = vmin.f32 16.0, %v5081
    %v5083 = vmul.f32 %v5082, 2.1237322e-06
    %v5084 = vadd.f32 %v5083, 0.00028619796
    %v5085 = vmul.f32 %v5082, %v5084
    %v5086 = vadd.f32 %v5085, 0.0036580483
    %v5087 = vmul.f32 %v5082, %v5086
    %v5088 = vadd.f32 %v5087, 0.05243302
    %v5089 = vmul.f32 %v5082, %v5088
    %v5090 = vadd.f32 %v5089, 0.18741608
    %v5091 = vmul.f32 %v5082, %v5090
    %v5092 = vadd.f32 %v5091, 1.1283791
    %v5093 = vmul.f32 %v5034, %v5092
    %v5094 = vmul.f32 %v5082, 3.8918573e-05
    %v5095 = vadd.f32 %v5094, 0.001143296
    %v5096 = vmul.f32 %v5082, %v5095
    %v5097 = vadd.f32 %v5096, 0.014752088
    %v5098 = vmul.f32 %v5082, %v5097
    %v5099 = vadd.f32 %v5098, 0.112945676
    %v5100 = vmul.f32 %v5082, %v5099
    %v5101 = vadd.f32 %v5100, 0.4994258
    %v5102 = vmul.f32 %v5082, %v5101
    %v5103 = vadd.f32 %v5102, 1.0
    %v5104 = vrcp.pop %v5103
    %v5105 = vmul.f32 %v5103, %v5104
    %v5106 = vsub.f32 1.0, %v5105
    %v5107 = vmul.f32 %v5104, %v5106
    %v5108 = vadd.f32 %v5104, %v5107
    %vm5109 = vweird.f32 %v5103
    %vm5110 = vweird.f32 %v5104
    %vm5111 = vmor %vm5109, %vm5110
    %v5112 = vsel %vm5111, %v5104, %v5108
    %v5113 = vand.u32 2147483647, %v5103
    %vm5114 = vcmp.eq.f32.partialorder %v5113, 8.507059e+37
    %v5115 = vand.u32 %v5103, 2147483648
    %v5116 = vor.u32 1.1754944e-38, %v5115
    %v5117 = vsel %vm5114, %v5116, %v5112
    %v5118 = vmul.f32 %v5093, %v5117
    %v5119 = vmin.f32 %v5118, 1.0
    %v5120 = vmax.f32 %v5119, -1.0
    %v5121 = vmul.f32 %v5035, %v5035
    %v5122 = vmin.f32 16.0, %v5121
    %v5123 = vmul.f32 %v5122, 2.1237322e-06
    %v5124 = vadd.f32 %v5123, 0.00028619796
    %v5125 = vmul.f32 %v5122, %v5124
    %v5126 = vadd.f32 %v5125, 0.0036580483
    %v5127 = vmul.f32 %v5122, %v5126
    %v5128 = vadd.f32 %v5127, 0.05243302
    %v5129 = vmul.f32 %v5122, %v5128
    %v5130 = vadd.f32 %v5129, 0.18741608
    %v5131 = vmul.f32 %v5122, %v5130
    %v5132 = vadd.f32 %v5131, 1.1283791
    %v5133 = vmul.f32 %v5035, %v5132
    %v5134 = vmul.f32 %v5122, 3.8918573e-05
    %v5135 = vadd.f32 %v5134, 0.001143296
    %v5136 = vmul.f32 %v5122, %v5135
    %v5137 = vadd.f32 %v5136, 0.014752088
    %v5138 = vmul.f32 %v5122, %v5137
    %v5139 = vadd.f32 %v5138, 0.112945676
    %v5140 = vmul.f32 %v5122, %v5139
    %v5141 = vadd.f32 %v5140, 0.4994258
    %v5142 = vmul.f32 %v5122, %v5141
    %v5143 = vadd.f32 %v5142, 1.0
    %v5144 = vrcp.pop %v5143
    %v5145 = vmul.f32 %v5143, %v5144
    %v5146 = vsub.f32 1.0, %v5145
    %v5147 = vmul.f32 %v5144, %v5146
    %v5148 = vadd.f32 %v5144, %v5147
    %vm5149 = vweird.f32 %v5143
    %vm5150 = vweird.f32 %v5144
    %vm5151 = vmor %vm5149, %vm5150
    %v5152 = vsel %vm5151, %v5144, %v5148
    %v5153 = vand.u32 2147483647, %v5143
    %vm5154 = vcmp.eq.f32.partialorder %v5153, 8.507059e+37
    %v5155 = vand.u32 %v5143, 2147483648
    %v5156 = vor.u32 1.1754944e-38, %v5155
    %v5157 = vsel %vm5154, %v5156, %v5152
    %v5158 = vmul.f32 %v5133, %v5157
    %v5159 = vmin.f32 %v5158, 1.0
    %v5160 = vmax.f32 %v5159, -1.0
    %v5161 = vmul.f32 %v5036, %v5036
    %v5162 = vmin.f32 16.0, %v5161
    %v5163 = vmul.f32 %v5162, 2.1237322e-06
    %v5164 = vadd.f32 %v5163, 0.00028619796
    %v5165 = vmul.f32 %v5162, %v5164
    %v5166 = vadd.f32 %v5165, 0.0036580483
    %v5167 = vmul.f32 %v5162, %v5166
    %v5168 = vadd.f32 %v5167, 0.05243302
    %v5169 = vmul.f32 %v5162, %v5168
    %v5170 = vadd.f32 %v5169, 0.18741608
    %v5171 = vmul.f32 %v5162, %v5170
    %v5172 = vadd.f32 %v5171, 1.1283791
    %v5173 = vmul.f32 %v5036, %v5172
    %v5174 = vmul.f32 %v5162, 3.8918573e-05
    %v5175 = vadd.f32 %v5174, 0.001143296
    %v5176 = vmul.f32 %v5162, %v5175
    %v5177 = vadd.f32 %v5176, 0.014752088
    %v5178 = vmul.f32 %v5162, %v5177
    %v5179 = vadd.f32 %v5178, 0.112945676
    %v5180 = vmul.f32 %v5162, %v5179
    %v5181 = vadd.f32 %v5180, 0.4994258
    %v5182 = vmul.f32 %v5162, %v5181
    %v5183 = vadd.f32 %v5182, 1.0
    %v5184 = vrcp.pop %v5183
    %v5185 = vmul.f32 %v5183, %v5184
    %v5186 = vsub.f32 1.0, %v5185
    %v5187 = vmul.f32 %v5184, %v5186
    %v5188 = vadd.f32 %v5184, %v5187
    %vm5189 = vweird.f32 %v5183
    %vm5190 = vweird.f32 %v5184
    %vm5191 = vmor %vm5189, %vm5190
    %v5192 = vsel %vm5191, %v5184, %v5188
    %v5193 = vand.u32 2147483647, %v5183
    %vm5194 = vcmp.eq.f32.partialorder %v5193, 8.507059e+37
    %v5195 = vand.u32 %v5183, 2147483648
    %v5196 = vor.u32 1.1754944e-38, %v5195
    %v5197 = vsel %vm5194, %v5196, %v5192
    %v5198 = vmul.f32 %v5173, %v5197
    %v5199 = vmin.f32 %v5198, 1.0
    %v5200 = vmax.f32 %v5199, -1.0
    %v5201 = vmul.f32 %v5037, %v5037
    %v5202 = vmin.f32 16.0, %v5201
    %v5203 = vmul.f32 %v5202, 2.1237322e-06
    %v5204 = vadd.f32 %v5203, 0.00028619796
    %v5205 = vmul.f32 %v5202, %v5204
    %v5206 = vadd.f32 %v5205, 0.0036580483
    %v5207 = vmul.f32 %v5202, %v5206
    %v5208 = vadd.f32 %v5207, 0.05243302
    %v5209 = vmul.f32 %v5202, %v5208
    %v5210 = vadd.f32 %v5209, 0.18741608
    %v5211 = vmul.f32 %v5202, %v5210
    %v5212 = vadd.f32 %v5211, 1.1283791
    %v5213 = vmul.f32 %v5037, %v5212
    %v5214 = vmul.f32 %v5202, 3.8918573e-05
    %v5215 = vadd.f32 %v5214, 0.001143296
    %v5216 = vmul.f32 %v5202, %v5215
    %v5217 = vadd.f32 %v5216, 0.014752088
    %v5218 = vmul.f32 %v5202, %v5217
    %v5219 = vadd.f32 %v5218, 0.112945676
    %v5220 = vmul.f32 %v5202, %v5219
    %v5221 = vadd.f32 %v5220, 0.4994258
    %v5222 = vmul.f32 %v5202, %v5221
    %v5223 = vadd.f32 %v5222, 1.0
    %v5224 = vrcp.pop %v5223
    %v5225 = vmul.f32 %v5223, %v5224
    %v5226 = vsub.f32 1.0, %v5225
    %v5227 = vmul.f32 %v5224, %v5226
    %v5228 = vadd.f32 %v5224, %v5227
    %vm5229 = vweird.f32 %v5223
    %vm5230 = vweird.f32 %v5224
    %vm5231 = vmor %vm5229, %vm5230
    %v5232 = vsel %vm5231, %v5224, %v5228
    %v5233 = vand.u32 2147483647, %v5223
    %vm5234 = vcmp.eq.f32.partialorder %v5233, 8.507059e+37
    %v5235 = vand.u32 %v5223, 2147483648
    %v5236 = vor.u32 1.1754944e-38, %v5235
    %v5237 = vsel %vm5234, %v5236, %v5232
    %v5238 = vmul.f32 %v5213, %v5237
    %v5239 = vmin.f32 %v5238, 1.0
    %v5240 = vmax.f32 %v5239, -1.0
    %v5241 = vmul.f32 %v5038, %v5038
    %v5242 = vmin.f32 16.0, %v5241
    %v5243 = vmul.f32 %v5242, 2.1237322e-06
    %v5244 = vadd.f32 %v5243, 0.00028619796
    %v5245 = vmul.f32 %v5242, %v5244
    %v5246 = vadd.f32 %v5245, 0.0036580483
    %v5247 = vmul.f32 %v5242, %v5246
    %v5248 = vadd.f32 %v5247, 0.05243302
    %v5249 = vmul.f32 %v5242, %v5248
    %v5250 = vadd.f32 %v5249, 0.18741608
    %v5251 = vmul.f32 %v5242, %v5250
    %v5252 = vadd.f32 %v5251, 1.1283791
    %v5253 = vmul.f32 %v5038, %v5252
    %v5254 = vmul.f32 %v5242, 3.8918573e-05
    %v5255 = vadd.f32 %v5254, 0.001143296
    %v5256 = vmul.f32 %v5242, %v5255
    %v5257 = vadd.f32 %v5256, 0.014752088
    %v5258 = vmul.f32 %v5242, %v5257
    %v5259 = vadd.f32 %v5258, 0.112945676
    %v5260 = vmul.f32 %v5242, %v5259
    %v5261 = vadd.f32 %v5260, 0.4994258
    %v5262 = vmul.f32 %v5242, %v5261
    %v5263 = vadd.f32 %v5262, 1.0
    %v5264 = vrcp.pop %v5263
    %v5265 = vmul.f32 %v5263, %v5264
    %v5266 = vsub.f32 1.0, %v5265
    %v5267 = vmul.f32 %v5264, %v5266
    %v5268 = vadd.f32 %v5264, %v5267
    %vm5269 = vweird.f32 %v5263
    %vm5270 = vweird.f32 %v5264
    %vm5271 = vmor %vm5269, %vm5270
    %v5272 = vsel %vm5271, %v5264, %v5268
    %v5273 = vand.u32 2147483647, %v5263
    %vm5274 = vcmp.eq.f32.partialorder %v5273, 8.507059e+37
    %v5275 = vand.u32 %v5263, 2147483648
    %v5276 = vor.u32 1.1754944e-38, %v5275
    %v5277 = vsel %vm5274, %v5276, %v5272
    %v5278 = vmul.f32 %v5253, %v5277
    %v5279 = vmin.f32 %v5278, 1.0
    %v5280 = vmax.f32 %v5279, -1.0
    %v5281 = vmul.f32 %v5039, %v5039
    %v5282 = vmin.f32 16.0, %v5281
    %v5283 = vmul.f32 %v5282, 2.1237322e-06
    %v5284 = vadd.f32 %v5283, 0.00028619796
    %v5285 = vmul.f32 %v5282, %v5284
    %v5286 = vadd.f32 %v5285, 0.0036580483
    %v5287 = vmul.f32 %v5282, %v5286
    %v5288 = vadd.f32 %v5287, 0.05243302
    %v5289 = vmul.f32 %v5282, %v5288
    %v5290 = vadd.f32 %v5289, 0.18741608
    %v5291 = vmul.f32 %v5282, %v5290
    %v5292 = vadd.f32 %v5291, 1.1283791
    %v5293 = vmul.f32 %v5039, %v5292
    %v5294 = vmul.f32 %v5282, 3.8918573e-05
    %v5295 = vadd.f32 %v5294, 0.001143296
    %v5296 = vmul.f32 %v5282, %v5295
    %v5297 = vadd.f32 %v5296, 0.014752088
    %v5298 = vmul.f32 %v5282, %v5297
    %v5299 = vadd.f32 %v5298, 0.112945676
    %v5300 = vmul.f32 %v5282, %v5299
    %v5301 = vadd.f32 %v5300, 0.4994258
    %v5302 = vmul.f32 %v5282, %v5301
    %v5303 = vadd.f32 %v5302, 1.0
    %v5304 = vrcp.pop %v5303
    %v5305 = vmul.f32 %v5303, %v5304
    %v5306 = vsub.f32 1.0, %v5305
    %v5307 = vmul.f32 %v5304, %v5306
    %v5308 = vadd.f32 %v5304, %v5307
    %vm5309 = vweird.f32 %v5303
    %vm5310 = vweird.f32 %v5304
    %vm5311 = vmor %vm5309, %vm5310
    %v5312 = vsel %vm5311, %v5304, %v5308
    %v5313 = vand.u32 2147483647, %v5303
    %vm5314 = vcmp.eq.f32.partialorder %v5313, 8.507059e+37
    %v5315 = vand.u32 %v5303, 2147483648
    %v5316 = vor.u32 1.1754944e-38, %v5315
    %v5317 = vsel %vm5314, %v5316, %v5312
    %v5318 = vmul.f32 %v5293, %v5317
    %v5319 = vmin.f32 %v5318, 1.0
    %v5320 = vmax.f32 %v5319, -1.0
    %v5321 = vmul.f32 %v5040, %v5040
    %v5322 = vmin.f32 16.0, %v5321
    %v5323 = vmul.f32 %v5322, 2.1237322e-06
    %v5324 = vadd.f32 %v5323, 0.00028619796
    %v5325 = vmul.f32 %v5322, %v5324
    %v5326 = vadd.f32 %v5325, 0.0036580483
    %v5327 = vmul.f32 %v5322, %v5326
    %v5328 = vadd.f32 %v5327, 0.05243302
    %v5329 = vmul.f32 %v5322, %v5328
    %v5330 = vadd.f32 %v5329, 0.18741608
    %v5331 = vmul.f32 %v5322, %v5330
    %v5332 = vadd.f32 %v5331, 1.1283791
    %v5333 = vmul.f32 %v5040, %v5332
    %v5334 = vmul.f32 %v5322, 3.8918573e-05
    %v5335 = vadd.f32 %v5334, 0.001143296
    %v5336 = vmul.f32 %v5322, %v5335
    %v5337 = vadd.f32 %v5336, 0.014752088
    %v5338 = vmul.f32 %v5322, %v5337
    %v5339 = vadd.f32 %v5338, 0.112945676
    %v5340 = vmul.f32 %v5322, %v5339
    %v5341 = vadd.f32 %v5340, 0.4994258
    %v5342 = vmul.f32 %v5322, %v5341
    %v5343 = vadd.f32 %v5342, 1.0
    %v5344 = vrcp.pop %v5343
    %v5345 = vmul.f32 %v5343, %v5344
    %v5346 = vsub.f32 1.0, %v5345
    %v5347 = vmul.f32 %v5344, %v5346
    %v5348 = vadd.f32 %v5344, %v5347
    %vm5349 = vweird.f32 %v5343
    %vm5350 = vweird.f32 %v5344
    %vm5351 = vmor %vm5349, %vm5350
    %v5352 = vsel %vm5351, %v5344, %v5348
    %v5353 = vand.u32 2147483647, %v5343
    %vm5354 = vcmp.eq.f32.partialorder %v5353, 8.507059e+37
    %v5355 = vand.u32 %v5343, 2147483648
    %v5356 = vor.u32 1.1754944e-38, %v5355
    %v5357 = vsel %vm5354, %v5356, %v5352
    %v5358 = vmul.f32 %v5333, %v5357
    %v5359 = vmin.f32 %v5358, 1.0
    %v5360 = vmax.f32 %v5359, -1.0
    %v5361 = vadd.f32 %v5080, 1.0
    %v5362 = vadd.f32 %v5120, 1.0
    %v5363 = vadd.f32 %v5160, 1.0
    %v5364 = vadd.f32 %v5200, 1.0
    %v5365 = vadd.f32 %v5240, 1.0
    %v5366 = vadd.f32 %v5280, 1.0
    %v5367 = vadd.f32 %v5320, 1.0
    %v5368 = vadd.f32 %v5360, 1.0
    %v5369 = vmul.f32 %v5025, %v5361
    %v5370 = vmul.f32 %v5026, %v5362
    %v5371 = vmul.f32 %v5027, %v5363
    %v5372 = vmul.f32 %v5028, %v5364
    %v5373 = vmul.f32 %v5029, %v5365
    %v5374 = vmul.f32 %v5030, %v5366
    %v5375 = vmul.f32 %v5031, %v5367
    %v5376 = vmul.f32 %v5032, %v5368
    %s5377 = scalar_lea.vmem %s2, 160
    %v5378 = vld [vmem:[%s5377] sm:$0xff]
    %v5379 = vld [vmem:[%s5377 + $0x8] sm:$0xff]
    %v5380 = vld [vmem:[%s5377 + $0x10] sm:$0xff]
    %v5381 = vld [vmem:[%s5377 + $0x18] sm:$0xff]
    %s5382 = scalar_lea.vmem %s4, 192
    %v5383 = vld [vmem:[%s5382] sm:$0xff]
    %v5384 = vld [vmem:[%s5382 + $0x8] sm:$0xff]
    %v5385 = vld [vmem:[%s5382 + $0x10] sm:$0xff]
    %v5386 = vld [vmem:[%s5382 + $0x18] sm:$0xff]
    %5388 = vset.pattern.permute.xlu0 0
    %5389 = vperm.xlu0 %5388, %v5383
    %v5390 = vpop.permute.xlu0 %5389
    %5393 = vset.pattern.permute.xlu0 0
    %5394 = vperm.xlu0 %5393, %v5384
    %v5395 = vpop.permute.xlu0 %5394
    %5398 = vset.pattern.permute.xlu0 0
    %5399 = vperm.xlu0 %5398, %v5385
    %v5400 = vpop.permute.xlu0 %5399
    %5403 = vset.pattern.permute.xlu0 0
    %5404 = vperm.xlu0 %5403, %v5386
    %v5405 = vpop.permute.xlu0 %5404
    %v5408 = vsel %vm1760, %v5378, 0
    %v5411 = vsel %vm1760, %v5379, 0
    %v5414 = vsel %vm1760, %v5380, 0
    %v5417 = vsel %vm1760, %v5381, 0
    %5419 = vmatpush.msra.mxu0 0.0
    %5420 = vmatpush.msra.mxu0 0.0
    %5421 = vmatpush.msra.mxu0 0.0
    %5422 = vmatpush.msra.mxu0 0.0
    %5423 = vmatpush.msra.mxu0 0.0
    %5424 = vmatpush.msra.mxu0 0.0
    %5425 = vmatpush.msra.mxu0 0.0
    %5426 = vmatpush.msra.mxu0 0.0
    %5427 = vmatpush.msra.mxu0 0.0
    %5428 = vmatpush.msra.mxu0 0.0
    %5429 = vmatpush.msra.mxu0 0.0
    %5430 = vmatpush.msra.mxu0 0.0
    %5431 = vmatpush.msra.mxu0 %v5375
    %5432 = vmatpush.msra.mxu0 %v5373
    %5433 = vmatpush.msra.mxu0 %v5371
    %5434 = vmatpush.msra.mxu0 %v5369
    %5435 = vmatmul.f32.gmra.mxu0 %v5408
    %v5436 = vpop.f32.mrf.mxu0
    %v5437 = vadd.f32 %v5390, %v5436
    %5438 = vmatmul.f32.gmra.mxu0 %v5411
    %v5439 = vpop.f32.mrf.mxu0
    %v5440 = vadd.f32 %v5395, %v5439
    %5441 = vmatmul.f32.gmra.mxu0 %v5414
    %v5442 = vpop.f32.mrf.mxu0
    %v5443 = vadd.f32 %v5400, %v5442
    %5444 = vmatmul.f32.gmra.mxu0 %v5417
    %v5445 = vpop.f32.mrf.mxu0
    %v5446 = vadd.f32 %v5405, %v5445
    %5447 = vdwg.mxu0
    %5448 = vmatpush.msra.mxu0 0.0
    %5449 = vmatpush.msra.mxu0 0.0
    %5450 = vmatpush.msra.mxu0 0.0
    %5451 = vmatpush.msra.mxu0 0.0
    %5452 = vmatpush.msra.mxu0 0.0
    %5453 = vmatpush.msra.mxu0 0.0
    %5454 = vmatpush.msra.mxu0 0.0
    %5455 = vmatpush.msra.mxu0 0.0
    %5456 = vmatpush.msra.mxu0 0.0
    %5457 = vmatpush.msra.mxu0 0.0
    %5458 = vmatpush.msra.mxu0 0.0
    %5459 = vmatpush.msra.mxu0 0.0
    %5460 = vmatpush.msra.mxu0 %v5376
    %5461 = vmatpush.msra.mxu0 %v5374
    %5462 = vmatpush.msra.mxu0 %v5372
    %5463 = vmatpush.msra.mxu0 %v5370
    %5464 = vmatmul.f32.gmra.mxu0 %v5408
    %v5465 = vpop.f32.mrf.mxu0
    %v5466 = vadd.f32 %v5390, %v5465
    %5467 = vmatmul.f32.gmra.mxu0 %v5411
    %v5468 = vpop.f32.mrf.mxu0
    %v5469 = vadd.f32 %v5395, %v5468
    %5470 = vmatmul.f32.gmra.mxu0 %v5414
    %v5471 = vpop.f32.mrf.mxu0
    %v5472 = vadd.f32 %v5400, %v5471
    %5473 = vmatmul.f32.gmra.mxu0 %v5417
    %v5474 = vpop.f32.mrf.mxu0
    %v5475 = vadd.f32 %v5405, %v5474
    %5476 = vdwg.mxu0
    %5477 = vmatpush.msra.mxu0 1.0
    %5478 = vmatpush.msra.mxu0 1.0
    %5479 = vmatpush.msra.mxu0 1.0
    %5480 = vmatpush.msra.mxu0 1.0
    %5481 = vmatpush.msra.mxu0 1.0
    %5482 = vmatpush.msra.mxu0 1.0
    %5483 = vmatpush.msra.mxu0 1.0
    %5484 = vmatpush.msra.mxu0 1.0
    %5485 = vmatpush.msra.mxu0 1.0
    %5486 = vmatpush.msra.mxu0 1.0
    %5487 = vmatpush.msra.mxu0 1.0
    %5488 = vmatpush.msra.mxu0 1.0
    %5489 = vmatpush.msra.mxu0 1.0
    %5490 = vmatpush.msra.mxu0 1.0
    %5491 = vmatpush.msra.mxu0 1.0
    %5492 = vmatpush.msra.mxu0 1.0
    %5493 = vmatmul.f32.gmra.mxu0 %v5437
    %v5494 = vpop.f32.mrf.mxu0
    %v5495 = vadd.f32 0.0, %v5494
    %5496 = vmatmul.f32.gmra.mxu0 %v5440
    %v5497 = vpop.f32.mrf.mxu0
    %v5498 = vadd.f32 0.0, %v5497
    %5499 = vmatmul.f32.gmra.mxu0 %v5443
    %v5500 = vpop.f32.mrf.mxu0
    %v5501 = vadd.f32 0.0, %v5500
    %5502 = vmatmul.f32.gmra.mxu0 %v5446
    %v5503 = vpop.f32.mrf.mxu0
    %v5504 = vadd.f32 0.0, %v5503
    %5505 = vdwg.mxu0
    %5506 = vmatpush.msra.mxu0 1.0
    %5507 = vmatpush.msra.mxu0 1.0
    %5508 = vmatpush.msra.mxu0 1.0
    %5509 = vmatpush.msra.mxu0 1.0
    %5510 = vmatpush.msra.mxu0 1.0
    %5511 = vmatpush.msra.mxu0 1.0
    %5512 = vmatpush.msra.mxu0 1.0
    %5513 = vmatpush.msra.mxu0 1.0
    %5514 = vmatpush.msra.mxu0 1.0
    %5515 = vmatpush.msra.mxu0 1.0
    %5516 = vmatpush.msra.mxu0 1.0
    %5517 = vmatpush.msra.mxu0 1.0
    %5518 = vmatpush.msra.mxu0 1.0
    %5519 = vmatpush.msra.mxu0 1.0
    %5520 = vmatpush.msra.mxu0 1.0
    %5521 = vmatpush.msra.mxu0 1.0
    %5522 = vmatmul.f32.gmra.mxu0 %v5466
    %v5523 = vpop.f32.mrf.mxu0
    %v5524 = vadd.f32 %v5495, %v5523
    %5525 = vmatmul.f32.gmra.mxu0 %v5469
    %v5526 = vpop.f32.mrf.mxu0
    %v5527 = vadd.f32 %v5498, %v5526
    %5528 = vmatmul.f32.gmra.mxu0 %v5472
    %v5529 = vpop.f32.mrf.mxu0
    %v5530 = vadd.f32 %v5501, %v5529
    %5531 = vmatmul.f32.gmra.mxu0 %v5475
    %v5532 = vpop.f32.mrf.mxu0
    %v5533 = vadd.f32 %v5504, %v5532
    %5534 = vdwg.mxu0
    %v5535 = vmul.f32 %v5524, 0.00390625
    %v5536 = vmul.f32 %v5527, 0.00390625
    %v5537 = vmul.f32 %v5530, 0.00390625
    %v5538 = vmul.f32 %v5533, 0.00390625
    %5540 = vset.pattern.permute.xlu0 0
    %5541 = vperm.xlu0 %5540, %v5535
    %v5542 = vpop.permute.xlu0 %5541
    %5545 = vset.pattern.permute.xlu0 0
    %5546 = vperm.xlu0 %5545, %v5536
    %v5547 = vpop.permute.xlu0 %5546
    %5550 = vset.pattern.permute.xlu0 0
    %5551 = vperm.xlu0 %5550, %v5537
    %v5552 = vpop.permute.xlu0 %5551
    %5555 = vset.pattern.permute.xlu0 0
    %5556 = vperm.xlu0 %5555, %v5538
    %v5557 = vpop.permute.xlu0 %5556
    %v5559 = vsub.f32 %v5437, %v5542
    %v5560 = vsub.f32 %v5466, %v5542
    %v5561 = vsub.f32 %v5440, %v5547
    %v5562 = vsub.f32 %v5469, %v5547
    %v5563 = vsub.f32 %v5443, %v5552
    %v5564 = vsub.f32 %v5472, %v5552
    %v5565 = vsub.f32 %v5446, %v5557
    %v5566 = vsub.f32 %v5475, %v5557
    %v5567 = vmul.f32 %v5559, %v5559
    %v5568 = vmul.f32 %v5560, %v5560
    %v5569 = vmul.f32 %v5561, %v5561
    %v5570 = vmul.f32 %v5562, %v5562
    %v5571 = vmul.f32 %v5563, %v5563
    %v5572 = vmul.f32 %v5564, %v5564
    %v5573 = vmul.f32 %v5565, %v5565
    %v5574 = vmul.f32 %v5566, %v5566
    %5575 = vmatpush.msra.mxu0 1.0
    %5576 = vmatpush.msra.mxu0 1.0
    %5577 = vmatpush.msra.mxu0 1.0
    %5578 = vmatpush.msra.mxu0 1.0
    %5579 = vmatpush.msra.mxu0 1.0
    %5580 = vmatpush.msra.mxu0 1.0
    %5581 = vmatpush.msra.mxu0 1.0
    %5582 = vmatpush.msra.mxu0 1.0
    %5583 = vmatpush.msra.mxu0 1.0
    %5584 = vmatpush.msra.mxu0 1.0
    %5585 = vmatpush.msra.mxu0 1.0
    %5586 = vmatpush.msra.mxu0 1.0
    %5587 = vmatpush.msra.mxu0 1.0
    %5588 = vmatpush.msra.mxu0 1.0
    %5589 = vmatpush.msra.mxu0 1.0
    %5590 = vmatpush.msra.mxu0 1.0
    %5591 = vmatmul.f32.gmra.mxu0 %v5567
    %v5592 = vpop.f32.mrf.mxu0
    %v5593 = vadd.f32 0.0, %v5592
    %5594 = vmatmul.f32.gmra.mxu0 %v5569
    %v5595 = vpop.f32.mrf.mxu0
    %v5596 = vadd.f32 0.0, %v5595
    %5597 = vmatmul.f32.gmra.mxu0 %v5571
    %v5598 = vpop.f32.mrf.mxu0
    %v5599 = vadd.f32 0.0, %v5598
    %5600 = vmatmul.f32.gmra.mxu0 %v5573
    %v5601 = vpop.f32.mrf.mxu0
    %v5602 = vadd.f32 0.0, %v5601
    %5603 = vdwg.mxu0
    %5604 = vmatpush.msra.mxu0 1.0
    %5605 = vmatpush.msra.mxu0 1.0
    %5606 = vmatpush.msra.mxu0 1.0
    %5607 = vmatpush.msra.mxu0 1.0
    %5608 = vmatpush.msra.mxu0 1.0
    %5609 = vmatpush.msra.mxu0 1.0
    %5610 = vmatpush.msra.mxu0 1.0
    %5611 = vmatpush.msra.mxu0 1.0
    %5612 = vmatpush.msra.mxu0 1.0
    %5613 = vmatpush.msra.mxu0 1.0
    %5614 = vmatpush.msra.mxu0 1.0
    %5615 = vmatpush.msra.mxu0 1.0
    %5616 = vmatpush.msra.mxu0 1.0
    %5617 = vmatpush.msra.mxu0 1.0
    %5618 = vmatpush.msra.mxu0 1.0
    %5619 = vmatpush.msra.mxu0 1.0
    %5620 = vmatmul.f32.gmra.mxu0 %v5568
    %v5621 = vpop.f32.mrf.mxu0
    %v5622 = vadd.f32 %v5593, %v5621
    %5623 = vmatmul.f32.gmra.mxu0 %v5570
    %v5624 = vpop.f32.mrf.mxu0
    %v5625 = vadd.f32 %v5596, %v5624
    %5626 = vmatmul.f32.gmra.mxu0 %v5572
    %v5627 = vpop.f32.mrf.mxu0
    %v5628 = vadd.f32 %v5599, %v5627
    %5629 = vmatmul.f32.gmra.mxu0 %v5574
    %v5630 = vpop.f32.mrf.mxu0
    %v5631 = vadd.f32 %v5602, %v5630
    %5632 = vdwg.mxu0
    %v5633 = vmul.f32 %v5622, 0.00390625
    %v5634 = vmul.f32 %v5625, 0.00390625
    %v5635 = vmul.f32 %v5628, 0.00390625
    %v5636 = vmul.f32 %v5631, 0.00390625
    %v5637 = vadd.f32 %v5633, 1e-05
    %v5638 = vadd.f32 %v5634, 1e-05
    %v5639 = vadd.f32 %v5635, 1e-05
    %v5640 = vadd.f32 %v5636, 1e-05
    %v5641 = vrsqrt.pop %v5637
    %v5642 = vmul.f32 %v5641, %v5637
    %v5643 = vmul.f32 %v5642, %v5641
    %v5644 = vmul.f32 0.5, %v5643
    %v5645 = vsub.f32 1.5, %v5644
    %v5646 = vmul.f32 %v5641, %v5645
    %vm5647 = vweird.f32 %v5637
    %vm5648 = vweird.f32 %v5641
    %vm5649 = vmor %vm5647, %vm5648
    %v5650 = vsel %vm5649, %v5641, %v5646
    %v5651 = vrsqrt.pop %v5638
    %v5652 = vmul.f32 %v5651, %v5638
    %v5653 = vmul.f32 %v5652, %v5651
    %v5654 = vmul.f32 0.5, %v5653
    %v5655 = vsub.f32 1.5, %v5654
    %v5656 = vmul.f32 %v5651, %v5655
    %vm5657 = vweird.f32 %v5638
    %vm5658 = vweird.f32 %v5651
    %vm5659 = vmor %vm5657, %vm5658
    %v5660 = vsel %vm5659, %v5651, %v5656
    %v5661 = vrsqrt.pop %v5639
    %v5662 = vmul.f32 %v5661, %v5639
    %v5663 = vmul.f32 %v5662, %v5661
    %v5664 = vmul.f32 0.5, %v5663
    %v5665 = vsub.f32 1.5, %v5664
    %v5666 = vmul.f32 %v5661, %v5665
    %vm5667 = vweird.f32 %v5639
    %vm5668 = vweird.f32 %v5661
    %vm5669 = vmor %vm5667, %vm5668
    %v5670 = vsel %vm5669, %v5661, %v5666
    %v5671 = vrsqrt.pop %v5640
    %v5672 = vmul.f32 %v5671, %v5640
    %v5673 = vmul.f32 %v5672, %v5671
    %v5674 = vmul.f32 0.5, %v5673
    %v5675 = vsub.f32 1.5, %v5674
    %v5676 = vmul.f32 %v5671, %v5675
    %vm5677 = vweird.f32 %v5640
    %vm5678 = vweird.f32 %v5671
    %vm5679 = vmor %vm5677, %vm5678
    %v5680 = vsel %vm5679, %v5671, %v5676
    %s5681 = scalar_lea.vmem %s4, 448
    %v5682 = vld [vmem:[%s5681] sm:$0xff]
    %v5683 = vld [vmem:[%s5681 + $0x8] sm:$0xff]
    %v5684 = vld [vmem:[%s5681 + $0x10] sm:$0xff]
    %v5685 = vld [vmem:[%s5681 + $0x18] sm:$0xff]
    %v5686 = vmul.f32 %v5650, %v5682
    %v5687 = vmul.f32 %v5660, %v5683
    %v5688 = vmul.f32 %v5670, %v5684
    %v5689 = vmul.f32 %v5680, %v5685
    %5691 = vset.pattern.permute.xlu0 0
    %5692 = vperm.xlu0 %5691, %v5686
    %v5693 = vpop.permute.xlu0 %5692
    %5696 = vset.pattern.permute.xlu0 0
    %5697 = vperm.xlu0 %5696, %v5687
    %v5698 = vpop.permute.xlu0 %5697
    %5701 = vset.pattern.permute.xlu0 0
    %5702 = vperm.xlu0 %5701, %v5688
    %v5703 = vpop.permute.xlu0 %5702
    %5706 = vset.pattern.permute.xlu0 0
    %5707 = vperm.xlu0 %5706, %v5689
    %v5708 = vpop.permute.xlu0 %5707
    %v5710 = vmul.f32 %v5559, %v5693
    %v5711 = vmul.f32 %v5560, %v5693
    %v5712 = vmul.f32 %v5561, %v5698
    %v5713 = vmul.f32 %v5562, %v5698
    %v5714 = vmul.f32 %v5563, %v5703
    %v5715 = vmul.f32 %v5564, %v5703
    %v5716 = vmul.f32 %v5565, %v5708
    %v5717 = vmul.f32 %v5566, %v5708
    %s5718 = scalar_lea.vmem %s4, 704
    %v5719 = vld [vmem:[%s5718] sm:$0xff]
    %v5720 = vld [vmem:[%s5718 + $0x8] sm:$0xff]
    %v5721 = vld [vmem:[%s5718 + $0x10] sm:$0xff]
    %v5722 = vld [vmem:[%s5718 + $0x18] sm:$0xff]
    %5724 = vset.pattern.permute.xlu0 0
    %5725 = vperm.xlu0 %5724, %v5719
    %v5726 = vpop.permute.xlu0 %5725
    %5729 = vset.pattern.permute.xlu0 0
    %5730 = vperm.xlu0 %5729, %v5720
    %v5731 = vpop.permute.xlu0 %5730
    %5734 = vset.pattern.permute.xlu0 0
    %5735 = vperm.xlu0 %5734, %v5721
    %v5736 = vpop.permute.xlu0 %5735
    %5739 = vset.pattern.permute.xlu0 0
    %5740 = vperm.xlu0 %5739, %v5722
    %v5741 = vpop.permute.xlu0 %5740
    %v5743 = vadd.f32 %v5710, %v5726
    %v5744 = vadd.f32 %v5711, %v5726
    %v5745 = vadd.f32 %v5712, %v5731
    %v5746 = vadd.f32 %v5713, %v5731
    %v5747 = vadd.f32 %v5714, %v5736
    %v5748 = vadd.f32 %v5715, %v5736
    %v5749 = vadd.f32 %v5716, %v5741
    %v5750 = vadd.f32 %v5717, %v5741
    %v5751 = vadd.f32 %v4643, %v5743
    %v5752 = vadd.f32 %v4644, %v5744
    %v5753 = vadd.f32 %v4645, %v5745
    %v5754 = vadd.f32 %v4646, %v5746
    %v5755 = vadd.f32 %v4647, %v5747
    %v5756 = vadd.f32 %v4648, %v5748
    %v5757 = vadd.f32 %v4649, %v5749
    %v5758 = vadd.f32 %v4650, %v5750
    %v5759 = vmul.f32 %v5751, 0.5
    %v5760 = vmul.f32 %v5752, 0.5
    %v5761 = vmul.f32 %v5753, 0.5
    %v5762 = vmul.f32 %v5754, 0.5
    %v5763 = vmul.f32 %v5755, 0.5
    %v5764 = vmul.f32 %v5756, 0.5
    %v5765 = vmul.f32 %v5757, 0.5
    %v5766 = vmul.f32 %v5758, 0.5
    %v5767 = vmul.f32 %v5751, 0.70710677
    %v5768 = vmul.f32 %v5752, 0.70710677
    %v5769 = vmul.f32 %v5753, 0.70710677
    %v5770 = vmul.f32 %v5754, 0.70710677
    %v5771 = vmul.f32 %v5755, 0.70710677
    %v5772 = vmul.f32 %v5756, 0.70710677
    %v5773 = vmul.f32 %v5757, 0.70710677
    %v5774 = vmul.f32 %v5758, 0.70710677
    %v5775 = vmul.f32 %v5767, %v5767
    %v5776 = vmin.f32 16.0, %v5775
    %v5777 = vmul.f32 %v5776, 2.1237322e-06
    %v5778 = vadd.f32 %v5777, 0.00028619796
    %v5779 = vmul.f32 %v5776, %v5778
    %v5780 = vadd.f32 %v5779, 0.0036580483
    %v5781 = vmul.f32 %v5776, %v5780
    %v5782 = vadd.f32 %v5781, 0.05243302
    %v5783 = vmul.f32 %v5776, %v5782
    %v5784 = vadd.f32 %v5783, 0.18741608
    %v5785 = vmul.f32 %v5776, %v5784
    %v5786 = vadd.f32 %v5785, 1.1283791
    %v5787 = vmul.f32 %v5767, %v5786
    %v5788 = vmul.f32 %v5776, 3.8918573e-05
    %v5789 = vadd.f32 %v5788, 0.001143296
    %v5790 = vmul.f32 %v5776, %v5789
    %v5791 = vadd.f32 %v5790, 0.014752088
    %v5792 = vmul.f32 %v5776, %v5791
    %v5793 = vadd.f32 %v5792, 0.112945676
    %v5794 = vmul.f32 %v5776, %v5793
    %v5795 = vadd.f32 %v5794, 0.4994258
    %v5796 = vmul.f32 %v5776, %v5795
    %v5797 = vadd.f32 %v5796, 1.0
    %v5798 = vrcp.pop %v5797
    %v5799 = vmul.f32 %v5797, %v5798
    %v5800 = vsub.f32 1.0, %v5799
    %v5801 = vmul.f32 %v5798, %v5800
    %v5802 = vadd.f32 %v5798, %v5801
    %vm5803 = vweird.f32 %v5797
    %vm5804 = vweird.f32 %v5798
    %vm5805 = vmor %vm5803, %vm5804
    %v5806 = vsel %vm5805, %v5798, %v5802
    %v5807 = vand.u32 2147483647, %v5797
    %vm5808 = vcmp.eq.f32.partialorder %v5807, 8.507059e+37
    %v5809 = vand.u32 %v5797, 2147483648
    %v5810 = vor.u32 1.1754944e-38, %v5809
    %v5811 = vsel %vm5808, %v5810, %v5806
    %v5812 = vmul.f32 %v5787, %v5811
    %v5813 = vmin.f32 %v5812, 1.0
    %v5814 = vmax.f32 %v5813, -1.0
    %v5815 = vmul.f32 %v5768, %v5768
    %v5816 = vmin.f32 16.0, %v5815
    %v5817 = vmul.f32 %v5816, 2.1237322e-06
    %v5818 = vadd.f32 %v5817, 0.00028619796
    %v5819 = vmul.f32 %v5816, %v5818
    %v5820 = vadd.f32 %v5819, 0.0036580483
    %v5821 = vmul.f32 %v5816, %v5820
    %v5822 = vadd.f32 %v5821, 0.05243302
    %v5823 = vmul.f32 %v5816, %v5822
    %v5824 = vadd.f32 %v5823, 0.18741608
    %v5825 = vmul.f32 %v5816, %v5824
    %v5826 = vadd.f32 %v5825, 1.1283791
    %v5827 = vmul.f32 %v5768, %v5826
    %v5828 = vmul.f32 %v5816, 3.8918573e-05
    %v5829 = vadd.f32 %v5828, 0.001143296
    %v5830 = vmul.f32 %v5816, %v5829
    %v5831 = vadd.f32 %v5830, 0.014752088
    %v5832 = vmul.f32 %v5816, %v5831
    %v5833 = vadd.f32 %v5832, 0.112945676
    %v5834 = vmul.f32 %v5816, %v5833
    %v5835 = vadd.f32 %v5834, 0.4994258
    %v5836 = vmul.f32 %v5816, %v5835
    %v5837 = vadd.f32 %v5836, 1.0
    %v5838 = vrcp.pop %v5837
    %v5839 = vmul.f32 %v5837, %v5838
    %v5840 = vsub.f32 1.0, %v5839
    %v5841 = vmul.f32 %v5838, %v5840
    %v5842 = vadd.f32 %v5838, %v5841
    %vm5843 = vweird.f32 %v5837
    %vm5844 = vweird.f32 %v5838
    %vm5845 = vmor %vm5843, %vm5844
    %v5846 = vsel %vm5845, %v5838, %v5842
    %v5847 = vand.u32 2147483647, %v5837
    %vm5848 = vcmp.eq.f32.partialorder %v5847, 8.507059e+37
    %v5849 = vand.u32 %v5837, 2147483648
    %v5850 = vor.u32 1.1754944e-38, %v5849
    %v5851 = vsel %vm5848, %v5850, %v5846
    %v5852 = vmul.f32 %v5827, %v5851
    %v5853 = vmin.f32 %v5852, 1.0
    %v5854 = vmax.f32 %v5853, -1.0
    %v5855 = vmul.f32 %v5769, %v5769
    %v5856 = vmin.f32 16.0, %v5855
    %v5857 = vmul.f32 %v5856, 2.1237322e-06
    %v5858 = vadd.f32 %v5857, 0.00028619796
    %v5859 = vmul.f32 %v5856, %v5858
    %v5860 = vadd.f32 %v5859, 0.0036580483
    %v5861 = vmul.f32 %v5856, %v5860
    %v5862 = vadd.f32 %v5861, 0.05243302
    %v5863 = vmul.f32 %v5856, %v5862
    %v5864 = vadd.f32 %v5863, 0.18741608
    %v5865 = vmul.f32 %v5856, %v5864
    %v5866 = vadd.f32 %v5865, 1.1283791
    %v5867 = vmul.f32 %v5769, %v5866
    %v5868 = vmul.f32 %v5856, 3.8918573e-05
    %v5869 = vadd.f32 %v5868, 0.001143296
    %v5870 = vmul.f32 %v5856, %v5869
    %v5871 = vadd.f32 %v5870, 0.014752088
    %v5872 = vmul.f32 %v5856, %v5871
    %v5873 = vadd.f32 %v5872, 0.112945676
    %v5874 = vmul.f32 %v5856, %v5873
    %v5875 = vadd.f32 %v5874, 0.4994258
    %v5876 = vmul.f32 %v5856, %v5875
    %v5877 = vadd.f32 %v5876, 1.0
    %v5878 = vrcp.pop %v5877
    %v5879 = vmul.f32 %v5877, %v5878
    %v5880 = vsub.f32 1.0, %v5879
    %v5881 = vmul.f32 %v5878, %v5880
    %v5882 = vadd.f32 %v5878, %v5881
    %vm5883 = vweird.f32 %v5877
    %vm5884 = vweird.f32 %v5878
    %vm5885 = vmor %vm5883, %vm5884
    %v5886 = vsel %vm5885, %v5878, %v5882
    %v5887 = vand.u32 2147483647, %v5877
    %vm5888 = vcmp.eq.f32.partialorder %v5887, 8.507059e+37
    %v5889 = vand.u32 %v5877, 2147483648
    %v5890 = vor.u32 1.1754944e-38, %v5889
    %v5891 = vsel %vm5888, %v5890, %v5886
    %v5892 = vmul.f32 %v5867, %v5891
    %v5893 = vmin.f32 %v5892, 1.0
    %v5894 = vmax.f32 %v5893, -1.0
    %v5895 = vmul.f32 %v5770, %v5770
    %v5896 = vmin.f32 16.0, %v5895
    %v5897 = vmul.f32 %v5896, 2.1237322e-06
    %v5898 = vadd.f32 %v5897, 0.00028619796
    %v5899 = vmul.f32 %v5896, %v5898
    %v5900 = vadd.f32 %v5899, 0.0036580483
    %v5901 = vmul.f32 %v5896, %v5900
    %v5902 = vadd.f32 %v5901, 0.05243302
    %v5903 = vmul.f32 %v5896, %v5902
    %v5904 = vadd.f32 %v5903, 0.18741608
    %v5905 = vmul.f32 %v5896, %v5904
    %v5906 = vadd.f32 %v5905, 1.1283791
    %v5907 = vmul.f32 %v5770, %v5906
    %v5908 = vmul.f32 %v5896, 3.8918573e-05
    %v5909 = vadd.f32 %v5908, 0.001143296
    %v5910 = vmul.f32 %v5896, %v5909
    %v5911 = vadd.f32 %v5910, 0.014752088
    %v5912 = vmul.f32 %v5896, %v5911
    %v5913 = vadd.f32 %v5912, 0.112945676
    %v5914 = vmul.f32 %v5896, %v5913
    %v5915 = vadd.f32 %v5914, 0.4994258
    %v5916 = vmul.f32 %v5896, %v5915
    %v5917 = vadd.f32 %v5916, 1.0
    %v5918 = vrcp.pop %v5917
    %v5919 = vmul.f32 %v5917, %v5918
    %v5920 = vsub.f32 1.0, %v5919
    %v5921 = vmul.f32 %v5918, %v5920
    %v5922 = vadd.f32 %v5918, %v5921
    %vm5923 = vweird.f32 %v5917
    %vm5924 = vweird.f32 %v5918
    %vm5925 = vmor %vm5923, %vm5924
    %v5926 = vsel %vm5925, %v5918, %v5922
    %v5927 = vand.u32 2147483647, %v5917
    %vm5928 = vcmp.eq.f32.partialorder %v5927, 8.507059e+37
    %v5929 = vand.u32 %v5917, 2147483648
    %v5930 = vor.u32 1.1754944e-38, %v5929
    %v5931 = vsel %vm5928, %v5930, %v5926
    %v5932 = vmul.f32 %v5907, %v5931
    %v5933 = vmin.f32 %v5932, 1.0
    %v5934 = vmax.f32 %v5933, -1.0
    %v5935 = vmul.f32 %v5771, %v5771
    %v5936 = vmin.f32 16.0, %v5935
    %v5937 = vmul.f32 %v5936, 2.1237322e-06
    %v5938 = vadd.f32 %v5937, 0.00028619796
    %v5939 = vmul.f32 %v5936, %v5938
    %v5940 = vadd.f32 %v5939, 0.0036580483
    %v5941 = vmul.f32 %v5936, %v5940
    %v5942 = vadd.f32 %v5941, 0.05243302
    %v5943 = vmul.f32 %v5936, %v5942
    %v5944 = vadd.f32 %v5943, 0.18741608
    %v5945 = vmul.f32 %v5936, %v5944
    %v5946 = vadd.f32 %v5945, 1.1283791
    %v5947 = vmul.f32 %v5771, %v5946
    %v5948 = vmul.f32 %v5936, 3.8918573e-05
    %v5949 = vadd.f32 %v5948, 0.001143296
    %v5950 = vmul.f32 %v5936, %v5949
    %v5951 = vadd.f32 %v5950, 0.014752088
    %v5952 = vmul.f32 %v5936, %v5951
    %v5953 = vadd.f32 %v5952, 0.112945676
    %v5954 = vmul.f32 %v5936, %v5953
    %v5955 = vadd.f32 %v5954, 0.4994258
    %v5956 = vmul.f32 %v5936, %v5955
    %v5957 = vadd.f32 %v5956, 1.0
    %v5958 = vrcp.pop %v5957
    %v5959 = vmul.f32 %v5957, %v5958
    %v5960 = vsub.f32 1.0, %v5959
    %v5961 = vmul.f32 %v5958, %v5960
    %v5962 = vadd.f32 %v5958, %v5961
    %vm5963 = vweird.f32 %v5957
    %vm5964 = vweird.f32 %v5958
    %vm5965 = vmor %vm5963, %vm5964
    %v5966 = vsel %vm5965, %v5958, %v5962
    %v5967 = vand.u32 2147483647, %v5957
    %vm5968 = vcmp.eq.f32.partialorder %v5967, 8.507059e+37
    %v5969 = vand.u32 %v5957, 2147483648
    %v5970 = vor.u32 1.1754944e-38, %v5969
    %v5971 = vsel %vm5968, %v5970, %v5966
    %v5972 = vmul.f32 %v5947, %v5971
    %v5973 = vmin.f32 %v5972, 1.0
    %v5974 = vmax.f32 %v5973, -1.0
    %v5975 = vmul.f32 %v5772, %v5772
    %v5976 = vmin.f32 16.0, %v5975
    %v5977 = vmul.f32 %v5976, 2.1237322e-06
    %v5978 = vadd.f32 %v5977, 0.00028619796
    %v5979 = vmul.f32 %v5976, %v5978
    %v5980 = vadd.f32 %v5979, 0.0036580483
    %v5981 = vmul.f32 %v5976, %v5980
    %v5982 = vadd.f32 %v5981, 0.05243302
    %v5983 = vmul.f32 %v5976, %v5982
    %v5984 = vadd.f32 %v5983, 0.18741608
    %v5985 = vmul.f32 %v5976, %v5984
    %v5986 = vadd.f32 %v5985, 1.1283791
    %v5987 = vmul.f32 %v5772, %v5986
    %v5988 = vmul.f32 %v5976, 3.8918573e-05
    %v5989 = vadd.f32 %v5988, 0.001143296
    %v5990 = vmul.f32 %v5976, %v5989
    %v5991 = vadd.f32 %v5990, 0.014752088
    %v5992 = vmul.f32 %v5976, %v5991
    %v5993 = vadd.f32 %v5992, 0.112945676
    %v5994 = vmul.f32 %v5976, %v5993
    %v5995 = vadd.f32 %v5994, 0.4994258
    %v5996 = vmul.f32 %v5976, %v5995
    %v5997 = vadd.f32 %v5996, 1.0
    %v5998 = vrcp.pop %v5997
    %v5999 = vmul.f32 %v5997, %v5998
    %v6000 = vsub.f32 1.0, %v5999
    %v6001 = vmul.f32 %v5998, %v6000
    %v6002 = vadd.f32 %v5998, %v6001
    %vm6003 = vweird.f32 %v5997
    %vm6004 = vweird.f32 %v5998
    %vm6005 = vmor %vm6003, %vm6004
    %v6006 = vsel %vm6005, %v5998, %v6002
    %v6007 = vand.u32 2147483647, %v5997
    %vm6008 = vcmp.eq.f32.partialorder %v6007, 8.507059e+37
    %v6009 = vand.u32 %v5997, 2147483648
    %v6010 = vor.u32 1.1754944e-38, %v6009
    %v6011 = vsel %vm6008, %v6010, %v6006
    %v6012 = vmul.f32 %v5987, %v6011
    %v6013 = vmin.f32 %v6012, 1.0
    %v6014 = vmax.f32 %v6013, -1.0
    %v6015 = vmul.f32 %v5773, %v5773
    %v6016 = vmin.f32 16.0, %v6015
    %v6017 = vmul.f32 %v6016, 2.1237322e-06
    %v6018 = vadd.f32 %v6017, 0.00028619796
    %v6019 = vmul.f32 %v6016, %v6018
    %v6020 = vadd.f32 %v6019, 0.0036580483
    %v6021 = vmul.f32 %v6016, %v6020
    %v6022 = vadd.f32 %v6021, 0.05243302
    %v6023 = vmul.f32 %v6016, %v6022
    %v6024 = vadd.f32 %v6023, 0.18741608
    %v6025 = vmul.f32 %v6016, %v6024
    %v6026 = vadd.f32 %v6025, 1.1283791
    %v6027 = vmul.f32 %v5773, %v6026
    %v6028 = vmul.f32 %v6016, 3.8918573e-05
    %v6029 = vadd.f32 %v6028, 0.001143296
    %v6030 = vmul.f32 %v6016, %v6029
    %v6031 = vadd.f32 %v6030, 0.014752088
    %v6032 = vmul.f32 %v6016, %v6031
    %v6033 = vadd.f32 %v6032, 0.112945676
    %v6034 = vmul.f32 %v6016, %v6033
    %v6035 = vadd.f32 %v6034, 0.4994258
    %v6036 = vmul.f32 %v6016, %v6035
    %v6037 = vadd.f32 %v6036, 1.0
    %v6038 = vrcp.pop %v6037
    %v6039 = vmul.f32 %v6037, %v6038
    %v6040 = vsub.f32 1.0, %v6039
    %v6041 = vmul.f32 %v6038, %v6040
    %v6042 = vadd.f32 %v6038, %v6041
    %vm6043 = vweird.f32 %v6037
    %vm6044 = vweird.f32 %v6038
    %vm6045 = vmor %vm6043, %vm6044
    %v6046 = vsel %vm6045, %v6038, %v6042
    %v6047 = vand.u32 2147483647, %v6037
    %vm6048 = vcmp.eq.f32.partialorder %v6047, 8.507059e+37
    %v6049 = vand.u32 %v6037, 2147483648
    %v6050 = vor.u32 1.1754944e-38, %v6049
    %v6051 = vsel %vm6048, %v6050, %v6046
    %v6052 = vmul.f32 %v6027, %v6051
    %v6053 = vmin.f32 %v6052, 1.0
    %v6054 = vmax.f32 %v6053, -1.0
    %v6055 = vmul.f32 %v5774, %v5774
    %v6056 = vmin.f32 16.0, %v6055
    %v6057 = vmul.f32 %v6056, 2.1237322e-06
    %v6058 = vadd.f32 %v6057, 0.00028619796
    %v6059 = vmul.f32 %v6056, %v6058
    %v6060 = vadd.f32 %v6059, 0.0036580483
    %v6061 = vmul.f32 %v6056, %v6060
    %v6062 = vadd.f32 %v6061, 0.05243302
    %v6063 = vmul.f32 %v6056, %v6062
    %v6064 = vadd.f32 %v6063, 0.18741608
    %v6065 = vmul.f32 %v6056, %v6064
    %v6066 = vadd.f32 %v6065, 1.1283791
    %v6067 = vmul.f32 %v5774, %v6066
    %v6068 = vmul.f32 %v6056, 3.8918573e-05
    %v6069 = vadd.f32 %v6068, 0.001143296
    %v6070 = vmul.f32 %v6056, %v6069
    %v6071 = vadd.f32 %v6070, 0.014752088
    %v6072 = vmul.f32 %v6056, %v6071
    %v6073 = vadd.f32 %v6072, 0.112945676
    %v6074 = vmul.f32 %v6056, %v6073
    %v6075 = vadd.f32 %v6074, 0.4994258
    %v6076 = vmul.f32 %v6056, %v6075
    %v6077 = vadd.f32 %v6076, 1.0
    %v6078 = vrcp.pop %v6077
    %v6079 = vmul.f32 %v6077, %v6078
    %v6080 = vsub.f32 1.0, %v6079
    %v6081 = vmul.f32 %v6078, %v6080
    %v6082 = vadd.f32 %v6078, %v6081
    %vm6083 = vweird.f32 %v6077
    %vm6084 = vweird.f32 %v6078
    %vm6085 = vmor %vm6083, %vm6084
    %v6086 = vsel %vm6085, %v6078, %v6082
    %v6087 = vand.u32 2147483647, %v6077
    %vm6088 = vcmp.eq.f32.partialorder %v6087, 8.507059e+37
    %v6089 = vand.u32 %v6077, 2147483648
    %v6090 = vor.u32 1.1754944e-38, %v6089
    %v6091 = vsel %vm6088, %v6090, %v6086
    %v6092 = vmul.f32 %v6067, %v6091
    %v6093 = vmin.f32 %v6092, 1.0
    %v6094 = vmax.f32 %v6093, -1.0
    %v6095 = vadd.f32 %v5814, 1.0
    %v6096 = vadd.f32 %v5854, 1.0
    %v6097 = vadd.f32 %v5894, 1.0
    %v6098 = vadd.f32 %v5934, 1.0
    %v6099 = vadd.f32 %v5974, 1.0
    %v6100 = vadd.f32 %v6014, 1.0
    %v6101 = vadd.f32 %v6054, 1.0
    %v6102 = vadd.f32 %v6094, 1.0
    %v6103 = vmul.f32 %v5759, %v6095
    %v6104 = vmul.f32 %v5760, %v6096
    %v6105 = vmul.f32 %v5761, %v6097
    %v6106 = vmul.f32 %v5762, %v6098
    %v6107 = vmul.f32 %v5763, %v6099
    %v6108 = vmul.f32 %v5764, %v6100
    %v6109 = vmul.f32 %v5765, %v6101
    %v6110 = vmul.f32 %v5766, %v6102
    %s6111 = scalar_lea.vmem %s2, 192
    %v6112 = vld [vmem:[%s6111] sm:$0xff]
    %v6113 = vld [vmem:[%s6111 + $0x8] sm:$0xff]
    %v6114 = vld [vmem:[%s6111 + $0x10] sm:$0xff]
    %v6115 = vld [vmem:[%s6111 + $0x18] sm:$0xff]
    %s6116 = scalar_lea.vmem %s4, 224
    %v6117 = vld [vmem:[%s6116] sm:$0xff]
    %v6118 = vld [vmem:[%s6116 + $0x8] sm:$0xff]
    %v6119 = vld [vmem:[%s6116 + $0x10] sm:$0xff]
    %v6120 = vld [vmem:[%s6116 + $0x18] sm:$0xff]
    %6122 = vset.pattern.permute.xlu0 0
    %6123 = vperm.xlu0 %6122, %v6117
    %v6124 = vpop.permute.xlu0 %6123
    %6127 = vset.pattern.permute.xlu0 0
    %6128 = vperm.xlu0 %6127, %v6118
    %v6129 = vpop.permute.xlu0 %6128
    %6132 = vset.pattern.permute.xlu0 0
    %6133 = vperm.xlu0 %6132, %v6119
    %v6134 = vpop.permute.xlu0 %6133
    %6137 = vset.pattern.permute.xlu0 0
    %6138 = vperm.xlu0 %6137, %v6120
    %v6139 = vpop.permute.xlu0 %6138
    %v6142 = vsel %vm1760, %v6112, 0
    %v6145 = vsel %vm1760, %v6113, 0
    %v6148 = vsel %vm1760, %v6114, 0
    %v6151 = vsel %vm1760, %v6115, 0
    %6153 = vmatpush.msra.mxu0 0.0
    %6154 = vmatpush.msra.mxu0 0.0
    %6155 = vmatpush.msra.mxu0 0.0
    %6156 = vmatpush.msra.mxu0 0.0
    %6157 = vmatpush.msra.mxu0 0.0
    %6158 = vmatpush.msra.mxu0 0.0
    %6159 = vmatpush.msra.mxu0 0.0
    %6160 = vmatpush.msra.mxu0 0.0
    %6161 = vmatpush.msra.mxu0 0.0
    %6162 = vmatpush.msra.mxu0 0.0
    %6163 = vmatpush.msra.mxu0 0.0
    %6164 = vmatpush.msra.mxu0 0.0
    %6165 = vmatpush.msra.mxu0 %v6109
    %6166 = vmatpush.msra.mxu0 %v6107
    %6167 = vmatpush.msra.mxu0 %v6105
    %6168 = vmatpush.msra.mxu0 %v6103
    %6169 = vmatmul.f32.gmra.mxu0 %v6142
    %v6170 = vpop.f32.mrf.mxu0
    %v6171 = vadd.f32 %v6124, %v6170
    %6172 = vmatmul.f32.gmra.mxu0 %v6145
    %v6173 = vpop.f32.mrf.mxu0
    %v6174 = vadd.f32 %v6129, %v6173
    %6175 = vmatmul.f32.gmra.mxu0 %v6148
    %v6176 = vpop.f32.mrf.mxu0
    %v6177 = vadd.f32 %v6134, %v6176
    %6178 = vmatmul.f32.gmra.mxu0 %v6151
    %v6179 = vpop.f32.mrf.mxu0
    %v6180 = vadd.f32 %v6139, %v6179
    %6181 = vdwg.mxu0
    %6182 = vmatpush.msra.mxu0 0.0
    %6183 = vmatpush.msra.mxu0 0.0
    %6184 = vmatpush.msra.mxu0 0.0
    %6185 = vmatpush.msra.mxu0 0.0
    %6186 = vmatpush.msra.mxu0 0.0
    %6187 = vmatpush.msra.mxu0 0.0
    %6188 = vmatpush.msra.mxu0 0.0
    %6189 = vmatpush.msra.mxu0 0.0
    %6190 = vmatpush.msra.mxu0 0.0
    %6191 = vmatpush.msra.mxu0 0.0
    %6192 = vmatpush.msra.mxu0 0.0
    %6193 = vmatpush.msra.mxu0 0.0
    %6194 = vmatpush.msra.mxu0 %v6110
    %6195 = vmatpush.msra.mxu0 %v6108
    %6196 = vmatpush.msra.mxu0 %v6106
    %6197 = vmatpush.msra.mxu0 %v6104
    %6198 = vmatmul.f32.gmra.mxu0 %v6142
    %v6199 = vpop.f32.mrf.mxu0
    %v6200 = vadd.f32 %v6124, %v6199
    %6201 = vmatmul.f32.gmra.mxu0 %v6145
    %v6202 = vpop.f32.mrf.mxu0
    %v6203 = vadd.f32 %v6129, %v6202
    %6204 = vmatmul.f32.gmra.mxu0 %v6148
    %v6205 = vpop.f32.mrf.mxu0
    %v6206 = vadd.f32 %v6134, %v6205
    %6207 = vmatmul.f32.gmra.mxu0 %v6151
    %v6208 = vpop.f32.mrf.mxu0
    %v6209 = vadd.f32 %v6139, %v6208
    %6210 = vdwg.mxu0
    %6211 = vmatpush.msra.mxu0 1.0
    %6212 = vmatpush.msra.mxu0 1.0
    %6213 = vmatpush.msra.mxu0 1.0
    %6214 = vmatpush.msra.mxu0 1.0
    %6215 = vmatpush.msra.mxu0 1.0
    %6216 = vmatpush.msra.mxu0 1.0
    %6217 = vmatpush.msra.mxu0 1.0
    %6218 = vmatpush.msra.mxu0 1.0
    %6219 = vmatpush.msra.mxu0 1.0
    %6220 = vmatpush.msra.mxu0 1.0
    %6221 = vmatpush.msra.mxu0 1.0
    %6222 = vmatpush.msra.mxu0 1.0
    %6223 = vmatpush.msra.mxu0 1.0
    %6224 = vmatpush.msra.mxu0 1.0
    %6225 = vmatpush.msra.mxu0 1.0
    %6226 = vmatpush.msra.mxu0 1.0
    %6227 = vmatmul.f32.gmra.mxu0 %v6171
    %v6228 = vpop.f32.mrf.mxu0
    %v6229 = vadd.f32 0.0, %v6228
    %6230 = vmatmul.f32.gmra.mxu0 %v6174
    %v6231 = vpop.f32.mrf.mxu0
    %v6232 = vadd.f32 0.0, %v6231
    %6233 = vmatmul.f32.gmra.mxu0 %v6177
    %v6234 = vpop.f32.mrf.mxu0
    %v6235 = vadd.f32 0.0, %v6234
    %6236 = vmatmul.f32.gmra.mxu0 %v6180
    %v6237 = vpop.f32.mrf.mxu0
    %v6238 = vadd.f32 0.0, %v6237
    %6239 = vdwg.mxu0
    %6240 = vmatpush.msra.mxu0 1.0
    %6241 = vmatpush.msra.mxu0 1.0
    %6242 = vmatpush.msra.mxu0 1.0
    %6243 = vmatpush.msra.mxu0 1.0
    %6244 = vmatpush.msra.mxu0 1.0
    %6245 = vmatpush.msra.mxu0 1.0
    %6246 = vmatpush.msra.mxu0 1.0
    %6247 = vmatpush.msra.mxu0 1.0
    %6248 = vmatpush.msra.mxu0 1.0
    %6249 = vmatpush.msra.mxu0 1.0
    %6250 = vmatpush.msra.mxu0 1.0
    %6251 = vmatpush.msra.mxu0 1.0
    %6252 = vmatpush.msra.mxu0 1.0
    %6253 = vmatpush.msra.mxu0 1.0
    %6254 = vmatpush.msra.mxu0 1.0
    %6255 = vmatpush.msra.mxu0 1.0
    %6256 = vmatmul.f32.gmra.mxu0 %v6200
    %v6257 = vpop.f32.mrf.mxu0
    %v6258 = vadd.f32 %v6229, %v6257
    %6259 = vmatmul.f32.gmra.mxu0 %v6203
    %v6260 = vpop.f32.mrf.mxu0
    %v6261 = vadd.f32 %v6232, %v6260
    %6262 = vmatmul.f32.gmra.mxu0 %v6206
    %v6263 = vpop.f32.mrf.mxu0
    %v6264 = vadd.f32 %v6235, %v6263
    %6265 = vmatmul.f32.gmra.mxu0 %v6209
    %v6266 = vpop.f32.mrf.mxu0
    %v6267 = vadd.f32 %v6238, %v6266
    %6268 = vdwg.mxu0
    %v6269 = vmul.f32 %v6258, 0.00390625
    %v6270 = vmul.f32 %v6261, 0.00390625
    %v6271 = vmul.f32 %v6264, 0.00390625
    %v6272 = vmul.f32 %v6267, 0.00390625
    %6274 = vset.pattern.permute.xlu0 0
    %6275 = vperm.xlu0 %6274, %v6269
    %v6276 = vpop.permute.xlu0 %6275
    %6279 = vset.pattern.permute.xlu0 0
    %6280 = vperm.xlu0 %6279, %v6270
    %v6281 = vpop.permute.xlu0 %6280
    %6284 = vset.pattern.permute.xlu0 0
    %6285 = vperm.xlu0 %6284, %v6271
    %v6286 = vpop.permute.xlu0 %6285
    %6289 = vset.pattern.permute.xlu0 0
    %6290 = vperm.xlu0 %6289, %v6272
    %v6291 = vpop.permute.xlu0 %6290
    %v6293 = vsub.f32 %v6171, %v6276
    %v6294 = vsub.f32 %v6200, %v6276
    %v6295 = vsub.f32 %v6174, %v6281
    %v6296 = vsub.f32 %v6203, %v6281
    %v6297 = vsub.f32 %v6177, %v6286
    %v6298 = vsub.f32 %v6206, %v6286
    %v6299 = vsub.f32 %v6180, %v6291
    %v6300 = vsub.f32 %v6209, %v6291
    %v6301 = vmul.f32 %v6293, %v6293
    %v6302 = vmul.f32 %v6294, %v6294
    %v6303 = vmul.f32 %v6295, %v6295
    %v6304 = vmul.f32 %v6296, %v6296
    %v6305 = vmul.f32 %v6297, %v6297
    %v6306 = vmul.f32 %v6298, %v6298
    %v6307 = vmul.f32 %v6299, %v6299
    %v6308 = vmul.f32 %v6300, %v6300
    %6309 = vmatpush.msra.mxu0 1.0
    %6310 = vmatpush.msra.mxu0 1.0
    %6311 = vmatpush.msra.mxu0 1.0
    %6312 = vmatpush.msra.mxu0 1.0
    %6313 = vmatpush.msra.mxu0 1.0
    %6314 = vmatpush.msra.mxu0 1.0
    %6315 = vmatpush.msra.mxu0 1.0
    %6316 = vmatpush.msra.mxu0 1.0
    %6317 = vmatpush.msra.mxu0 1.0
    %6318 = vmatpush.msra.mxu0 1.0
    %6319 = vmatpush.msra.mxu0 1.0
    %6320 = vmatpush.msra.mxu0 1.0
    %6321 = vmatpush.msra.mxu0 1.0
    %6322 = vmatpush.msra.mxu0 1.0
    %6323 = vmatpush.msra.mxu0 1.0
    %6324 = vmatpush.msra.mxu0 1.0
    %6325 = vmatmul.f32.gmra.mxu0 %v6301
    %v6326 = vpop.f32.mrf.mxu0
    %v6327 = vadd.f32 0.0, %v6326
    %6328 = vmatmul.f32.gmra.mxu0 %v6303
    %v6329 = vpop.f32.mrf.mxu0
    %v6330 = vadd.f32 0.0, %v6329
    %6331 = vmatmul.f32.gmra.mxu0 %v6305
    %v6332 = vpop.f32.mrf.mxu0
    %v6333 = vadd.f32 0.0, %v6332
    %6334 = vmatmul.f32.gmra.mxu0 %v6307
    %v6335 = vpop.f32.mrf.mxu0
    %v6336 = vadd.f32 0.0, %v6335
    %6337 = vdwg.mxu0
    %6338 = vmatpush.msra.mxu0 1.0
    %6339 = vmatpush.msra.mxu0 1.0
    %6340 = vmatpush.msra.mxu0 1.0
    %6341 = vmatpush.msra.mxu0 1.0
    %6342 = vmatpush.msra.mxu0 1.0
    %6343 = vmatpush.msra.mxu0 1.0
    %6344 = vmatpush.msra.mxu0 1.0
    %6345 = vmatpush.msra.mxu0 1.0
    %6346 = vmatpush.msra.mxu0 1.0
    %6347 = vmatpush.msra.mxu0 1.0
    %6348 = vmatpush.msra.mxu0 1.0
    %6349 = vmatpush.msra.mxu0 1.0
    %6350 = vmatpush.msra.mxu0 1.0
    %6351 = vmatpush.msra.mxu0 1.0
    %6352 = vmatpush.msra.mxu0 1.0
    %6353 = vmatpush.msra.mxu0 1.0
    %6354 = vmatmul.f32.gmra.mxu0 %v6302
    %v6355 = vpop.f32.mrf.mxu0
    %v6356 = vadd.f32 %v6327, %v6355
    %6357 = vmatmul.f32.gmra.mxu0 %v6304
    %v6358 = vpop.f32.mrf.mxu0
    %v6359 = vadd.f32 %v6330, %v6358
    %6360 = vmatmul.f32.gmra.mxu0 %v6306
    %v6361 = vpop.f32.mrf.mxu0
    %v6362 = vadd.f32 %v6333, %v6361
    %6363 = vmatmul.f32.gmra.mxu0 %v6308
    %v6364 = vpop.f32.mrf.mxu0
    %v6365 = vadd.f32 %v6336, %v6364
    %6366 = vdwg.mxu0
    %v6367 = vmul.f32 %v6356, 0.00390625
    %v6368 = vmul.f32 %v6359, 0.00390625
    %v6369 = vmul.f32 %v6362, 0.00390625
    %v6370 = vmul.f32 %v6365, 0.00390625
    %v6371 = vadd.f32 %v6367, 1e-05
    %v6372 = vadd.f32 %v6368, 1e-05
    %v6373 = vadd.f32 %v6369, 1e-05
    %v6374 = vadd.f32 %v6370, 1e-05
    %v6375 = vrsqrt.pop %v6371
    %v6376 = vmul.f32 %v6375, %v6371
    %v6377 = vmul.f32 %v6376, %v6375
    %v6378 = vmul.f32 0.5, %v6377
    %v6379 = vsub.f32 1.5, %v6378
    %v6380 = vmul.f32 %v6375, %v6379
    %vm6381 = vweird.f32 %v6371
    %vm6382 = vweird.f32 %v6375
    %vm6383 = vmor %vm6381, %vm6382
    %v6384 = vsel %vm6383, %v6375, %v6380
    %v6385 = vrsqrt.pop %v6372
    %v6386 = vmul.f32 %v6385, %v6372
    %v6387 = vmul.f32 %v6386, %v6385
    %v6388 = vmul.f32 0.5, %v6387
    %v6389 = vsub.f32 1.5, %v6388
    %v6390 = vmul.f32 %v6385, %v6389
    %vm6391 = vweird.f32 %v6372
    %vm6392 = vweird.f32 %v6385
    %vm6393 = vmor %vm6391, %vm6392
    %v6394 = vsel %vm6393, %v6385, %v6390
    %v6395 = vrsqrt.pop %v6373
    %v6396 = vmul.f32 %v6395, %v6373
    %v6397 = vmul.f32 %v6396, %v6395
    %v6398 = vmul.f32 0.5, %v6397
    %v6399 = vsub.f32 1.5, %v6398
    %v6400 = vmul.f32 %v6395, %v6399
    %vm6401 = vweird.f32 %v6373
    %vm6402 = vweird.f32 %v6395
    %vm6403 = vmor %vm6401, %vm6402
    %v6404 = vsel %vm6403, %v6395, %v6400
    %v6405 = vrsqrt.pop %v6374
    %v6406 = vmul.f32 %v6405, %v6374
    %v6407 = vmul.f32 %v6406, %v6405
    %v6408 = vmul.f32 0.5, %v6407
    %v6409 = vsub.f32 1.5, %v6408
    %v6410 = vmul.f32 %v6405, %v6409
    %vm6411 = vweird.f32 %v6374
    %vm6412 = vweird.f32 %v6405
    %vm6413 = vmor %vm6411, %vm6412
    %v6414 = vsel %vm6413, %v6405, %v6410
    %s6415 = scalar_lea.vmem %s4, 480
    %v6416 = vld [vmem:[%s6415] sm:$0xff]
    %v6417 = vld [vmem:[%s6415 + $0x8] sm:$0xff]
    %v6418 = vld [vmem:[%s6415 + $0x10] sm:$0xff]
    %v6419 = vld [vmem:[%s6415 + $0x18] sm:$0xff]
    %v6420 = vmul.f32 %v6384, %v6416
    %v6421 = vmul.f32 %v6394, %v6417
    %v6422 = vmul.f32 %v6404, %v6418
    %v6423 = vmul.f32 %v6414, %v6419
    %6425 = vset.pattern.permute.xlu0 0
    %6426 = vperm.xlu0 %6425, %v6420
    %v6427 = vpop.permute.xlu0 %6426
    %6430 = vset.pattern.permute.xlu0 0
    %6431 = vperm.xlu0 %6430, %v6421
    %v6432 = vpop.permute.xlu0 %6431
    %6435 = vset.pattern.permute.xlu0 0
    %6436 = vperm.xlu0 %6435, %v6422
    %v6437 = vpop.permute.xlu0 %6436
    %6440 = vset.pattern.permute.xlu0 0
    %6441 = vperm.xlu0 %6440, %v6423
    %v6442 = vpop.permute.xlu0 %6441
    %v6444 = vmul.f32 %v6293, %v6427
    %v6445 = vmul.f32 %v6294, %v6427
    %v6446 = vmul.f32 %v6295, %v6432
    %v6447 = vmul.f32 %v6296, %v6432
    %v6448 = vmul.f32 %v6297, %v6437
    %v6449 = vmul.f32 %v6298, %v6437
    %v6450 = vmul.f32 %v6299, %v6442
    %v6451 = vmul.f32 %v6300, %v6442
    %s6452 = scalar_lea.vmem %s4, 736
    %v6453 = vld [vmem:[%s6452] sm:$0xff]
    %v6454 = vld [vmem:[%s6452 + $0x8] sm:$0xff]
    %v6455 = vld [vmem:[%s6452 + $0x10] sm:$0xff]
    %v6456 = vld [vmem:[%s6452 + $0x18] sm:$0xff]
    %6458 = vset.pattern.permute.xlu0 0
    %6459 = vperm.xlu0 %6458, %v6453
    %v6460 = vpop.permute.xlu0 %6459
    %6463 = vset.pattern.permute.xlu0 0
    %6464 = vperm.xlu0 %6463, %v6454
    %v6465 = vpop.permute.xlu0 %6464
    %6468 = vset.pattern.permute.xlu0 0
    %6469 = vperm.xlu0 %6468, %v6455
    %v6470 = vpop.permute.xlu0 %6469
    %6473 = vset.pattern.permute.xlu0 0
    %6474 = vperm.xlu0 %6473, %v6456
    %v6475 = vpop.permute.xlu0 %6474
    %v6477 = vadd.f32 %v6444, %v6460
    %v6478 = vadd.f32 %v6445, %v6460
    %v6479 = vadd.f32 %v6446, %v6465
    %v6480 = vadd.f32 %v6447, %v6465
    %v6481 = vadd.f32 %v6448, %v6470
    %v6482 = vadd.f32 %v6449, %v6470
    %v6483 = vadd.f32 %v6450, %v6475
    %v6484 = vadd.f32 %v6451, %v6475
    %v6485 = vmul.f32 %v6477, 0.5
    %v6486 = vmul.f32 %v6478, 0.5
    %v6487 = vmul.f32 %v6479, 0.5
    %v6488 = vmul.f32 %v6480, 0.5
    %v6489 = vmul.f32 %v6481, 0.5
    %v6490 = vmul.f32 %v6482, 0.5
    %v6491 = vmul.f32 %v6483, 0.5
    %v6492 = vmul.f32 %v6484, 0.5
    %v6493 = vmul.f32 %v6477, 0.70710677
    %v6494 = vmul.f32 %v6478, 0.70710677
    %v6495 = vmul.f32 %v6479, 0.70710677
    %v6496 = vmul.f32 %v6480, 0.70710677
    %v6497 = vmul.f32 %v6481, 0.70710677
    %v6498 = vmul.f32 %v6482, 0.70710677
    %v6499 = vmul.f32 %v6483, 0.70710677
    %v6500 = vmul.f32 %v6484, 0.70710677
    %v6501 = vmul.f32 %v6493, %v6493
    %v6502 = vmin.f32 16.0, %v6501
    %v6503 = vmul.f32 %v6502, 2.1237322e-06
    %v6504 = vadd.f32 %v6503, 0.00028619796
    %v6505 = vmul.f32 %v6502, %v6504
    %v6506 = vadd.f32 %v6505, 0.0036580483
    %v6507 = vmul.f32 %v6502, %v6506
    %v6508 = vadd.f32 %v6507, 0.05243302
    %v6509 = vmul.f32 %v6502, %v6508
    %v6510 = vadd.f32 %v6509, 0.18741608
    %v6511 = vmul.f32 %v6502, %v6510
    %v6512 = vadd.f32 %v6511, 1.1283791
    %v6513 = vmul.f32 %v6493, %v6512
    %v6514 = vmul.f32 %v6502, 3.8918573e-05
    %v6515 = vadd.f32 %v6514, 0.001143296
    %v6516 = vmul.f32 %v6502, %v6515
    %v6517 = vadd.f32 %v6516, 0.014752088
    %v6518 = vmul.f32 %v6502, %v6517
    %v6519 = vadd.f32 %v6518, 0.112945676
    %v6520 = vmul.f32 %v6502, %v6519
    %v6521 = vadd.f32 %v6520, 0.4994258
    %v6522 = vmul.f32 %v6502, %v6521
    %v6523 = vadd.f32 %v6522, 1.0
    %v6524 = vrcp.pop %v6523
    %v6525 = vmul.f32 %v6523, %v6524
    %v6526 = vsub.f32 1.0, %v6525
    %v6527 = vmul.f32 %v6524, %v6526
    %v6528 = vadd.f32 %v6524, %v6527
    %vm6529 = vweird.f32 %v6523
    %vm6530 = vweird.f32 %v6524
    %vm6531 = vmor %vm6529, %vm6530
    %v6532 = vsel %vm6531, %v6524, %v6528
    %v6533 = vand.u32 2147483647, %v6523
    %vm6534 = vcmp.eq.f32.partialorder %v6533, 8.507059e+37
    %v6535 = vand.u32 %v6523, 2147483648
    %v6536 = vor.u32 1.1754944e-38, %v6535
    %v6537 = vsel %vm6534, %v6536, %v6532
    %v6538 = vmul.f32 %v6513, %v6537
    %v6539 = vmin.f32 %v6538, 1.0
    %v6540 = vmax.f32 %v6539, -1.0
    %v6541 = vmul.f32 %v6494, %v6494
    %v6542 = vmin.f32 16.0, %v6541
    %v6543 = vmul.f32 %v6542, 2.1237322e-06
    %v6544 = vadd.f32 %v6543, 0.00028619796
    %v6545 = vmul.f32 %v6542, %v6544
    %v6546 = vadd.f32 %v6545, 0.0036580483
    %v6547 = vmul.f32 %v6542, %v6546
    %v6548 = vadd.f32 %v6547, 0.05243302
    %v6549 = vmul.f32 %v6542, %v6548
    %v6550 = vadd.f32 %v6549, 0.18741608
    %v6551 = vmul.f32 %v6542, %v6550
    %v6552 = vadd.f32 %v6551, 1.1283791
    %v6553 = vmul.f32 %v6494, %v6552
    %v6554 = vmul.f32 %v6542, 3.8918573e-05
    %v6555 = vadd.f32 %v6554, 0.001143296
    %v6556 = vmul.f32 %v6542, %v6555
    %v6557 = vadd.f32 %v6556, 0.014752088
    %v6558 = vmul.f32 %v6542, %v6557
    %v6559 = vadd.f32 %v6558, 0.112945676
    %v6560 = vmul.f32 %v6542, %v6559
    %v6561 = vadd.f32 %v6560, 0.4994258
    %v6562 = vmul.f32 %v6542, %v6561
    %v6563 = vadd.f32 %v6562, 1.0
    %v6564 = vrcp.pop %v6563
    %v6565 = vmul.f32 %v6563, %v6564
    %v6566 = vsub.f32 1.0, %v6565
    %v6567 = vmul.f32 %v6564, %v6566
    %v6568 = vadd.f32 %v6564, %v6567
    %vm6569 = vweird.f32 %v6563
    %vm6570 = vweird.f32 %v6564
    %vm6571 = vmor %vm6569, %vm6570
    %v6572 = vsel %vm6571, %v6564, %v6568
    %v6573 = vand.u32 2147483647, %v6563
    %vm6574 = vcmp.eq.f32.partialorder %v6573, 8.507059e+37
    %v6575 = vand.u32 %v6563, 2147483648
    %v6576 = vor.u32 1.1754944e-38, %v6575
    %v6577 = vsel %vm6574, %v6576, %v6572
    %v6578 = vmul.f32 %v6553, %v6577
    %v6579 = vmin.f32 %v6578, 1.0
    %v6580 = vmax.f32 %v6579, -1.0
    %v6581 = vmul.f32 %v6495, %v6495
    %v6582 = vmin.f32 16.0, %v6581
    %v6583 = vmul.f32 %v6582, 2.1237322e-06
    %v6584 = vadd.f32 %v6583, 0.00028619796
    %v6585 = vmul.f32 %v6582, %v6584
    %v6586 = vadd.f32 %v6585, 0.0036580483
    %v6587 = vmul.f32 %v6582, %v6586
    %v6588 = vadd.f32 %v6587, 0.05243302
    %v6589 = vmul.f32 %v6582, %v6588
    %v6590 = vadd.f32 %v6589, 0.18741608
    %v6591 = vmul.f32 %v6582, %v6590
    %v6592 = vadd.f32 %v6591, 1.1283791
    %v6593 = vmul.f32 %v6495, %v6592
    %v6594 = vmul.f32 %v6582, 3.8918573e-05
    %v6595 = vadd.f32 %v6594, 0.001143296
    %v6596 = vmul.f32 %v6582, %v6595
    %v6597 = vadd.f32 %v6596, 0.014752088
    %v6598 = vmul.f32 %v6582, %v6597
    %v6599 = vadd.f32 %v6598, 0.112945676
    %v6600 = vmul.f32 %v6582, %v6599
    %v6601 = vadd.f32 %v6600, 0.4994258
    %v6602 = vmul.f32 %v6582, %v6601
    %v6603 = vadd.f32 %v6602, 1.0
    %v6604 = vrcp.pop %v6603
    %v6605 = vmul.f32 %v6603, %v6604
    %v6606 = vsub.f32 1.0, %v6605
    %v6607 = vmul.f32 %v6604, %v6606
    %v6608 = vadd.f32 %v6604, %v6607
    %vm6609 = vweird.f32 %v6603
    %vm6610 = vweird.f32 %v6604
    %vm6611 = vmor %vm6609, %vm6610
    %v6612 = vsel %vm6611, %v6604, %v6608
    %v6613 = vand.u32 2147483647, %v6603
    %vm6614 = vcmp.eq.f32.partialorder %v6613, 8.507059e+37
    %v6615 = vand.u32 %v6603, 2147483648
    %v6616 = vor.u32 1.1754944e-38, %v6615
    %v6617 = vsel %vm6614, %v6616, %v6612
    %v6618 = vmul.f32 %v6593, %v6617
    %v6619 = vmin.f32 %v6618, 1.0
    %v6620 = vmax.f32 %v6619, -1.0
    %v6621 = vmul.f32 %v6496, %v6496
    %v6622 = vmin.f32 16.0, %v6621
    %v6623 = vmul.f32 %v6622, 2.1237322e-06
    %v6624 = vadd.f32 %v6623, 0.00028619796
    %v6625 = vmul.f32 %v6622, %v6624
    %v6626 = vadd.f32 %v6625, 0.0036580483
    %v6627 = vmul.f32 %v6622, %v6626
    %v6628 = vadd.f32 %v6627, 0.05243302
    %v6629 = vmul.f32 %v6622, %v6628
    %v6630 = vadd.f32 %v6629, 0.18741608
    %v6631 = vmul.f32 %v6622, %v6630
    %v6632 = vadd.f32 %v6631, 1.1283791
    %v6633 = vmul.f32 %v6496, %v6632
    %v6634 = vmul.f32 %v6622, 3.8918573e-05
    %v6635 = vadd.f32 %v6634, 0.001143296
    %v6636 = vmul.f32 %v6622, %v6635
    %v6637 = vadd.f32 %v6636, 0.014752088
    %v6638 = vmul.f32 %v6622, %v6637
    %v6639 = vadd.f32 %v6638, 0.112945676
    %v6640 = vmul.f32 %v6622, %v6639
    %v6641 = vadd.f32 %v6640, 0.4994258
    %v6642 = vmul.f32 %v6622, %v6641
    %v6643 = vadd.f32 %v6642, 1.0
    %v6644 = vrcp.pop %v6643
    %v6645 = vmul.f32 %v6643, %v6644
    %v6646 = vsub.f32 1.0, %v6645
    %v6647 = vmul.f32 %v6644, %v6646
    %v6648 = vadd.f32 %v6644, %v6647
    %vm6649 = vweird.f32 %v6643
    %vm6650 = vweird.f32 %v6644
    %vm6651 = vmor %vm6649, %vm6650
    %v6652 = vsel %vm6651, %v6644, %v6648
    %v6653 = vand.u32 2147483647, %v6643
    %vm6654 = vcmp.eq.f32.partialorder %v6653, 8.507059e+37
    %v6655 = vand.u32 %v6643, 2147483648
    %v6656 = vor.u32 1.1754944e-38, %v6655
    %v6657 = vsel %vm6654, %v6656, %v6652
    %v6658 = vmul.f32 %v6633, %v6657
    %v6659 = vmin.f32 %v6658, 1.0
    %v6660 = vmax.f32 %v6659, -1.0
    %v6661 = vmul.f32 %v6497, %v6497
    %v6662 = vmin.f32 16.0, %v6661
    %v6663 = vmul.f32 %v6662, 2.1237322e-06
    %v6664 = vadd.f32 %v6663, 0.00028619796
    %v6665 = vmul.f32 %v6662, %v6664
    %v6666 = vadd.f32 %v6665, 0.0036580483
    %v6667 = vmul.f32 %v6662, %v6666
    %v6668 = vadd.f32 %v6667, 0.05243302
    %v6669 = vmul.f32 %v6662, %v6668
    %v6670 = vadd.f32 %v6669, 0.18741608
    %v6671 = vmul.f32 %v6662, %v6670
    %v6672 = vadd.f32 %v6671, 1.1283791
    %v6673 = vmul.f32 %v6497, %v6672
    %v6674 = vmul.f32 %v6662, 3.8918573e-05
    %v6675 = vadd.f32 %v6674, 0.001143296
    %v6676 = vmul.f32 %v6662, %v6675
    %v6677 = vadd.f32 %v6676, 0.014752088
    %v6678 = vmul.f32 %v6662, %v6677
    %v6679 = vadd.f32 %v6678, 0.112945676
    %v6680 = vmul.f32 %v6662, %v6679
    %v6681 = vadd.f32 %v6680, 0.4994258
    %v6682 = vmul.f32 %v6662, %v6681
    %v6683 = vadd.f32 %v6682, 1.0
    %v6684 = vrcp.pop %v6683
    %v6685 = vmul.f32 %v6683, %v6684
    %v6686 = vsub.f32 1.0, %v6685
    %v6687 = vmul.f32 %v6684, %v6686
    %v6688 = vadd.f32 %v6684, %v6687
    %vm6689 = vweird.f32 %v6683
    %vm6690 = vweird.f32 %v6684
    %vm6691 = vmor %vm6689, %vm6690
    %v6692 = vsel %vm6691, %v6684, %v6688
    %v6693 = vand.u32 2147483647, %v6683
    %vm6694 = vcmp.eq.f32.partialorder %v6693, 8.507059e+37
    %v6695 = vand.u32 %v6683, 2147483648
    %v6696 = vor.u32 1.1754944e-38, %v6695
    %v6697 = vsel %vm6694, %v6696, %v6692
    %v6698 = vmul.f32 %v6673, %v6697
    %v6699 = vmin.f32 %v6698, 1.0
    %v6700 = vmax.f32 %v6699, -1.0
    %v6701 = vmul.f32 %v6498, %v6498
    %v6702 = vmin.f32 16.0, %v6701
    %v6703 = vmul.f32 %v6702, 2.1237322e-06
    %v6704 = vadd.f32 %v6703, 0.00028619796
    %v6705 = vmul.f32 %v6702, %v6704
    %v6706 = vadd.f32 %v6705, 0.0036580483
    %v6707 = vmul.f32 %v6702, %v6706
    %v6708 = vadd.f32 %v6707, 0.05243302
    %v6709 = vmul.f32 %v6702, %v6708
    %v6710 = vadd.f32 %v6709, 0.18741608
    %v6711 = vmul.f32 %v6702, %v6710
    %v6712 = vadd.f32 %v6711, 1.1283791
    %v6713 = vmul.f32 %v6498, %v6712
    %v6714 = vmul.f32 %v6702, 3.8918573e-05
    %v6715 = vadd.f32 %v6714, 0.001143296
    %v6716 = vmul.f32 %v6702, %v6715
    %v6717 = vadd.f32 %v6716, 0.014752088
    %v6718 = vmul.f32 %v6702, %v6717
    %v6719 = vadd.f32 %v6718, 0.112945676
    %v6720 = vmul.f32 %v6702, %v6719
    %v6721 = vadd.f32 %v6720, 0.4994258
    %v6722 = vmul.f32 %v6702, %v6721
    %v6723 = vadd.f32 %v6722, 1.0
    %v6724 = vrcp.pop %v6723
    %v6725 = vmul.f32 %v6723, %v6724
    %v6726 = vsub.f32 1.0, %v6725
    %v6727 = vmul.f32 %v6724, %v6726
    %v6728 = vadd.f32 %v6724, %v6727
    %vm6729 = vweird.f32 %v6723
    %vm6730 = vweird.f32 %v6724
    %vm6731 = vmor %vm6729, %vm6730
    %v6732 = vsel %vm6731, %v6724, %v6728
    %v6733 = vand.u32 2147483647, %v6723
    %vm6734 = vcmp.eq.f32.partialorder %v6733, 8.507059e+37
    %v6735 = vand.u32 %v6723, 2147483648
    %v6736 = vor.u32 1.1754944e-38, %v6735
    %v6737 = vsel %vm6734, %v6736, %v6732
    %v6738 = vmul.f32 %v6713, %v6737
    %v6739 = vmin.f32 %v6738, 1.0
    %v6740 = vmax.f32 %v6739, -1.0
    %v6741 = vmul.f32 %v6499, %v6499
    %v6742 = vmin.f32 16.0, %v6741
    %v6743 = vmul.f32 %v6742, 2.1237322e-06
    %v6744 = vadd.f32 %v6743, 0.00028619796
    %v6745 = vmul.f32 %v6742, %v6744
    %v6746 = vadd.f32 %v6745, 0.0036580483
    %v6747 = vmul.f32 %v6742, %v6746
    %v6748 = vadd.f32 %v6747, 0.05243302
    %v6749 = vmul.f32 %v6742, %v6748
    %v6750 = vadd.f32 %v6749, 0.18741608
    %v6751 = vmul.f32 %v6742, %v6750
    %v6752 = vadd.f32 %v6751, 1.1283791
    %v6753 = vmul.f32 %v6499, %v6752
    %v6754 = vmul.f32 %v6742, 3.8918573e-05
    %v6755 = vadd.f32 %v6754, 0.001143296
    %v6756 = vmul.f32 %v6742, %v6755
    %v6757 = vadd.f32 %v6756, 0.014752088
    %v6758 = vmul.f32 %v6742, %v6757
    %v6759 = vadd.f32 %v6758, 0.112945676
    %v6760 = vmul.f32 %v6742, %v6759
    %v6761 = vadd.f32 %v6760, 0.4994258
    %v6762 = vmul.f32 %v6742, %v6761
    %v6763 = vadd.f32 %v6762, 1.0
    %v6764 = vrcp.pop %v6763
    %v6765 = vmul.f32 %v6763, %v6764
    %v6766 = vsub.f32 1.0, %v6765
    %v6767 = vmul.f32 %v6764, %v6766
    %v6768 = vadd.f32 %v6764, %v6767
    %vm6769 = vweird.f32 %v6763
    %vm6770 = vweird.f32 %v6764
    %vm6771 = vmor %vm6769, %vm6770
    %v6772 = vsel %vm6771, %v6764, %v6768
    %v6773 = vand.u32 2147483647, %v6763
    %vm6774 = vcmp.eq.f32.partialorder %v6773, 8.507059e+37
    %v6775 = vand.u32 %v6763, 2147483648
    %v6776 = vor.u32 1.1754944e-38, %v6775
    %v6777 = vsel %vm6774, %v6776, %v6772
    %v6778 = vmul.f32 %v6753, %v6777
    %v6779 = vmin.f32 %v6778, 1.0
    %v6780 = vmax.f32 %v6779, -1.0
    %v6781 = vmul.f32 %v6500, %v6500
    %v6782 = vmin.f32 16.0, %v6781
    %v6783 = vmul.f32 %v6782, 2.1237322e-06
    %v6784 = vadd.f32 %v6783, 0.00028619796
    %v6785 = vmul.f32 %v6782, %v6784
    %v6786 = vadd.f32 %v6785, 0.0036580483
    %v6787 = vmul.f32 %v6782, %v6786
    %v6788 = vadd.f32 %v6787, 0.05243302
    %v6789 = vmul.f32 %v6782, %v6788
    %v6790 = vadd.f32 %v6789, 0.18741608
    %v6791 = vmul.f32 %v6782, %v6790
    %v6792 = vadd.f32 %v6791, 1.1283791
    %v6793 = vmul.f32 %v6500, %v6792
    %v6794 = vmul.f32 %v6782, 3.8918573e-05
    %v6795 = vadd.f32 %v6794, 0.001143296
    %v6796 = vmul.f32 %v6782, %v6795
    %v6797 = vadd.f32 %v6796, 0.014752088
    %v6798 = vmul.f32 %v6782, %v6797
    %v6799 = vadd.f32 %v6798, 0.112945676
    %v6800 = vmul.f32 %v6782, %v6799
    %v6801 = vadd.f32 %v6800, 0.4994258
    %v6802 = vmul.f32 %v6782, %v6801
    %v6803 = vadd.f32 %v6802, 1.0
    %v6804 = vrcp.pop %v6803
    %v6805 = vmul.f32 %v6803, %v6804
    %v6806 = vsub.f32 1.0, %v6805
    %v6807 = vmul.f32 %v6804, %v6806
    %v6808 = vadd.f32 %v6804, %v6807
    %vm6809 = vweird.f32 %v6803
    %vm6810 = vweird.f32 %v6804
    %vm6811 = vmor %vm6809, %vm6810
    %v6812 = vsel %vm6811, %v6804, %v6808
    %v6813 = vand.u32 2147483647, %v6803
    %vm6814 = vcmp.eq.f32.partialorder %v6813, 8.507059e+37
    %v6815 = vand.u32 %v6803, 2147483648
    %v6816 = vor.u32 1.1754944e-38, %v6815
    %v6817 = vsel %vm6814, %v6816, %v6812
    %v6818 = vmul.f32 %v6793, %v6817
    %v6819 = vmin.f32 %v6818, 1.0
    %v6820 = vmax.f32 %v6819, -1.0
    %v6821 = vadd.f32 %v6540, 1.0
    %v6822 = vadd.f32 %v6580, 1.0
    %v6823 = vadd.f32 %v6620, 1.0
    %v6824 = vadd.f32 %v6660, 1.0
    %v6825 = vadd.f32 %v6700, 1.0
    %v6826 = vadd.f32 %v6740, 1.0
    %v6827 = vadd.f32 %v6780, 1.0
    %v6828 = vadd.f32 %v6820, 1.0
    %v6829 = vmul.f32 %v6485, %v6821
    %v6830 = vmul.f32 %v6486, %v6822
    %v6831 = vmul.f32 %v6487, %v6823
    %v6832 = vmul.f32 %v6488, %v6824
    %v6833 = vmul.f32 %v6489, %v6825
    %v6834 = vmul.f32 %v6490, %v6826
    %v6835 = vmul.f32 %v6491, %v6827
    %v6836 = vmul.f32 %v6492, %v6828
    %v6837 = vld [vmem:[%s3] sm:$0x3]
    %s6838 = scalar_lea.vmem %s4, 768
    %v6839 = vld [vmem:[%s6838] sm:$0xff]
    %6841 = vset.pattern.permute.xlu0 0
    %6842 = vperm.xlu0 %6841, %v6839
    %v6843 = vpop.permute.xlu0 %6842
    %v6846 = vsel %vm1760, %v6837, 0
    %6848 = vmatpush.msra.mxu0 0.0
    %6849 = vmatpush.msra.mxu0 0.0
    %6850 = vmatpush.msra.mxu0 0.0
    %6851 = vmatpush.msra.mxu0 0.0
    %6852 = vmatpush.msra.mxu0 0.0
    %6853 = vmatpush.msra.mxu0 0.0
    %6854 = vmatpush.msra.mxu0 0.0
    %6855 = vmatpush.msra.mxu0 0.0
    %6856 = vmatpush.msra.mxu0 0.0
    %6857 = vmatpush.msra.mxu0 0.0
    %6858 = vmatpush.msra.mxu0 0.0
    %6859 = vmatpush.msra.mxu0 0.0
    %6860 = vmatpush.msra.mxu0 %v6835
    %6861 = vmatpush.msra.mxu0 %v6833
    %6862 = vmatpush.msra.mxu0 %v6831
    %6863 = vmatpush.msra.mxu0 %v6829
    %6864 = vmatmul.f32.gmra.mxu0 %v6846
    %v6865 = vpop.f32.mrf.mxu0
    %v6866 = vadd.f32 %v6843, %v6865
    %6867 = vdwg.mxu0
    %6868 = vmatpush.msra.mxu0 0.0
    %6869 = vmatpush.msra.mxu0 0.0
    %6870 = vmatpush.msra.mxu0 0.0
    %6871 = vmatpush.msra.mxu0 0.0
    %6872 = vmatpush.msra.mxu0 0.0
    %6873 = vmatpush.msra.mxu0 0.0
    %6874 = vmatpush.msra.mxu0 0.0
    %6875 = vmatpush.msra.mxu0 0.0
    %6876 = vmatpush.msra.mxu0 0.0
    %6877 = vmatpush.msra.mxu0 0.0
    %6878 = vmatpush.msra.mxu0 0.0
    %6879 = vmatpush.msra.mxu0 0.0
    %6880 = vmatpush.msra.mxu0 %v6836
    %6881 = vmatpush.msra.mxu0 %v6834
    %6882 = vmatpush.msra.mxu0 %v6832
    %6883 = vmatpush.msra.mxu0 %v6830
    %6884 = vmatmul.f32.gmra.mxu0 %v6846
    %v6885 = vpop.f32.mrf.mxu0
    %v6886 = vadd.f32 %v6843, %v6885
    %6887 = vdwg.mxu0
    %v6890 = vrot.slane %v6886, 6
    %vm6891 = vcmask 1041408
    %v6892 = vsel %vm6891, %v6866, %v6890
    %6894 = vst [vmem:[#allocation2] sm:$0xf] %v6892
    // Predicated region
    $region22: #{tpu_custom_call.1} parent=1 // pred_check
      _
    $region23: #{tpu_custom_call.1} parent=1 // pred_check_branch
      %6896 = sbr.rel (0) target = $region25
    $region24: #{tpu_custom_call.1} parent=1 // pred_region
      %6898 = vsyncadd [#allocation3], 0
      %s6900 = sshll.u32 [#allocation2], 4
      %s6901 = int_to_ptr.vmem [resolvable:$true] %s6900
      %s6902 = sshll.u32 %s5, 4
      %s6903 = int_to_ptr.hbm [resolvable:$true] %s6902
      %6905 = dma.vmem_to_hbm [thread:$0]  %s6901, 64, %s6903, [#allocation3]
    $region25: #{tpu_custom_call.1} parent=1 // pred_fallthru
      _
    // Predicated region
    $region26: #{tpu_custom_call.1} parent=1 // pred_check
      _
    $region27: #{tpu_custom_call.1} parent=1 // pred_check_branch
      %6907 = sbr.rel (0) target = $region29
    $region28: #{tpu_custom_call.1} parent=1 // pred_region
      %6909 = dma.done [#allocation3], 64
    $region29: #{tpu_custom_call.1} parent=1 // pred_fallthru
      _
    %6910 = vsyncpa [#allocation3], 1

</llo_original>
